<compile_context>
chip_gen: v6e
topology: v6e:2x2x1
jax: 0.10.0
libtpu: 0.0.40
codegen_flags: <defaults>
</compile_context>

<pallas_src>
import functools

import jax
import jax.numpy as jnp
from jax.experimental import pallas as pl
from jax.experimental.pallas import tpu as pltpu


# ------------------------------ fused kernel ------------------------------

def _fused_feature_kernel(x1_ref, w1_ref, b1_ref, w2_ref, b2_ref,
                          wih_ref, whh_ref, bl_ref, c_out_ref,
                          *, n_b, n_bp, n_t, pool2, hid):
    """conv1+pool1 -> conv2+pool2 -> LSTM, fully fused, single grid step.

    x1_ref : (P1, Hp1p*Bp, K1p) bf16  conv1 im2col; leading dim = pool-1 tap,
                                      rows (hp_pad, b_pad), K = (w, c_in, kh)
    w1_ref : (K1p, W*16)        bf16  block-diagonal (per-asset) conv1 weight
    b1_ref : (1, W*16)          f32   conv1 bias tiled per asset
    w2_ref : (KH2, W*16, 32)    bf16  conv2 weight: one (w,c)->c2 matrix per kh tap
    b2_ref : (1, 32)            f32
    wih_ref: (32, 4*hid)        bf16  W_ih^T
    whh_ref: (hid, 4*hid)       bf16  W_hh^T
    bl_ref : (1, 4*hid)         f32   b_ih + b_hh
    c_out  : (n_b, hid)         f32   final LSTM cell state c_T
    """
    pool1 = x1_ref.shape[0]
    kh2 = w2_ref.shape[0]
    c2 = w2_ref.shape[-1]

    # ---- conv1 GEMM fused with MaxPool2d((10,1)): running max over pool taps ----
    m = jnp.dot(x1_ref[0], w1_ref[...], preferred_element_type=jnp.float32)
    for pp in range(1, pool1):                           # static unroll (10 taps)
        m = jnp.maximum(
            m, jnp.dot(x1_ref[pp], w1_ref[...], preferred_element_type=jnp.float32))
    # bias + ReLU hoisted after the max (per-lane bias, ReLU monotone => identical)
    pooled1 = jnp.maximum(m + b1_ref[...], 0.0)          # (Hp1p*Bp, W*16) f32
    # pooled1 rows: (hp, b_pad); lanes: (asset w, conv1 channel c).

    # ---- conv2 as kh-tap GEMMs on 8-row-aligned slices + bias + ReLU ----
    m2 = n_t * pool2 * n_bp                              # rows (t', b), t' = 2t+p2
    acc2 = jnp.zeros((m2, c2), jnp.float32)
    for kh in range(kh2):                                # static unroll (10 taps)
        xk = pooled1[kh * n_bp:kh * n_bp + m2, :].astype(w2_ref.dtype)
        acc2 = acc2 + jnp.dot(xk, w2_ref[kh], preferred_element_type=jnp.float32)
    y2 = jnp.maximum(acc2 + b2_ref[...], 0.0)            # (P2*T*Bp, 32) f32

    # ---- MaxPool2d((2,1)) + LSTM recurrence (PyTorch gate order i,f,g,o) ----
    h = jnp.zeros((n_bp, hid), jnp.float32)
    c = jnp.zeros((n_bp, hid), jnp.float32)
    for s in range(n_t):                                 # T = 3 -> static unroll
        r0 = s * pool2 * n_bp
        xt = jnp.maximum(y2[r0:r0 + n_bp, :],            # pool tap p2 = 0
                         y2[r0 + n_bp:r0 + 2 * n_bp, :])  # pool tap p2 = 1
        gates = (jnp.dot(xt.astype(wih_ref.dtype), wih_ref[...],
                         preferred_element_type=jnp.float32)
                 + jnp.dot(h.astype(whh_ref.dtype), whh_ref[...],
                           preferred_element_type=jnp.float32)
                 + bl_ref[...])                          # (Bp, 4H) f32
        # gate math stays in f32 (v5e VPU/EUP have no bf16 path)
        i = jax.nn.sigmoid(gates[:, 0 * hid:1 * hid])
        f = jax.nn.sigmoid(gates[:, 1 * hid:2 * hid])
        g = jnp.tanh(gates[:, 2 * hid:3 * hid])
        o = jax.nn.sigmoid(gates[:, 3 * hid:4 * hid])
        c = f * c + i * g
        h = o * jnp.tanh(c)
    c_out_ref[...] = c[:n_b, :]                          # drop batch-padding rows


# ------------------------- parameter construction -------------------------

def init_params(key, n_asset):
    ks = jax.random.split(key, 8)
    s = 0.1
    return {
        # conv1: Conv2d(7 -> 16, kernel=(15, 1)), PyTorch weight layout.
        "w1": s * jax.random.normal(ks[0], (16, 7, 15, 1), jnp.float32),
        "b1": s * jax.random.normal(ks[1], (16,), jnp.float32),
        # conv2: Conv2d(16 -> 32, kernel=(10, n_asset)).
        "w2": s * jax.random.normal(ks[2], (32, 16, 10, n_asset), jnp.float32),
        "b2": s * jax.random.normal(ks[3], (32,), jnp.float32),
        # LSTM(input=32, hidden=256), PyTorch weight layout (4H, in)/(4H, H).
        "w_ih": s * jax.random.normal(ks[4], (4 * 256, 32), jnp.float32),
        "w_hh": s * jax.random.normal(ks[5], (4 * 256, 256), jnp.float32),
        "b_ih": s * jax.random.normal(ks[6], (4 * 256,), jnp.float32),
        "b_hh": s * jax.random.normal(ks[7], (4 * 256,), jnp.float32),
    }


# ------------------------------ forward pass ------------------------------

def feature_extractor_forward(x, p, n_asset):
    B, C, H, W = x.shape
    assert W == n_asset
    x = x.astype(jnp.float32)

    # conv1(7->16, k=(15,1), stride=(3,1), dil=(2,1)) -> ReLU -> MaxPool((10,1))
    KH1, S1, D1, P1, C1 = 15, 3, 2, 10, 16
    Ho1 = (H - D1 * (KH1 - 1) - 1) // S1 + 1
    Hp1 = Ho1 // P1
    # conv2(16->32, k=(10, n_asset)) -> ReLU -> MaxPool((2,1)) -> LSTM(32, 256)
    KH2, P2, C2 = 10, 2, 32
    Ho2 = Hp1 - KH2 + 1
    T = Ho2 // P2
    hid = 256
    assert Hp1 >= KH2 and T >= 1

    # Padding so every in-kernel slice is (8,128)-tile aligned.
    Bp = 8                                    # batch -> one full sublane tile
    assert B <= Bp
    Hp1p = ((Hp1 + 7) // 8) * 8               # pooled-row padding (x8 sublanes)
    K1 = W * C * KH1                          # block-diag contraction (w, c_in, kh)
    K1p = ((K1 + 127) // 128) * 128
    # conv2 taps read pooled rows hp = t' + kh; the padded rows hp in [Hp1, Hp1p)
    # hold relu(bias) garbage and must never be read.
    assert T * P2 + KH2 - 1 <= Hp1 <= Hp1p

    # ---- conv1 im2col (static gather, plain JAX) ----
    hp_i = jnp.arange(Hp1)
    p_i = jnp.arange(P1)
    kh_i = jnp.arange(KH1)
    hsrc = (hp_i[None, :, None] * P1 + p_i[:, None, None]) * S1 \
        + kh_i[None, None, :] * D1                       # (P1, Hp1, KH1)
    px = x[:, :, hsrc, :]                                # (B, C, P1, Hp1, KH1, W)
    px = px.transpose(2, 3, 0, 5, 1, 4)                  # (P1, Hp1, B, W, C, KH1)
    px = px.reshape(P1, Hp1, B, K1)                      # K layout: w*105 + c*15 + kh
    px = jnp.pad(px, ((0, 0), (0, Hp1p - Hp1), (0, Bp - B), (0, K1p - K1)))
    patches1 = px.reshape(P1, Hp1p * Bp, K1p).astype(jnp.bfloat16)

    # ---- weight re-layouts (static, tiny) ----
    w1_mat = p["w1"].reshape(C1, C * KH1).T              # (105, 16), k = (c_in, kh)
    w1_blk = jnp.einsum("kc,uv->ukvc", w1_mat,
                        jnp.eye(W, dtype=w1_mat.dtype))  # block-diag over assets
    w1_blk = w1_blk.reshape(K1, W * C1)
    w1_blk = jnp.pad(w1_blk, ((0, K1p - K1), (0, 0))).astype(jnp.bfloat16)
    b1_t = jnp.tile(p["b1"], (W,)).reshape(1, W * C1).astype(jnp.float32)

    # conv2 weight as one (w*16+c, c2) matrix per kh tap (matches pooled1 lanes)
    w2_taps = p["w2"].transpose(2, 3, 1, 0).reshape(KH2, W * C1, C2)
    w2_taps = w2_taps.astype(jnp.bfloat16)
    b2_t = p["b2"].reshape(1, C2).astype(jnp.float32)

    w_ih_t = p["w_ih"].T.astype(jnp.bfloat16)            # (32, 4*hid)
    w_hh_t = p["w_hh"].T.astype(jnp.bfloat16)            # (hid, 4*hid)
    b_lstm = (p["b_ih"] + p["b_hh"]).reshape(1, 4 * hid).astype(jnp.float32)

    # ---- single fused pallas_call (grid-less, one step) ----
    # VMEM residency: patches1 1.25 MiB + weights ~0.7 MiB + f32 intermediates
    # <0.5 MiB  -> far below the scoped VMEM default on v5e/v6e/v7x, so no
    # vmem_limit_bytes / retiling is needed on any generation.
    vmem = pl.BlockSpec(memory_space=pltpu.MemorySpace.VMEM)
    c_n = pl.pallas_call(
        functools.partial(_fused_feature_kernel, n_b=B, n_bp=Bp, n_t=T,
                          pool2=P2, hid=hid),
        out_shape=jax.ShapeDtypeStruct((B, hid), jnp.float32),
        in_specs=[vmem] * 8,
        out_specs=vmem,
    )(patches1, w1_blk, b1_t, w2_taps, b2_t, w_ih_t, w_hh_t, b_lstm)
    return c_n


if __name__ == "__main__":
    n_asset = 4
    B, C, H = 2, 7, 476   # conv1+pool1 -> 15 rows, conv2+pool2 -> LSTM seq len 3
    key = jax.random.PRNGKey(0)
    kx, kp = jax.random.split(key)
    x = jax.random.normal(kx, (B, C, H, n_asset), jnp.float32)
    params = init_params(kp, n_asset)

    fwd = jax.jit(functools.partial(feature_extractor_forward, n_asset=n_asset))
    out = jax.block_until_ready(fwd(x, params))
    assert out.shape == (B, 256), out.shape
    assert jnp.all(jnp.isfinite(out))
    print("KERNEL_OK")
</pallas_src>

<mosaic_0001>
module attributes {stable_mosaic.version = 11 : i64} {
  func.func @_fused_feature_kernel(%arg0: memref<10x128x512xbf16, #tpu.memory_space<vmem>>, %arg1: memref<512x64xbf16, #tpu.memory_space<vmem>>, %arg2: memref<1x64xf32, #tpu.memory_space<vmem>>, %arg3: memref<10x64x32xbf16, #tpu.memory_space<vmem>>, %arg4: memref<1x32xf32, #tpu.memory_space<vmem>>, %arg5: memref<32x1024xbf16, #tpu.memory_space<vmem>>, %arg6: memref<256x1024xbf16, #tpu.memory_space<vmem>>, %arg7: memref<1x1024xf32, #tpu.memory_space<vmem>>, %arg8: memref<2x256xf32, #tpu.memory_space<vmem>>) attributes {dimension_semantics = [], scalar_prefetch = 0 : i64, scratch_operands = 0 : i64, tpu.core_type = #tpu.core_type<tc>} {
    %c0 = arith.constant 0 : index
    %c0_0 = arith.constant 0 : index
    %c0_1 = arith.constant 0 : index
    %0 = vector.load %arg0[%c0, %c0_0, %c0_1] : memref<10x128x512xbf16, #tpu.memory_space<vmem>>, vector<1x128x512xbf16>
    %1 = vector.shape_cast %0 : vector<1x128x512xbf16> to vector<128x512xbf16>
    %c0_2 = arith.constant 0 : index
    %c0_3 = arith.constant 0 : index
    %2 = vector.load %arg1[%c0_2, %c0_3] : memref<512x64xbf16, #tpu.memory_space<vmem>>, vector<512x64xbf16>
    %cst = arith.constant dense<0.000000e+00> : vector<128x64xf32>
    %3 = tpu.matmul %1, %2, %cst {dimension_numbers = #tpu.dot_dimension_numbers<[1], [0], [0], [1], [0, 0, 1, 1], [], []>} : vector<128x512xbf16>, vector<512x64xbf16>, vector<128x64xf32> -> vector<128x64xf32>
    %c1 = arith.constant 1 : index
    %c0_4 = arith.constant 0 : index
    %c0_5 = arith.constant 0 : index
    %4 = vector.load %arg0[%c1, %c0_4, %c0_5] : memref<10x128x512xbf16, #tpu.memory_space<vmem>>, vector<1x128x512xbf16>
    %5 = vector.shape_cast %4 : vector<1x128x512xbf16> to vector<128x512xbf16>
    %c0_6 = arith.constant 0 : index
    %c0_7 = arith.constant 0 : index
    %6 = vector.load %arg1[%c0_6, %c0_7] : memref<512x64xbf16, #tpu.memory_space<vmem>>, vector<512x64xbf16>
    %cst_8 = arith.constant dense<0.000000e+00> : vector<128x64xf32>
    %7 = tpu.matmul %5, %6, %cst_8 {dimension_numbers = #tpu.dot_dimension_numbers<[1], [0], [0], [1], [0, 0, 1, 1], [], []>} : vector<128x512xbf16>, vector<512x64xbf16>, vector<128x64xf32> -> vector<128x64xf32>
    %8 = arith.maximumf %3, %7 : vector<128x64xf32>
    %c2 = arith.constant 2 : index
    %c0_9 = arith.constant 0 : index
    %c0_10 = arith.constant 0 : index
    %9 = vector.load %arg0[%c2, %c0_9, %c0_10] : memref<10x128x512xbf16, #tpu.memory_space<vmem>>, vector<1x128x512xbf16>
    %10 = vector.shape_cast %9 : vector<1x128x512xbf16> to vector<128x512xbf16>
    %c0_11 = arith.constant 0 : index
    %c0_12 = arith.constant 0 : index
    %11 = vector.load %arg1[%c0_11, %c0_12] : memref<512x64xbf16, #tpu.memory_space<vmem>>, vector<512x64xbf16>
    %cst_13 = arith.constant dense<0.000000e+00> : vector<128x64xf32>
    %12 = tpu.matmul %10, %11, %cst_13 {dimension_numbers = #tpu.dot_dimension_numbers<[1], [0], [0], [1], [0, 0, 1, 1], [], []>} : vector<128x512xbf16>, vector<512x64xbf16>, vector<128x64xf32> -> vector<128x64xf32>
    %13 = arith.maximumf %8, %12 : vector<128x64xf32>
    %c3 = arith.constant 3 : index
    %c0_14 = arith.constant 0 : index
    %c0_15 = arith.constant 0 : index
    %14 = vector.load %arg0[%c3, %c0_14, %c0_15] : memref<10x128x512xbf16, #tpu.memory_space<vmem>>, vector<1x128x512xbf16>
    %15 = vector.shape_cast %14 : vector<1x128x512xbf16> to vector<128x512xbf16>
    %c0_16 = arith.constant 0 : index
    %c0_17 = arith.constant 0 : index
    %16 = vector.load %arg1[%c0_16, %c0_17] : memref<512x64xbf16, #tpu.memory_space<vmem>>, vector<512x64xbf16>
    %cst_18 = arith.constant dense<0.000000e+00> : vector<128x64xf32>
    %17 = tpu.matmul %15, %16, %cst_18 {dimension_numbers = #tpu.dot_dimension_numbers<[1], [0], [0], [1], [0, 0, 1, 1], [], []>} : vector<128x512xbf16>, vector<512x64xbf16>, vector<128x64xf32> -> vector<128x64xf32>
    %18 = arith.maximumf %13, %17 : vector<128x64xf32>
    %c4 = arith.constant 4 : index
    %c0_19 = arith.constant 0 : index
    %c0_20 = arith.constant 0 : index
    %19 = vector.load %arg0[%c4, %c0_19, %c0_20] : memref<10x128x512xbf16, #tpu.memory_space<vmem>>, vector<1x128x512xbf16>
    %20 = vector.shape_cast %19 : vector<1x128x512xbf16> to vector<128x512xbf16>
    %c0_21 = arith.constant 0 : index
    %c0_22 = arith.constant 0 : index
    %21 = vector.load %arg1[%c0_21, %c0_22] : memref<512x64xbf16, #tpu.memory_space<vmem>>, vector<512x64xbf16>
    %cst_23 = arith.constant dense<0.000000e+00> : vector<128x64xf32>
    %22 = tpu.matmul %20, %21, %cst_23 {dimension_numbers = #tpu.dot_dimension_numbers<[1], [0], [0], [1], [0, 0, 1, 1], [], []>} : vector<128x512xbf16>, vector<512x64xbf16>, vector<128x64xf32> -> vector<128x64xf32>
    %23 = arith.maximumf %18, %22 : vector<128x64xf32>
    %c5 = arith.constant 5 : index
    %c0_24 = arith.constant 0 : index
    %c0_25 = arith.constant 0 : index
    %24 = vector.load %arg0[%c5, %c0_24, %c0_25] : memref<10x128x512xbf16, #tpu.memory_space<vmem>>, vector<1x128x512xbf16>
    %25 = vector.shape_cast %24 : vector<1x128x512xbf16> to vector<128x512xbf16>
    %c0_26 = arith.constant 0 : index
    %c0_27 = arith.constant 0 : index
    %26 = vector.load %arg1[%c0_26, %c0_27] : memref<512x64xbf16, #tpu.memory_space<vmem>>, vector<512x64xbf16>
    %cst_28 = arith.constant dense<0.000000e+00> : vector<128x64xf32>
    %27 = tpu.matmul %25, %26, %cst_28 {dimension_numbers = #tpu.dot_dimension_numbers<[1], [0], [0], [1], [0, 0, 1, 1], [], []>} : vector<128x512xbf16>, vector<512x64xbf16>, vector<128x64xf32> -> vector<128x64xf32>
    %28 = arith.maximumf %23, %27 : vector<128x64xf32>
    %c6 = arith.constant 6 : index
    %c0_29 = arith.constant 0 : index
    %c0_30 = arith.constant 0 : index
    %29 = vector.load %arg0[%c6, %c0_29, %c0_30] : memref<10x128x512xbf16, #tpu.memory_space<vmem>>, vector<1x128x512xbf16>
    %30 = vector.shape_cast %29 : vector<1x128x512xbf16> to vector<128x512xbf16>
    %c0_31 = arith.constant 0 : index
    %c0_32 = arith.constant 0 : index
    %31 = vector.load %arg1[%c0_31, %c0_32] : memref<512x64xbf16, #tpu.memory_space<vmem>>, vector<512x64xbf16>
    %cst_33 = arith.constant dense<0.000000e+00> : vector<128x64xf32>
    %32 = tpu.matmul %30, %31, %cst_33 {dimension_numbers = #tpu.dot_dimension_numbers<[1], [0], [0], [1], [0, 0, 1, 1], [], []>} : vector<128x512xbf16>, vector<512x64xbf16>, vector<128x64xf32> -> vector<128x64xf32>
    %33 = arith.maximumf %28, %32 : vector<128x64xf32>
    %c7 = arith.constant 7 : index
    %c0_34 = arith.constant 0 : index
    %c0_35 = arith.constant 0 : index
    %34 = vector.load %arg0[%c7, %c0_34, %c0_35] : memref<10x128x512xbf16, #tpu.memory_space<vmem>>, vector<1x128x512xbf16>
    %35 = vector.shape_cast %34 : vector<1x128x512xbf16> to vector<128x512xbf16>
    %c0_36 = arith.constant 0 : index
    %c0_37 = arith.constant 0 : index
    %36 = vector.load %arg1[%c0_36, %c0_37] : memref<512x64xbf16, #tpu.memory_space<vmem>>, vector<512x64xbf16>
    %cst_38 = arith.constant dense<0.000000e+00> : vector<128x64xf32>
    %37 = tpu.matmul %35, %36, %cst_38 {dimension_numbers = #tpu.dot_dimension_numbers<[1], [0], [0], [1], [0, 0, 1, 1], [], []>} : vector<128x512xbf16>, vector<512x64xbf16>, vector<128x64xf32> -> vector<128x64xf32>
    %38 = arith.maximumf %33, %37 : vector<128x64xf32>
    %c8 = arith.constant 8 : index
    %c0_39 = arith.constant 0 : index
    %c0_40 = arith.constant 0 : index
    %39 = vector.load %arg0[%c8, %c0_39, %c0_40] : memref<10x128x512xbf16, #tpu.memory_space<vmem>>, vector<1x128x512xbf16>
    %40 = vector.shape_cast %39 : vector<1x128x512xbf16> to vector<128x512xbf16>
    %c0_41 = arith.constant 0 : index
    %c0_42 = arith.constant 0 : index
    %41 = vector.load %arg1[%c0_41, %c0_42] : memref<512x64xbf16, #tpu.memory_space<vmem>>, vector<512x64xbf16>
    %cst_43 = arith.constant dense<0.000000e+00> : vector<128x64xf32>
    %42 = tpu.matmul %40, %41, %cst_43 {dimension_numbers = #tpu.dot_dimension_numbers<[1], [0], [0], [1], [0, 0, 1, 1], [], []>} : vector<128x512xbf16>, vector<512x64xbf16>, vector<128x64xf32> -> vector<128x64xf32>
    %43 = arith.maximumf %38, %42 : vector<128x64xf32>
    %c9 = arith.constant 9 : index
    %c0_44 = arith.constant 0 : index
    %c0_45 = arith.constant 0 : index
    %44 = vector.load %arg0[%c9, %c0_44, %c0_45] : memref<10x128x512xbf16, #tpu.memory_space<vmem>>, vector<1x128x512xbf16>
    %45 = vector.shape_cast %44 : vector<1x128x512xbf16> to vector<128x512xbf16>
    %c0_46 = arith.constant 0 : index
    %c0_47 = arith.constant 0 : index
    %46 = vector.load %arg1[%c0_46, %c0_47] : memref<512x64xbf16, #tpu.memory_space<vmem>>, vector<512x64xbf16>
    %cst_48 = arith.constant dense<0.000000e+00> : vector<128x64xf32>
    %47 = tpu.matmul %45, %46, %cst_48 {dimension_numbers = #tpu.dot_dimension_numbers<[1], [0], [0], [1], [0, 0, 1, 1], [], []>} : vector<128x512xbf16>, vector<512x64xbf16>, vector<128x64xf32> -> vector<128x64xf32>
    %48 = arith.maximumf %43, %47 : vector<128x64xf32>
    %c0_49 = arith.constant 0 : index
    %c0_50 = arith.constant 0 : index
    %49 = vector.load %arg2[%c0_49, %c0_50] : memref<1x64xf32, #tpu.memory_space<vmem>>, vector<1x64xf32>
    %50 = vector.broadcast %49 : vector<1x64xf32> to vector<128x64xf32>
    %51 = arith.addf %48, %50 : vector<128x64xf32>
    %cst_51 = arith.constant 0.000000e+00 : f32
    %52 = vector.broadcast %cst_51 : f32 to vector<128x64xf32>
    %53 = arith.maximumf %51, %52 : vector<128x64xf32>
    %cst_52 = arith.constant 0.000000e+00 : f32
    %54 = vector.broadcast %cst_52 : f32 to vector<48x32xf32>
    %55 = vector.extract_strided_slice %53 {offsets = [0, 0], sizes = [48, 64], strides = [1, 1]} : vector<128x64xf32> to vector<48x64xf32>
    %56 = arith.truncf %55 : vector<48x64xf32> to vector<48x64xbf16>
    %c0_53 = arith.constant 0 : index
    %c0_54 = arith.constant 0 : index
    %c0_55 = arith.constant 0 : index
    %57 = vector.load %arg3[%c0_53, %c0_54, %c0_55] : memref<10x64x32xbf16, #tpu.memory_space<vmem>>, vector<1x64x32xbf16>
    %58 = vector.shape_cast %57 : vector<1x64x32xbf16> to vector<64x32xbf16>
    %cst_56 = arith.constant dense<0.000000e+00> : vector<48x32xf32>
    %59 = tpu.matmul %56, %58, %cst_56 {dimension_numbers = #tpu.dot_dimension_numbers<[1], [0], [0], [1], [0, 0, 1, 1], [], []>} : vector<48x64xbf16>, vector<64x32xbf16>, vector<48x32xf32> -> vector<48x32xf32>
    %60 = arith.addf %54, %59 : vector<48x32xf32>
    %61 = vector.extract_strided_slice %53 {offsets = [8, 0], sizes = [48, 64], strides = [1, 1]} : vector<128x64xf32> to vector<48x64xf32>
    %62 = arith.truncf %61 : vector<48x64xf32> to vector<48x64xbf16>
    %c1_57 = arith.constant 1 : index
    %c0_58 = arith.constant 0 : index
    %c0_59 = arith.constant 0 : index
    %63 = vector.load %arg3[%c1_57, %c0_58, %c0_59] : memref<10x64x32xbf16, #tpu.memory_space<vmem>>, vector<1x64x32xbf16>
    %64 = vector.shape_cast %63 : vector<1x64x32xbf16> to vector<64x32xbf16>
    %cst_60 = arith.constant dense<0.000000e+00> : vector<48x32xf32>
    %65 = tpu.matmul %62, %64, %cst_60 {dimension_numbers = #tpu.dot_dimension_numbers<[1], [0], [0], [1], [0, 0, 1, 1], [], []>} : vector<48x64xbf16>, vector<64x32xbf16>, vector<48x32xf32> -> vector<48x32xf32>
    %66 = arith.addf %60, %65 : vector<48x32xf32>
    %67 = vector.extract_strided_slice %53 {offsets = [16, 0], sizes = [48, 64], strides = [1, 1]} : vector<128x64xf32> to vector<48x64xf32>
    %68 = arith.truncf %67 : vector<48x64xf32> to vector<48x64xbf16>
    %c2_61 = arith.constant 2 : index
    %c0_62 = arith.constant 0 : index
    %c0_63 = arith.constant 0 : index
    %69 = vector.load %arg3[%c2_61, %c0_62, %c0_63] : memref<10x64x32xbf16, #tpu.memory_space<vmem>>, vector<1x64x32xbf16>
    %70 = vector.shape_cast %69 : vector<1x64x32xbf16> to vector<64x32xbf16>
    %cst_64 = arith.constant dense<0.000000e+00> : vector<48x32xf32>
    %71 = tpu.matmul %68, %70, %cst_64 {dimension_numbers = #tpu.dot_dimension_numbers<[1], [0], [0], [1], [0, 0, 1, 1], [], []>} : vector<48x64xbf16>, vector<64x32xbf16>, vector<48x32xf32> -> vector<48x32xf32>
    %72 = arith.addf %66, %71 : vector<48x32xf32>
    %73 = vector.extract_strided_slice %53 {offsets = [24, 0], sizes = [48, 64], strides = [1, 1]} : vector<128x64xf32> to vector<48x64xf32>
    %74 = arith.truncf %73 : vector<48x64xf32> to vector<48x64xbf16>
    %c3_65 = arith.constant 3 : index
    %c0_66 = arith.constant 0 : index
    %c0_67 = arith.constant 0 : index
    %75 = vector.load %arg3[%c3_65, %c0_66, %c0_67] : memref<10x64x32xbf16, #tpu.memory_space<vmem>>, vector<1x64x32xbf16>
    %76 = vector.shape_cast %75 : vector<1x64x32xbf16> to vector<64x32xbf16>
    %cst_68 = arith.constant dense<0.000000e+00> : vector<48x32xf32>
    %77 = tpu.matmul %74, %76, %cst_68 {dimension_numbers = #tpu.dot_dimension_numbers<[1], [0], [0], [1], [0, 0, 1, 1], [], []>} : vector<48x64xbf16>, vector<64x32xbf16>, vector<48x32xf32> -> vector<48x32xf32>
    %78 = arith.addf %72, %77 : vector<48x32xf32>
    %79 = vector.extract_strided_slice %53 {offsets = [32, 0], sizes = [48, 64], strides = [1, 1]} : vector<128x64xf32> to vector<48x64xf32>
    %80 = arith.truncf %79 : vector<48x64xf32> to vector<48x64xbf16>
    %c4_69 = arith.constant 4 : index
    %c0_70 = arith.constant 0 : index
    %c0_71 = arith.constant 0 : index
    %81 = vector.load %arg3[%c4_69, %c0_70, %c0_71] : memref<10x64x32xbf16, #tpu.memory_space<vmem>>, vector<1x64x32xbf16>
    %82 = vector.shape_cast %81 : vector<1x64x32xbf16> to vector<64x32xbf16>
    %cst_72 = arith.constant dense<0.000000e+00> : vector<48x32xf32>
    %83 = tpu.matmul %80, %82, %cst_72 {dimension_numbers = #tpu.dot_dimension_numbers<[1], [0], [0], [1], [0, 0, 1, 1], [], []>} : vector<48x64xbf16>, vector<64x32xbf16>, vector<48x32xf32> -> vector<48x32xf32>
    %84 = arith.addf %78, %83 : vector<48x32xf32>
    %85 = vector.extract_strided_slice %53 {offsets = [40, 0], sizes = [48, 64], strides = [1, 1]} : vector<128x64xf32> to vector<48x64xf32>
    %86 = arith.truncf %85 : vector<48x64xf32> to vector<48x64xbf16>
    %c5_73 = arith.constant 5 : index
    %c0_74 = arith.constant 0 : index
    %c0_75 = arith.constant 0 : index
    %87 = vector.load %arg3[%c5_73, %c0_74, %c0_75] : memref<10x64x32xbf16, #tpu.memory_space<vmem>>, vector<1x64x32xbf16>
    %88 = vector.shape_cast %87 : vector<1x64x32xbf16> to vector<64x32xbf16>
    %cst_76 = arith.constant dense<0.000000e+00> : vector<48x32xf32>
    %89 = tpu.matmul %86, %88, %cst_76 {dimension_numbers = #tpu.dot_dimension_numbers<[1], [0], [0], [1], [0, 0, 1, 1], [], []>} : vector<48x64xbf16>, vector<64x32xbf16>, vector<48x32xf32> -> vector<48x32xf32>
    %90 = arith.addf %84, %89 : vector<48x32xf32>
    %91 = vector.extract_strided_slice %53 {offsets = [48, 0], sizes = [48, 64], strides = [1, 1]} : vector<128x64xf32> to vector<48x64xf32>
    %92 = arith.truncf %91 : vector<48x64xf32> to vector<48x64xbf16>
    %c6_77 = arith.constant 6 : index
    %c0_78 = arith.constant 0 : index
    %c0_79 = arith.constant 0 : index
    %93 = vector.load %arg3[%c6_77, %c0_78, %c0_79] : memref<10x64x32xbf16, #tpu.memory_space<vmem>>, vector<1x64x32xbf16>
    %94 = vector.shape_cast %93 : vector<1x64x32xbf16> to vector<64x32xbf16>
    %cst_80 = arith.constant dense<0.000000e+00> : vector<48x32xf32>
    %95 = tpu.matmul %92, %94, %cst_80 {dimension_numbers = #tpu.dot_dimension_numbers<[1], [0], [0], [1], [0, 0, 1, 1], [], []>} : vector<48x64xbf16>, vector<64x32xbf16>, vector<48x32xf32> -> vector<48x32xf32>
    %96 = arith.addf %90, %95 : vector<48x32xf32>
    %97 = vector.extract_strided_slice %53 {offsets = [56, 0], sizes = [48, 64], strides = [1, 1]} : vector<128x64xf32> to vector<48x64xf32>
    %98 = arith.truncf %97 : vector<48x64xf32> to vector<48x64xbf16>
    %c7_81 = arith.constant 7 : index
    %c0_82 = arith.constant 0 : index
    %c0_83 = arith.constant 0 : index
    %99 = vector.load %arg3[%c7_81, %c0_82, %c0_83] : memref<10x64x32xbf16, #tpu.memory_space<vmem>>, vector<1x64x32xbf16>
    %100 = vector.shape_cast %99 : vector<1x64x32xbf16> to vector<64x32xbf16>
    %cst_84 = arith.constant dense<0.000000e+00> : vector<48x32xf32>
    %101 = tpu.matmul %98, %100, %cst_84 {dimension_numbers = #tpu.dot_dimension_numbers<[1], [0], [0], [1], [0, 0, 1, 1], [], []>} : vector<48x64xbf16>, vector<64x32xbf16>, vector<48x32xf32> -> vector<48x32xf32>
    %102 = arith.addf %96, %101 : vector<48x32xf32>
    %103 = vector.extract_strided_slice %53 {offsets = [64, 0], sizes = [48, 64], strides = [1, 1]} : vector<128x64xf32> to vector<48x64xf32>
    %104 = arith.truncf %103 : vector<48x64xf32> to vector<48x64xbf16>
    %c8_85 = arith.constant 8 : index
    %c0_86 = arith.constant 0 : index
    %c0_87 = arith.constant 0 : index
    %105 = vector.load %arg3[%c8_85, %c0_86, %c0_87] : memref<10x64x32xbf16, #tpu.memory_space<vmem>>, vector<1x64x32xbf16>
    %106 = vector.shape_cast %105 : vector<1x64x32xbf16> to vector<64x32xbf16>
    %cst_88 = arith.constant dense<0.000000e+00> : vector<48x32xf32>
    %107 = tpu.matmul %104, %106, %cst_88 {dimension_numbers = #tpu.dot_dimension_numbers<[1], [0], [0], [1], [0, 0, 1, 1], [], []>} : vector<48x64xbf16>, vector<64x32xbf16>, vector<48x32xf32> -> vector<48x32xf32>
    %108 = arith.addf %102, %107 : vector<48x32xf32>
    %109 = vector.extract_strided_slice %53 {offsets = [72, 0], sizes = [48, 64], strides = [1, 1]} : vector<128x64xf32> to vector<48x64xf32>
    %110 = arith.truncf %109 : vector<48x64xf32> to vector<48x64xbf16>
    %c9_89 = arith.constant 9 : index
    %c0_90 = arith.constant 0 : index
    %c0_91 = arith.constant 0 : index
    %111 = vector.load %arg3[%c9_89, %c0_90, %c0_91] : memref<10x64x32xbf16, #tpu.memory_space<vmem>>, vector<1x64x32xbf16>
    %112 = vector.shape_cast %111 : vector<1x64x32xbf16> to vector<64x32xbf16>
    %cst_92 = arith.constant dense<0.000000e+00> : vector<48x32xf32>
    %113 = tpu.matmul %110, %112, %cst_92 {dimension_numbers = #tpu.dot_dimension_numbers<[1], [0], [0], [1], [0, 0, 1, 1], [], []>} : vector<48x64xbf16>, vector<64x32xbf16>, vector<48x32xf32> -> vector<48x32xf32>
    %114 = arith.addf %108, %113 : vector<48x32xf32>
    %c0_93 = arith.constant 0 : index
    %c0_94 = arith.constant 0 : index
    %115 = vector.load %arg4[%c0_93, %c0_94] : memref<1x32xf32, #tpu.memory_space<vmem>>, vector<1x32xf32>
    %116 = vector.broadcast %115 : vector<1x32xf32> to vector<48x32xf32>
    %117 = arith.addf %114, %116 : vector<48x32xf32>
    %cst_95 = arith.constant 0.000000e+00 : f32
    %118 = vector.broadcast %cst_95 : f32 to vector<48x32xf32>
    %119 = arith.maximumf %117, %118 : vector<48x32xf32>
    %cst_96 = arith.constant 0.000000e+00 : f32
    %120 = vector.broadcast %cst_96 : f32 to vector<8x256xf32>
    %cst_97 = arith.constant 0.000000e+00 : f32
    %121 = vector.broadcast %cst_97 : f32 to vector<8x256xf32>
    %122 = vector.extract_strided_slice %119 {offsets = [0, 0], sizes = [8, 32], strides = [1, 1]} : vector<48x32xf32> to vector<8x32xf32>
    %123 = vector.extract_strided_slice %119 {offsets = [8, 0], sizes = [8, 32], strides = [1, 1]} : vector<48x32xf32> to vector<8x32xf32>
    %124 = arith.maximumf %122, %123 : vector<8x32xf32>
    %125 = arith.truncf %124 : vector<8x32xf32> to vector<8x32xbf16>
    %c0_98 = arith.constant 0 : index
    %c0_99 = arith.constant 0 : index
    %126 = vector.load %arg5[%c0_98, %c0_99] : memref<32x1024xbf16, #tpu.memory_space<vmem>>, vector<32x1024xbf16>
    %cst_100 = arith.constant dense<0.000000e+00> : vector<8x1024xf32>
    %127 = tpu.matmul %125, %126, %cst_100 {dimension_numbers = #tpu.dot_dimension_numbers<[1], [0], [0], [1], [0, 0, 1, 1], [], []>} : vector<8x32xbf16>, vector<32x1024xbf16>, vector<8x1024xf32> -> vector<8x1024xf32>
    %128 = arith.truncf %120 : vector<8x256xf32> to vector<8x256xbf16>
    %c0_101 = arith.constant 0 : index
    %c0_102 = arith.constant 0 : index
    %129 = vector.load %arg6[%c0_101, %c0_102] : memref<256x1024xbf16, #tpu.memory_space<vmem>>, vector<256x1024xbf16>
    %cst_103 = arith.constant dense<0.000000e+00> : vector<8x1024xf32>
    %130 = tpu.matmul %128, %129, %cst_103 {dimension_numbers = #tpu.dot_dimension_numbers<[1], [0], [0], [1], [0, 0, 1, 1], [], []>} : vector<8x256xbf16>, vector<256x1024xbf16>, vector<8x1024xf32> -> vector<8x1024xf32>
    %131 = arith.addf %127, %130 : vector<8x1024xf32>
    %c0_104 = arith.constant 0 : index
    %c0_105 = arith.constant 0 : index
    %132 = vector.load %arg7[%c0_104, %c0_105] : memref<1x1024xf32, #tpu.memory_space<vmem>>, vector<1x1024xf32>
    %133 = vector.broadcast %132 : vector<1x1024xf32> to vector<8x1024xf32>
    %134 = arith.addf %131, %133 : vector<8x1024xf32>
    %135 = vector.extract_strided_slice %134 {offsets = [0, 0], sizes = [8, 256], strides = [1, 1]} : vector<8x1024xf32> to vector<8x256xf32>
    %136 = arith.negf %135 : vector<8x256xf32>
    %137 = math.exp %136 : vector<8x256xf32>
    %cst_106 = arith.constant 1.000000e+00 : f32
    %138 = vector.broadcast %cst_106 : f32 to vector<8x256xf32>
    %139 = arith.addf %138, %137 : vector<8x256xf32>
    %140 = arith.divf %138, %139 : vector<8x256xf32>
    %141 = vector.extract_strided_slice %134 {offsets = [0, 256], sizes = [8, 256], strides = [1, 1]} : vector<8x1024xf32> to vector<8x256xf32>
    %142 = arith.negf %141 : vector<8x256xf32>
    %143 = math.exp %142 : vector<8x256xf32>
    %cst_107 = arith.constant 1.000000e+00 : f32
    %144 = vector.broadcast %cst_107 : f32 to vector<8x256xf32>
    %145 = arith.addf %144, %143 : vector<8x256xf32>
    %146 = arith.divf %144, %145 : vector<8x256xf32>
    %147 = vector.extract_strided_slice %134 {offsets = [0, 512], sizes = [8, 256], strides = [1, 1]} : vector<8x1024xf32> to vector<8x256xf32>
    %148 = math.tanh %147 : vector<8x256xf32>
    %149 = vector.extract_strided_slice %134 {offsets = [0, 768], sizes = [8, 256], strides = [1, 1]} : vector<8x1024xf32> to vector<8x256xf32>
    %150 = arith.negf %149 : vector<8x256xf32>
    %151 = math.exp %150 : vector<8x256xf32>
    %cst_108 = arith.constant 1.000000e+00 : f32
    %152 = vector.broadcast %cst_108 : f32 to vector<8x256xf32>
    %153 = arith.addf %152, %151 : vector<8x256xf32>
    %154 = arith.divf %152, %153 : vector<8x256xf32>
    %155 = arith.mulf %146, %121 : vector<8x256xf32>
    %156 = arith.mulf %140, %148 : vector<8x256xf32>
    %157 = arith.addf %155, %156 : vector<8x256xf32>
    %158 = math.tanh %157 : vector<8x256xf32>
    %159 = arith.mulf %154, %158 : vector<8x256xf32>
    %160 = vector.extract_strided_slice %119 {offsets = [16, 0], sizes = [8, 32], strides = [1, 1]} : vector<48x32xf32> to vector<8x32xf32>
    %161 = vector.extract_strided_slice %119 {offsets = [24, 0], sizes = [8, 32], strides = [1, 1]} : vector<48x32xf32> to vector<8x32xf32>
    %162 = arith.maximumf %160, %161 : vector<8x32xf32>
    %163 = arith.truncf %162 : vector<8x32xf32> to vector<8x32xbf16>
    %c0_109 = arith.constant 0 : index
    %c0_110 = arith.constant 0 : index
    %164 = vector.load %arg5[%c0_109, %c0_110] : memref<32x1024xbf16, #tpu.memory_space<vmem>>, vector<32x1024xbf16>
    %cst_111 = arith.constant dense<0.000000e+00> : vector<8x1024xf32>
    %165 = tpu.matmul %163, %164, %cst_111 {dimension_numbers = #tpu.dot_dimension_numbers<[1], [0], [0], [1], [0, 0, 1, 1], [], []>} : vector<8x32xbf16>, vector<32x1024xbf16>, vector<8x1024xf32> -> vector<8x1024xf32>
    %166 = arith.truncf %159 : vector<8x256xf32> to vector<8x256xbf16>
    %c0_112 = arith.constant 0 : index
    %c0_113 = arith.constant 0 : index
    %167 = vector.load %arg6[%c0_112, %c0_113] : memref<256x1024xbf16, #tpu.memory_space<vmem>>, vector<256x1024xbf16>
    %cst_114 = arith.constant dense<0.000000e+00> : vector<8x1024xf32>
    %168 = tpu.matmul %166, %167, %cst_114 {dimension_numbers = #tpu.dot_dimension_numbers<[1], [0], [0], [1], [0, 0, 1, 1], [], []>} : vector<8x256xbf16>, vector<256x1024xbf16>, vector<8x1024xf32> -> vector<8x1024xf32>
    %169 = arith.addf %165, %168 : vector<8x1024xf32>
    %c0_115 = arith.constant 0 : index
    %c0_116 = arith.constant 0 : index
    %170 = vector.load %arg7[%c0_115, %c0_116] : memref<1x1024xf32, #tpu.memory_space<vmem>>, vector<1x1024xf32>
    %171 = vector.broadcast %170 : vector<1x1024xf32> to vector<8x1024xf32>
    %172 = arith.addf %169, %171 : vector<8x1024xf32>
    %173 = vector.extract_strided_slice %172 {offsets = [0, 0], sizes = [8, 256], strides = [1, 1]} : vector<8x1024xf32> to vector<8x256xf32>
    %174 = arith.negf %173 : vector<8x256xf32>
    %175 = math.exp %174 : vector<8x256xf32>
    %cst_117 = arith.constant 1.000000e+00 : f32
    %176 = vector.broadcast %cst_117 : f32 to vector<8x256xf32>
    %177 = arith.addf %176, %175 : vector<8x256xf32>
    %178 = arith.divf %176, %177 : vector<8x256xf32>
    %179 = vector.extract_strided_slice %172 {offsets = [0, 256], sizes = [8, 256], strides = [1, 1]} : vector<8x1024xf32> to vector<8x256xf32>
    %180 = arith.negf %179 : vector<8x256xf32>
    %181 = math.exp %180 : vector<8x256xf32>
    %cst_118 = arith.constant 1.000000e+00 : f32
    %182 = vector.broadcast %cst_118 : f32 to vector<8x256xf32>
    %183 = arith.addf %182, %181 : vector<8x256xf32>
    %184 = arith.divf %182, %183 : vector<8x256xf32>
    %185 = vector.extract_strided_slice %172 {offsets = [0, 512], sizes = [8, 256], strides = [1, 1]} : vector<8x1024xf32> to vector<8x256xf32>
    %186 = math.tanh %185 : vector<8x256xf32>
    %187 = vector.extract_strided_slice %172 {offsets = [0, 768], sizes = [8, 256], strides = [1, 1]} : vector<8x1024xf32> to vector<8x256xf32>
    %188 = arith.negf %187 : vector<8x256xf32>
    %189 = math.exp %188 : vector<8x256xf32>
    %cst_119 = arith.constant 1.000000e+00 : f32
    %190 = vector.broadcast %cst_119 : f32 to vector<8x256xf32>
    %191 = arith.addf %190, %189 : vector<8x256xf32>
    %192 = arith.divf %190, %191 : vector<8x256xf32>
    %193 = arith.mulf %184, %157 : vector<8x256xf32>
    %194 = arith.mulf %178, %186 : vector<8x256xf32>
    %195 = arith.addf %193, %194 : vector<8x256xf32>
    %196 = math.tanh %195 : vector<8x256xf32>
    %197 = arith.mulf %192, %196 : vector<8x256xf32>
    %198 = vector.extract_strided_slice %119 {offsets = [32, 0], sizes = [8, 32], strides = [1, 1]} : vector<48x32xf32> to vector<8x32xf32>
    %199 = vector.extract_strided_slice %119 {offsets = [40, 0], sizes = [8, 32], strides = [1, 1]} : vector<48x32xf32> to vector<8x32xf32>
    %200 = arith.maximumf %198, %199 : vector<8x32xf32>
    %201 = arith.truncf %200 : vector<8x32xf32> to vector<8x32xbf16>
    %c0_120 = arith.constant 0 : index
    %c0_121 = arith.constant 0 : index
    %202 = vector.load %arg5[%c0_120, %c0_121] : memref<32x1024xbf16, #tpu.memory_space<vmem>>, vector<32x1024xbf16>
    %cst_122 = arith.constant dense<0.000000e+00> : vector<8x1024xf32>
    %203 = tpu.matmul %201, %202, %cst_122 {dimension_numbers = #tpu.dot_dimension_numbers<[1], [0], [0], [1], [0, 0, 1, 1], [], []>} : vector<8x32xbf16>, vector<32x1024xbf16>, vector<8x1024xf32> -> vector<8x1024xf32>
    %204 = arith.truncf %197 : vector<8x256xf32> to vector<8x256xbf16>
    %c0_123 = arith.constant 0 : index
    %c0_124 = arith.constant 0 : index
    %205 = vector.load %arg6[%c0_123, %c0_124] : memref<256x1024xbf16, #tpu.memory_space<vmem>>, vector<256x1024xbf16>
    %cst_125 = arith.constant dense<0.000000e+00> : vector<8x1024xf32>
    %206 = tpu.matmul %204, %205, %cst_125 {dimension_numbers = #tpu.dot_dimension_numbers<[1], [0], [0], [1], [0, 0, 1, 1], [], []>} : vector<8x256xbf16>, vector<256x1024xbf16>, vector<8x1024xf32> -> vector<8x1024xf32>
    %207 = arith.addf %203, %206 : vector<8x1024xf32>
    %c0_126 = arith.constant 0 : index
    %c0_127 = arith.constant 0 : index
    %208 = vector.load %arg7[%c0_126, %c0_127] : memref<1x1024xf32, #tpu.memory_space<vmem>>, vector<1x1024xf32>
    %209 = vector.broadcast %208 : vector<1x1024xf32> to vector<8x1024xf32>
    %210 = arith.addf %207, %209 : vector<8x1024xf32>
    %211 = vector.extract_strided_slice %210 {offsets = [0, 0], sizes = [8, 256], strides = [1, 1]} : vector<8x1024xf32> to vector<8x256xf32>
    %212 = arith.negf %211 : vector<8x256xf32>
    %213 = math.exp %212 : vector<8x256xf32>
    %cst_128 = arith.constant 1.000000e+00 : f32
    %214 = vector.broadcast %cst_128 : f32 to vector<8x256xf32>
    %215 = arith.addf %214, %213 : vector<8x256xf32>
    %216 = arith.divf %214, %215 : vector<8x256xf32>
    %217 = vector.extract_strided_slice %210 {offsets = [0, 256], sizes = [8, 256], strides = [1, 1]} : vector<8x1024xf32> to vector<8x256xf32>
    %218 = arith.negf %217 : vector<8x256xf32>
    %219 = math.exp %218 : vector<8x256xf32>
    %cst_129 = arith.constant 1.000000e+00 : f32
    %220 = vector.broadcast %cst_129 : f32 to vector<8x256xf32>
    %221 = arith.addf %220, %219 : vector<8x256xf32>
    %222 = arith.divf %220, %221 : vector<8x256xf32>
    %223 = vector.extract_strided_slice %210 {offsets = [0, 512], sizes = [8, 256], strides = [1, 1]} : vector<8x1024xf32> to vector<8x256xf32>
    %224 = math.tanh %223 : vector<8x256xf32>
    %225 = arith.mulf %222, %195 : vector<8x256xf32>
    %226 = arith.mulf %216, %224 : vector<8x256xf32>
    %227 = arith.addf %225, %226 : vector<8x256xf32>
    %228 = vector.extract_strided_slice %227 {offsets = [0, 0], sizes = [2, 256], strides = [1, 1]} : vector<8x256xf32> to vector<2x256xf32>
    %c0_130 = arith.constant 0 : index
    %c0_131 = arith.constant 0 : index
    %229 = vector.load %arg8[%c0_130, %c0_131] : memref<2x256xf32, #tpu.memory_space<vmem>>, vector<2x256xf32>
    tpu.vector_store %arg8[%c0_130, %c0_131], %228 {strides = array<i32>} : memref<2x256xf32, #tpu.memory_space<vmem>>, vector<2x256xf32>,
    return
  }
}

</mosaic_0001>

<llo_original>
// kernel: tile.8
$region0: #{tile.8}
  #allocation0 [shape = 's32[1]{0}', space=sflag, size = 0x4, scoped, tag = 'scoped memory for tile.8']
  %s0 = inlined_call_operand.vmem [shape: f32[16], index: 0, kind: input, shape index: {}]
  %s1 = inlined_call_operand.vmem [shape: f32[4,16], index: 1, kind: output, shape index: {}]
  // Predicated region
  $region2: #{tile.8} parent=0 // pred_check
    _
  $region3: #{tile.8} parent=0 // pred_check_branch
    %3 = sbr.rel (0) target = $region5
  $region4: #{tile.8} parent=0 // pred_region
    _
  $region5: #{tile.8} parent=0 // pred_fallthru
    _
  %v4 = vld [vmem:[%s0] ss:$0 sm:$0xff]
  %5 = vst [vmem:[%s1] sm:$0xf] %v4

// kernel: tile.9
$region0: #{tile.9}
  %s0 = inlined_call_operand.vmem [shape: f32[4,16], index: 0, kind: input, shape index: {}]
  %s1 = inlined_call_operand.vmem [shape: f32[1,64], index: 1, kind: output, shape index: {}]
  $region1: #{tile.9} parent=0
    #allocation0 [shape = 'u8[4096]{0}', space=vmem, size = 0x1000, scoped, tag = 'scoped mem for output reshape']
    #allocation1 [shape = 'u8[4096]{0}', space=vmem, size = 0x1000, scoped, tag = 'scoped mem for input reshape']
    %s3 = sshll.u32 1, 4
    %s4 = ssub.s32 %s3, 1
    %v5 = vld [vmem:[%s0] sm:%s4]
    %6 = vst [vmem:[#allocation1] sm:%s4] %v5
    %v7 = vld [vmem:[#allocation1] sm:$0x1]
    %vm8 = vcmask 130048
    %9 = vst.msk [vmem:[#allocation0] sm:$0x1] %vm8, %v7
    %s10 = scalar_lea.vmem [#allocation1], 3
    %v11 = vld [vmem:[%s10] sm:$0x1]
    %12 = vrot.lane.b32.xlu0 %v11, 48
    %v13 = vpop.permute.xlu0 %12
    %vm14 = vcmask 523648
    %15 = vst.msk [vmem:[#allocation0] sm:$0x1] %vm14, %v13
    %s16 = scalar_lea.vmem [#allocation1], 2
    %v17 = vld [vmem:[%s16] sm:$0x1]
    %18 = vrot.lane.b32.xlu0 %v17, 32
    %v19 = vpop.permute.xlu0 %18
    %vm20 = vcmask 392448
    %21 = vst.msk [vmem:[#allocation0] sm:$0x1] %vm20, %v19
    %s22 = scalar_lea.vmem [#allocation1], 1
    %v23 = vld [vmem:[%s22] sm:$0x1]
    %24 = vrot.lane.b32.xlu0 %v23, 16
    %v25 = vpop.permute.xlu0 %24
    %vm26 = vcmask 261248
    %27 = vst.msk [vmem:[#allocation0] sm:$0x1] %vm26, %v25
    %s29 = sshll.u32 1, 1
    %s30 = ssub.s32 %s29, 1
    %v32 = vld [vmem:[#allocation0] sm:%s30]
    %s33 = sshll.u32 1, 1
    %s34 = ssub.s32 %s33, 1
    %35 = vst [vmem:[%s1] sm:%s34] %v32

// kernel: feature_extractor_forward.1
$region0: #{feature_extractor_forward.1}
  #allocation0 [shape = 'u32[]', space=smem, size = 0x4, offset = 0x4, fixed_abs, tag = 'smem constant byte address 0x4 - core index']
  #allocation1 [shape = 'u32[144,128]{1,0:T(1,128)}', space=vmem, size = 0x12000, scoped, tag = 'internal scratch']
  %s0 = inlined_call_operand.vmem [shape: bf16[10,128,512], index: 0, kind: input, shape index: {}]
  %s1 = inlined_call_operand.vmem [shape: bf16[512,64], index: 1, kind: input, shape index: {}]
  %s2 = inlined_call_operand.vmem [shape: f32[1,64], index: 2, kind: input, shape index: {}]
  %s3 = inlined_call_operand.vmem [shape: bf16[10,64,32], index: 3, kind: input, shape index: {}]
  %s4 = inlined_call_operand.vmem [shape: f32[1,32], index: 4, kind: input, shape index: {}]
  %s5 = inlined_call_operand.vmem [shape: bf16[32,1024], index: 5, kind: input, shape index: {}]
  %s6 = inlined_call_operand.vmem [shape: bf16[256,1024], index: 6, kind: input, shape index: {}]
  %s7 = inlined_call_operand.vmem [shape: f32[1,1024], index: 7, kind: input, shape index: {}]
  %s8 = inlined_call_operand.hbm [shape: f32[2,256], index: 8, kind: output, shape index: {}]
  %s9 = sld [smem:[#allocation0]]
  $region42: #{feature_extractor_forward.1} parent=0
    _
  %s11 = ssub.s32 1, %s9
  %s12 = scalar_select 0, %s11, %s9
  $region1: #{feature_extractor_forward.1} parent=0
    #allocation2 [shape = 'u8[2048]{0}', space=vmem, size = 0x800, scoped, tag = 'output window, operand 0, single buffered']
    #allocation3 [shape = 's32[1]{0}', space=sflag, size = 0x4, scoped, tag = 'scoped memory for feature_extractor_forward.1']
    %13 = vsyncpa [#allocation3], 0
    // Predicated region
    $region2: #{feature_extractor_forward.1} parent=1 // pred_check
      _
    $region3: #{feature_extractor_forward.1} parent=1 // pred_check_branch
      %15 = sbr.rel (0) target = $region5
    $region4: #{feature_extractor_forward.1} parent=1 // pred_region
      _
    $region5: #{feature_extractor_forward.1} parent=1 // pred_fallthru
      _
    // Predicated region
    $region6: #{feature_extractor_forward.1} parent=1 // pred_check
      _
    $region7: #{feature_extractor_forward.1} parent=1 // pred_check_branch
      %17 = sbr.rel (0) target = $region9
    $region8: #{feature_extractor_forward.1} parent=1 // pred_region
      _
    $region9: #{feature_extractor_forward.1} parent=1 // pred_fallthru
      _
    // Predicated region
    $region10: #{feature_extractor_forward.1} parent=1 // pred_check
      _
    $region11: #{feature_extractor_forward.1} parent=1 // pred_check_branch
      %19 = sbr.rel (0) target = $region13
    $region12: #{feature_extractor_forward.1} parent=1 // pred_region
      _
    $region13: #{feature_extractor_forward.1} parent=1 // pred_fallthru
      _
    // Predicated region
    $region14: #{feature_extractor_forward.1} parent=1 // pred_check
      _
    $region15: #{feature_extractor_forward.1} parent=1 // pred_check_branch
      %21 = sbr.rel (0) target = $region17
    $region16: #{feature_extractor_forward.1} parent=1 // pred_region
      _
    $region17: #{feature_extractor_forward.1} parent=1 // pred_fallthru
      _
    // Predicated region
    $region18: #{feature_extractor_forward.1} parent=1 // pred_check
      _
    $region19: #{feature_extractor_forward.1} parent=1 // pred_check_branch
      %23 = sbr.rel (0) target = $region21
    $region20: #{feature_extractor_forward.1} parent=1 // pred_region
      _
    $region21: #{feature_extractor_forward.1} parent=1 // pred_fallthru
      _
    // Predicated region
    $region22: #{feature_extractor_forward.1} parent=1 // pred_check
      _
    $region23: #{feature_extractor_forward.1} parent=1 // pred_check_branch
      %25 = sbr.rel (0) target = $region25
    $region24: #{feature_extractor_forward.1} parent=1 // pred_region
      _
    $region25: #{feature_extractor_forward.1} parent=1 // pred_fallthru
      _
    // Predicated region
    $region26: #{feature_extractor_forward.1} parent=1 // pred_check
      _
    $region27: #{feature_extractor_forward.1} parent=1 // pred_check_branch
      %27 = sbr.rel (0) target = $region29
    $region28: #{feature_extractor_forward.1} parent=1 // pred_region
      _
    $region29: #{feature_extractor_forward.1} parent=1 // pred_fallthru
      _
    // Predicated region
    $region30: #{feature_extractor_forward.1} parent=1 // pred_check
      _
    $region31: #{feature_extractor_forward.1} parent=1 // pred_check_branch
      %29 = sbr.rel (0) target = $region33
    $region32: #{feature_extractor_forward.1} parent=1 // pred_region
      _
    $region33: #{feature_extractor_forward.1} parent=1 // pred_fallthru
      _
    %v31 = vld [vmem:[%s0] sm:$0xff]
    %v32 = vld [vmem:[%s0 + $0x8] sm:$0xff]
    %v33 = vld [vmem:[%s0 + $0x10] sm:$0xff]
    %v34 = vld [vmem:[%s0 + $0x18] sm:$0xff]
    %v35 = vld [vmem:[%s0 + $0x20] sm:$0xff]
    %v36 = vld [vmem:[%s0 + $0x28] sm:$0xff]
    %v37 = vld [vmem:[%s0 + $0x30] sm:$0xff]
    %v38 = vld [vmem:[%s0 + $0x38] sm:$0xff]
    %v39 = vld [vmem:[%s0 + $0x40] sm:$0xff]
    %v40 = vld [vmem:[%s0 + $0x48] sm:$0xff]
    %v41 = vld [vmem:[%s0 + $0x50] sm:$0xff]
    %v42 = vld [vmem:[%s0 + $0x58] sm:$0xff]
    %v43 = vld [vmem:[%s0 + $0x60] sm:$0xff]
    %v44 = vld [vmem:[%s0 + $0x68] sm:$0xff]
    %v45 = vld [vmem:[%s0 + $0x70] sm:$0xff]
    %v46 = vld [vmem:[%s0 + $0x78] sm:$0xff]
    %v47 = vld [vmem:[%s0 + $0x80] sm:$0xff]
    %v48 = vld [vmem:[%s0 + $0x88] sm:$0xff]
    %v49 = vld [vmem:[%s0 + $0x90] sm:$0xff]
    %v50 = vld [vmem:[%s0 + $0x98] sm:$0xff]
    %v51 = vld [vmem:[%s0 + $0xa0] sm:$0xff]
    %v52 = vld [vmem:[%s0 + $0xa8] sm:$0xff]
    %v53 = vld [vmem:[%s0 + $0xb0] sm:$0xff]
    %v54 = vld [vmem:[%s0 + $0xb8] sm:$0xff]
    %v55 = vld [vmem:[%s0 + $0xc0] sm:$0xff]
    %v56 = vld [vmem:[%s0 + $0xc8] sm:$0xff]
    %v57 = vld [vmem:[%s0 + $0xd0] sm:$0xff]
    %v58 = vld [vmem:[%s0 + $0xd8] sm:$0xff]
    %v59 = vld [vmem:[%s0 + $0xe0] sm:$0xff]
    %v60 = vld [vmem:[%s0 + $0xe8] sm:$0xff]
    %v61 = vld [vmem:[%s0 + $0xf0] sm:$0xff]
    %v62 = vld [vmem:[%s0 + $0xf8] sm:$0xff]
    %v63 = vld [vmem:[%s1] sm:$0xf]
    %v64 = vld [vmem:[%s1 + $0x4] sm:$0xf]
    %v65 = vld [vmem:[%s1 + $0x8] sm:$0xf]
    %v66 = vld [vmem:[%s1 + $0xc] sm:$0xf]
    %v67 = vld [vmem:[%s1 + $0x10] sm:$0xf]
    %v68 = vld [vmem:[%s1 + $0x14] sm:$0xf]
    %v69 = vld [vmem:[%s1 + $0x18] sm:$0xf]
    %v70 = vld [vmem:[%s1 + $0x1c] sm:$0xf]
    %v71 = vld [vmem:[%s1 + $0x20] sm:$0xf]
    %v72 = vld [vmem:[%s1 + $0x24] sm:$0xf]
    %v73 = vld [vmem:[%s1 + $0x28] sm:$0xf]
    %v74 = vld [vmem:[%s1 + $0x2c] sm:$0xf]
    %v75 = vld [vmem:[%s1 + $0x30] sm:$0xf]
    %v76 = vld [vmem:[%s1 + $0x34] sm:$0xf]
    %v77 = vld [vmem:[%s1 + $0x38] sm:$0xf]
    %v78 = vld [vmem:[%s1 + $0x3c] sm:$0xf]
    %v79 = vld [vmem:[%s1 + $0x40] sm:$0xf]
    %v80 = vld [vmem:[%s1 + $0x44] sm:$0xf]
    %v81 = vld [vmem:[%s1 + $0x48] sm:$0xf]
    %v82 = vld [vmem:[%s1 + $0x4c] sm:$0xf]
    %v83 = vld [vmem:[%s1 + $0x50] sm:$0xf]
    %v84 = vld [vmem:[%s1 + $0x54] sm:$0xf]
    %v85 = vld [vmem:[%s1 + $0x58] sm:$0xf]
    %v86 = vld [vmem:[%s1 + $0x5c] sm:$0xf]
    %v87 = vld [vmem:[%s1 + $0x60] sm:$0xf]
    %v88 = vld [vmem:[%s1 + $0x64] sm:$0xf]
    %v89 = vld [vmem:[%s1 + $0x68] sm:$0xf]
    %v90 = vld [vmem:[%s1 + $0x6c] sm:$0xf]
    %v91 = vld [vmem:[%s1 + $0x70] sm:$0xf]
    %v92 = vld [vmem:[%s1 + $0x74] sm:$0xf]
    %v93 = vld [vmem:[%s1 + $0x78] sm:$0xf]
    %v94 = vld [vmem:[%s1 + $0x7c] sm:$0xf]
    %v95 = vld [vmem:[%s1 + $0x80] sm:$0xf]
    %v96 = vld [vmem:[%s1 + $0x84] sm:$0xf]
    %v97 = vld [vmem:[%s1 + $0x88] sm:$0xf]
    %v98 = vld [vmem:[%s1 + $0x8c] sm:$0xf]
    %v99 = vld [vmem:[%s1 + $0x90] sm:$0xf]
    %v100 = vld [vmem:[%s1 + $0x94] sm:$0xf]
    %v101 = vld [vmem:[%s1 + $0x98] sm:$0xf]
    %v102 = vld [vmem:[%s1 + $0x9c] sm:$0xf]
    %v103 = vld [vmem:[%s1 + $0xa0] sm:$0xf]
    %v104 = vld [vmem:[%s1 + $0xa4] sm:$0xf]
    %v105 = vld [vmem:[%s1 + $0xa8] sm:$0xf]
    %v106 = vld [vmem:[%s1 + $0xac] sm:$0xf]
    %v107 = vld [vmem:[%s1 + $0xb0] sm:$0xf]
    %v108 = vld [vmem:[%s1 + $0xb4] sm:$0xf]
    %v109 = vld [vmem:[%s1 + $0xb8] sm:$0xf]
    %v110 = vld [vmem:[%s1 + $0xbc] sm:$0xf]
    %v111 = vld [vmem:[%s1 + $0xc0] sm:$0xf]
    %v112 = vld [vmem:[%s1 + $0xc4] sm:$0xf]
    %v113 = vld [vmem:[%s1 + $0xc8] sm:$0xf]
    %v114 = vld [vmem:[%s1 + $0xcc] sm:$0xf]
    %v115 = vld [vmem:[%s1 + $0xd0] sm:$0xf]
    %v116 = vld [vmem:[%s1 + $0xd4] sm:$0xf]
    %v117 = vld [vmem:[%s1 + $0xd8] sm:$0xf]
    %v118 = vld [vmem:[%s1 + $0xdc] sm:$0xf]
    %v119 = vld [vmem:[%s1 + $0xe0] sm:$0xf]
    %v120 = vld [vmem:[%s1 + $0xe4] sm:$0xf]
    %v121 = vld [vmem:[%s1 + $0xe8] sm:$0xf]
    %v122 = vld [vmem:[%s1 + $0xec] sm:$0xf]
    %v123 = vld [vmem:[%s1 + $0xf0] sm:$0xf]
    %v124 = vld [vmem:[%s1 + $0xf4] sm:$0xf]
    %v125 = vld [vmem:[%s1 + $0xf8] sm:$0xf]
    %v126 = vld [vmem:[%s1 + $0xfc] sm:$0xf]
    %v159 = vunpack.c.l.b16 %v31
    %v160 = vunpack.c.h.b16 %v31
    %v161 = vunpack.c.l.b16 %v32
    %v162 = vunpack.c.h.b16 %v32
    %v163 = vunpack.c.l.b16 %v33
    %v164 = vunpack.c.h.b16 %v33
    %v165 = vunpack.c.l.b16 %v34
    %v166 = vunpack.c.h.b16 %v34
    %v167 = vunpack.c.l.b16 %v35
    %v168 = vunpack.c.h.b16 %v35
    %v169 = vunpack.c.l.b16 %v36
    %v170 = vunpack.c.h.b16 %v36
    %v171 = vunpack.c.l.b16 %v37
    %v172 = vunpack.c.h.b16 %v37
    %v173 = vunpack.c.l.b16 %v38
    %v174 = vunpack.c.h.b16 %v38
    %v175 = vunpack.c.l.b16 %v39
    %v176 = vunpack.c.h.b16 %v39
    %v177 = vunpack.c.l.b16 %v40
    %v178 = vunpack.c.h.b16 %v40
    %v179 = vunpack.c.l.b16 %v41
    %v180 = vunpack.c.h.b16 %v41
    %v181 = vunpack.c.l.b16 %v42
    %v182 = vunpack.c.h.b16 %v42
    %v183 = vunpack.c.l.b16 %v43
    %v184 = vunpack.c.h.b16 %v43
    %v185 = vunpack.c.l.b16 %v44
    %v186 = vunpack.c.h.b16 %v44
    %v187 = vunpack.c.l.b16 %v45
    %v188 = vunpack.c.h.b16 %v45
    %v189 = vunpack.c.l.b16 %v46
    %v190 = vunpack.c.h.b16 %v46
    %v191 = vunpack.c.l.b16 %v47
    %v192 = vunpack.c.h.b16 %v47
    %v193 = vunpack.c.l.b16 %v48
    %v194 = vunpack.c.h.b16 %v48
    %v195 = vunpack.c.l.b16 %v49
    %v196 = vunpack.c.h.b16 %v49
    %v197 = vunpack.c.l.b16 %v50
    %v198 = vunpack.c.h.b16 %v50
    %v199 = vunpack.c.l.b16 %v51
    %v200 = vunpack.c.h.b16 %v51
    %v201 = vunpack.c.l.b16 %v52
    %v202 = vunpack.c.h.b16 %v52
    %v203 = vunpack.c.l.b16 %v53
    %v204 = vunpack.c.h.b16 %v53
    %v205 = vunpack.c.l.b16 %v54
    %v206 = vunpack.c.h.b16 %v54
    %v207 = vunpack.c.l.b16 %v55
    %v208 = vunpack.c.h.b16 %v55
    %v209 = vunpack.c.l.b16 %v56
    %v210 = vunpack.c.h.b16 %v56
    %v211 = vunpack.c.l.b16 %v57
    %v212 = vunpack.c.h.b16 %v57
    %v213 = vunpack.c.l.b16 %v58
    %v214 = vunpack.c.h.b16 %v58
    %v215 = vunpack.c.l.b16 %v59
    %v216 = vunpack.c.h.b16 %v59
    %v217 = vunpack.c.l.b16 %v60
    %v218 = vunpack.c.h.b16 %v60
    %v219 = vunpack.c.l.b16 %v61
    %v220 = vunpack.c.h.b16 %v61
    %v221 = vunpack.c.l.b16 %v62
    %v222 = vunpack.c.h.b16 %v62
    %v223 = vpack.c.b16 %v163, %v159
    %v224 = vpack.c.b16 %v164, %v160
    %v225 = vpack.c.b16 %v165, %v161
    %v226 = vpack.c.b16 %v166, %v162
    %v227 = vpack.c.b16 %v171, %v167
    %v228 = vpack.c.b16 %v172, %v168
    %v229 = vpack.c.b16 %v173, %v169
    %v230 = vpack.c.b16 %v174, %v170
    %v231 = vpack.c.b16 %v179, %v175
    %v232 = vpack.c.b16 %v180, %v176
    %v233 = vpack.c.b16 %v181, %v177
    %v234 = vpack.c.b16 %v182, %v178
    %v235 = vpack.c.b16 %v187, %v183
    %v236 = vpack.c.b16 %v188, %v184
    %v237 = vpack.c.b16 %v189, %v185
    %v238 = vpack.c.b16 %v190, %v186
    %v239 = vpack.c.b16 %v195, %v191
    %v240 = vpack.c.b16 %v196, %v192
    %v241 = vpack.c.b16 %v197, %v193
    %v242 = vpack.c.b16 %v198, %v194
    %v243 = vpack.c.b16 %v203, %v199
    %v244 = vpack.c.b16 %v204, %v200
    %v245 = vpack.c.b16 %v205, %v201
    %v246 = vpack.c.b16 %v206, %v202
    %v247 = vpack.c.b16 %v211, %v207
    %v248 = vpack.c.b16 %v212, %v208
    %v249 = vpack.c.b16 %v213, %v209
    %v250 = vpack.c.b16 %v214, %v210
    %v251 = vpack.c.b16 %v219, %v215
    %v252 = vpack.c.b16 %v220, %v216
    %v253 = vpack.c.b16 %v221, %v217
    %v254 = vpack.c.b16 %v222, %v218
    %v351 = vunpack.c.l.b16 %v63
    %v352 = vunpack.c.l.b16 %v64
    %v353 = vunpack.c.l.b16 %v65
    %v354 = vunpack.c.l.b16 %v66
    %v355 = vunpack.c.l.b16 %v67
    %v356 = vunpack.c.l.b16 %v68
    %v357 = vunpack.c.l.b16 %v69
    %v358 = vunpack.c.l.b16 %v70
    %v359 = vunpack.c.l.b16 %v71
    %v360 = vunpack.c.l.b16 %v72
    %v361 = vunpack.c.l.b16 %v73
    %v362 = vunpack.c.l.b16 %v74
    %v363 = vunpack.c.l.b16 %v75
    %v364 = vunpack.c.l.b16 %v76
    %v365 = vunpack.c.l.b16 %v77
    %v366 = vunpack.c.l.b16 %v78
    %v367 = vunpack.c.l.b16 %v79
    %v368 = vunpack.c.l.b16 %v80
    %v369 = vunpack.c.l.b16 %v81
    %v370 = vunpack.c.l.b16 %v82
    %v371 = vunpack.c.l.b16 %v83
    %v372 = vunpack.c.l.b16 %v84
    %v373 = vunpack.c.l.b16 %v85
    %v374 = vunpack.c.l.b16 %v86
    %v375 = vunpack.c.l.b16 %v87
    %v376 = vunpack.c.l.b16 %v88
    %v377 = vunpack.c.l.b16 %v89
    %v378 = vunpack.c.l.b16 %v90
    %v379 = vunpack.c.l.b16 %v91
    %v380 = vunpack.c.l.b16 %v92
    %v381 = vunpack.c.l.b16 %v93
    %v382 = vunpack.c.l.b16 %v94
    %v383 = vunpack.c.l.b16 %v95
    %v384 = vunpack.c.l.b16 %v96
    %v385 = vunpack.c.l.b16 %v97
    %v386 = vunpack.c.l.b16 %v98
    %v387 = vunpack.c.l.b16 %v99
    %v388 = vunpack.c.l.b16 %v100
    %v389 = vunpack.c.l.b16 %v101
    %v390 = vunpack.c.l.b16 %v102
    %v391 = vunpack.c.l.b16 %v103
    %v392 = vunpack.c.l.b16 %v104
    %v393 = vunpack.c.l.b16 %v105
    %v394 = vunpack.c.l.b16 %v106
    %v395 = vunpack.c.l.b16 %v107
    %v396 = vunpack.c.l.b16 %v108
    %v397 = vunpack.c.l.b16 %v109
    %v398 = vunpack.c.l.b16 %v110
    %v399 = vunpack.c.l.b16 %v111
    %v400 = vunpack.c.l.b16 %v112
    %v401 = vunpack.c.l.b16 %v113
    %v402 = vunpack.c.l.b16 %v114
    %v403 = vunpack.c.l.b16 %v115
    %v404 = vunpack.c.l.b16 %v116
    %v405 = vunpack.c.l.b16 %v117
    %v406 = vunpack.c.l.b16 %v118
    %v407 = vunpack.c.l.b16 %v119
    %v408 = vunpack.c.l.b16 %v120
    %v409 = vunpack.c.l.b16 %v121
    %v410 = vunpack.c.l.b16 %v122
    %v411 = vunpack.c.l.b16 %v123
    %v412 = vunpack.c.l.b16 %v124
    %v413 = vunpack.c.l.b16 %v125
    %v414 = vunpack.c.l.b16 %v126
    %v415 = vpack.c.b16 %v352, %v351
    %v416 = vpack.c.b16 %v354, %v353
    %v417 = vpack.c.b16 %v356, %v355
    %v418 = vpack.c.b16 %v358, %v357
    %v419 = vpack.c.b16 %v360, %v359
    %v420 = vpack.c.b16 %v362, %v361
    %v421 = vpack.c.b16 %v364, %v363
    %v422 = vpack.c.b16 %v366, %v365
    %v423 = vpack.c.b16 %v368, %v367
    %v424 = vpack.c.b16 %v370, %v369
    %v425 = vpack.c.b16 %v372, %v371
    %v426 = vpack.c.b16 %v374, %v373
    %v427 = vpack.c.b16 %v376, %v375
    %v428 = vpack.c.b16 %v378, %v377
    %v429 = vpack.c.b16 %v380, %v379
    %v430 = vpack.c.b16 %v382, %v381
    %v431 = vpack.c.b16 %v384, %v383
    %v432 = vpack.c.b16 %v386, %v385
    %v433 = vpack.c.b16 %v388, %v387
    %v434 = vpack.c.b16 %v390, %v389
    %v435 = vpack.c.b16 %v392, %v391
    %v436 = vpack.c.b16 %v394, %v393
    %v437 = vpack.c.b16 %v396, %v395
    %v438 = vpack.c.b16 %v398, %v397
    %v439 = vpack.c.b16 %v400, %v399
    %v440 = vpack.c.b16 %v402, %v401
    %v441 = vpack.c.b16 %v404, %v403
    %v442 = vpack.c.b16 %v406, %v405
    %v443 = vpack.c.b16 %v408, %v407
    %v444 = vpack.c.b16 %v410, %v409
    %v445 = vpack.c.b16 %v412, %v411
    %v446 = vpack.c.b16 %v414, %v413
    %479 = vmatprep.subr.bf16.mxu0 0
    %480 = vmatpush1.bf16.msra.mxu0 %v422
    %481 = vmatprep.subr.bf16.mxu0 0
    %482 = vmatpush1.bf16.msra.mxu0 %v421
    %483 = vmatprep.subr.bf16.mxu0 0
    %484 = vmatpush1.bf16.msra.mxu0 %v420
    %485 = vmatprep.subr.bf16.mxu0 0
    %486 = vmatpush1.bf16.msra.mxu0 %v419
    %487 = vmatprep.subr.bf16.mxu0 0
    %488 = vmatpush1.bf16.msra.mxu0 %v418
    %489 = vmatprep.subr.bf16.mxu0 0
    %490 = vmatpush1.bf16.msra.mxu0 %v417
    %491 = vmatprep.subr.bf16.mxu0 0
    %492 = vmatpush1.bf16.msra.mxu0 %v416
    %493 = vmatprep.subr.bf16.mxu0 0
    %494 = vmatpush1.bf16.msra.mxu0 %v415
    %495 = vmatprep.subr.bf16.mxu0 0
    %496 = vmatpush2.bf16.msra.mxu0 %v430
    %497 = vmatprep.subr.bf16.mxu0 0
    %498 = vmatpush2.bf16.msra.mxu0 %v429
    %499 = vmatprep.subr.bf16.mxu0 0
    %500 = vmatpush2.bf16.msra.mxu0 %v428
    %501 = vmatprep.subr.bf16.mxu0 0
    %502 = vmatpush2.bf16.msra.mxu0 %v427
    %503 = vmatprep.subr.bf16.mxu0 0
    %504 = vmatpush2.bf16.msra.mxu0 %v426
    %505 = vmatprep.subr.bf16.mxu0 0
    %506 = vmatpush2.bf16.msra.mxu0 %v425
    %507 = vmatprep.subr.bf16.mxu0 0
    %508 = vmatpush2.bf16.msra.mxu0 %v424
    %509 = vmatprep.subr.bf16.mxu0 0
    %510 = vmatpush2.bf16.msra.mxu0 %v423
    %511 = vmatprep.mubr.bf16.mxu0 %v224
    %512 = vmatmul.mubr.bf16.gmra.mxu0 %v223
    %v513 = vpop.f32.mrf.mxu0
    %v514 = vadd.f32 0.0, %v513
    %v515 = vpop.f32.mrf.mxu0
    %v516 = vpop.f32.mrf.mxu0
    %v517 = vadd.f32 0.0, %v516
    %v518 = vpop.f32.mrf.mxu0
    %519 = vmatprep.mubr.bf16.mxu0 %v228
    %520 = vmatmul.mubr.bf16.gmra.mxu0 %v227
    %v521 = vpop.f32.mrf.mxu0
    %v522 = vadd.f32 0.0, %v521
    %v523 = vpop.f32.mrf.mxu0
    %v524 = vpop.f32.mrf.mxu0
    %v525 = vadd.f32 0.0, %v524
    %v526 = vpop.f32.mrf.mxu0
    %527 = vmatprep.mubr.bf16.mxu0 %v232
    %528 = vmatmul.mubr.bf16.gmra.mxu0 %v231
    %v529 = vpop.f32.mrf.mxu0
    %v530 = vadd.f32 0.0, %v529
    %v531 = vpop.f32.mrf.mxu0
    %v532 = vpop.f32.mrf.mxu0
    %v533 = vadd.f32 0.0, %v532
    %v534 = vpop.f32.mrf.mxu0
    %535 = vmatprep.mubr.bf16.mxu0 %v236
    %536 = vmatmul.mubr.bf16.gmra.mxu0 %v235
    %v537 = vpop.f32.mrf.mxu0
    %v538 = vadd.f32 0.0, %v537
    %v539 = vpop.f32.mrf.mxu0
    %v540 = vpop.f32.mrf.mxu0
    %v541 = vadd.f32 0.0, %v540
    %v542 = vpop.f32.mrf.mxu0
    %543 = vmatprep.mubr.bf16.mxu0 %v240
    %544 = vmatmul.mubr.bf16.gmra.mxu0 %v239
    %v545 = vpop.f32.mrf.mxu0
    %v546 = vadd.f32 0.0, %v545
    %v547 = vpop.f32.mrf.mxu0
    %v548 = vpop.f32.mrf.mxu0
    %v549 = vadd.f32 0.0, %v548
    %v550 = vpop.f32.mrf.mxu0
    %551 = vmatprep.mubr.bf16.mxu0 %v244
    %552 = vmatmul.mubr.bf16.gmra.mxu0 %v243
    %v553 = vpop.f32.mrf.mxu0
    %v554 = vadd.f32 0.0, %v553
    %v555 = vpop.f32.mrf.mxu0
    %v556 = vpop.f32.mrf.mxu0
    %v557 = vadd.f32 0.0, %v556
    %v558 = vpop.f32.mrf.mxu0
    %559 = vmatprep.mubr.bf16.mxu0 %v248
    %560 = vmatmul.mubr.bf16.gmra.mxu0 %v247
    %v561 = vpop.f32.mrf.mxu0
    %v562 = vadd.f32 0.0, %v561
    %v563 = vpop.f32.mrf.mxu0
    %v564 = vpop.f32.mrf.mxu0
    %v565 = vadd.f32 0.0, %v564
    %v566 = vpop.f32.mrf.mxu0
    %567 = vmatprep.mubr.bf16.mxu0 %v252
    %568 = vmatmul.mubr.bf16.gmra.mxu0 %v251
    %v569 = vpop.f32.mrf.mxu0
    %v570 = vadd.f32 0.0, %v569
    %v571 = vpop.f32.mrf.mxu0
    %v572 = vpop.f32.mrf.mxu0
    %v573 = vpop.f32.mrf.mxu0
    %574 = vdwg.mxu0
    %575 = vmatprep.subr.bf16.mxu0 0
    %576 = vmatpush1.bf16.msra.mxu0 %v438
    %577 = vmatprep.subr.bf16.mxu0 0
    %578 = vmatpush1.bf16.msra.mxu0 %v437
    %579 = vmatprep.subr.bf16.mxu0 0
    %580 = vmatpush1.bf16.msra.mxu0 %v436
    %581 = vmatprep.subr.bf16.mxu0 0
    %582 = vmatpush1.bf16.msra.mxu0 %v435
    %583 = vmatprep.subr.bf16.mxu0 0
    %584 = vmatpush1.bf16.msra.mxu0 %v434
    %585 = vmatprep.subr.bf16.mxu0 0
    %586 = vmatpush1.bf16.msra.mxu0 %v433
    %587 = vmatprep.subr.bf16.mxu0 0
    %588 = vmatpush1.bf16.msra.mxu0 %v432
    %589 = vmatprep.subr.bf16.mxu0 0
    %590 = vmatpush1.bf16.msra.mxu0 %v431
    %591 = vmatprep.subr.bf16.mxu0 0
    %592 = vmatpush2.bf16.msra.mxu0 %v446
    %593 = vmatprep.subr.bf16.mxu0 0
    %594 = vmatpush2.bf16.msra.mxu0 %v445
    %595 = vmatprep.subr.bf16.mxu0 0
    %596 = vmatpush2.bf16.msra.mxu0 %v444
    %597 = vmatprep.subr.bf16.mxu0 0
    %598 = vmatpush2.bf16.msra.mxu0 %v443
    %599 = vmatprep.subr.bf16.mxu0 0
    %600 = vmatpush2.bf16.msra.mxu0 %v442
    %601 = vmatprep.subr.bf16.mxu0 0
    %602 = vmatpush2.bf16.msra.mxu0 %v441
    %603 = vmatprep.subr.bf16.mxu0 0
    %604 = vmatpush2.bf16.msra.mxu0 %v440
    %605 = vmatprep.subr.bf16.mxu0 0
    %606 = vmatpush2.bf16.msra.mxu0 %v439
    %607 = vmatprep.mubr.bf16.mxu0 %v226
    %608 = vmatmul.mubr.bf16.gmra.mxu0 %v225
    %v609 = vpop.f32.mrf.mxu0
    %v610 = vadd.f32 %v514, %v609
    %v611 = vpop.f32.mrf.mxu0
    %v612 = vpop.f32.mrf.mxu0
    %v613 = vadd.f32 %v517, %v612
    %v614 = vpop.f32.mrf.mxu0
    %615 = vmatprep.mubr.bf16.mxu0 %v230
    %616 = vmatmul.mubr.bf16.gmra.mxu0 %v229
    %v617 = vpop.f32.mrf.mxu0
    %v618 = vadd.f32 %v522, %v617
    %v619 = vpop.f32.mrf.mxu0
    %v620 = vpop.f32.mrf.mxu0
    %v621 = vadd.f32 %v525, %v620
    %v622 = vpop.f32.mrf.mxu0
    %623 = vmatprep.mubr.bf16.mxu0 %v234
    %624 = vmatmul.mubr.bf16.gmra.mxu0 %v233
    %v625 = vpop.f32.mrf.mxu0
    %v626 = vadd.f32 %v530, %v625
    %v627 = vpop.f32.mrf.mxu0
    %v628 = vpop.f32.mrf.mxu0
    %v629 = vadd.f32 %v533, %v628
    %v630 = vpop.f32.mrf.mxu0
    %631 = vmatprep.mubr.bf16.mxu0 %v238
    %632 = vmatmul.mubr.bf16.gmra.mxu0 %v237
    %v633 = vpop.f32.mrf.mxu0
    %v634 = vadd.f32 %v538, %v633
    %v635 = vpop.f32.mrf.mxu0
    %v636 = vpop.f32.mrf.mxu0
    %v637 = vadd.f32 %v541, %v636
    %v638 = vpop.f32.mrf.mxu0
    %639 = vmatprep.mubr.bf16.mxu0 %v242
    %640 = vmatmul.mubr.bf16.gmra.mxu0 %v241
    %v641 = vpop.f32.mrf.mxu0
    %v642 = vadd.f32 %v546, %v641
    %v643 = vpop.f32.mrf.mxu0
    %v644 = vpop.f32.mrf.mxu0
    %v645 = vadd.f32 %v549, %v644
    %v646 = vpop.f32.mrf.mxu0
    %647 = vmatprep.mubr.bf16.mxu0 %v246
    %648 = vmatmul.mubr.bf16.gmra.mxu0 %v245
    %v649 = vpop.f32.mrf.mxu0
    %v650 = vadd.f32 %v554, %v649
    %v651 = vpop.f32.mrf.mxu0
    %v652 = vpop.f32.mrf.mxu0
    %v653 = vadd.f32 %v557, %v652
    %v654 = vpop.f32.mrf.mxu0
    %655 = vmatprep.mubr.bf16.mxu0 %v250
    %656 = vmatmul.mubr.bf16.gmra.mxu0 %v249
    %v657 = vpop.f32.mrf.mxu0
    %v658 = vadd.f32 %v562, %v657
    %v659 = vpop.f32.mrf.mxu0
    %v660 = vpop.f32.mrf.mxu0
    %v661 = vadd.f32 %v565, %v660
    %v662 = vpop.f32.mrf.mxu0
    %663 = vmatprep.mubr.bf16.mxu0 %v254
    %664 = vmatmul.mubr.bf16.gmra.mxu0 %v253
    %v665 = vpop.f32.mrf.mxu0
    %v666 = vadd.f32 %v570, %v665
    %v667 = vpop.f32.mrf.mxu0
    %v668 = vpop.f32.mrf.mxu0
    %v669 = vpop.f32.mrf.mxu0
    %670 = vdwg.mxu0
    %s671 = scalar_lea.vmem %s0, 256
    %v672 = vld [vmem:[%s671] sm:$0xff]
    %v673 = vld [vmem:[%s671 + $0x8] sm:$0xff]
    %v674 = vld [vmem:[%s671 + $0x10] sm:$0xff]
    %v675 = vld [vmem:[%s671 + $0x18] sm:$0xff]
    %v676 = vld [vmem:[%s671 + $0x20] sm:$0xff]
    %v677 = vld [vmem:[%s671 + $0x28] sm:$0xff]
    %v678 = vld [vmem:[%s671 + $0x30] sm:$0xff]
    %v679 = vld [vmem:[%s671 + $0x38] sm:$0xff]
    %v680 = vld [vmem:[%s671 + $0x40] sm:$0xff]
    %v681 = vld [vmem:[%s671 + $0x48] sm:$0xff]
    %v682 = vld [vmem:[%s671 + $0x50] sm:$0xff]
    %v683 = vld [vmem:[%s671 + $0x58] sm:$0xff]
    %v684 = vld [vmem:[%s671 + $0x60] sm:$0xff]
    %v685 = vld [vmem:[%s671 + $0x68] sm:$0xff]
    %v686 = vld [vmem:[%s671 + $0x70] sm:$0xff]
    %v687 = vld [vmem:[%s671 + $0x78] sm:$0xff]
    %v688 = vld [vmem:[%s671 + $0x80] sm:$0xff]
    %v689 = vld [vmem:[%s671 + $0x88] sm:$0xff]
    %v690 = vld [vmem:[%s671 + $0x90] sm:$0xff]
    %v691 = vld [vmem:[%s671 + $0x98] sm:$0xff]
    %v692 = vld [vmem:[%s671 + $0xa0] sm:$0xff]
    %v693 = vld [vmem:[%s671 + $0xa8] sm:$0xff]
    %v694 = vld [vmem:[%s671 + $0xb0] sm:$0xff]
    %v695 = vld [vmem:[%s671 + $0xb8] sm:$0xff]
    %v696 = vld [vmem:[%s671 + $0xc0] sm:$0xff]
    %v697 = vld [vmem:[%s671 + $0xc8] sm:$0xff]
    %v698 = vld [vmem:[%s671 + $0xd0] sm:$0xff]
    %v699 = vld [vmem:[%s671 + $0xd8] sm:$0xff]
    %v700 = vld [vmem:[%s671 + $0xe0] sm:$0xff]
    %v701 = vld [vmem:[%s671 + $0xe8] sm:$0xff]
    %v702 = vld [vmem:[%s671 + $0xf0] sm:$0xff]
    %v703 = vld [vmem:[%s671 + $0xf8] sm:$0xff]
    %v736 = vunpack.c.l.b16 %v672
    %v737 = vunpack.c.h.b16 %v672
    %v738 = vunpack.c.l.b16 %v673
    %v739 = vunpack.c.h.b16 %v673
    %v740 = vunpack.c.l.b16 %v674
    %v741 = vunpack.c.h.b16 %v674
    %v742 = vunpack.c.l.b16 %v675
    %v743 = vunpack.c.h.b16 %v675
    %v744 = vunpack.c.l.b16 %v676
    %v745 = vunpack.c.h.b16 %v676
    %v746 = vunpack.c.l.b16 %v677
    %v747 = vunpack.c.h.b16 %v677
    %v748 = vunpack.c.l.b16 %v678
    %v749 = vunpack.c.h.b16 %v678
    %v750 = vunpack.c.l.b16 %v679
    %v751 = vunpack.c.h.b16 %v679
    %v752 = vunpack.c.l.b16 %v680
    %v753 = vunpack.c.h.b16 %v680
    %v754 = vunpack.c.l.b16 %v681
    %v755 = vunpack.c.h.b16 %v681
    %v756 = vunpack.c.l.b16 %v682
    %v757 = vunpack.c.h.b16 %v682
    %v758 = vunpack.c.l.b16 %v683
    %v759 = vunpack.c.h.b16 %v683
    %v760 = vunpack.c.l.b16 %v684
    %v761 = vunpack.c.h.b16 %v684
    %v762 = vunpack.c.l.b16 %v685
    %v763 = vunpack.c.h.b16 %v685
    %v764 = vunpack.c.l.b16 %v686
    %v765 = vunpack.c.h.b16 %v686
    %v766 = vunpack.c.l.b16 %v687
    %v767 = vunpack.c.h.b16 %v687
    %v768 = vunpack.c.l.b16 %v688
    %v769 = vunpack.c.h.b16 %v688
    %v770 = vunpack.c.l.b16 %v689
    %v771 = vunpack.c.h.b16 %v689
    %v772 = vunpack.c.l.b16 %v690
    %v773 = vunpack.c.h.b16 %v690
    %v774 = vunpack.c.l.b16 %v691
    %v775 = vunpack.c.h.b16 %v691
    %v776 = vunpack.c.l.b16 %v692
    %v777 = vunpack.c.h.b16 %v692
    %v778 = vunpack.c.l.b16 %v693
    %v779 = vunpack.c.h.b16 %v693
    %v780 = vunpack.c.l.b16 %v694
    %v781 = vunpack.c.h.b16 %v694
    %v782 = vunpack.c.l.b16 %v695
    %v783 = vunpack.c.h.b16 %v695
    %v784 = vunpack.c.l.b16 %v696
    %v785 = vunpack.c.h.b16 %v696
    %v786 = vunpack.c.l.b16 %v697
    %v787 = vunpack.c.h.b16 %v697
    %v788 = vunpack.c.l.b16 %v698
    %v789 = vunpack.c.h.b16 %v698
    %v790 = vunpack.c.l.b16 %v699
    %v791 = vunpack.c.h.b16 %v699
    %v792 = vunpack.c.l.b16 %v700
    %v793 = vunpack.c.h.b16 %v700
    %v794 = vunpack.c.l.b16 %v701
    %v795 = vunpack.c.h.b16 %v701
    %v796 = vunpack.c.l.b16 %v702
    %v797 = vunpack.c.h.b16 %v702
    %v798 = vunpack.c.l.b16 %v703
    %v799 = vunpack.c.h.b16 %v703
    %v800 = vpack.c.b16 %v740, %v736
    %v801 = vpack.c.b16 %v741, %v737
    %v802 = vpack.c.b16 %v742, %v738
    %v803 = vpack.c.b16 %v743, %v739
    %v804 = vpack.c.b16 %v748, %v744
    %v805 = vpack.c.b16 %v749, %v745
    %v806 = vpack.c.b16 %v750, %v746
    %v807 = vpack.c.b16 %v751, %v747
    %v808 = vpack.c.b16 %v756, %v752
    %v809 = vpack.c.b16 %v757, %v753
    %v810 = vpack.c.b16 %v758, %v754
    %v811 = vpack.c.b16 %v759, %v755
    %v812 = vpack.c.b16 %v764, %v760
    %v813 = vpack.c.b16 %v765, %v761
    %v814 = vpack.c.b16 %v766, %v762
    %v815 = vpack.c.b16 %v767, %v763
    %v816 = vpack.c.b16 %v772, %v768
    %v817 = vpack.c.b16 %v773, %v769
    %v818 = vpack.c.b16 %v774, %v770
    %v819 = vpack.c.b16 %v775, %v771
    %v820 = vpack.c.b16 %v780, %v776
    %v821 = vpack.c.b16 %v781, %v777
    %v822 = vpack.c.b16 %v782, %v778
    %v823 = vpack.c.b16 %v783, %v779
    %v824 = vpack.c.b16 %v788, %v784
    %v825 = vpack.c.b16 %v789, %v785
    %v826 = vpack.c.b16 %v790, %v786
    %v827 = vpack.c.b16 %v791, %v787
    %v828 = vpack.c.b16 %v796, %v792
    %v829 = vpack.c.b16 %v797, %v793
    %v830 = vpack.c.b16 %v798, %v794
    %v831 = vpack.c.b16 %v799, %v795
    %864 = vmatprep.subr.bf16.mxu0 0
    %865 = vmatpush1.bf16.msra.mxu0 %v422
    %866 = vmatprep.subr.bf16.mxu0 0
    %867 = vmatpush1.bf16.msra.mxu0 %v421
    %868 = vmatprep.subr.bf16.mxu0 0
    %869 = vmatpush1.bf16.msra.mxu0 %v420
    %870 = vmatprep.subr.bf16.mxu0 0
    %871 = vmatpush1.bf16.msra.mxu0 %v419
    %872 = vmatprep.subr.bf16.mxu0 0
    %873 = vmatpush1.bf16.msra.mxu0 %v418
    %874 = vmatprep.subr.bf16.mxu0 0
    %875 = vmatpush1.bf16.msra.mxu0 %v417
    %876 = vmatprep.subr.bf16.mxu0 0
    %877 = vmatpush1.bf16.msra.mxu0 %v416
    %878 = vmatprep.subr.bf16.mxu0 0
    %879 = vmatpush1.bf16.msra.mxu0 %v415
    %880 = vmatprep.subr.bf16.mxu0 0
    %881 = vmatpush2.bf16.msra.mxu0 %v430
    %882 = vmatprep.subr.bf16.mxu0 0
    %883 = vmatpush2.bf16.msra.mxu0 %v429
    %884 = vmatprep.subr.bf16.mxu0 0
    %885 = vmatpush2.bf16.msra.mxu0 %v428
    %886 = vmatprep.subr.bf16.mxu0 0
    %887 = vmatpush2.bf16.msra.mxu0 %v427
    %888 = vmatprep.subr.bf16.mxu0 0
    %889 = vmatpush2.bf16.msra.mxu0 %v426
    %890 = vmatprep.subr.bf16.mxu0 0
    %891 = vmatpush2.bf16.msra.mxu0 %v425
    %892 = vmatprep.subr.bf16.mxu0 0
    %893 = vmatpush2.bf16.msra.mxu0 %v424
    %894 = vmatprep.subr.bf16.mxu0 0
    %895 = vmatpush2.bf16.msra.mxu0 %v423
    %896 = vmatprep.mubr.bf16.mxu0 %v801
    %897 = vmatmul.mubr.bf16.gmra.mxu0 %v800
    %v898 = vpop.f32.mrf.mxu0
    %v899 = vadd.f32 0.0, %v898
    %v900 = vpop.f32.mrf.mxu0
    %v901 = vpop.f32.mrf.mxu0
    %v902 = vadd.f32 0.0, %v901
    %v903 = vpop.f32.mrf.mxu0
    %904 = vmatprep.mubr.bf16.mxu0 %v805
    %905 = vmatmul.mubr.bf16.gmra.mxu0 %v804
    %v906 = vpop.f32.mrf.mxu0
    %v907 = vadd.f32 0.0, %v906
    %v908 = vpop.f32.mrf.mxu0
    %v909 = vpop.f32.mrf.mxu0
    %v910 = vadd.f32 0.0, %v909
    %v911 = vpop.f32.mrf.mxu0
    %912 = vmatprep.mubr.bf16.mxu0 %v809
    %913 = vmatmul.mubr.bf16.gmra.mxu0 %v808
    %v914 = vpop.f32.mrf.mxu0
    %v915 = vadd.f32 0.0, %v914
    %v916 = vpop.f32.mrf.mxu0
    %v917 = vpop.f32.mrf.mxu0
    %v918 = vadd.f32 0.0, %v917
    %v919 = vpop.f32.mrf.mxu0
    %920 = vmatprep.mubr.bf16.mxu0 %v813
    %921 = vmatmul.mubr.bf16.gmra.mxu0 %v812
    %v922 = vpop.f32.mrf.mxu0
    %v923 = vadd.f32 0.0, %v922
    %v924 = vpop.f32.mrf.mxu0
    %v925 = vpop.f32.mrf.mxu0
    %v926 = vadd.f32 0.0, %v925
    %v927 = vpop.f32.mrf.mxu0
    %928 = vmatprep.mubr.bf16.mxu0 %v817
    %929 = vmatmul.mubr.bf16.gmra.mxu0 %v816
    %v930 = vpop.f32.mrf.mxu0
    %v931 = vadd.f32 0.0, %v930
    %v932 = vpop.f32.mrf.mxu0
    %v933 = vpop.f32.mrf.mxu0
    %v934 = vadd.f32 0.0, %v933
    %v935 = vpop.f32.mrf.mxu0
    %936 = vmatprep.mubr.bf16.mxu0 %v821
    %937 = vmatmul.mubr.bf16.gmra.mxu0 %v820
    %v938 = vpop.f32.mrf.mxu0
    %v939 = vadd.f32 0.0, %v938
    %v940 = vpop.f32.mrf.mxu0
    %v941 = vpop.f32.mrf.mxu0
    %v942 = vadd.f32 0.0, %v941
    %v943 = vpop.f32.mrf.mxu0
    %944 = vmatprep.mubr.bf16.mxu0 %v825
    %945 = vmatmul.mubr.bf16.gmra.mxu0 %v824
    %v946 = vpop.f32.mrf.mxu0
    %v947 = vadd.f32 0.0, %v946
    %v948 = vpop.f32.mrf.mxu0
    %v949 = vpop.f32.mrf.mxu0
    %v950 = vadd.f32 0.0, %v949
    %v951 = vpop.f32.mrf.mxu0
    %952 = vmatprep.mubr.bf16.mxu0 %v829
    %953 = vmatmul.mubr.bf16.gmra.mxu0 %v828
    %v954 = vpop.f32.mrf.mxu0
    %v955 = vadd.f32 0.0, %v954
    %v956 = vpop.f32.mrf.mxu0
    %v957 = vpop.f32.mrf.mxu0
    %v958 = vpop.f32.mrf.mxu0
    %959 = vdwg.mxu0
    %960 = vmatprep.subr.bf16.mxu0 0
    %961 = vmatpush1.bf16.msra.mxu0 %v438
    %962 = vmatprep.subr.bf16.mxu0 0
    %963 = vmatpush1.bf16.msra.mxu0 %v437
    %964 = vmatprep.subr.bf16.mxu0 0
    %965 = vmatpush1.bf16.msra.mxu0 %v436
    %966 = vmatprep.subr.bf16.mxu0 0
    %967 = vmatpush1.bf16.msra.mxu0 %v435
    %968 = vmatprep.subr.bf16.mxu0 0
    %969 = vmatpush1.bf16.msra.mxu0 %v434
    %970 = vmatprep.subr.bf16.mxu0 0
    %971 = vmatpush1.bf16.msra.mxu0 %v433
    %972 = vmatprep.subr.bf16.mxu0 0
    %973 = vmatpush1.bf16.msra.mxu0 %v432
    %974 = vmatprep.subr.bf16.mxu0 0
    %975 = vmatpush1.bf16.msra.mxu0 %v431
    %976 = vmatprep.subr.bf16.mxu0 0
    %977 = vmatpush2.bf16.msra.mxu0 %v446
    %978 = vmatprep.subr.bf16.mxu0 0
    %979 = vmatpush2.bf16.msra.mxu0 %v445
    %980 = vmatprep.subr.bf16.mxu0 0
    %981 = vmatpush2.bf16.msra.mxu0 %v444
    %982 = vmatprep.subr.bf16.mxu0 0
    %983 = vmatpush2.bf16.msra.mxu0 %v443
    %984 = vmatprep.subr.bf16.mxu0 0
    %985 = vmatpush2.bf16.msra.mxu0 %v442
    %986 = vmatprep.subr.bf16.mxu0 0
    %987 = vmatpush2.bf16.msra.mxu0 %v441
    %988 = vmatprep.subr.bf16.mxu0 0
    %989 = vmatpush2.bf16.msra.mxu0 %v440
    %990 = vmatprep.subr.bf16.mxu0 0
    %991 = vmatpush2.bf16.msra.mxu0 %v439
    %992 = vmatprep.mubr.bf16.mxu0 %v803
    %993 = vmatmul.mubr.bf16.gmra.mxu0 %v802
    %v994 = vpop.f32.mrf.mxu0
    %v995 = vadd.f32 %v899, %v994
    %v996 = vpop.f32.mrf.mxu0
    %v997 = vpop.f32.mrf.mxu0
    %v998 = vadd.f32 %v902, %v997
    %v999 = vpop.f32.mrf.mxu0
    %1000 = vmatprep.mubr.bf16.mxu0 %v807
    %1001 = vmatmul.mubr.bf16.gmra.mxu0 %v806
    %v1002 = vpop.f32.mrf.mxu0
    %v1003 = vadd.f32 %v907, %v1002
    %v1004 = vpop.f32.mrf.mxu0
    %v1005 = vpop.f32.mrf.mxu0
    %v1006 = vadd.f32 %v910, %v1005
    %v1007 = vpop.f32.mrf.mxu0
    %1008 = vmatprep.mubr.bf16.mxu0 %v811
    %1009 = vmatmul.mubr.bf16.gmra.mxu0 %v810
    %v1010 = vpop.f32.mrf.mxu0
    %v1011 = vadd.f32 %v915, %v1010
    %v1012 = vpop.f32.mrf.mxu0
    %v1013 = vpop.f32.mrf.mxu0
    %v1014 = vadd.f32 %v918, %v1013
    %v1015 = vpop.f32.mrf.mxu0
    %1016 = vmatprep.mubr.bf16.mxu0 %v815
    %1017 = vmatmul.mubr.bf16.gmra.mxu0 %v814
    %v1018 = vpop.f32.mrf.mxu0
    %v1019 = vadd.f32 %v923, %v1018
    %v1020 = vpop.f32.mrf.mxu0
    %v1021 = vpop.f32.mrf.mxu0
    %v1022 = vadd.f32 %v926, %v1021
    %v1023 = vpop.f32.mrf.mxu0
    %1024 = vmatprep.mubr.bf16.mxu0 %v819
    %1025 = vmatmul.mubr.bf16.gmra.mxu0 %v818
    %v1026 = vpop.f32.mrf.mxu0
    %v1027 = vadd.f32 %v931, %v1026
    %v1028 = vpop.f32.mrf.mxu0
    %v1029 = vpop.f32.mrf.mxu0
    %v1030 = vadd.f32 %v934, %v1029
    %v1031 = vpop.f32.mrf.mxu0
    %1032 = vmatprep.mubr.bf16.mxu0 %v823
    %1033 = vmatmul.mubr.bf16.gmra.mxu0 %v822
    %v1034 = vpop.f32.mrf.mxu0
    %v1035 = vadd.f32 %v939, %v1034
    %v1036 = vpop.f32.mrf.mxu0
    %v1037 = vpop.f32.mrf.mxu0
    %v1038 = vadd.f32 %v942, %v1037
    %v1039 = vpop.f32.mrf.mxu0
    %1040 = vmatprep.mubr.bf16.mxu0 %v827
    %1041 = vmatmul.mubr.bf16.gmra.mxu0 %v826
    %v1042 = vpop.f32.mrf.mxu0
    %v1043 = vadd.f32 %v947, %v1042
    %v1044 = vpop.f32.mrf.mxu0
    %v1045 = vpop.f32.mrf.mxu0
    %v1046 = vadd.f32 %v950, %v1045
    %v1047 = vpop.f32.mrf.mxu0
    %1048 = vmatprep.mubr.bf16.mxu0 %v831
    %1049 = vmatmul.mubr.bf16.gmra.mxu0 %v830
    %v1050 = vpop.f32.mrf.mxu0
    %v1051 = vadd.f32 %v955, %v1050
    %v1052 = vpop.f32.mrf.mxu0
    %v1053 = vpop.f32.mrf.mxu0
    %v1054 = vpop.f32.mrf.mxu0
    %1055 = vdwg.mxu0
    %v1056 = vmax.f32 %v610, %v995
    %v1057 = vmax.f32 %v613, %v998
    %v1058 = vmax.f32 %v618, %v1003
    %v1059 = vmax.f32 %v621, %v1006
    %v1060 = vmax.f32 %v626, %v1011
    %v1061 = vmax.f32 %v629, %v1014
    %v1062 = vmax.f32 %v634, %v1019
    %v1063 = vmax.f32 %v637, %v1022
    %v1064 = vmax.f32 %v642, %v1027
    %v1065 = vmax.f32 %v645, %v1030
    %v1066 = vmax.f32 %v650, %v1035
    %v1067 = vmax.f32 %v653, %v1038
    %v1068 = vmax.f32 %v658, %v1043
    %v1069 = vmax.f32 %v661, %v1046
    %v1070 = vmax.f32 %v666, %v1051
    %s1071 = scalar_lea.vmem %s0, 512
    %v1072 = vld [vmem:[%s1071] sm:$0xff]
    %v1073 = vld [vmem:[%s1071 + $0x8] sm:$0xff]
    %v1074 = vld [vmem:[%s1071 + $0x10] sm:$0xff]
    %v1075 = vld [vmem:[%s1071 + $0x18] sm:$0xff]
    %v1076 = vld [vmem:[%s1071 + $0x20] sm:$0xff]
    %v1077 = vld [vmem:[%s1071 + $0x28] sm:$0xff]
    %v1078 = vld [vmem:[%s1071 + $0x30] sm:$0xff]
    %v1079 = vld [vmem:[%s1071 + $0x38] sm:$0xff]
    %v1080 = vld [vmem:[%s1071 + $0x40] sm:$0xff]
    %v1081 = vld [vmem:[%s1071 + $0x48] sm:$0xff]
    %v1082 = vld [vmem:[%s1071 + $0x50] sm:$0xff]
    %v1083 = vld [vmem:[%s1071 + $0x58] sm:$0xff]
    %v1084 = vld [vmem:[%s1071 + $0x60] sm:$0xff]
    %v1085 = vld [vmem:[%s1071 + $0x68] sm:$0xff]
    %v1086 = vld [vmem:[%s1071 + $0x70] sm:$0xff]
    %v1087 = vld [vmem:[%s1071 + $0x78] sm:$0xff]
    %v1088 = vld [vmem:[%s1071 + $0x80] sm:$0xff]
    %v1089 = vld [vmem:[%s1071 + $0x88] sm:$0xff]
    %v1090 = vld [vmem:[%s1071 + $0x90] sm:$0xff]
    %v1091 = vld [vmem:[%s1071 + $0x98] sm:$0xff]
    %v1092 = vld [vmem:[%s1071 + $0xa0] sm:$0xff]
    %v1093 = vld [vmem:[%s1071 + $0xa8] sm:$0xff]
    %v1094 = vld [vmem:[%s1071 + $0xb0] sm:$0xff]
    %v1095 = vld [vmem:[%s1071 + $0xb8] sm:$0xff]
    %v1096 = vld [vmem:[%s1071 + $0xc0] sm:$0xff]
    %v1097 = vld [vmem:[%s1071 + $0xc8] sm:$0xff]
    %v1098 = vld [vmem:[%s1071 + $0xd0] sm:$0xff]
    %v1099 = vld [vmem:[%s1071 + $0xd8] sm:$0xff]
    %v1100 = vld [vmem:[%s1071 + $0xe0] sm:$0xff]
    %v1101 = vld [vmem:[%s1071 + $0xe8] sm:$0xff]
    %v1102 = vld [vmem:[%s1071 + $0xf0] sm:$0xff]
    %v1103 = vld [vmem:[%s1071 + $0xf8] sm:$0xff]
    %v1136 = vunpack.c.l.b16 %v1072
    %v1137 = vunpack.c.h.b16 %v1072
    %v1138 = vunpack.c.l.b16 %v1073
    %v1139 = vunpack.c.h.b16 %v1073
    %v1140 = vunpack.c.l.b16 %v1074
    %v1141 = vunpack.c.h.b16 %v1074
    %v1142 = vunpack.c.l.b16 %v1075
    %v1143 = vunpack.c.h.b16 %v1075
    %v1144 = vunpack.c.l.b16 %v1076
    %v1145 = vunpack.c.h.b16 %v1076
    %v1146 = vunpack.c.l.b16 %v1077
    %v1147 = vunpack.c.h.b16 %v1077
    %v1148 = vunpack.c.l.b16 %v1078
    %v1149 = vunpack.c.h.b16 %v1078
    %v1150 = vunpack.c.l.b16 %v1079
    %v1151 = vunpack.c.h.b16 %v1079
    %v1152 = vunpack.c.l.b16 %v1080
    %v1153 = vunpack.c.h.b16 %v1080
    %v1154 = vunpack.c.l.b16 %v1081
    %v1155 = vunpack.c.h.b16 %v1081
    %v1156 = vunpack.c.l.b16 %v1082
    %v1157 = vunpack.c.h.b16 %v1082
    %v1158 = vunpack.c.l.b16 %v1083
    %v1159 = vunpack.c.h.b16 %v1083
    %v1160 = vunpack.c.l.b16 %v1084
    %v1161 = vunpack.c.h.b16 %v1084
    %v1162 = vunpack.c.l.b16 %v1085
    %v1163 = vunpack.c.h.b16 %v1085
    %v1164 = vunpack.c.l.b16 %v1086
    %v1165 = vunpack.c.h.b16 %v1086
    %v1166 = vunpack.c.l.b16 %v1087
    %v1167 = vunpack.c.h.b16 %v1087
    %v1168 = vunpack.c.l.b16 %v1088
    %v1169 = vunpack.c.h.b16 %v1088
    %v1170 = vunpack.c.l.b16 %v1089
    %v1171 = vunpack.c.h.b16 %v1089
    %v1172 = vunpack.c.l.b16 %v1090
    %v1173 = vunpack.c.h.b16 %v1090
    %v1174 = vunpack.c.l.b16 %v1091
    %v1175 = vunpack.c.h.b16 %v1091
    %v1176 = vunpack.c.l.b16 %v1092
    %v1177 = vunpack.c.h.b16 %v1092
    %v1178 = vunpack.c.l.b16 %v1093
    %v1179 = vunpack.c.h.b16 %v1093
    %v1180 = vunpack.c.l.b16 %v1094
    %v1181 = vunpack.c.h.b16 %v1094
    %v1182 = vunpack.c.l.b16 %v1095
    %v1183 = vunpack.c.h.b16 %v1095
    %v1184 = vunpack.c.l.b16 %v1096
    %v1185 = vunpack.c.h.b16 %v1096
    %v1186 = vunpack.c.l.b16 %v1097
    %v1187 = vunpack.c.h.b16 %v1097
    %v1188 = vunpack.c.l.b16 %v1098
    %v1189 = vunpack.c.h.b16 %v1098
    %v1190 = vunpack.c.l.b16 %v1099
    %v1191 = vunpack.c.h.b16 %v1099
    %v1192 = vunpack.c.l.b16 %v1100
    %v1193 = vunpack.c.h.b16 %v1100
    %v1194 = vunpack.c.l.b16 %v1101
    %v1195 = vunpack.c.h.b16 %v1101
    %v1196 = vunpack.c.l.b16 %v1102
    %v1197 = vunpack.c.h.b16 %v1102
    %v1198 = vunpack.c.l.b16 %v1103
    %v1199 = vunpack.c.h.b16 %v1103
    %v1200 = vpack.c.b16 %v1140, %v1136
    %v1201 = vpack.c.b16 %v1141, %v1137
    %v1202 = vpack.c.b16 %v1142, %v1138
    %v1203 = vpack.c.b16 %v1143, %v1139
    %v1204 = vpack.c.b16 %v1148, %v1144
    %v1205 = vpack.c.b16 %v1149, %v1145
    %v1206 = vpack.c.b16 %v1150, %v1146
    %v1207 = vpack.c.b16 %v1151, %v1147
    %v1208 = vpack.c.b16 %v1156, %v1152
    %v1209 = vpack.c.b16 %v1157, %v1153
    %v1210 = vpack.c.b16 %v1158, %v1154
    %v1211 = vpack.c.b16 %v1159, %v1155
    %v1212 = vpack.c.b16 %v1164, %v1160
    %v1213 = vpack.c.b16 %v1165, %v1161
    %v1214 = vpack.c.b16 %v1166, %v1162
    %v1215 = vpack.c.b16 %v1167, %v1163
    %v1216 = vpack.c.b16 %v1172, %v1168
    %v1217 = vpack.c.b16 %v1173, %v1169
    %v1218 = vpack.c.b16 %v1174, %v1170
    %v1219 = vpack.c.b16 %v1175, %v1171
    %v1220 = vpack.c.b16 %v1180, %v1176
    %v1221 = vpack.c.b16 %v1181, %v1177
    %v1222 = vpack.c.b16 %v1182, %v1178
    %v1223 = vpack.c.b16 %v1183, %v1179
    %v1224 = vpack.c.b16 %v1188, %v1184
    %v1225 = vpack.c.b16 %v1189, %v1185
    %v1226 = vpack.c.b16 %v1190, %v1186
    %v1227 = vpack.c.b16 %v1191, %v1187
    %v1228 = vpack.c.b16 %v1196, %v1192
    %v1229 = vpack.c.b16 %v1197, %v1193
    %v1230 = vpack.c.b16 %v1198, %v1194
    %v1231 = vpack.c.b16 %v1199, %v1195
    %1264 = vmatprep.subr.bf16.mxu0 0
    %1265 = vmatpush1.bf16.msra.mxu0 %v422
    %1266 = vmatprep.subr.bf16.mxu0 0
    %1267 = vmatpush1.bf16.msra.mxu0 %v421
    %1268 = vmatprep.subr.bf16.mxu0 0
    %1269 = vmatpush1.bf16.msra.mxu0 %v420
    %1270 = vmatprep.subr.bf16.mxu0 0
    %1271 = vmatpush1.bf16.msra.mxu0 %v419
    %1272 = vmatprep.subr.bf16.mxu0 0
    %1273 = vmatpush1.bf16.msra.mxu0 %v418
    %1274 = vmatprep.subr.bf16.mxu0 0
    %1275 = vmatpush1.bf16.msra.mxu0 %v417
    %1276 = vmatprep.subr.bf16.mxu0 0
    %1277 = vmatpush1.bf16.msra.mxu0 %v416
    %1278 = vmatprep.subr.bf16.mxu0 0
    %1279 = vmatpush1.bf16.msra.mxu0 %v415
    %1280 = vmatprep.subr.bf16.mxu0 0
    %1281 = vmatpush2.bf16.msra.mxu0 %v430
    %1282 = vmatprep.subr.bf16.mxu0 0
    %1283 = vmatpush2.bf16.msra.mxu0 %v429
    %1284 = vmatprep.subr.bf16.mxu0 0
    %1285 = vmatpush2.bf16.msra.mxu0 %v428
    %1286 = vmatprep.subr.bf16.mxu0 0
    %1287 = vmatpush2.bf16.msra.mxu0 %v427
    %1288 = vmatprep.subr.bf16.mxu0 0
    %1289 = vmatpush2.bf16.msra.mxu0 %v426
    %1290 = vmatprep.subr.bf16.mxu0 0
    %1291 = vmatpush2.bf16.msra.mxu0 %v425
    %1292 = vmatprep.subr.bf16.mxu0 0
    %1293 = vmatpush2.bf16.msra.mxu0 %v424
    %1294 = vmatprep.subr.bf16.mxu0 0
    %1295 = vmatpush2.bf16.msra.mxu0 %v423
    %1296 = vmatprep.mubr.bf16.mxu0 %v1201
    %1297 = vmatmul.mubr.bf16.gmra.mxu0 %v1200
    %v1298 = vpop.f32.mrf.mxu0
    %v1299 = vadd.f32 0.0, %v1298
    %v1300 = vpop.f32.mrf.mxu0
    %v1301 = vpop.f32.mrf.mxu0
    %v1302 = vadd.f32 0.0, %v1301
    %v1303 = vpop.f32.mrf.mxu0
    %1304 = vmatprep.mubr.bf16.mxu0 %v1205
    %1305 = vmatmul.mubr.bf16.gmra.mxu0 %v1204
    %v1306 = vpop.f32.mrf.mxu0
    %v1307 = vadd.f32 0.0, %v1306
    %v1308 = vpop.f32.mrf.mxu0
    %v1309 = vpop.f32.mrf.mxu0
    %v1310 = vadd.f32 0.0, %v1309
    %v1311 = vpop.f32.mrf.mxu0
    %1312 = vmatprep.mubr.bf16.mxu0 %v1209
    %1313 = vmatmul.mubr.bf16.gmra.mxu0 %v1208
    %v1314 = vpop.f32.mrf.mxu0
    %v1315 = vadd.f32 0.0, %v1314
    %v1316 = vpop.f32.mrf.mxu0
    %v1317 = vpop.f32.mrf.mxu0
    %v1318 = vadd.f32 0.0, %v1317
    %v1319 = vpop.f32.mrf.mxu0
    %1320 = vmatprep.mubr.bf16.mxu0 %v1213
    %1321 = vmatmul.mubr.bf16.gmra.mxu0 %v1212
    %v1322 = vpop.f32.mrf.mxu0
    %v1323 = vadd.f32 0.0, %v1322
    %v1324 = vpop.f32.mrf.mxu0
    %v1325 = vpop.f32.mrf.mxu0
    %v1326 = vadd.f32 0.0, %v1325
    %v1327 = vpop.f32.mrf.mxu0
    %1328 = vmatprep.mubr.bf16.mxu0 %v1217
    %1329 = vmatmul.mubr.bf16.gmra.mxu0 %v1216
    %v1330 = vpop.f32.mrf.mxu0
    %v1331 = vadd.f32 0.0, %v1330
    %v1332 = vpop.f32.mrf.mxu0
    %v1333 = vpop.f32.mrf.mxu0
    %v1334 = vadd.f32 0.0, %v1333
    %v1335 = vpop.f32.mrf.mxu0
    %1336 = vmatprep.mubr.bf16.mxu0 %v1221
    %1337 = vmatmul.mubr.bf16.gmra.mxu0 %v1220
    %v1338 = vpop.f32.mrf.mxu0
    %v1339 = vadd.f32 0.0, %v1338
    %v1340 = vpop.f32.mrf.mxu0
    %v1341 = vpop.f32.mrf.mxu0
    %v1342 = vadd.f32 0.0, %v1341
    %v1343 = vpop.f32.mrf.mxu0
    %1344 = vmatprep.mubr.bf16.mxu0 %v1225
    %1345 = vmatmul.mubr.bf16.gmra.mxu0 %v1224
    %v1346 = vpop.f32.mrf.mxu0
    %v1347 = vadd.f32 0.0, %v1346
    %v1348 = vpop.f32.mrf.mxu0
    %v1349 = vpop.f32.mrf.mxu0
    %v1350 = vadd.f32 0.0, %v1349
    %v1351 = vpop.f32.mrf.mxu0
    %1352 = vmatprep.mubr.bf16.mxu0 %v1229
    %1353 = vmatmul.mubr.bf16.gmra.mxu0 %v1228
    %v1354 = vpop.f32.mrf.mxu0
    %v1355 = vadd.f32 0.0, %v1354
    %v1356 = vpop.f32.mrf.mxu0
    %v1357 = vpop.f32.mrf.mxu0
    %v1358 = vpop.f32.mrf.mxu0
    %1359 = vdwg.mxu0
    %1360 = vmatprep.subr.bf16.mxu0 0
    %1361 = vmatpush1.bf16.msra.mxu0 %v438
    %1362 = vmatprep.subr.bf16.mxu0 0
    %1363 = vmatpush1.bf16.msra.mxu0 %v437
    %1364 = vmatprep.subr.bf16.mxu0 0
    %1365 = vmatpush1.bf16.msra.mxu0 %v436
    %1366 = vmatprep.subr.bf16.mxu0 0
    %1367 = vmatpush1.bf16.msra.mxu0 %v435
    %1368 = vmatprep.subr.bf16.mxu0 0
    %1369 = vmatpush1.bf16.msra.mxu0 %v434
    %1370 = vmatprep.subr.bf16.mxu0 0
    %1371 = vmatpush1.bf16.msra.mxu0 %v433
    %1372 = vmatprep.subr.bf16.mxu0 0
    %1373 = vmatpush1.bf16.msra.mxu0 %v432
    %1374 = vmatprep.subr.bf16.mxu0 0
    %1375 = vmatpush1.bf16.msra.mxu0 %v431
    %1376 = vmatprep.subr.bf16.mxu0 0
    %1377 = vmatpush2.bf16.msra.mxu0 %v446
    %1378 = vmatprep.subr.bf16.mxu0 0
    %1379 = vmatpush2.bf16.msra.mxu0 %v445
    %1380 = vmatprep.subr.bf16.mxu0 0
    %1381 = vmatpush2.bf16.msra.mxu0 %v444
    %1382 = vmatprep.subr.bf16.mxu0 0
    %1383 = vmatpush2.bf16.msra.mxu0 %v443
    %1384 = vmatprep.subr.bf16.mxu0 0
    %1385 = vmatpush2.bf16.msra.mxu0 %v442
    %1386 = vmatprep.subr.bf16.mxu0 0
    %1387 = vmatpush2.bf16.msra.mxu0 %v441
    %1388 = vmatprep.subr.bf16.mxu0 0
    %1389 = vmatpush2.bf16.msra.mxu0 %v440
    %1390 = vmatprep.subr.bf16.mxu0 0
    %1391 = vmatpush2.bf16.msra.mxu0 %v439
    %1392 = vmatprep.mubr.bf16.mxu0 %v1203
    %1393 = vmatmul.mubr.bf16.gmra.mxu0 %v1202
    %v1394 = vpop.f32.mrf.mxu0
    %v1395 = vadd.f32 %v1299, %v1394
    %v1396 = vpop.f32.mrf.mxu0
    %v1397 = vpop.f32.mrf.mxu0
    %v1398 = vadd.f32 %v1302, %v1397
    %v1399 = vpop.f32.mrf.mxu0
    %1400 = vmatprep.mubr.bf16.mxu0 %v1207
    %1401 = vmatmul.mubr.bf16.gmra.mxu0 %v1206
    %v1402 = vpop.f32.mrf.mxu0
    %v1403 = vadd.f32 %v1307, %v1402
    %v1404 = vpop.f32.mrf.mxu0
    %v1405 = vpop.f32.mrf.mxu0
    %v1406 = vadd.f32 %v1310, %v1405
    %v1407 = vpop.f32.mrf.mxu0
    %1408 = vmatprep.mubr.bf16.mxu0 %v1211
    %1409 = vmatmul.mubr.bf16.gmra.mxu0 %v1210
    %v1410 = vpop.f32.mrf.mxu0
    %v1411 = vadd.f32 %v1315, %v1410
    %v1412 = vpop.f32.mrf.mxu0
    %v1413 = vpop.f32.mrf.mxu0
    %v1414 = vadd.f32 %v1318, %v1413
    %v1415 = vpop.f32.mrf.mxu0
    %1416 = vmatprep.mubr.bf16.mxu0 %v1215
    %1417 = vmatmul.mubr.bf16.gmra.mxu0 %v1214
    %v1418 = vpop.f32.mrf.mxu0
    %v1419 = vadd.f32 %v1323, %v1418
    %v1420 = vpop.f32.mrf.mxu0
    %v1421 = vpop.f32.mrf.mxu0
    %v1422 = vadd.f32 %v1326, %v1421
    %v1423 = vpop.f32.mrf.mxu0
    %1424 = vmatprep.mubr.bf16.mxu0 %v1219
    %1425 = vmatmul.mubr.bf16.gmra.mxu0 %v1218
    %v1426 = vpop.f32.mrf.mxu0
    %v1427 = vadd.f32 %v1331, %v1426
    %v1428 = vpop.f32.mrf.mxu0
    %v1429 = vpop.f32.mrf.mxu0
    %v1430 = vadd.f32 %v1334, %v1429
    %v1431 = vpop.f32.mrf.mxu0
    %1432 = vmatprep.mubr.bf16.mxu0 %v1223
    %1433 = vmatmul.mubr.bf16.gmra.mxu0 %v1222
    %v1434 = vpop.f32.mrf.mxu0
    %v1435 = vadd.f32 %v1339, %v1434
    %v1436 = vpop.f32.mrf.mxu0
    %v1437 = vpop.f32.mrf.mxu0
    %v1438 = vadd.f32 %v1342, %v1437
    %v1439 = vpop.f32.mrf.mxu0
    %1440 = vmatprep.mubr.bf16.mxu0 %v1227
    %1441 = vmatmul.mubr.bf16.gmra.mxu0 %v1226
    %v1442 = vpop.f32.mrf.mxu0
    %v1443 = vadd.f32 %v1347, %v1442
    %v1444 = vpop.f32.mrf.mxu0
    %v1445 = vpop.f32.mrf.mxu0
    %v1446 = vadd.f32 %v1350, %v1445
    %v1447 = vpop.f32.mrf.mxu0
    %1448 = vmatprep.mubr.bf16.mxu0 %v1231
    %1449 = vmatmul.mubr.bf16.gmra.mxu0 %v1230
    %v1450 = vpop.f32.mrf.mxu0
    %v1451 = vadd.f32 %v1355, %v1450
    %v1452 = vpop.f32.mrf.mxu0
    %v1453 = vpop.f32.mrf.mxu0
    %v1454 = vpop.f32.mrf.mxu0
    %1455 = vdwg.mxu0
    %v1456 = vmax.f32 %v1056, %v1395
    %v1457 = vmax.f32 %v1057, %v1398
    %v1458 = vmax.f32 %v1058, %v1403
    %v1459 = vmax.f32 %v1059, %v1406
    %v1460 = vmax.f32 %v1060, %v1411
    %v1461 = vmax.f32 %v1061, %v1414
    %v1462 = vmax.f32 %v1062, %v1419
    %v1463 = vmax.f32 %v1063, %v1422
    %v1464 = vmax.f32 %v1064, %v1427
    %v1465 = vmax.f32 %v1065, %v1430
    %v1466 = vmax.f32 %v1066, %v1435
    %v1467 = vmax.f32 %v1067, %v1438
    %v1468 = vmax.f32 %v1068, %v1443
    %v1469 = vmax.f32 %v1069, %v1446
    %v1470 = vmax.f32 %v1070, %v1451
    %s1471 = scalar_lea.vmem %s0, 768
    %v1472 = vld [vmem:[%s1471] sm:$0xff]
    %v1473 = vld [vmem:[%s1471 + $0x8] sm:$0xff]
    %v1474 = vld [vmem:[%s1471 + $0x10] sm:$0xff]
    %v1475 = vld [vmem:[%s1471 + $0x18] sm:$0xff]
    %v1476 = vld [vmem:[%s1471 + $0x20] sm:$0xff]
    %v1477 = vld [vmem:[%s1471 + $0x28] sm:$0xff]
    %v1478 = vld [vmem:[%s1471 + $0x30] sm:$0xff]
    %v1479 = vld [vmem:[%s1471 + $0x38] sm:$0xff]
    %v1480 = vld [vmem:[%s1471 + $0x40] sm:$0xff]
    %v1481 = vld [vmem:[%s1471 + $0x48] sm:$0xff]
    %v1482 = vld [vmem:[%s1471 + $0x50] sm:$0xff]
    %v1483 = vld [vmem:[%s1471 + $0x58] sm:$0xff]
    %v1484 = vld [vmem:[%s1471 + $0x60] sm:$0xff]
    %v1485 = vld [vmem:[%s1471 + $0x68] sm:$0xff]
    %v1486 = vld [vmem:[%s1471 + $0x70] sm:$0xff]
    %v1487 = vld [vmem:[%s1471 + $0x78] sm:$0xff]
    %v1488 = vld [vmem:[%s1471 + $0x80] sm:$0xff]
    %v1489 = vld [vmem:[%s1471 + $0x88] sm:$0xff]
    %v1490 = vld [vmem:[%s1471 + $0x90] sm:$0xff]
    %v1491 = vld [vmem:[%s1471 + $0x98] sm:$0xff]
    %v1492 = vld [vmem:[%s1471 + $0xa0] sm:$0xff]
    %v1493 = vld [vmem:[%s1471 + $0xa8] sm:$0xff]
    %v1494 = vld [vmem:[%s1471 + $0xb0] sm:$0xff]
    %v1495 = vld [vmem:[%s1471 + $0xb8] sm:$0xff]
    %v1496 = vld [vmem:[%s1471 + $0xc0] sm:$0xff]
    %v1497 = vld [vmem:[%s1471 + $0xc8] sm:$0xff]
    %v1498 = vld [vmem:[%s1471 + $0xd0] sm:$0xff]
    %v1499 = vld [vmem:[%s1471 + $0xd8] sm:$0xff]
    %v1500 = vld [vmem:[%s1471 + $0xe0] sm:$0xff]
    %v1501 = vld [vmem:[%s1471 + $0xe8] sm:$0xff]
    %v1502 = vld [vmem:[%s1471 + $0xf0] sm:$0xff]
    %v1503 = vld [vmem:[%s1471 + $0xf8] sm:$0xff]
    %v1536 = vunpack.c.l.b16 %v1472
    %v1537 = vunpack.c.h.b16 %v1472
    %v1538 = vunpack.c.l.b16 %v1473
    %v1539 = vunpack.c.h.b16 %v1473
    %v1540 = vunpack.c.l.b16 %v1474
    %v1541 = vunpack.c.h.b16 %v1474
    %v1542 = vunpack.c.l.b16 %v1475
    %v1543 = vunpack.c.h.b16 %v1475
    %v1544 = vunpack.c.l.b16 %v1476
    %v1545 = vunpack.c.h.b16 %v1476
    %v1546 = vunpack.c.l.b16 %v1477
    %v1547 = vunpack.c.h.b16 %v1477
    %v1548 = vunpack.c.l.b16 %v1478
    %v1549 = vunpack.c.h.b16 %v1478
    %v1550 = vunpack.c.l.b16 %v1479
    %v1551 = vunpack.c.h.b16 %v1479
    %v1552 = vunpack.c.l.b16 %v1480
    %v1553 = vunpack.c.h.b16 %v1480
    %v1554 = vunpack.c.l.b16 %v1481
    %v1555 = vunpack.c.h.b16 %v1481
    %v1556 = vunpack.c.l.b16 %v1482
    %v1557 = vunpack.c.h.b16 %v1482
    %v1558 = vunpack.c.l.b16 %v1483
    %v1559 = vunpack.c.h.b16 %v1483
    %v1560 = vunpack.c.l.b16 %v1484
    %v1561 = vunpack.c.h.b16 %v1484
    %v1562 = vunpack.c.l.b16 %v1485
    %v1563 = vunpack.c.h.b16 %v1485
    %v1564 = vunpack.c.l.b16 %v1486
    %v1565 = vunpack.c.h.b16 %v1486
    %v1566 = vunpack.c.l.b16 %v1487
    %v1567 = vunpack.c.h.b16 %v1487
    %v1568 = vunpack.c.l.b16 %v1488
    %v1569 = vunpack.c.h.b16 %v1488
    %v1570 = vunpack.c.l.b16 %v1489
    %v1571 = vunpack.c.h.b16 %v1489
    %v1572 = vunpack.c.l.b16 %v1490
    %v1573 = vunpack.c.h.b16 %v1490
    %v1574 = vunpack.c.l.b16 %v1491
    %v1575 = vunpack.c.h.b16 %v1491
    %v1576 = vunpack.c.l.b16 %v1492
    %v1577 = vunpack.c.h.b16 %v1492
    %v1578 = vunpack.c.l.b16 %v1493
    %v1579 = vunpack.c.h.b16 %v1493
    %v1580 = vunpack.c.l.b16 %v1494
    %v1581 = vunpack.c.h.b16 %v1494
    %v1582 = vunpack.c.l.b16 %v1495
    %v1583 = vunpack.c.h.b16 %v1495
    %v1584 = vunpack.c.l.b16 %v1496
    %v1585 = vunpack.c.h.b16 %v1496
    %v1586 = vunpack.c.l.b16 %v1497
    %v1587 = vunpack.c.h.b16 %v1497
    %v1588 = vunpack.c.l.b16 %v1498
    %v1589 = vunpack.c.h.b16 %v1498
    %v1590 = vunpack.c.l.b16 %v1499
    %v1591 = vunpack.c.h.b16 %v1499
    %v1592 = vunpack.c.l.b16 %v1500
    %v1593 = vunpack.c.h.b16 %v1500
    %v1594 = vunpack.c.l.b16 %v1501
    %v1595 = vunpack.c.h.b16 %v1501
    %v1596 = vunpack.c.l.b16 %v1502
    %v1597 = vunpack.c.h.b16 %v1502
    %v1598 = vunpack.c.l.b16 %v1503
    %v1599 = vunpack.c.h.b16 %v1503
    %v1600 = vpack.c.b16 %v1540, %v1536
    %v1601 = vpack.c.b16 %v1541, %v1537
    %v1602 = vpack.c.b16 %v1542, %v1538
    %v1603 = vpack.c.b16 %v1543, %v1539
    %v1604 = vpack.c.b16 %v1548, %v1544
    %v1605 = vpack.c.b16 %v1549, %v1545
    %v1606 = vpack.c.b16 %v1550, %v1546
    %v1607 = vpack.c.b16 %v1551, %v1547
    %v1608 = vpack.c.b16 %v1556, %v1552
    %v1609 = vpack.c.b16 %v1557, %v1553
    %v1610 = vpack.c.b16 %v1558, %v1554
    %v1611 = vpack.c.b16 %v1559, %v1555
    %v1612 = vpack.c.b16 %v1564, %v1560
    %v1613 = vpack.c.b16 %v1565, %v1561
    %v1614 = vpack.c.b16 %v1566, %v1562
    %v1615 = vpack.c.b16 %v1567, %v1563
    %v1616 = vpack.c.b16 %v1572, %v1568
    %v1617 = vpack.c.b16 %v1573, %v1569
    %v1618 = vpack.c.b16 %v1574, %v1570
    %v1619 = vpack.c.b16 %v1575, %v1571
    %v1620 = vpack.c.b16 %v1580, %v1576
    %v1621 = vpack.c.b16 %v1581, %v1577
    %v1622 = vpack.c.b16 %v1582, %v1578
    %v1623 = vpack.c.b16 %v1583, %v1579
    %v1624 = vpack.c.b16 %v1588, %v1584
    %v1625 = vpack.c.b16 %v1589, %v1585
    %v1626 = vpack.c.b16 %v1590, %v1586
    %v1627 = vpack.c.b16 %v1591, %v1587
    %v1628 = vpack.c.b16 %v1596, %v1592
    %v1629 = vpack.c.b16 %v1597, %v1593
    %v1630 = vpack.c.b16 %v1598, %v1594
    %v1631 = vpack.c.b16 %v1599, %v1595
    %1664 = vmatprep.subr.bf16.mxu0 0
    %1665 = vmatpush1.bf16.msra.mxu0 %v422
    %1666 = vmatprep.subr.bf16.mxu0 0
    %1667 = vmatpush1.bf16.msra.mxu0 %v421
    %1668 = vmatprep.subr.bf16.mxu0 0
    %1669 = vmatpush1.bf16.msra.mxu0 %v420
    %1670 = vmatprep.subr.bf16.mxu0 0
    %1671 = vmatpush1.bf16.msra.mxu0 %v419
    %1672 = vmatprep.subr.bf16.mxu0 0
    %1673 = vmatpush1.bf16.msra.mxu0 %v418
    %1674 = vmatprep.subr.bf16.mxu0 0
    %1675 = vmatpush1.bf16.msra.mxu0 %v417
    %1676 = vmatprep.subr.bf16.mxu0 0
    %1677 = vmatpush1.bf16.msra.mxu0 %v416
    %1678 = vmatprep.subr.bf16.mxu0 0
    %1679 = vmatpush1.bf16.msra.mxu0 %v415
    %1680 = vmatprep.subr.bf16.mxu0 0
    %1681 = vmatpush2.bf16.msra.mxu0 %v430
    %1682 = vmatprep.subr.bf16.mxu0 0
    %1683 = vmatpush2.bf16.msra.mxu0 %v429
    %1684 = vmatprep.subr.bf16.mxu0 0
    %1685 = vmatpush2.bf16.msra.mxu0 %v428
    %1686 = vmatprep.subr.bf16.mxu0 0
    %1687 = vmatpush2.bf16.msra.mxu0 %v427
    %1688 = vmatprep.subr.bf16.mxu0 0
    %1689 = vmatpush2.bf16.msra.mxu0 %v426
    %1690 = vmatprep.subr.bf16.mxu0 0
    %1691 = vmatpush2.bf16.msra.mxu0 %v425
    %1692 = vmatprep.subr.bf16.mxu0 0
    %1693 = vmatpush2.bf16.msra.mxu0 %v424
    %1694 = vmatprep.subr.bf16.mxu0 0
    %1695 = vmatpush2.bf16.msra.mxu0 %v423
    %1696 = vmatprep.mubr.bf16.mxu0 %v1601
    %1697 = vmatmul.mubr.bf16.gmra.mxu0 %v1600
    %v1698 = vpop.f32.mrf.mxu0
    %v1699 = vadd.f32 0.0, %v1698
    %v1700 = vpop.f32.mrf.mxu0
    %v1701 = vpop.f32.mrf.mxu0
    %v1702 = vadd.f32 0.0, %v1701
    %v1703 = vpop.f32.mrf.mxu0
    %1704 = vmatprep.mubr.bf16.mxu0 %v1605
    %1705 = vmatmul.mubr.bf16.gmra.mxu0 %v1604
    %v1706 = vpop.f32.mrf.mxu0
    %v1707 = vadd.f32 0.0, %v1706
    %v1708 = vpop.f32.mrf.mxu0
    %v1709 = vpop.f32.mrf.mxu0
    %v1710 = vadd.f32 0.0, %v1709
    %v1711 = vpop.f32.mrf.mxu0
    %1712 = vmatprep.mubr.bf16.mxu0 %v1609
    %1713 = vmatmul.mubr.bf16.gmra.mxu0 %v1608
    %v1714 = vpop.f32.mrf.mxu0
    %v1715 = vadd.f32 0.0, %v1714
    %v1716 = vpop.f32.mrf.mxu0
    %v1717 = vpop.f32.mrf.mxu0
    %v1718 = vadd.f32 0.0, %v1717
    %v1719 = vpop.f32.mrf.mxu0
    %1720 = vmatprep.mubr.bf16.mxu0 %v1613
    %1721 = vmatmul.mubr.bf16.gmra.mxu0 %v1612
    %v1722 = vpop.f32.mrf.mxu0
    %v1723 = vadd.f32 0.0, %v1722
    %v1724 = vpop.f32.mrf.mxu0
    %v1725 = vpop.f32.mrf.mxu0
    %v1726 = vadd.f32 0.0, %v1725
    %v1727 = vpop.f32.mrf.mxu0
    %1728 = vmatprep.mubr.bf16.mxu0 %v1617
    %1729 = vmatmul.mubr.bf16.gmra.mxu0 %v1616
    %v1730 = vpop.f32.mrf.mxu0
    %v1731 = vadd.f32 0.0, %v1730
    %v1732 = vpop.f32.mrf.mxu0
    %v1733 = vpop.f32.mrf.mxu0
    %v1734 = vadd.f32 0.0, %v1733
    %v1735 = vpop.f32.mrf.mxu0
    %1736 = vmatprep.mubr.bf16.mxu0 %v1621
    %1737 = vmatmul.mubr.bf16.gmra.mxu0 %v1620
    %v1738 = vpop.f32.mrf.mxu0
    %v1739 = vadd.f32 0.0, %v1738
    %v1740 = vpop.f32.mrf.mxu0
    %v1741 = vpop.f32.mrf.mxu0
    %v1742 = vadd.f32 0.0, %v1741
    %v1743 = vpop.f32.mrf.mxu0
    %1744 = vmatprep.mubr.bf16.mxu0 %v1625
    %1745 = vmatmul.mubr.bf16.gmra.mxu0 %v1624
    %v1746 = vpop.f32.mrf.mxu0
    %v1747 = vadd.f32 0.0, %v1746
    %v1748 = vpop.f32.mrf.mxu0
    %v1749 = vpop.f32.mrf.mxu0
    %v1750 = vadd.f32 0.0, %v1749
    %v1751 = vpop.f32.mrf.mxu0
    %1752 = vmatprep.mubr.bf16.mxu0 %v1629
    %1753 = vmatmul.mubr.bf16.gmra.mxu0 %v1628
    %v1754 = vpop.f32.mrf.mxu0
    %v1755 = vadd.f32 0.0, %v1754
    %v1756 = vpop.f32.mrf.mxu0
    %v1757 = vpop.f32.mrf.mxu0
    %v1758 = vpop.f32.mrf.mxu0
    %1759 = vdwg.mxu0
    %1760 = vmatprep.subr.bf16.mxu0 0
    %1761 = vmatpush1.bf16.msra.mxu0 %v438
    %1762 = vmatprep.subr.bf16.mxu0 0
    %1763 = vmatpush1.bf16.msra.mxu0 %v437
    %1764 = vmatprep.subr.bf16.mxu0 0
    %1765 = vmatpush1.bf16.msra.mxu0 %v436
    %1766 = vmatprep.subr.bf16.mxu0 0
    %1767 = vmatpush1.bf16.msra.mxu0 %v435
    %1768 = vmatprep.subr.bf16.mxu0 0
    %1769 = vmatpush1.bf16.msra.mxu0 %v434
    %1770 = vmatprep.subr.bf16.mxu0 0
    %1771 = vmatpush1.bf16.msra.mxu0 %v433
    %1772 = vmatprep.subr.bf16.mxu0 0
    %1773 = vmatpush1.bf16.msra.mxu0 %v432
    %1774 = vmatprep.subr.bf16.mxu0 0
    %1775 = vmatpush1.bf16.msra.mxu0 %v431
    %1776 = vmatprep.subr.bf16.mxu0 0
    %1777 = vmatpush2.bf16.msra.mxu0 %v446
    %1778 = vmatprep.subr.bf16.mxu0 0
    %1779 = vmatpush2.bf16.msra.mxu0 %v445
    %1780 = vmatprep.subr.bf16.mxu0 0
    %1781 = vmatpush2.bf16.msra.mxu0 %v444
    %1782 = vmatprep.subr.bf16.mxu0 0
    %1783 = vmatpush2.bf16.msra.mxu0 %v443
    %1784 = vmatprep.subr.bf16.mxu0 0
    %1785 = vmatpush2.bf16.msra.mxu0 %v442
    %1786 = vmatprep.subr.bf16.mxu0 0
    %1787 = vmatpush2.bf16.msra.mxu0 %v441
    %1788 = vmatprep.subr.bf16.mxu0 0
    %1789 = vmatpush2.bf16.msra.mxu0 %v440
    %1790 = vmatprep.subr.bf16.mxu0 0
    %1791 = vmatpush2.bf16.msra.mxu0 %v439
    %1792 = vmatprep.mubr.bf16.mxu0 %v1603
    %1793 = vmatmul.mubr.bf16.gmra.mxu0 %v1602
    %v1794 = vpop.f32.mrf.mxu0
    %v1795 = vadd.f32 %v1699, %v1794
    %v1796 = vpop.f32.mrf.mxu0
    %v1797 = vpop.f32.mrf.mxu0
    %v1798 = vadd.f32 %v1702, %v1797
    %v1799 = vpop.f32.mrf.mxu0
    %1800 = vmatprep.mubr.bf16.mxu0 %v1607
    %1801 = vmatmul.mubr.bf16.gmra.mxu0 %v1606
    %v1802 = vpop.f32.mrf.mxu0
    %v1803 = vadd.f32 %v1707, %v1802
    %v1804 = vpop.f32.mrf.mxu0
    %v1805 = vpop.f32.mrf.mxu0
    %v1806 = vadd.f32 %v1710, %v1805
    %v1807 = vpop.f32.mrf.mxu0
    %1808 = vmatprep.mubr.bf16.mxu0 %v1611
    %1809 = vmatmul.mubr.bf16.gmra.mxu0 %v1610
    %v1810 = vpop.f32.mrf.mxu0
    %v1811 = vadd.f32 %v1715, %v1810
    %v1812 = vpop.f32.mrf.mxu0
    %v1813 = vpop.f32.mrf.mxu0
    %v1814 = vadd.f32 %v1718, %v1813
    %v1815 = vpop.f32.mrf.mxu0
    %1816 = vmatprep.mubr.bf16.mxu0 %v1615
    %1817 = vmatmul.mubr.bf16.gmra.mxu0 %v1614
    %v1818 = vpop.f32.mrf.mxu0
    %v1819 = vadd.f32 %v1723, %v1818
    %v1820 = vpop.f32.mrf.mxu0
    %v1821 = vpop.f32.mrf.mxu0
    %v1822 = vadd.f32 %v1726, %v1821
    %v1823 = vpop.f32.mrf.mxu0
    %1824 = vmatprep.mubr.bf16.mxu0 %v1619
    %1825 = vmatmul.mubr.bf16.gmra.mxu0 %v1618
    %v1826 = vpop.f32.mrf.mxu0
    %v1827 = vadd.f32 %v1731, %v1826
    %v1828 = vpop.f32.mrf.mxu0
    %v1829 = vpop.f32.mrf.mxu0
    %v1830 = vadd.f32 %v1734, %v1829
    %v1831 = vpop.f32.mrf.mxu0
    %1832 = vmatprep.mubr.bf16.mxu0 %v1623
    %1833 = vmatmul.mubr.bf16.gmra.mxu0 %v1622
    %v1834 = vpop.f32.mrf.mxu0
    %v1835 = vadd.f32 %v1739, %v1834
    %v1836 = vpop.f32.mrf.mxu0
    %v1837 = vpop.f32.mrf.mxu0
    %v1838 = vadd.f32 %v1742, %v1837
    %v1839 = vpop.f32.mrf.mxu0
    %1840 = vmatprep.mubr.bf16.mxu0 %v1627
    %1841 = vmatmul.mubr.bf16.gmra.mxu0 %v1626
    %v1842 = vpop.f32.mrf.mxu0
    %v1843 = vadd.f32 %v1747, %v1842
    %v1844 = vpop.f32.mrf.mxu0
    %v1845 = vpop.f32.mrf.mxu0
    %v1846 = vadd.f32 %v1750, %v1845
    %v1847 = vpop.f32.mrf.mxu0
    %1848 = vmatprep.mubr.bf16.mxu0 %v1631
    %1849 = vmatmul.mubr.bf16.gmra.mxu0 %v1630
    %v1850 = vpop.f32.mrf.mxu0
    %v1851 = vadd.f32 %v1755, %v1850
    %v1852 = vpop.f32.mrf.mxu0
    %v1853 = vpop.f32.mrf.mxu0
    %v1854 = vpop.f32.mrf.mxu0
    %1855 = vdwg.mxu0
    %v1856 = vmax.f32 %v1456, %v1795
    %v1857 = vmax.f32 %v1457, %v1798
    %v1858 = vmax.f32 %v1458, %v1803
    %v1859 = vmax.f32 %v1459, %v1806
    %v1860 = vmax.f32 %v1460, %v1811
    %v1861 = vmax.f32 %v1461, %v1814
    %v1862 = vmax.f32 %v1462, %v1819
    %v1863 = vmax.f32 %v1463, %v1822
    %v1864 = vmax.f32 %v1464, %v1827
    %v1865 = vmax.f32 %v1465, %v1830
    %v1866 = vmax.f32 %v1466, %v1835
    %v1867 = vmax.f32 %v1467, %v1838
    %v1868 = vmax.f32 %v1468, %v1843
    %v1869 = vmax.f32 %v1469, %v1846
    %v1870 = vmax.f32 %v1470, %v1851
    %s1871 = scalar_lea.vmem %s0, 1024
    %v1872 = vld [vmem:[%s1871] sm:$0xff]
    %v1873 = vld [vmem:[%s1871 + $0x8] sm:$0xff]
    %v1874 = vld [vmem:[%s1871 + $0x10] sm:$0xff]
    %v1875 = vld [vmem:[%s1871 + $0x18] sm:$0xff]
    %v1876 = vld [vmem:[%s1871 + $0x20] sm:$0xff]
    %v1877 = vld [vmem:[%s1871 + $0x28] sm:$0xff]
    %v1878 = vld [vmem:[%s1871 + $0x30] sm:$0xff]
    %v1879 = vld [vmem:[%s1871 + $0x38] sm:$0xff]
    %v1880 = vld [vmem:[%s1871 + $0x40] sm:$0xff]
    %v1881 = vld [vmem:[%s1871 + $0x48] sm:$0xff]
    %v1882 = vld [vmem:[%s1871 + $0x50] sm:$0xff]
    %v1883 = vld [vmem:[%s1871 + $0x58] sm:$0xff]
    %v1884 = vld [vmem:[%s1871 + $0x60] sm:$0xff]
    %v1885 = vld [vmem:[%s1871 + $0x68] sm:$0xff]
    %v1886 = vld [vmem:[%s1871 + $0x70] sm:$0xff]
    %v1887 = vld [vmem:[%s1871 + $0x78] sm:$0xff]
    %v1888 = vld [vmem:[%s1871 + $0x80] sm:$0xff]
    %v1889 = vld [vmem:[%s1871 + $0x88] sm:$0xff]
    %v1890 = vld [vmem:[%s1871 + $0x90] sm:$0xff]
    %v1891 = vld [vmem:[%s1871 + $0x98] sm:$0xff]
    %v1892 = vld [vmem:[%s1871 + $0xa0] sm:$0xff]
    %v1893 = vld [vmem:[%s1871 + $0xa8] sm:$0xff]
    %v1894 = vld [vmem:[%s1871 + $0xb0] sm:$0xff]
    %v1895 = vld [vmem:[%s1871 + $0xb8] sm:$0xff]
    %v1896 = vld [vmem:[%s1871 + $0xc0] sm:$0xff]
    %v1897 = vld [vmem:[%s1871 + $0xc8] sm:$0xff]
    %v1898 = vld [vmem:[%s1871 + $0xd0] sm:$0xff]
    %v1899 = vld [vmem:[%s1871 + $0xd8] sm:$0xff]
    %v1900 = vld [vmem:[%s1871 + $0xe0] sm:$0xff]
    %v1901 = vld [vmem:[%s1871 + $0xe8] sm:$0xff]
    %v1902 = vld [vmem:[%s1871 + $0xf0] sm:$0xff]
    %v1903 = vld [vmem:[%s1871 + $0xf8] sm:$0xff]
    %v1936 = vunpack.c.l.b16 %v1872
    %v1937 = vunpack.c.h.b16 %v1872
    %v1938 = vunpack.c.l.b16 %v1873
    %v1939 = vunpack.c.h.b16 %v1873
    %v1940 = vunpack.c.l.b16 %v1874
    %v1941 = vunpack.c.h.b16 %v1874
    %v1942 = vunpack.c.l.b16 %v1875
    %v1943 = vunpack.c.h.b16 %v1875
    %v1944 = vunpack.c.l.b16 %v1876
    %v1945 = vunpack.c.h.b16 %v1876
    %v1946 = vunpack.c.l.b16 %v1877
    %v1947 = vunpack.c.h.b16 %v1877
    %v1948 = vunpack.c.l.b16 %v1878
    %v1949 = vunpack.c.h.b16 %v1878
    %v1950 = vunpack.c.l.b16 %v1879
    %v1951 = vunpack.c.h.b16 %v1879
    %v1952 = vunpack.c.l.b16 %v1880
    %v1953 = vunpack.c.h.b16 %v1880
    %v1954 = vunpack.c.l.b16 %v1881
    %v1955 = vunpack.c.h.b16 %v1881
    %v1956 = vunpack.c.l.b16 %v1882
    %v1957 = vunpack.c.h.b16 %v1882
    %v1958 = vunpack.c.l.b16 %v1883
    %v1959 = vunpack.c.h.b16 %v1883
    %v1960 = vunpack.c.l.b16 %v1884
    %v1961 = vunpack.c.h.b16 %v1884
    %v1962 = vunpack.c.l.b16 %v1885
    %v1963 = vunpack.c.h.b16 %v1885
    %v1964 = vunpack.c.l.b16 %v1886
    %v1965 = vunpack.c.h.b16 %v1886
    %v1966 = vunpack.c.l.b16 %v1887
    %v1967 = vunpack.c.h.b16 %v1887
    %v1968 = vunpack.c.l.b16 %v1888
    %v1969 = vunpack.c.h.b16 %v1888
    %v1970 = vunpack.c.l.b16 %v1889
    %v1971 = vunpack.c.h.b16 %v1889
    %v1972 = vunpack.c.l.b16 %v1890
    %v1973 = vunpack.c.h.b16 %v1890
    %v1974 = vunpack.c.l.b16 %v1891
    %v1975 = vunpack.c.h.b16 %v1891
    %v1976 = vunpack.c.l.b16 %v1892
    %v1977 = vunpack.c.h.b16 %v1892
    %v1978 = vunpack.c.l.b16 %v1893
    %v1979 = vunpack.c.h.b16 %v1893
    %v1980 = vunpack.c.l.b16 %v1894
    %v1981 = vunpack.c.h.b16 %v1894
    %v1982 = vunpack.c.l.b16 %v1895
    %v1983 = vunpack.c.h.b16 %v1895
    %v1984 = vunpack.c.l.b16 %v1896
    %v1985 = vunpack.c.h.b16 %v1896
    %v1986 = vunpack.c.l.b16 %v1897
    %v1987 = vunpack.c.h.b16 %v1897
    %v1988 = vunpack.c.l.b16 %v1898
    %v1989 = vunpack.c.h.b16 %v1898
    %v1990 = vunpack.c.l.b16 %v1899
    %v1991 = vunpack.c.h.b16 %v1899
    %v1992 = vunpack.c.l.b16 %v1900
    %v1993 = vunpack.c.h.b16 %v1900
    %v1994 = vunpack.c.l.b16 %v1901
    %v1995 = vunpack.c.h.b16 %v1901
    %v1996 = vunpack.c.l.b16 %v1902
    %v1997 = vunpack.c.h.b16 %v1902
    %v1998 = vunpack.c.l.b16 %v1903
    %v1999 = vunpack.c.h.b16 %v1903
    %v2000 = vpack.c.b16 %v1940, %v1936
    %v2001 = vpack.c.b16 %v1941, %v1937
    %v2002 = vpack.c.b16 %v1942, %v1938
    %v2003 = vpack.c.b16 %v1943, %v1939
    %v2004 = vpack.c.b16 %v1948, %v1944
    %v2005 = vpack.c.b16 %v1949, %v1945
    %v2006 = vpack.c.b16 %v1950, %v1946
    %v2007 = vpack.c.b16 %v1951, %v1947
    %v2008 = vpack.c.b16 %v1956, %v1952
    %v2009 = vpack.c.b16 %v1957, %v1953
    %v2010 = vpack.c.b16 %v1958, %v1954
    %v2011 = vpack.c.b16 %v1959, %v1955
    %v2012 = vpack.c.b16 %v1964, %v1960
    %v2013 = vpack.c.b16 %v1965, %v1961
    %v2014 = vpack.c.b16 %v1966, %v1962
    %v2015 = vpack.c.b16 %v1967, %v1963
    %v2016 = vpack.c.b16 %v1972, %v1968
    %v2017 = vpack.c.b16 %v1973, %v1969
    %v2018 = vpack.c.b16 %v1974, %v1970
    %v2019 = vpack.c.b16 %v1975, %v1971
    %v2020 = vpack.c.b16 %v1980, %v1976
    %v2021 = vpack.c.b16 %v1981, %v1977
    %v2022 = vpack.c.b16 %v1982, %v1978
    %v2023 = vpack.c.b16 %v1983, %v1979
    %v2024 = vpack.c.b16 %v1988, %v1984
    %v2025 = vpack.c.b16 %v1989, %v1985
    %v2026 = vpack.c.b16 %v1990, %v1986
    %v2027 = vpack.c.b16 %v1991, %v1987
    %v2028 = vpack.c.b16 %v1996, %v1992
    %v2029 = vpack.c.b16 %v1997, %v1993
    %v2030 = vpack.c.b16 %v1998, %v1994
    %v2031 = vpack.c.b16 %v1999, %v1995
    %2064 = vmatprep.subr.bf16.mxu0 0
    %2065 = vmatpush1.bf16.msra.mxu0 %v422
    %2066 = vmatprep.subr.bf16.mxu0 0
    %2067 = vmatpush1.bf16.msra.mxu0 %v421
    %2068 = vmatprep.subr.bf16.mxu0 0
    %2069 = vmatpush1.bf16.msra.mxu0 %v420
    %2070 = vmatprep.subr.bf16.mxu0 0
    %2071 = vmatpush1.bf16.msra.mxu0 %v419
    %2072 = vmatprep.subr.bf16.mxu0 0
    %2073 = vmatpush1.bf16.msra.mxu0 %v418
    %2074 = vmatprep.subr.bf16.mxu0 0
    %2075 = vmatpush1.bf16.msra.mxu0 %v417
    %2076 = vmatprep.subr.bf16.mxu0 0
    %2077 = vmatpush1.bf16.msra.mxu0 %v416
    %2078 = vmatprep.subr.bf16.mxu0 0
    %2079 = vmatpush1.bf16.msra.mxu0 %v415
    %2080 = vmatprep.subr.bf16.mxu0 0
    %2081 = vmatpush2.bf16.msra.mxu0 %v430
    %2082 = vmatprep.subr.bf16.mxu0 0
    %2083 = vmatpush2.bf16.msra.mxu0 %v429
    %2084 = vmatprep.subr.bf16.mxu0 0
    %2085 = vmatpush2.bf16.msra.mxu0 %v428
    %2086 = vmatprep.subr.bf16.mxu0 0
    %2087 = vmatpush2.bf16.msra.mxu0 %v427
    %2088 = vmatprep.subr.bf16.mxu0 0
    %2089 = vmatpush2.bf16.msra.mxu0 %v426
    %2090 = vmatprep.subr.bf16.mxu0 0
    %2091 = vmatpush2.bf16.msra.mxu0 %v425
    %2092 = vmatprep.subr.bf16.mxu0 0
    %2093 = vmatpush2.bf16.msra.mxu0 %v424
    %2094 = vmatprep.subr.bf16.mxu0 0
    %2095 = vmatpush2.bf16.msra.mxu0 %v423
    %2096 = vmatprep.mubr.bf16.mxu0 %v2001
    %2097 = vmatmul.mubr.bf16.gmra.mxu0 %v2000
    %v2098 = vpop.f32.mrf.mxu0
    %v2099 = vadd.f32 0.0, %v2098
    %v2100 = vpop.f32.mrf.mxu0
    %v2101 = vpop.f32.mrf.mxu0
    %v2102 = vadd.f32 0.0, %v2101
    %v2103 = vpop.f32.mrf.mxu0
    %2104 = vmatprep.mubr.bf16.mxu0 %v2005
    %2105 = vmatmul.mubr.bf16.gmra.mxu0 %v2004
    %v2106 = vpop.f32.mrf.mxu0
    %v2107 = vadd.f32 0.0, %v2106
    %v2108 = vpop.f32.mrf.mxu0
    %v2109 = vpop.f32.mrf.mxu0
    %v2110 = vadd.f32 0.0, %v2109
    %v2111 = vpop.f32.mrf.mxu0
    %2112 = vmatprep.mubr.bf16.mxu0 %v2009
    %2113 = vmatmul.mubr.bf16.gmra.mxu0 %v2008
    %v2114 = vpop.f32.mrf.mxu0
    %v2115 = vadd.f32 0.0, %v2114
    %v2116 = vpop.f32.mrf.mxu0
    %v2117 = vpop.f32.mrf.mxu0
    %v2118 = vadd.f32 0.0, %v2117
    %v2119 = vpop.f32.mrf.mxu0
    %2120 = vmatprep.mubr.bf16.mxu0 %v2013
    %2121 = vmatmul.mubr.bf16.gmra.mxu0 %v2012
    %v2122 = vpop.f32.mrf.mxu0
    %v2123 = vadd.f32 0.0, %v2122
    %v2124 = vpop.f32.mrf.mxu0
    %v2125 = vpop.f32.mrf.mxu0
    %v2126 = vadd.f32 0.0, %v2125
    %v2127 = vpop.f32.mrf.mxu0
    %2128 = vmatprep.mubr.bf16.mxu0 %v2017
    %2129 = vmatmul.mubr.bf16.gmra.mxu0 %v2016
    %v2130 = vpop.f32.mrf.mxu0
    %v2131 = vadd.f32 0.0, %v2130
    %v2132 = vpop.f32.mrf.mxu0
    %v2133 = vpop.f32.mrf.mxu0
    %v2134 = vadd.f32 0.0, %v2133
    %v2135 = vpop.f32.mrf.mxu0
    %2136 = vmatprep.mubr.bf16.mxu0 %v2021
    %2137 = vmatmul.mubr.bf16.gmra.mxu0 %v2020
    %v2138 = vpop.f32.mrf.mxu0
    %v2139 = vadd.f32 0.0, %v2138
    %v2140 = vpop.f32.mrf.mxu0
    %v2141 = vpop.f32.mrf.mxu0
    %v2142 = vadd.f32 0.0, %v2141
    %v2143 = vpop.f32.mrf.mxu0
    %2144 = vmatprep.mubr.bf16.mxu0 %v2025
    %2145 = vmatmul.mubr.bf16.gmra.mxu0 %v2024
    %v2146 = vpop.f32.mrf.mxu0
    %v2147 = vadd.f32 0.0, %v2146
    %v2148 = vpop.f32.mrf.mxu0
    %v2149 = vpop.f32.mrf.mxu0
    %v2150 = vadd.f32 0.0, %v2149
    %v2151 = vpop.f32.mrf.mxu0
    %2152 = vmatprep.mubr.bf16.mxu0 %v2029
    %2153 = vmatmul.mubr.bf16.gmra.mxu0 %v2028
    %v2154 = vpop.f32.mrf.mxu0
    %v2155 = vadd.f32 0.0, %v2154
    %v2156 = vpop.f32.mrf.mxu0
    %v2157 = vpop.f32.mrf.mxu0
    %v2158 = vpop.f32.mrf.mxu0
    %2159 = vdwg.mxu0
    %2160 = vmatprep.subr.bf16.mxu0 0
    %2161 = vmatpush1.bf16.msra.mxu0 %v438
    %2162 = vmatprep.subr.bf16.mxu0 0
    %2163 = vmatpush1.bf16.msra.mxu0 %v437
    %2164 = vmatprep.subr.bf16.mxu0 0
    %2165 = vmatpush1.bf16.msra.mxu0 %v436
    %2166 = vmatprep.subr.bf16.mxu0 0
    %2167 = vmatpush1.bf16.msra.mxu0 %v435
    %2168 = vmatprep.subr.bf16.mxu0 0
    %2169 = vmatpush1.bf16.msra.mxu0 %v434
    %2170 = vmatprep.subr.bf16.mxu0 0
    %2171 = vmatpush1.bf16.msra.mxu0 %v433
    %2172 = vmatprep.subr.bf16.mxu0 0
    %2173 = vmatpush1.bf16.msra.mxu0 %v432
    %2174 = vmatprep.subr.bf16.mxu0 0
    %2175 = vmatpush1.bf16.msra.mxu0 %v431
    %2176 = vmatprep.subr.bf16.mxu0 0
    %2177 = vmatpush2.bf16.msra.mxu0 %v446
    %2178 = vmatprep.subr.bf16.mxu0 0
    %2179 = vmatpush2.bf16.msra.mxu0 %v445
    %2180 = vmatprep.subr.bf16.mxu0 0
    %2181 = vmatpush2.bf16.msra.mxu0 %v444
    %2182 = vmatprep.subr.bf16.mxu0 0
    %2183 = vmatpush2.bf16.msra.mxu0 %v443
    %2184 = vmatprep.subr.bf16.mxu0 0
    %2185 = vmatpush2.bf16.msra.mxu0 %v442
    %2186 = vmatprep.subr.bf16.mxu0 0
    %2187 = vmatpush2.bf16.msra.mxu0 %v441
    %2188 = vmatprep.subr.bf16.mxu0 0
    %2189 = vmatpush2.bf16.msra.mxu0 %v440
    %2190 = vmatprep.subr.bf16.mxu0 0
    %2191 = vmatpush2.bf16.msra.mxu0 %v439
    %2192 = vmatprep.mubr.bf16.mxu0 %v2003
    %2193 = vmatmul.mubr.bf16.gmra.mxu0 %v2002
    %v2194 = vpop.f32.mrf.mxu0
    %v2195 = vadd.f32 %v2099, %v2194
    %v2196 = vpop.f32.mrf.mxu0
    %v2197 = vpop.f32.mrf.mxu0
    %v2198 = vadd.f32 %v2102, %v2197
    %v2199 = vpop.f32.mrf.mxu0
    %2200 = vmatprep.mubr.bf16.mxu0 %v2007
    %2201 = vmatmul.mubr.bf16.gmra.mxu0 %v2006
    %v2202 = vpop.f32.mrf.mxu0
    %v2203 = vadd.f32 %v2107, %v2202
    %v2204 = vpop.f32.mrf.mxu0
    %v2205 = vpop.f32.mrf.mxu0
    %v2206 = vadd.f32 %v2110, %v2205
    %v2207 = vpop.f32.mrf.mxu0
    %2208 = vmatprep.mubr.bf16.mxu0 %v2011
    %2209 = vmatmul.mubr.bf16.gmra.mxu0 %v2010
    %v2210 = vpop.f32.mrf.mxu0
    %v2211 = vadd.f32 %v2115, %v2210
    %v2212 = vpop.f32.mrf.mxu0
    %v2213 = vpop.f32.mrf.mxu0
    %v2214 = vadd.f32 %v2118, %v2213
    %v2215 = vpop.f32.mrf.mxu0
    %2216 = vmatprep.mubr.bf16.mxu0 %v2015
    %2217 = vmatmul.mubr.bf16.gmra.mxu0 %v2014
    %v2218 = vpop.f32.mrf.mxu0
    %v2219 = vadd.f32 %v2123, %v2218
    %v2220 = vpop.f32.mrf.mxu0
    %v2221 = vpop.f32.mrf.mxu0
    %v2222 = vadd.f32 %v2126, %v2221
    %v2223 = vpop.f32.mrf.mxu0
    %2224 = vmatprep.mubr.bf16.mxu0 %v2019
    %2225 = vmatmul.mubr.bf16.gmra.mxu0 %v2018
    %v2226 = vpop.f32.mrf.mxu0
    %v2227 = vadd.f32 %v2131, %v2226
    %v2228 = vpop.f32.mrf.mxu0
    %v2229 = vpop.f32.mrf.mxu0
    %v2230 = vadd.f32 %v2134, %v2229
    %v2231 = vpop.f32.mrf.mxu0
    %2232 = vmatprep.mubr.bf16.mxu0 %v2023
    %2233 = vmatmul.mubr.bf16.gmra.mxu0 %v2022
    %v2234 = vpop.f32.mrf.mxu0
    %v2235 = vadd.f32 %v2139, %v2234
    %v2236 = vpop.f32.mrf.mxu0
    %v2237 = vpop.f32.mrf.mxu0
    %v2238 = vadd.f32 %v2142, %v2237
    %v2239 = vpop.f32.mrf.mxu0
    %2240 = vmatprep.mubr.bf16.mxu0 %v2027
    %2241 = vmatmul.mubr.bf16.gmra.mxu0 %v2026
    %v2242 = vpop.f32.mrf.mxu0
    %v2243 = vadd.f32 %v2147, %v2242
    %v2244 = vpop.f32.mrf.mxu0
    %v2245 = vpop.f32.mrf.mxu0
    %v2246 = vadd.f32 %v2150, %v2245
    %v2247 = vpop.f32.mrf.mxu0
    %2248 = vmatprep.mubr.bf16.mxu0 %v2031
    %2249 = vmatmul.mubr.bf16.gmra.mxu0 %v2030
    %v2250 = vpop.f32.mrf.mxu0
    %v2251 = vadd.f32 %v2155, %v2250
    %v2252 = vpop.f32.mrf.mxu0
    %v2253 = vpop.f32.mrf.mxu0
    %v2254 = vpop.f32.mrf.mxu0
    %2255 = vdwg.mxu0
    %v2256 = vmax.f32 %v1856, %v2195
    %v2257 = vmax.f32 %v1857, %v2198
    %v2258 = vmax.f32 %v1858, %v2203
    %v2259 = vmax.f32 %v1859, %v2206
    %v2260 = vmax.f32 %v1860, %v2211
    %v2261 = vmax.f32 %v1861, %v2214
    %v2262 = vmax.f32 %v1862, %v2219
    %v2263 = vmax.f32 %v1863, %v2222
    %v2264 = vmax.f32 %v1864, %v2227
    %v2265 = vmax.f32 %v1865, %v2230
    %v2266 = vmax.f32 %v1866, %v2235
    %v2267 = vmax.f32 %v1867, %v2238
    %v2268 = vmax.f32 %v1868, %v2243
    %v2269 = vmax.f32 %v1869, %v2246
    %v2270 = vmax.f32 %v1870, %v2251
    %s2271 = scalar_lea.vmem %s0, 1280
    %v2272 = vld [vmem:[%s2271] sm:$0xff]
    %v2273 = vld [vmem:[%s2271 + $0x8] sm:$0xff]
    %v2274 = vld [vmem:[%s2271 + $0x10] sm:$0xff]
    %v2275 = vld [vmem:[%s2271 + $0x18] sm:$0xff]
    %v2276 = vld [vmem:[%s2271 + $0x20] sm:$0xff]
    %v2277 = vld [vmem:[%s2271 + $0x28] sm:$0xff]
    %v2278 = vld [vmem:[%s2271 + $0x30] sm:$0xff]
    %v2279 = vld [vmem:[%s2271 + $0x38] sm:$0xff]
    %v2280 = vld [vmem:[%s2271 + $0x40] sm:$0xff]
    %v2281 = vld [vmem:[%s2271 + $0x48] sm:$0xff]
    %v2282 = vld [vmem:[%s2271 + $0x50] sm:$0xff]
    %v2283 = vld [vmem:[%s2271 + $0x58] sm:$0xff]
    %v2284 = vld [vmem:[%s2271 + $0x60] sm:$0xff]
    %v2285 = vld [vmem:[%s2271 + $0x68] sm:$0xff]
    %v2286 = vld [vmem:[%s2271 + $0x70] sm:$0xff]
    %v2287 = vld [vmem:[%s2271 + $0x78] sm:$0xff]
    %v2288 = vld [vmem:[%s2271 + $0x80] sm:$0xff]
    %v2289 = vld [vmem:[%s2271 + $0x88] sm:$0xff]
    %v2290 = vld [vmem:[%s2271 + $0x90] sm:$0xff]
    %v2291 = vld [vmem:[%s2271 + $0x98] sm:$0xff]
    %v2292 = vld [vmem:[%s2271 + $0xa0] sm:$0xff]
    %v2293 = vld [vmem:[%s2271 + $0xa8] sm:$0xff]
    %v2294 = vld [vmem:[%s2271 + $0xb0] sm:$0xff]
    %v2295 = vld [vmem:[%s2271 + $0xb8] sm:$0xff]
    %v2296 = vld [vmem:[%s2271 + $0xc0] sm:$0xff]
    %v2297 = vld [vmem:[%s2271 + $0xc8] sm:$0xff]
    %v2298 = vld [vmem:[%s2271 + $0xd0] sm:$0xff]
    %v2299 = vld [vmem:[%s2271 + $0xd8] sm:$0xff]
    %v2300 = vld [vmem:[%s2271 + $0xe0] sm:$0xff]
    %v2301 = vld [vmem:[%s2271 + $0xe8] sm:$0xff]
    %v2302 = vld [vmem:[%s2271 + $0xf0] sm:$0xff]
    %v2303 = vld [vmem:[%s2271 + $0xf8] sm:$0xff]
    %v2336 = vunpack.c.l.b16 %v2272
    %v2337 = vunpack.c.h.b16 %v2272
    %v2338 = vunpack.c.l.b16 %v2273
    %v2339 = vunpack.c.h.b16 %v2273
    %v2340 = vunpack.c.l.b16 %v2274
    %v2341 = vunpack.c.h.b16 %v2274
    %v2342 = vunpack.c.l.b16 %v2275
    %v2343 = vunpack.c.h.b16 %v2275
    %v2344 = vunpack.c.l.b16 %v2276
    %v2345 = vunpack.c.h.b16 %v2276
    %v2346 = vunpack.c.l.b16 %v2277
    %v2347 = vunpack.c.h.b16 %v2277
    %v2348 = vunpack.c.l.b16 %v2278
    %v2349 = vunpack.c.h.b16 %v2278
    %v2350 = vunpack.c.l.b16 %v2279
    %v2351 = vunpack.c.h.b16 %v2279
    %v2352 = vunpack.c.l.b16 %v2280
    %v2353 = vunpack.c.h.b16 %v2280
    %v2354 = vunpack.c.l.b16 %v2281
    %v2355 = vunpack.c.h.b16 %v2281
    %v2356 = vunpack.c.l.b16 %v2282
    %v2357 = vunpack.c.h.b16 %v2282
    %v2358 = vunpack.c.l.b16 %v2283
    %v2359 = vunpack.c.h.b16 %v2283
    %v2360 = vunpack.c.l.b16 %v2284
    %v2361 = vunpack.c.h.b16 %v2284
    %v2362 = vunpack.c.l.b16 %v2285
    %v2363 = vunpack.c.h.b16 %v2285
    %v2364 = vunpack.c.l.b16 %v2286
    %v2365 = vunpack.c.h.b16 %v2286
    %v2366 = vunpack.c.l.b16 %v2287
    %v2367 = vunpack.c.h.b16 %v2287
    %v2368 = vunpack.c.l.b16 %v2288
    %v2369 = vunpack.c.h.b16 %v2288
    %v2370 = vunpack.c.l.b16 %v2289
    %v2371 = vunpack.c.h.b16 %v2289
    %v2372 = vunpack.c.l.b16 %v2290
    %v2373 = vunpack.c.h.b16 %v2290
    %v2374 = vunpack.c.l.b16 %v2291
    %v2375 = vunpack.c.h.b16 %v2291
    %v2376 = vunpack.c.l.b16 %v2292
    %v2377 = vunpack.c.h.b16 %v2292
    %v2378 = vunpack.c.l.b16 %v2293
    %v2379 = vunpack.c.h.b16 %v2293
    %v2380 = vunpack.c.l.b16 %v2294
    %v2381 = vunpack.c.h.b16 %v2294
    %v2382 = vunpack.c.l.b16 %v2295
    %v2383 = vunpack.c.h.b16 %v2295
    %v2384 = vunpack.c.l.b16 %v2296
    %v2385 = vunpack.c.h.b16 %v2296
    %v2386 = vunpack.c.l.b16 %v2297
    %v2387 = vunpack.c.h.b16 %v2297
    %v2388 = vunpack.c.l.b16 %v2298
    %v2389 = vunpack.c.h.b16 %v2298
    %v2390 = vunpack.c.l.b16 %v2299
    %v2391 = vunpack.c.h.b16 %v2299
    %v2392 = vunpack.c.l.b16 %v2300
    %v2393 = vunpack.c.h.b16 %v2300
    %v2394 = vunpack.c.l.b16 %v2301
    %v2395 = vunpack.c.h.b16 %v2301
    %v2396 = vunpack.c.l.b16 %v2302
    %v2397 = vunpack.c.h.b16 %v2302
    %v2398 = vunpack.c.l.b16 %v2303
    %v2399 = vunpack.c.h.b16 %v2303
    %v2400 = vpack.c.b16 %v2340, %v2336
    %v2401 = vpack.c.b16 %v2341, %v2337
    %v2402 = vpack.c.b16 %v2342, %v2338
    %v2403 = vpack.c.b16 %v2343, %v2339
    %v2404 = vpack.c.b16 %v2348, %v2344
    %v2405 = vpack.c.b16 %v2349, %v2345
    %v2406 = vpack.c.b16 %v2350, %v2346
    %v2407 = vpack.c.b16 %v2351, %v2347
    %v2408 = vpack.c.b16 %v2356, %v2352
    %v2409 = vpack.c.b16 %v2357, %v2353
    %v2410 = vpack.c.b16 %v2358, %v2354
    %v2411 = vpack.c.b16 %v2359, %v2355
    %v2412 = vpack.c.b16 %v2364, %v2360
    %v2413 = vpack.c.b16 %v2365, %v2361
    %v2414 = vpack.c.b16 %v2366, %v2362
    %v2415 = vpack.c.b16 %v2367, %v2363
    %v2416 = vpack.c.b16 %v2372, %v2368
    %v2417 = vpack.c.b16 %v2373, %v2369
    %v2418 = vpack.c.b16 %v2374, %v2370
    %v2419 = vpack.c.b16 %v2375, %v2371
    %v2420 = vpack.c.b16 %v2380, %v2376
    %v2421 = vpack.c.b16 %v2381, %v2377
    %v2422 = vpack.c.b16 %v2382, %v2378
    %v2423 = vpack.c.b16 %v2383, %v2379
    %v2424 = vpack.c.b16 %v2388, %v2384
    %v2425 = vpack.c.b16 %v2389, %v2385
    %v2426 = vpack.c.b16 %v2390, %v2386
    %v2427 = vpack.c.b16 %v2391, %v2387
    %v2428 = vpack.c.b16 %v2396, %v2392
    %v2429 = vpack.c.b16 %v2397, %v2393
    %v2430 = vpack.c.b16 %v2398, %v2394
    %v2431 = vpack.c.b16 %v2399, %v2395
    %2464 = vmatprep.subr.bf16.mxu0 0
    %2465 = vmatpush1.bf16.msra.mxu0 %v422
    %2466 = vmatprep.subr.bf16.mxu0 0
    %2467 = vmatpush1.bf16.msra.mxu0 %v421
    %2468 = vmatprep.subr.bf16.mxu0 0
    %2469 = vmatpush1.bf16.msra.mxu0 %v420
    %2470 = vmatprep.subr.bf16.mxu0 0
    %2471 = vmatpush1.bf16.msra.mxu0 %v419
    %2472 = vmatprep.subr.bf16.mxu0 0
    %2473 = vmatpush1.bf16.msra.mxu0 %v418
    %2474 = vmatprep.subr.bf16.mxu0 0
    %2475 = vmatpush1.bf16.msra.mxu0 %v417
    %2476 = vmatprep.subr.bf16.mxu0 0
    %2477 = vmatpush1.bf16.msra.mxu0 %v416
    %2478 = vmatprep.subr.bf16.mxu0 0
    %2479 = vmatpush1.bf16.msra.mxu0 %v415
    %2480 = vmatprep.subr.bf16.mxu0 0
    %2481 = vmatpush2.bf16.msra.mxu0 %v430
    %2482 = vmatprep.subr.bf16.mxu0 0
    %2483 = vmatpush2.bf16.msra.mxu0 %v429
    %2484 = vmatprep.subr.bf16.mxu0 0
    %2485 = vmatpush2.bf16.msra.mxu0 %v428
    %2486 = vmatprep.subr.bf16.mxu0 0
    %2487 = vmatpush2.bf16.msra.mxu0 %v427
    %2488 = vmatprep.subr.bf16.mxu0 0
    %2489 = vmatpush2.bf16.msra.mxu0 %v426
    %2490 = vmatprep.subr.bf16.mxu0 0
    %2491 = vmatpush2.bf16.msra.mxu0 %v425
    %2492 = vmatprep.subr.bf16.mxu0 0
    %2493 = vmatpush2.bf16.msra.mxu0 %v424
    %2494 = vmatprep.subr.bf16.mxu0 0
    %2495 = vmatpush2.bf16.msra.mxu0 %v423
    %2496 = vmatprep.mubr.bf16.mxu0 %v2401
    %2497 = vmatmul.mubr.bf16.gmra.mxu0 %v2400
    %v2498 = vpop.f32.mrf.mxu0
    %v2499 = vadd.f32 0.0, %v2498
    %v2500 = vpop.f32.mrf.mxu0
    %v2501 = vpop.f32.mrf.mxu0
    %v2502 = vadd.f32 0.0, %v2501
    %v2503 = vpop.f32.mrf.mxu0
    %2504 = vmatprep.mubr.bf16.mxu0 %v2405
    %2505 = vmatmul.mubr.bf16.gmra.mxu0 %v2404
    %v2506 = vpop.f32.mrf.mxu0
    %v2507 = vadd.f32 0.0, %v2506
    %v2508 = vpop.f32.mrf.mxu0
    %v2509 = vpop.f32.mrf.mxu0
    %v2510 = vadd.f32 0.0, %v2509
    %v2511 = vpop.f32.mrf.mxu0
    %2512 = vmatprep.mubr.bf16.mxu0 %v2409
    %2513 = vmatmul.mubr.bf16.gmra.mxu0 %v2408
    %v2514 = vpop.f32.mrf.mxu0
    %v2515 = vadd.f32 0.0, %v2514
    %v2516 = vpop.f32.mrf.mxu0
    %v2517 = vpop.f32.mrf.mxu0
    %v2518 = vadd.f32 0.0, %v2517
    %v2519 = vpop.f32.mrf.mxu0
    %2520 = vmatprep.mubr.bf16.mxu0 %v2413
    %2521 = vmatmul.mubr.bf16.gmra.mxu0 %v2412
    %v2522 = vpop.f32.mrf.mxu0
    %v2523 = vadd.f32 0.0, %v2522
    %v2524 = vpop.f32.mrf.mxu0
    %v2525 = vpop.f32.mrf.mxu0
    %v2526 = vadd.f32 0.0, %v2525
    %v2527 = vpop.f32.mrf.mxu0
    %2528 = vmatprep.mubr.bf16.mxu0 %v2417
    %2529 = vmatmul.mubr.bf16.gmra.mxu0 %v2416
    %v2530 = vpop.f32.mrf.mxu0
    %v2531 = vadd.f32 0.0, %v2530
    %v2532 = vpop.f32.mrf.mxu0
    %v2533 = vpop.f32.mrf.mxu0
    %v2534 = vadd.f32 0.0, %v2533
    %v2535 = vpop.f32.mrf.mxu0
    %2536 = vmatprep.mubr.bf16.mxu0 %v2421
    %2537 = vmatmul.mubr.bf16.gmra.mxu0 %v2420
    %v2538 = vpop.f32.mrf.mxu0
    %v2539 = vadd.f32 0.0, %v2538
    %v2540 = vpop.f32.mrf.mxu0
    %v2541 = vpop.f32.mrf.mxu0
    %v2542 = vadd.f32 0.0, %v2541
    %v2543 = vpop.f32.mrf.mxu0
    %2544 = vmatprep.mubr.bf16.mxu0 %v2425
    %2545 = vmatmul.mubr.bf16.gmra.mxu0 %v2424
    %v2546 = vpop.f32.mrf.mxu0
    %v2547 = vadd.f32 0.0, %v2546
    %v2548 = vpop.f32.mrf.mxu0
    %v2549 = vpop.f32.mrf.mxu0
    %v2550 = vadd.f32 0.0, %v2549
    %v2551 = vpop.f32.mrf.mxu0
    %2552 = vmatprep.mubr.bf16.mxu0 %v2429
    %2553 = vmatmul.mubr.bf16.gmra.mxu0 %v2428
    %v2554 = vpop.f32.mrf.mxu0
    %v2555 = vadd.f32 0.0, %v2554
    %v2556 = vpop.f32.mrf.mxu0
    %v2557 = vpop.f32.mrf.mxu0
    %v2558 = vpop.f32.mrf.mxu0
    %2559 = vdwg.mxu0
    %2560 = vmatprep.subr.bf16.mxu0 0
    %2561 = vmatpush1.bf16.msra.mxu0 %v438
    %2562 = vmatprep.subr.bf16.mxu0 0
    %2563 = vmatpush1.bf16.msra.mxu0 %v437
    %2564 = vmatprep.subr.bf16.mxu0 0
    %2565 = vmatpush1.bf16.msra.mxu0 %v436
    %2566 = vmatprep.subr.bf16.mxu0 0
    %2567 = vmatpush1.bf16.msra.mxu0 %v435
    %2568 = vmatprep.subr.bf16.mxu0 0
    %2569 = vmatpush1.bf16.msra.mxu0 %v434
    %2570 = vmatprep.subr.bf16.mxu0 0
    %2571 = vmatpush1.bf16.msra.mxu0 %v433
    %2572 = vmatprep.subr.bf16.mxu0 0
    %2573 = vmatpush1.bf16.msra.mxu0 %v432
    %2574 = vmatprep.subr.bf16.mxu0 0
    %2575 = vmatpush1.bf16.msra.mxu0 %v431
    %2576 = vmatprep.subr.bf16.mxu0 0
    %2577 = vmatpush2.bf16.msra.mxu0 %v446
    %2578 = vmatprep.subr.bf16.mxu0 0
    %2579 = vmatpush2.bf16.msra.mxu0 %v445
    %2580 = vmatprep.subr.bf16.mxu0 0
    %2581 = vmatpush2.bf16.msra.mxu0 %v444
    %2582 = vmatprep.subr.bf16.mxu0 0
    %2583 = vmatpush2.bf16.msra.mxu0 %v443
    %2584 = vmatprep.subr.bf16.mxu0 0
    %2585 = vmatpush2.bf16.msra.mxu0 %v442
    %2586 = vmatprep.subr.bf16.mxu0 0
    %2587 = vmatpush2.bf16.msra.mxu0 %v441
    %2588 = vmatprep.subr.bf16.mxu0 0
    %2589 = vmatpush2.bf16.msra.mxu0 %v440
    %2590 = vmatprep.subr.bf16.mxu0 0
    %2591 = vmatpush2.bf16.msra.mxu0 %v439
    %2592 = vmatprep.mubr.bf16.mxu0 %v2403
    %2593 = vmatmul.mubr.bf16.gmra.mxu0 %v2402
    %v2594 = vpop.f32.mrf.mxu0
    %v2595 = vadd.f32 %v2499, %v2594
    %v2596 = vpop.f32.mrf.mxu0
    %v2597 = vpop.f32.mrf.mxu0
    %v2598 = vadd.f32 %v2502, %v2597
    %v2599 = vpop.f32.mrf.mxu0
    %2600 = vmatprep.mubr.bf16.mxu0 %v2407
    %2601 = vmatmul.mubr.bf16.gmra.mxu0 %v2406
    %v2602 = vpop.f32.mrf.mxu0
    %v2603 = vadd.f32 %v2507, %v2602
    %v2604 = vpop.f32.mrf.mxu0
    %v2605 = vpop.f32.mrf.mxu0
    %v2606 = vadd.f32 %v2510, %v2605
    %v2607 = vpop.f32.mrf.mxu0
    %2608 = vmatprep.mubr.bf16.mxu0 %v2411
    %2609 = vmatmul.mubr.bf16.gmra.mxu0 %v2410
    %v2610 = vpop.f32.mrf.mxu0
    %v2611 = vadd.f32 %v2515, %v2610
    %v2612 = vpop.f32.mrf.mxu0
    %v2613 = vpop.f32.mrf.mxu0
    %v2614 = vadd.f32 %v2518, %v2613
    %v2615 = vpop.f32.mrf.mxu0
    %2616 = vmatprep.mubr.bf16.mxu0 %v2415
    %2617 = vmatmul.mubr.bf16.gmra.mxu0 %v2414
    %v2618 = vpop.f32.mrf.mxu0
    %v2619 = vadd.f32 %v2523, %v2618
    %v2620 = vpop.f32.mrf.mxu0
    %v2621 = vpop.f32.mrf.mxu0
    %v2622 = vadd.f32 %v2526, %v2621
    %v2623 = vpop.f32.mrf.mxu0
    %2624 = vmatprep.mubr.bf16.mxu0 %v2419
    %2625 = vmatmul.mubr.bf16.gmra.mxu0 %v2418
    %v2626 = vpop.f32.mrf.mxu0
    %v2627 = vadd.f32 %v2531, %v2626
    %v2628 = vpop.f32.mrf.mxu0
    %v2629 = vpop.f32.mrf.mxu0
    %v2630 = vadd.f32 %v2534, %v2629
    %v2631 = vpop.f32.mrf.mxu0
    %2632 = vmatprep.mubr.bf16.mxu0 %v2423
    %2633 = vmatmul.mubr.bf16.gmra.mxu0 %v2422
    %v2634 = vpop.f32.mrf.mxu0
    %v2635 = vadd.f32 %v2539, %v2634
    %v2636 = vpop.f32.mrf.mxu0
    %v2637 = vpop.f32.mrf.mxu0
    %v2638 = vadd.f32 %v2542, %v2637
    %v2639 = vpop.f32.mrf.mxu0
    %2640 = vmatprep.mubr.bf16.mxu0 %v2427
    %2641 = vmatmul.mubr.bf16.gmra.mxu0 %v2426
    %v2642 = vpop.f32.mrf.mxu0
    %v2643 = vadd.f32 %v2547, %v2642
    %v2644 = vpop.f32.mrf.mxu0
    %v2645 = vpop.f32.mrf.mxu0
    %v2646 = vadd.f32 %v2550, %v2645
    %v2647 = vpop.f32.mrf.mxu0
    %2648 = vmatprep.mubr.bf16.mxu0 %v2431
    %2649 = vmatmul.mubr.bf16.gmra.mxu0 %v2430
    %v2650 = vpop.f32.mrf.mxu0
    %v2651 = vadd.f32 %v2555, %v2650
    %v2652 = vpop.f32.mrf.mxu0
    %v2653 = vpop.f32.mrf.mxu0
    %v2654 = vpop.f32.mrf.mxu0
    %2655 = vdwg.mxu0
    %v2656 = vmax.f32 %v2256, %v2595
    %v2657 = vmax.f32 %v2257, %v2598
    %v2658 = vmax.f32 %v2258, %v2603
    %v2659 = vmax.f32 %v2259, %v2606
    %v2660 = vmax.f32 %v2260, %v2611
    %v2661 = vmax.f32 %v2261, %v2614
    %v2662 = vmax.f32 %v2262, %v2619
    %v2663 = vmax.f32 %v2263, %v2622
    %v2664 = vmax.f32 %v2264, %v2627
    %v2665 = vmax.f32 %v2265, %v2630
    %v2666 = vmax.f32 %v2266, %v2635
    %v2667 = vmax.f32 %v2267, %v2638
    %v2668 = vmax.f32 %v2268, %v2643
    %v2669 = vmax.f32 %v2269, %v2646
    %v2670 = vmax.f32 %v2270, %v2651
    %s2671 = scalar_lea.vmem %s0, 1536
    %v2672 = vld [vmem:[%s2671] sm:$0xff]
    %v2673 = vld [vmem:[%s2671 + $0x8] sm:$0xff]
    %v2674 = vld [vmem:[%s2671 + $0x10] sm:$0xff]
    %v2675 = vld [vmem:[%s2671 + $0x18] sm:$0xff]
    %v2676 = vld [vmem:[%s2671 + $0x20] sm:$0xff]
    %v2677 = vld [vmem:[%s2671 + $0x28] sm:$0xff]
    %v2678 = vld [vmem:[%s2671 + $0x30] sm:$0xff]
    %v2679 = vld [vmem:[%s2671 + $0x38] sm:$0xff]
    %v2680 = vld [vmem:[%s2671 + $0x40] sm:$0xff]
    %v2681 = vld [vmem:[%s2671 + $0x48] sm:$0xff]
    %v2682 = vld [vmem:[%s2671 + $0x50] sm:$0xff]
    %v2683 = vld [vmem:[%s2671 + $0x58] sm:$0xff]
    %v2684 = vld [vmem:[%s2671 + $0x60] sm:$0xff]
    %v2685 = vld [vmem:[%s2671 + $0x68] sm:$0xff]
    %v2686 = vld [vmem:[%s2671 + $0x70] sm:$0xff]
    %v2687 = vld [vmem:[%s2671 + $0x78] sm:$0xff]
    %v2688 = vld [vmem:[%s2671 + $0x80] sm:$0xff]
    %v2689 = vld [vmem:[%s2671 + $0x88] sm:$0xff]
    %v2690 = vld [vmem:[%s2671 + $0x90] sm:$0xff]
    %v2691 = vld [vmem:[%s2671 + $0x98] sm:$0xff]
    %v2692 = vld [vmem:[%s2671 + $0xa0] sm:$0xff]
    %v2693 = vld [vmem:[%s2671 + $0xa8] sm:$0xff]
    %v2694 = vld [vmem:[%s2671 + $0xb0] sm:$0xff]
    %v2695 = vld [vmem:[%s2671 + $0xb8] sm:$0xff]
    %v2696 = vld [vmem:[%s2671 + $0xc0] sm:$0xff]
    %v2697 = vld [vmem:[%s2671 + $0xc8] sm:$0xff]
    %v2698 = vld [vmem:[%s2671 + $0xd0] sm:$0xff]
    %v2699 = vld [vmem:[%s2671 + $0xd8] sm:$0xff]
    %v2700 = vld [vmem:[%s2671 + $0xe0] sm:$0xff]
    %v2701 = vld [vmem:[%s2671 + $0xe8] sm:$0xff]
    %v2702 = vld [vmem:[%s2671 + $0xf0] sm:$0xff]
    %v2703 = vld [vmem:[%s2671 + $0xf8] sm:$0xff]
    %v2736 = vunpack.c.l.b16 %v2672
    %v2737 = vunpack.c.h.b16 %v2672
    %v2738 = vunpack.c.l.b16 %v2673
    %v2739 = vunpack.c.h.b16 %v2673
    %v2740 = vunpack.c.l.b16 %v2674
    %v2741 = vunpack.c.h.b16 %v2674
    %v2742 = vunpack.c.l.b16 %v2675
    %v2743 = vunpack.c.h.b16 %v2675
    %v2744 = vunpack.c.l.b16 %v2676
    %v2745 = vunpack.c.h.b16 %v2676
    %v2746 = vunpack.c.l.b16 %v2677
    %v2747 = vunpack.c.h.b16 %v2677
    %v2748 = vunpack.c.l.b16 %v2678
    %v2749 = vunpack.c.h.b16 %v2678
    %v2750 = vunpack.c.l.b16 %v2679
    %v2751 = vunpack.c.h.b16 %v2679
    %v2752 = vunpack.c.l.b16 %v2680
    %v2753 = vunpack.c.h.b16 %v2680
    %v2754 = vunpack.c.l.b16 %v2681
    %v2755 = vunpack.c.h.b16 %v2681
    %v2756 = vunpack.c.l.b16 %v2682
    %v2757 = vunpack.c.h.b16 %v2682
    %v2758 = vunpack.c.l.b16 %v2683
    %v2759 = vunpack.c.h.b16 %v2683
    %v2760 = vunpack.c.l.b16 %v2684
    %v2761 = vunpack.c.h.b16 %v2684
    %v2762 = vunpack.c.l.b16 %v2685
    %v2763 = vunpack.c.h.b16 %v2685
    %v2764 = vunpack.c.l.b16 %v2686
    %v2765 = vunpack.c.h.b16 %v2686
    %v2766 = vunpack.c.l.b16 %v2687
    %v2767 = vunpack.c.h.b16 %v2687
    %v2768 = vunpack.c.l.b16 %v2688
    %v2769 = vunpack.c.h.b16 %v2688
    %v2770 = vunpack.c.l.b16 %v2689
    %v2771 = vunpack.c.h.b16 %v2689
    %v2772 = vunpack.c.l.b16 %v2690
    %v2773 = vunpack.c.h.b16 %v2690
    %v2774 = vunpack.c.l.b16 %v2691
    %v2775 = vunpack.c.h.b16 %v2691
    %v2776 = vunpack.c.l.b16 %v2692
    %v2777 = vunpack.c.h.b16 %v2692
    %v2778 = vunpack.c.l.b16 %v2693
    %v2779 = vunpack.c.h.b16 %v2693
    %v2780 = vunpack.c.l.b16 %v2694
    %v2781 = vunpack.c.h.b16 %v2694
    %v2782 = vunpack.c.l.b16 %v2695
    %v2783 = vunpack.c.h.b16 %v2695
    %v2784 = vunpack.c.l.b16 %v2696
    %v2785 = vunpack.c.h.b16 %v2696
    %v2786 = vunpack.c.l.b16 %v2697
    %v2787 = vunpack.c.h.b16 %v2697
    %v2788 = vunpack.c.l.b16 %v2698
    %v2789 = vunpack.c.h.b16 %v2698
    %v2790 = vunpack.c.l.b16 %v2699
    %v2791 = vunpack.c.h.b16 %v2699
    %v2792 = vunpack.c.l.b16 %v2700
    %v2793 = vunpack.c.h.b16 %v2700
    %v2794 = vunpack.c.l.b16 %v2701
    %v2795 = vunpack.c.h.b16 %v2701
    %v2796 = vunpack.c.l.b16 %v2702
    %v2797 = vunpack.c.h.b16 %v2702
    %v2798 = vunpack.c.l.b16 %v2703
    %v2799 = vunpack.c.h.b16 %v2703
    %v2800 = vpack.c.b16 %v2740, %v2736
    %v2801 = vpack.c.b16 %v2741, %v2737
    %v2802 = vpack.c.b16 %v2742, %v2738
    %v2803 = vpack.c.b16 %v2743, %v2739
    %v2804 = vpack.c.b16 %v2748, %v2744
    %v2805 = vpack.c.b16 %v2749, %v2745
    %v2806 = vpack.c.b16 %v2750, %v2746
    %v2807 = vpack.c.b16 %v2751, %v2747
    %v2808 = vpack.c.b16 %v2756, %v2752
    %v2809 = vpack.c.b16 %v2757, %v2753
    %v2810 = vpack.c.b16 %v2758, %v2754
    %v2811 = vpack.c.b16 %v2759, %v2755
    %v2812 = vpack.c.b16 %v2764, %v2760
    %v2813 = vpack.c.b16 %v2765, %v2761
    %v2814 = vpack.c.b16 %v2766, %v2762
    %v2815 = vpack.c.b16 %v2767, %v2763
    %v2816 = vpack.c.b16 %v2772, %v2768
    %v2817 = vpack.c.b16 %v2773, %v2769
    %v2818 = vpack.c.b16 %v2774, %v2770
    %v2819 = vpack.c.b16 %v2775, %v2771
    %v2820 = vpack.c.b16 %v2780, %v2776
    %v2821 = vpack.c.b16 %v2781, %v2777
    %v2822 = vpack.c.b16 %v2782, %v2778
    %v2823 = vpack.c.b16 %v2783, %v2779
    %v2824 = vpack.c.b16 %v2788, %v2784
    %v2825 = vpack.c.b16 %v2789, %v2785
    %v2826 = vpack.c.b16 %v2790, %v2786
    %v2827 = vpack.c.b16 %v2791, %v2787
    %v2828 = vpack.c.b16 %v2796, %v2792
    %v2829 = vpack.c.b16 %v2797, %v2793
    %v2830 = vpack.c.b16 %v2798, %v2794
    %v2831 = vpack.c.b16 %v2799, %v2795
    %2864 = vmatprep.subr.bf16.mxu0 0
    %2865 = vmatpush1.bf16.msra.mxu0 %v422
    %2866 = vmatprep.subr.bf16.mxu0 0
    %2867 = vmatpush1.bf16.msra.mxu0 %v421
    %2868 = vmatprep.subr.bf16.mxu0 0
    %2869 = vmatpush1.bf16.msra.mxu0 %v420
    %2870 = vmatprep.subr.bf16.mxu0 0
    %2871 = vmatpush1.bf16.msra.mxu0 %v419
    %2872 = vmatprep.subr.bf16.mxu0 0
    %2873 = vmatpush1.bf16.msra.mxu0 %v418
    %2874 = vmatprep.subr.bf16.mxu0 0
    %2875 = vmatpush1.bf16.msra.mxu0 %v417
    %2876 = vmatprep.subr.bf16.mxu0 0
    %2877 = vmatpush1.bf16.msra.mxu0 %v416
    %2878 = vmatprep.subr.bf16.mxu0 0
    %2879 = vmatpush1.bf16.msra.mxu0 %v415
    %2880 = vmatprep.subr.bf16.mxu0 0
    %2881 = vmatpush2.bf16.msra.mxu0 %v430
    %2882 = vmatprep.subr.bf16.mxu0 0
    %2883 = vmatpush2.bf16.msra.mxu0 %v429
    %2884 = vmatprep.subr.bf16.mxu0 0
    %2885 = vmatpush2.bf16.msra.mxu0 %v428
    %2886 = vmatprep.subr.bf16.mxu0 0
    %2887 = vmatpush2.bf16.msra.mxu0 %v427
    %2888 = vmatprep.subr.bf16.mxu0 0
    %2889 = vmatpush2.bf16.msra.mxu0 %v426
    %2890 = vmatprep.subr.bf16.mxu0 0
    %2891 = vmatpush2.bf16.msra.mxu0 %v425
    %2892 = vmatprep.subr.bf16.mxu0 0
    %2893 = vmatpush2.bf16.msra.mxu0 %v424
    %2894 = vmatprep.subr.bf16.mxu0 0
    %2895 = vmatpush2.bf16.msra.mxu0 %v423
    %2896 = vmatprep.mubr.bf16.mxu0 %v2801
    %2897 = vmatmul.mubr.bf16.gmra.mxu0 %v2800
    %v2898 = vpop.f32.mrf.mxu0
    %v2899 = vadd.f32 0.0, %v2898
    %v2900 = vpop.f32.mrf.mxu0
    %v2901 = vpop.f32.mrf.mxu0
    %v2902 = vadd.f32 0.0, %v2901
    %v2903 = vpop.f32.mrf.mxu0
    %2904 = vmatprep.mubr.bf16.mxu0 %v2805
    %2905 = vmatmul.mubr.bf16.gmra.mxu0 %v2804
    %v2906 = vpop.f32.mrf.mxu0
    %v2907 = vadd.f32 0.0, %v2906
    %v2908 = vpop.f32.mrf.mxu0
    %v2909 = vpop.f32.mrf.mxu0
    %v2910 = vadd.f32 0.0, %v2909
    %v2911 = vpop.f32.mrf.mxu0
    %2912 = vmatprep.mubr.bf16.mxu0 %v2809
    %2913 = vmatmul.mubr.bf16.gmra.mxu0 %v2808
    %v2914 = vpop.f32.mrf.mxu0
    %v2915 = vadd.f32 0.0, %v2914
    %v2916 = vpop.f32.mrf.mxu0
    %v2917 = vpop.f32.mrf.mxu0
    %v2918 = vadd.f32 0.0, %v2917
    %v2919 = vpop.f32.mrf.mxu0
    %2920 = vmatprep.mubr.bf16.mxu0 %v2813
    %2921 = vmatmul.mubr.bf16.gmra.mxu0 %v2812
    %v2922 = vpop.f32.mrf.mxu0
    %v2923 = vadd.f32 0.0, %v2922
    %v2924 = vpop.f32.mrf.mxu0
    %v2925 = vpop.f32.mrf.mxu0
    %v2926 = vadd.f32 0.0, %v2925
    %v2927 = vpop.f32.mrf.mxu0
    %2928 = vmatprep.mubr.bf16.mxu0 %v2817
    %2929 = vmatmul.mubr.bf16.gmra.mxu0 %v2816
    %v2930 = vpop.f32.mrf.mxu0
    %v2931 = vadd.f32 0.0, %v2930
    %v2932 = vpop.f32.mrf.mxu0
    %v2933 = vpop.f32.mrf.mxu0
    %v2934 = vadd.f32 0.0, %v2933
    %v2935 = vpop.f32.mrf.mxu0
    %2936 = vmatprep.mubr.bf16.mxu0 %v2821
    %2937 = vmatmul.mubr.bf16.gmra.mxu0 %v2820
    %v2938 = vpop.f32.mrf.mxu0
    %v2939 = vadd.f32 0.0, %v2938
    %v2940 = vpop.f32.mrf.mxu0
    %v2941 = vpop.f32.mrf.mxu0
    %v2942 = vadd.f32 0.0, %v2941
    %v2943 = vpop.f32.mrf.mxu0
    %2944 = vmatprep.mubr.bf16.mxu0 %v2825
    %2945 = vmatmul.mubr.bf16.gmra.mxu0 %v2824
    %v2946 = vpop.f32.mrf.mxu0
    %v2947 = vadd.f32 0.0, %v2946
    %v2948 = vpop.f32.mrf.mxu0
    %v2949 = vpop.f32.mrf.mxu0
    %v2950 = vadd.f32 0.0, %v2949
    %v2951 = vpop.f32.mrf.mxu0
    %2952 = vmatprep.mubr.bf16.mxu0 %v2829
    %2953 = vmatmul.mubr.bf16.gmra.mxu0 %v2828
    %v2954 = vpop.f32.mrf.mxu0
    %v2955 = vadd.f32 0.0, %v2954
    %v2956 = vpop.f32.mrf.mxu0
    %v2957 = vpop.f32.mrf.mxu0
    %v2958 = vpop.f32.mrf.mxu0
    %2959 = vdwg.mxu0
    %2960 = vmatprep.subr.bf16.mxu0 0
    %2961 = vmatpush1.bf16.msra.mxu0 %v438
    %2962 = vmatprep.subr.bf16.mxu0 0
    %2963 = vmatpush1.bf16.msra.mxu0 %v437
    %2964 = vmatprep.subr.bf16.mxu0 0
    %2965 = vmatpush1.bf16.msra.mxu0 %v436
    %2966 = vmatprep.subr.bf16.mxu0 0
    %2967 = vmatpush1.bf16.msra.mxu0 %v435
    %2968 = vmatprep.subr.bf16.mxu0 0
    %2969 = vmatpush1.bf16.msra.mxu0 %v434
    %2970 = vmatprep.subr.bf16.mxu0 0
    %2971 = vmatpush1.bf16.msra.mxu0 %v433
    %2972 = vmatprep.subr.bf16.mxu0 0
    %2973 = vmatpush1.bf16.msra.mxu0 %v432
    %2974 = vmatprep.subr.bf16.mxu0 0
    %2975 = vmatpush1.bf16.msra.mxu0 %v431
    %2976 = vmatprep.subr.bf16.mxu0 0
    %2977 = vmatpush2.bf16.msra.mxu0 %v446
    %2978 = vmatprep.subr.bf16.mxu0 0
    %2979 = vmatpush2.bf16.msra.mxu0 %v445
    %2980 = vmatprep.subr.bf16.mxu0 0
    %2981 = vmatpush2.bf16.msra.mxu0 %v444
    %2982 = vmatprep.subr.bf16.mxu0 0
    %2983 = vmatpush2.bf16.msra.mxu0 %v443
    %2984 = vmatprep.subr.bf16.mxu0 0
    %2985 = vmatpush2.bf16.msra.mxu0 %v442
    %2986 = vmatprep.subr.bf16.mxu0 0
    %2987 = vmatpush2.bf16.msra.mxu0 %v441
    %2988 = vmatprep.subr.bf16.mxu0 0
    %2989 = vmatpush2.bf16.msra.mxu0 %v440
    %2990 = vmatprep.subr.bf16.mxu0 0
    %2991 = vmatpush2.bf16.msra.mxu0 %v439
    %2992 = vmatprep.mubr.bf16.mxu0 %v2803
    %2993 = vmatmul.mubr.bf16.gmra.mxu0 %v2802
    %v2994 = vpop.f32.mrf.mxu0
    %v2995 = vadd.f32 %v2899, %v2994
    %v2996 = vpop.f32.mrf.mxu0
    %v2997 = vpop.f32.mrf.mxu0
    %v2998 = vadd.f32 %v2902, %v2997
    %v2999 = vpop.f32.mrf.mxu0
    %3000 = vmatprep.mubr.bf16.mxu0 %v2807
    %3001 = vmatmul.mubr.bf16.gmra.mxu0 %v2806
    %v3002 = vpop.f32.mrf.mxu0
    %v3003 = vadd.f32 %v2907, %v3002
    %v3004 = vpop.f32.mrf.mxu0
    %v3005 = vpop.f32.mrf.mxu0
    %v3006 = vadd.f32 %v2910, %v3005
    %v3007 = vpop.f32.mrf.mxu0
    %3008 = vmatprep.mubr.bf16.mxu0 %v2811
    %3009 = vmatmul.mubr.bf16.gmra.mxu0 %v2810
    %v3010 = vpop.f32.mrf.mxu0
    %v3011 = vadd.f32 %v2915, %v3010
    %v3012 = vpop.f32.mrf.mxu0
    %v3013 = vpop.f32.mrf.mxu0
    %v3014 = vadd.f32 %v2918, %v3013
    %v3015 = vpop.f32.mrf.mxu0
    %3016 = vmatprep.mubr.bf16.mxu0 %v2815
    %3017 = vmatmul.mubr.bf16.gmra.mxu0 %v2814
    %v3018 = vpop.f32.mrf.mxu0
    %v3019 = vadd.f32 %v2923, %v3018
    %v3020 = vpop.f32.mrf.mxu0
    %v3021 = vpop.f32.mrf.mxu0
    %v3022 = vadd.f32 %v2926, %v3021
    %v3023 = vpop.f32.mrf.mxu0
    %3024 = vmatprep.mubr.bf16.mxu0 %v2819
    %3025 = vmatmul.mubr.bf16.gmra.mxu0 %v2818
    %v3026 = vpop.f32.mrf.mxu0
    %v3027 = vadd.f32 %v2931, %v3026
    %v3028 = vpop.f32.mrf.mxu0
    %v3029 = vpop.f32.mrf.mxu0
    %v3030 = vadd.f32 %v2934, %v3029
    %v3031 = vpop.f32.mrf.mxu0
    %3032 = vmatprep.mubr.bf16.mxu0 %v2823
    %3033 = vmatmul.mubr.bf16.gmra.mxu0 %v2822
    %v3034 = vpop.f32.mrf.mxu0
    %v3035 = vadd.f32 %v2939, %v3034
    %v3036 = vpop.f32.mrf.mxu0
    %v3037 = vpop.f32.mrf.mxu0
    %v3038 = vadd.f32 %v2942, %v3037
    %v3039 = vpop.f32.mrf.mxu0
    %3040 = vmatprep.mubr.bf16.mxu0 %v2827
    %3041 = vmatmul.mubr.bf16.gmra.mxu0 %v2826
    %v3042 = vpop.f32.mrf.mxu0
    %v3043 = vadd.f32 %v2947, %v3042
    %v3044 = vpop.f32.mrf.mxu0
    %v3045 = vpop.f32.mrf.mxu0
    %v3046 = vadd.f32 %v2950, %v3045
    %v3047 = vpop.f32.mrf.mxu0
    %3048 = vmatprep.mubr.bf16.mxu0 %v2831
    %3049 = vmatmul.mubr.bf16.gmra.mxu0 %v2830
    %v3050 = vpop.f32.mrf.mxu0
    %v3051 = vadd.f32 %v2955, %v3050
    %v3052 = vpop.f32.mrf.mxu0
    %v3053 = vpop.f32.mrf.mxu0
    %v3054 = vpop.f32.mrf.mxu0
    %3055 = vdwg.mxu0
    %v3056 = vmax.f32 %v2656, %v2995
    %v3057 = vmax.f32 %v2657, %v2998
    %v3058 = vmax.f32 %v2658, %v3003
    %v3059 = vmax.f32 %v2659, %v3006
    %v3060 = vmax.f32 %v2660, %v3011
    %v3061 = vmax.f32 %v2661, %v3014
    %v3062 = vmax.f32 %v2662, %v3019
    %v3063 = vmax.f32 %v2663, %v3022
    %v3064 = vmax.f32 %v2664, %v3027
    %v3065 = vmax.f32 %v2665, %v3030
    %v3066 = vmax.f32 %v2666, %v3035
    %v3067 = vmax.f32 %v2667, %v3038
    %v3068 = vmax.f32 %v2668, %v3043
    %v3069 = vmax.f32 %v2669, %v3046
    %v3070 = vmax.f32 %v2670, %v3051
    %s3071 = scalar_lea.vmem %s0, 1792
    %v3072 = vld [vmem:[%s3071] sm:$0xff]
    %v3073 = vld [vmem:[%s3071 + $0x8] sm:$0xff]
    %v3074 = vld [vmem:[%s3071 + $0x10] sm:$0xff]
    %v3075 = vld [vmem:[%s3071 + $0x18] sm:$0xff]
    %v3076 = vld [vmem:[%s3071 + $0x20] sm:$0xff]
    %v3077 = vld [vmem:[%s3071 + $0x28] sm:$0xff]
    %v3078 = vld [vmem:[%s3071 + $0x30] sm:$0xff]
    %v3079 = vld [vmem:[%s3071 + $0x38] sm:$0xff]
    %v3080 = vld [vmem:[%s3071 + $0x40] sm:$0xff]
    %v3081 = vld [vmem:[%s3071 + $0x48] sm:$0xff]
    %v3082 = vld [vmem:[%s3071 + $0x50] sm:$0xff]
    %v3083 = vld [vmem:[%s3071 + $0x58] sm:$0xff]
    %v3084 = vld [vmem:[%s3071 + $0x60] sm:$0xff]
    %v3085 = vld [vmem:[%s3071 + $0x68] sm:$0xff]
    %v3086 = vld [vmem:[%s3071 + $0x70] sm:$0xff]
    %v3087 = vld [vmem:[%s3071 + $0x78] sm:$0xff]
    %v3088 = vld [vmem:[%s3071 + $0x80] sm:$0xff]
    %v3089 = vld [vmem:[%s3071 + $0x88] sm:$0xff]
    %v3090 = vld [vmem:[%s3071 + $0x90] sm:$0xff]
    %v3091 = vld [vmem:[%s3071 + $0x98] sm:$0xff]
    %v3092 = vld [vmem:[%s3071 + $0xa0] sm:$0xff]
    %v3093 = vld [vmem:[%s3071 + $0xa8] sm:$0xff]
    %v3094 = vld [vmem:[%s3071 + $0xb0] sm:$0xff]
    %v3095 = vld [vmem:[%s3071 + $0xb8] sm:$0xff]
    %v3096 = vld [vmem:[%s3071 + $0xc0] sm:$0xff]
    %v3097 = vld [vmem:[%s3071 + $0xc8] sm:$0xff]
    %v3098 = vld [vmem:[%s3071 + $0xd0] sm:$0xff]
    %v3099 = vld [vmem:[%s3071 + $0xd8] sm:$0xff]
    %v3100 = vld [vmem:[%s3071 + $0xe0] sm:$0xff]
    %v3101 = vld [vmem:[%s3071 + $0xe8] sm:$0xff]
    %v3102 = vld [vmem:[%s3071 + $0xf0] sm:$0xff]
    %v3103 = vld [vmem:[%s3071 + $0xf8] sm:$0xff]
    %v3136 = vunpack.c.l.b16 %v3072
    %v3137 = vunpack.c.h.b16 %v3072
    %v3138 = vunpack.c.l.b16 %v3073
    %v3139 = vunpack.c.h.b16 %v3073
    %v3140 = vunpack.c.l.b16 %v3074
    %v3141 = vunpack.c.h.b16 %v3074
    %v3142 = vunpack.c.l.b16 %v3075
    %v3143 = vunpack.c.h.b16 %v3075
    %v3144 = vunpack.c.l.b16 %v3076
    %v3145 = vunpack.c.h.b16 %v3076
    %v3146 = vunpack.c.l.b16 %v3077
    %v3147 = vunpack.c.h.b16 %v3077
    %v3148 = vunpack.c.l.b16 %v3078
    %v3149 = vunpack.c.h.b16 %v3078
    %v3150 = vunpack.c.l.b16 %v3079
    %v3151 = vunpack.c.h.b16 %v3079
    %v3152 = vunpack.c.l.b16 %v3080
    %v3153 = vunpack.c.h.b16 %v3080
    %v3154 = vunpack.c.l.b16 %v3081
    %v3155 = vunpack.c.h.b16 %v3081
    %v3156 = vunpack.c.l.b16 %v3082
    %v3157 = vunpack.c.h.b16 %v3082
    %v3158 = vunpack.c.l.b16 %v3083
    %v3159 = vunpack.c.h.b16 %v3083
    %v3160 = vunpack.c.l.b16 %v3084
    %v3161 = vunpack.c.h.b16 %v3084
    %v3162 = vunpack.c.l.b16 %v3085
    %v3163 = vunpack.c.h.b16 %v3085
    %v3164 = vunpack.c.l.b16 %v3086
    %v3165 = vunpack.c.h.b16 %v3086
    %v3166 = vunpack.c.l.b16 %v3087
    %v3167 = vunpack.c.h.b16 %v3087
    %v3168 = vunpack.c.l.b16 %v3088
    %v3169 = vunpack.c.h.b16 %v3088
    %v3170 = vunpack.c.l.b16 %v3089
    %v3171 = vunpack.c.h.b16 %v3089
    %v3172 = vunpack.c.l.b16 %v3090
    %v3173 = vunpack.c.h.b16 %v3090
    %v3174 = vunpack.c.l.b16 %v3091
    %v3175 = vunpack.c.h.b16 %v3091
    %v3176 = vunpack.c.l.b16 %v3092
    %v3177 = vunpack.c.h.b16 %v3092
    %v3178 = vunpack.c.l.b16 %v3093
    %v3179 = vunpack.c.h.b16 %v3093
    %v3180 = vunpack.c.l.b16 %v3094
    %v3181 = vunpack.c.h.b16 %v3094
    %v3182 = vunpack.c.l.b16 %v3095
    %v3183 = vunpack.c.h.b16 %v3095
    %v3184 = vunpack.c.l.b16 %v3096
    %v3185 = vunpack.c.h.b16 %v3096
    %v3186 = vunpack.c.l.b16 %v3097
    %v3187 = vunpack.c.h.b16 %v3097
    %v3188 = vunpack.c.l.b16 %v3098
    %v3189 = vunpack.c.h.b16 %v3098
    %v3190 = vunpack.c.l.b16 %v3099
    %v3191 = vunpack.c.h.b16 %v3099
    %v3192 = vunpack.c.l.b16 %v3100
    %v3193 = vunpack.c.h.b16 %v3100
    %v3194 = vunpack.c.l.b16 %v3101
    %v3195 = vunpack.c.h.b16 %v3101
    %v3196 = vunpack.c.l.b16 %v3102
    %v3197 = vunpack.c.h.b16 %v3102
    %v3198 = vunpack.c.l.b16 %v3103
    %v3199 = vunpack.c.h.b16 %v3103
    %v3200 = vpack.c.b16 %v3140, %v3136
    %v3201 = vpack.c.b16 %v3141, %v3137
    %v3202 = vpack.c.b16 %v3142, %v3138
    %v3203 = vpack.c.b16 %v3143, %v3139
    %v3204 = vpack.c.b16 %v3148, %v3144
    %v3205 = vpack.c.b16 %v3149, %v3145
    %v3206 = vpack.c.b16 %v3150, %v3146
    %v3207 = vpack.c.b16 %v3151, %v3147
    %v3208 = vpack.c.b16 %v3156, %v3152
    %v3209 = vpack.c.b16 %v3157, %v3153
    %v3210 = vpack.c.b16 %v3158, %v3154
    %v3211 = vpack.c.b16 %v3159, %v3155
    %v3212 = vpack.c.b16 %v3164, %v3160
    %v3213 = vpack.c.b16 %v3165, %v3161
    %v3214 = vpack.c.b16 %v3166, %v3162
    %v3215 = vpack.c.b16 %v3167, %v3163
    %v3216 = vpack.c.b16 %v3172, %v3168
    %v3217 = vpack.c.b16 %v3173, %v3169
    %v3218 = vpack.c.b16 %v3174, %v3170
    %v3219 = vpack.c.b16 %v3175, %v3171
    %v3220 = vpack.c.b16 %v3180, %v3176
    %v3221 = vpack.c.b16 %v3181, %v3177
    %v3222 = vpack.c.b16 %v3182, %v3178
    %v3223 = vpack.c.b16 %v3183, %v3179
    %v3224 = vpack.c.b16 %v3188, %v3184
    %v3225 = vpack.c.b16 %v3189, %v3185
    %v3226 = vpack.c.b16 %v3190, %v3186
    %v3227 = vpack.c.b16 %v3191, %v3187
    %v3228 = vpack.c.b16 %v3196, %v3192
    %v3229 = vpack.c.b16 %v3197, %v3193
    %v3230 = vpack.c.b16 %v3198, %v3194
    %v3231 = vpack.c.b16 %v3199, %v3195
    %3264 = vmatprep.subr.bf16.mxu0 0
    %3265 = vmatpush1.bf16.msra.mxu0 %v422
    %3266 = vmatprep.subr.bf16.mxu0 0
    %3267 = vmatpush1.bf16.msra.mxu0 %v421
    %3268 = vmatprep.subr.bf16.mxu0 0
    %3269 = vmatpush1.bf16.msra.mxu0 %v420
    %3270 = vmatprep.subr.bf16.mxu0 0
    %3271 = vmatpush1.bf16.msra.mxu0 %v419
    %3272 = vmatprep.subr.bf16.mxu0 0
    %3273 = vmatpush1.bf16.msra.mxu0 %v418
    %3274 = vmatprep.subr.bf16.mxu0 0
    %3275 = vmatpush1.bf16.msra.mxu0 %v417
    %3276 = vmatprep.subr.bf16.mxu0 0
    %3277 = vmatpush1.bf16.msra.mxu0 %v416
    %3278 = vmatprep.subr.bf16.mxu0 0
    %3279 = vmatpush1.bf16.msra.mxu0 %v415
    %3280 = vmatprep.subr.bf16.mxu0 0
    %3281 = vmatpush2.bf16.msra.mxu0 %v430
    %3282 = vmatprep.subr.bf16.mxu0 0
    %3283 = vmatpush2.bf16.msra.mxu0 %v429
    %3284 = vmatprep.subr.bf16.mxu0 0
    %3285 = vmatpush2.bf16.msra.mxu0 %v428
    %3286 = vmatprep.subr.bf16.mxu0 0
    %3287 = vmatpush2.bf16.msra.mxu0 %v427
    %3288 = vmatprep.subr.bf16.mxu0 0
    %3289 = vmatpush2.bf16.msra.mxu0 %v426
    %3290 = vmatprep.subr.bf16.mxu0 0
    %3291 = vmatpush2.bf16.msra.mxu0 %v425
    %3292 = vmatprep.subr.bf16.mxu0 0
    %3293 = vmatpush2.bf16.msra.mxu0 %v424
    %3294 = vmatprep.subr.bf16.mxu0 0
    %3295 = vmatpush2.bf16.msra.mxu0 %v423
    %3296 = vmatprep.mubr.bf16.mxu0 %v3201
    %3297 = vmatmul.mubr.bf16.gmra.mxu0 %v3200
    %v3298 = vpop.f32.mrf.mxu0
    %v3299 = vadd.f32 0.0, %v3298
    %v3300 = vpop.f32.mrf.mxu0
    %v3301 = vpop.f32.mrf.mxu0
    %v3302 = vadd.f32 0.0, %v3301
    %v3303 = vpop.f32.mrf.mxu0
    %3304 = vmatprep.mubr.bf16.mxu0 %v3205
    %3305 = vmatmul.mubr.bf16.gmra.mxu0 %v3204
    %v3306 = vpop.f32.mrf.mxu0
    %v3307 = vadd.f32 0.0, %v3306
    %v3308 = vpop.f32.mrf.mxu0
    %v3309 = vpop.f32.mrf.mxu0
    %v3310 = vadd.f32 0.0, %v3309
    %v3311 = vpop.f32.mrf.mxu0
    %3312 = vmatprep.mubr.bf16.mxu0 %v3209
    %3313 = vmatmul.mubr.bf16.gmra.mxu0 %v3208
    %v3314 = vpop.f32.mrf.mxu0
    %v3315 = vadd.f32 0.0, %v3314
    %v3316 = vpop.f32.mrf.mxu0
    %v3317 = vpop.f32.mrf.mxu0
    %v3318 = vadd.f32 0.0, %v3317
    %v3319 = vpop.f32.mrf.mxu0
    %3320 = vmatprep.mubr.bf16.mxu0 %v3213
    %3321 = vmatmul.mubr.bf16.gmra.mxu0 %v3212
    %v3322 = vpop.f32.mrf.mxu0
    %v3323 = vadd.f32 0.0, %v3322
    %v3324 = vpop.f32.mrf.mxu0
    %v3325 = vpop.f32.mrf.mxu0
    %v3326 = vadd.f32 0.0, %v3325
    %v3327 = vpop.f32.mrf.mxu0
    %3328 = vmatprep.mubr.bf16.mxu0 %v3217
    %3329 = vmatmul.mubr.bf16.gmra.mxu0 %v3216
    %v3330 = vpop.f32.mrf.mxu0
    %v3331 = vadd.f32 0.0, %v3330
    %v3332 = vpop.f32.mrf.mxu0
    %v3333 = vpop.f32.mrf.mxu0
    %v3334 = vadd.f32 0.0, %v3333
    %v3335 = vpop.f32.mrf.mxu0
    %3336 = vmatprep.mubr.bf16.mxu0 %v3221
    %3337 = vmatmul.mubr.bf16.gmra.mxu0 %v3220
    %v3338 = vpop.f32.mrf.mxu0
    %v3339 = vadd.f32 0.0, %v3338
    %v3340 = vpop.f32.mrf.mxu0
    %v3341 = vpop.f32.mrf.mxu0
    %v3342 = vadd.f32 0.0, %v3341
    %v3343 = vpop.f32.mrf.mxu0
    %3344 = vmatprep.mubr.bf16.mxu0 %v3225
    %3345 = vmatmul.mubr.bf16.gmra.mxu0 %v3224
    %v3346 = vpop.f32.mrf.mxu0
    %v3347 = vadd.f32 0.0, %v3346
    %v3348 = vpop.f32.mrf.mxu0
    %v3349 = vpop.f32.mrf.mxu0
    %v3350 = vadd.f32 0.0, %v3349
    %v3351 = vpop.f32.mrf.mxu0
    %3352 = vmatprep.mubr.bf16.mxu0 %v3229
    %3353 = vmatmul.mubr.bf16.gmra.mxu0 %v3228
    %v3354 = vpop.f32.mrf.mxu0
    %v3355 = vadd.f32 0.0, %v3354
    %v3356 = vpop.f32.mrf.mxu0
    %v3357 = vpop.f32.mrf.mxu0
    %v3358 = vpop.f32.mrf.mxu0
    %3359 = vdwg.mxu0
    %3360 = vmatprep.subr.bf16.mxu0 0
    %3361 = vmatpush1.bf16.msra.mxu0 %v438
    %3362 = vmatprep.subr.bf16.mxu0 0
    %3363 = vmatpush1.bf16.msra.mxu0 %v437
    %3364 = vmatprep.subr.bf16.mxu0 0
    %3365 = vmatpush1.bf16.msra.mxu0 %v436
    %3366 = vmatprep.subr.bf16.mxu0 0
    %3367 = vmatpush1.bf16.msra.mxu0 %v435
    %3368 = vmatprep.subr.bf16.mxu0 0
    %3369 = vmatpush1.bf16.msra.mxu0 %v434
    %3370 = vmatprep.subr.bf16.mxu0 0
    %3371 = vmatpush1.bf16.msra.mxu0 %v433
    %3372 = vmatprep.subr.bf16.mxu0 0
    %3373 = vmatpush1.bf16.msra.mxu0 %v432
    %3374 = vmatprep.subr.bf16.mxu0 0
    %3375 = vmatpush1.bf16.msra.mxu0 %v431
    %3376 = vmatprep.subr.bf16.mxu0 0
    %3377 = vmatpush2.bf16.msra.mxu0 %v446
    %3378 = vmatprep.subr.bf16.mxu0 0
    %3379 = vmatpush2.bf16.msra.mxu0 %v445
    %3380 = vmatprep.subr.bf16.mxu0 0
    %3381 = vmatpush2.bf16.msra.mxu0 %v444
    %3382 = vmatprep.subr.bf16.mxu0 0
    %3383 = vmatpush2.bf16.msra.mxu0 %v443
    %3384 = vmatprep.subr.bf16.mxu0 0
    %3385 = vmatpush2.bf16.msra.mxu0 %v442
    %3386 = vmatprep.subr.bf16.mxu0 0
    %3387 = vmatpush2.bf16.msra.mxu0 %v441
    %3388 = vmatprep.subr.bf16.mxu0 0
    %3389 = vmatpush2.bf16.msra.mxu0 %v440
    %3390 = vmatprep.subr.bf16.mxu0 0
    %3391 = vmatpush2.bf16.msra.mxu0 %v439
    %3392 = vmatprep.mubr.bf16.mxu0 %v3203
    %3393 = vmatmul.mubr.bf16.gmra.mxu0 %v3202
    %v3394 = vpop.f32.mrf.mxu0
    %v3395 = vadd.f32 %v3299, %v3394
    %v3396 = vpop.f32.mrf.mxu0
    %v3397 = vpop.f32.mrf.mxu0
    %v3398 = vadd.f32 %v3302, %v3397
    %v3399 = vpop.f32.mrf.mxu0
    %3400 = vmatprep.mubr.bf16.mxu0 %v3207
    %3401 = vmatmul.mubr.bf16.gmra.mxu0 %v3206
    %v3402 = vpop.f32.mrf.mxu0
    %v3403 = vadd.f32 %v3307, %v3402
    %v3404 = vpop.f32.mrf.mxu0
    %v3405 = vpop.f32.mrf.mxu0
    %v3406 = vadd.f32 %v3310, %v3405
    %v3407 = vpop.f32.mrf.mxu0
    %3408 = vmatprep.mubr.bf16.mxu0 %v3211
    %3409 = vmatmul.mubr.bf16.gmra.mxu0 %v3210
    %v3410 = vpop.f32.mrf.mxu0
    %v3411 = vadd.f32 %v3315, %v3410
    %v3412 = vpop.f32.mrf.mxu0
    %v3413 = vpop.f32.mrf.mxu0
    %v3414 = vadd.f32 %v3318, %v3413
    %v3415 = vpop.f32.mrf.mxu0
    %3416 = vmatprep.mubr.bf16.mxu0 %v3215
    %3417 = vmatmul.mubr.bf16.gmra.mxu0 %v3214
    %v3418 = vpop.f32.mrf.mxu0
    %v3419 = vadd.f32 %v3323, %v3418
    %v3420 = vpop.f32.mrf.mxu0
    %v3421 = vpop.f32.mrf.mxu0
    %v3422 = vadd.f32 %v3326, %v3421
    %v3423 = vpop.f32.mrf.mxu0
    %3424 = vmatprep.mubr.bf16.mxu0 %v3219
    %3425 = vmatmul.mubr.bf16.gmra.mxu0 %v3218
    %v3426 = vpop.f32.mrf.mxu0
    %v3427 = vadd.f32 %v3331, %v3426
    %v3428 = vpop.f32.mrf.mxu0
    %v3429 = vpop.f32.mrf.mxu0
    %v3430 = vadd.f32 %v3334, %v3429
    %v3431 = vpop.f32.mrf.mxu0
    %3432 = vmatprep.mubr.bf16.mxu0 %v3223
    %3433 = vmatmul.mubr.bf16.gmra.mxu0 %v3222
    %v3434 = vpop.f32.mrf.mxu0
    %v3435 = vadd.f32 %v3339, %v3434
    %v3436 = vpop.f32.mrf.mxu0
    %v3437 = vpop.f32.mrf.mxu0
    %v3438 = vadd.f32 %v3342, %v3437
    %v3439 = vpop.f32.mrf.mxu0
    %3440 = vmatprep.mubr.bf16.mxu0 %v3227
    %3441 = vmatmul.mubr.bf16.gmra.mxu0 %v3226
    %v3442 = vpop.f32.mrf.mxu0
    %v3443 = vadd.f32 %v3347, %v3442
    %v3444 = vpop.f32.mrf.mxu0
    %v3445 = vpop.f32.mrf.mxu0
    %v3446 = vadd.f32 %v3350, %v3445
    %v3447 = vpop.f32.mrf.mxu0
    %3448 = vmatprep.mubr.bf16.mxu0 %v3231
    %3449 = vmatmul.mubr.bf16.gmra.mxu0 %v3230
    %v3450 = vpop.f32.mrf.mxu0
    %v3451 = vadd.f32 %v3355, %v3450
    %v3452 = vpop.f32.mrf.mxu0
    %v3453 = vpop.f32.mrf.mxu0
    %v3454 = vpop.f32.mrf.mxu0
    %3455 = vdwg.mxu0
    %v3456 = vmax.f32 %v3056, %v3395
    %v3457 = vmax.f32 %v3057, %v3398
    %v3458 = vmax.f32 %v3058, %v3403
    %v3459 = vmax.f32 %v3059, %v3406
    %v3460 = vmax.f32 %v3060, %v3411
    %v3461 = vmax.f32 %v3061, %v3414
    %v3462 = vmax.f32 %v3062, %v3419
    %v3463 = vmax.f32 %v3063, %v3422
    %v3464 = vmax.f32 %v3064, %v3427
    %v3465 = vmax.f32 %v3065, %v3430
    %v3466 = vmax.f32 %v3066, %v3435
    %v3467 = vmax.f32 %v3067, %v3438
    %v3468 = vmax.f32 %v3068, %v3443
    %v3469 = vmax.f32 %v3069, %v3446
    %v3470 = vmax.f32 %v3070, %v3451
    %s3471 = scalar_lea.vmem %s0, 2048
    %v3472 = vld [vmem:[%s3471] sm:$0xff]
    %v3473 = vld [vmem:[%s3471 + $0x8] sm:$0xff]
    %v3474 = vld [vmem:[%s3471 + $0x10] sm:$0xff]
    %v3475 = vld [vmem:[%s3471 + $0x18] sm:$0xff]
    %v3476 = vld [vmem:[%s3471 + $0x20] sm:$0xff]
    %v3477 = vld [vmem:[%s3471 + $0x28] sm:$0xff]
    %v3478 = vld [vmem:[%s3471 + $0x30] sm:$0xff]
    %v3479 = vld [vmem:[%s3471 + $0x38] sm:$0xff]
    %v3480 = vld [vmem:[%s3471 + $0x40] sm:$0xff]
    %v3481 = vld [vmem:[%s3471 + $0x48] sm:$0xff]
    %v3482 = vld [vmem:[%s3471 + $0x50] sm:$0xff]
    %v3483 = vld [vmem:[%s3471 + $0x58] sm:$0xff]
    %v3484 = vld [vmem:[%s3471 + $0x60] sm:$0xff]
    %v3485 = vld [vmem:[%s3471 + $0x68] sm:$0xff]
    %v3486 = vld [vmem:[%s3471 + $0x70] sm:$0xff]
    %v3487 = vld [vmem:[%s3471 + $0x78] sm:$0xff]
    %v3488 = vld [vmem:[%s3471 + $0x80] sm:$0xff]
    %v3489 = vld [vmem:[%s3471 + $0x88] sm:$0xff]
    %v3490 = vld [vmem:[%s3471 + $0x90] sm:$0xff]
    %v3491 = vld [vmem:[%s3471 + $0x98] sm:$0xff]
    %v3492 = vld [vmem:[%s3471 + $0xa0] sm:$0xff]
    %v3493 = vld [vmem:[%s3471 + $0xa8] sm:$0xff]
    %v3494 = vld [vmem:[%s3471 + $0xb0] sm:$0xff]
    %v3495 = vld [vmem:[%s3471 + $0xb8] sm:$0xff]
    %v3496 = vld [vmem:[%s3471 + $0xc0] sm:$0xff]
    %v3497 = vld [vmem:[%s3471 + $0xc8] sm:$0xff]
    %v3498 = vld [vmem:[%s3471 + $0xd0] sm:$0xff]
    %v3499 = vld [vmem:[%s3471 + $0xd8] sm:$0xff]
    %v3500 = vld [vmem:[%s3471 + $0xe0] sm:$0xff]
    %v3501 = vld [vmem:[%s3471 + $0xe8] sm:$0xff]
    %v3502 = vld [vmem:[%s3471 + $0xf0] sm:$0xff]
    %v3503 = vld [vmem:[%s3471 + $0xf8] sm:$0xff]
    %v3536 = vunpack.c.l.b16 %v3472
    %v3537 = vunpack.c.h.b16 %v3472
    %v3538 = vunpack.c.l.b16 %v3473
    %v3539 = vunpack.c.h.b16 %v3473
    %v3540 = vunpack.c.l.b16 %v3474
    %v3541 = vunpack.c.h.b16 %v3474
    %v3542 = vunpack.c.l.b16 %v3475
    %v3543 = vunpack.c.h.b16 %v3475
    %v3544 = vunpack.c.l.b16 %v3476
    %v3545 = vunpack.c.h.b16 %v3476
    %v3546 = vunpack.c.l.b16 %v3477
    %v3547 = vunpack.c.h.b16 %v3477
    %v3548 = vunpack.c.l.b16 %v3478
    %v3549 = vunpack.c.h.b16 %v3478
    %v3550 = vunpack.c.l.b16 %v3479
    %v3551 = vunpack.c.h.b16 %v3479
    %v3552 = vunpack.c.l.b16 %v3480
    %v3553 = vunpack.c.h.b16 %v3480
    %v3554 = vunpack.c.l.b16 %v3481
    %v3555 = vunpack.c.h.b16 %v3481
    %v3556 = vunpack.c.l.b16 %v3482
    %v3557 = vunpack.c.h.b16 %v3482
    %v3558 = vunpack.c.l.b16 %v3483
    %v3559 = vunpack.c.h.b16 %v3483
    %v3560 = vunpack.c.l.b16 %v3484
    %v3561 = vunpack.c.h.b16 %v3484
    %v3562 = vunpack.c.l.b16 %v3485
    %v3563 = vunpack.c.h.b16 %v3485
    %v3564 = vunpack.c.l.b16 %v3486
    %v3565 = vunpack.c.h.b16 %v3486
    %v3566 = vunpack.c.l.b16 %v3487
    %v3567 = vunpack.c.h.b16 %v3487
    %v3568 = vunpack.c.l.b16 %v3488
    %v3569 = vunpack.c.h.b16 %v3488
    %v3570 = vunpack.c.l.b16 %v3489
    %v3571 = vunpack.c.h.b16 %v3489
    %v3572 = vunpack.c.l.b16 %v3490
    %v3573 = vunpack.c.h.b16 %v3490
    %v3574 = vunpack.c.l.b16 %v3491
    %v3575 = vunpack.c.h.b16 %v3491
    %v3576 = vunpack.c.l.b16 %v3492
    %v3577 = vunpack.c.h.b16 %v3492
    %v3578 = vunpack.c.l.b16 %v3493
    %v3579 = vunpack.c.h.b16 %v3493
    %v3580 = vunpack.c.l.b16 %v3494
    %v3581 = vunpack.c.h.b16 %v3494
    %v3582 = vunpack.c.l.b16 %v3495
    %v3583 = vunpack.c.h.b16 %v3495
    %v3584 = vunpack.c.l.b16 %v3496
    %v3585 = vunpack.c.h.b16 %v3496
    %v3586 = vunpack.c.l.b16 %v3497
    %v3587 = vunpack.c.h.b16 %v3497
    %v3588 = vunpack.c.l.b16 %v3498
    %v3589 = vunpack.c.h.b16 %v3498
    %v3590 = vunpack.c.l.b16 %v3499
    %v3591 = vunpack.c.h.b16 %v3499
    %v3592 = vunpack.c.l.b16 %v3500
    %v3593 = vunpack.c.h.b16 %v3500
    %v3594 = vunpack.c.l.b16 %v3501
    %v3595 = vunpack.c.h.b16 %v3501
    %v3596 = vunpack.c.l.b16 %v3502
    %v3597 = vunpack.c.h.b16 %v3502
    %v3598 = vunpack.c.l.b16 %v3503
    %v3599 = vunpack.c.h.b16 %v3503
    %v3600 = vpack.c.b16 %v3540, %v3536
    %v3601 = vpack.c.b16 %v3541, %v3537
    %v3602 = vpack.c.b16 %v3542, %v3538
    %v3603 = vpack.c.b16 %v3543, %v3539
    %v3604 = vpack.c.b16 %v3548, %v3544
    %v3605 = vpack.c.b16 %v3549, %v3545
    %v3606 = vpack.c.b16 %v3550, %v3546
    %v3607 = vpack.c.b16 %v3551, %v3547
    %v3608 = vpack.c.b16 %v3556, %v3552
    %v3609 = vpack.c.b16 %v3557, %v3553
    %v3610 = vpack.c.b16 %v3558, %v3554
    %v3611 = vpack.c.b16 %v3559, %v3555
    %v3612 = vpack.c.b16 %v3564, %v3560
    %v3613 = vpack.c.b16 %v3565, %v3561
    %v3614 = vpack.c.b16 %v3566, %v3562
    %v3615 = vpack.c.b16 %v3567, %v3563
    %v3616 = vpack.c.b16 %v3572, %v3568
    %v3617 = vpack.c.b16 %v3573, %v3569
    %v3618 = vpack.c.b16 %v3574, %v3570
    %v3619 = vpack.c.b16 %v3575, %v3571
    %v3620 = vpack.c.b16 %v3580, %v3576
    %v3621 = vpack.c.b16 %v3581, %v3577
    %v3622 = vpack.c.b16 %v3582, %v3578
    %v3623 = vpack.c.b16 %v3583, %v3579
    %v3624 = vpack.c.b16 %v3588, %v3584
    %v3625 = vpack.c.b16 %v3589, %v3585
    %v3626 = vpack.c.b16 %v3590, %v3586
    %v3627 = vpack.c.b16 %v3591, %v3587
    %v3628 = vpack.c.b16 %v3596, %v3592
    %v3629 = vpack.c.b16 %v3597, %v3593
    %v3630 = vpack.c.b16 %v3598, %v3594
    %v3631 = vpack.c.b16 %v3599, %v3595
    %3664 = vmatprep.subr.bf16.mxu0 0
    %3665 = vmatpush1.bf16.msra.mxu0 %v422
    %3666 = vmatprep.subr.bf16.mxu0 0
    %3667 = vmatpush1.bf16.msra.mxu0 %v421
    %3668 = vmatprep.subr.bf16.mxu0 0
    %3669 = vmatpush1.bf16.msra.mxu0 %v420
    %3670 = vmatprep.subr.bf16.mxu0 0
    %3671 = vmatpush1.bf16.msra.mxu0 %v419
    %3672 = vmatprep.subr.bf16.mxu0 0
    %3673 = vmatpush1.bf16.msra.mxu0 %v418
    %3674 = vmatprep.subr.bf16.mxu0 0
    %3675 = vmatpush1.bf16.msra.mxu0 %v417
    %3676 = vmatprep.subr.bf16.mxu0 0
    %3677 = vmatpush1.bf16.msra.mxu0 %v416
    %3678 = vmatprep.subr.bf16.mxu0 0
    %3679 = vmatpush1.bf16.msra.mxu0 %v415
    %3680 = vmatprep.subr.bf16.mxu0 0
    %3681 = vmatpush2.bf16.msra.mxu0 %v430
    %3682 = vmatprep.subr.bf16.mxu0 0
    %3683 = vmatpush2.bf16.msra.mxu0 %v429
    %3684 = vmatprep.subr.bf16.mxu0 0
    %3685 = vmatpush2.bf16.msra.mxu0 %v428
    %3686 = vmatprep.subr.bf16.mxu0 0
    %3687 = vmatpush2.bf16.msra.mxu0 %v427
    %3688 = vmatprep.subr.bf16.mxu0 0
    %3689 = vmatpush2.bf16.msra.mxu0 %v426
    %3690 = vmatprep.subr.bf16.mxu0 0
    %3691 = vmatpush2.bf16.msra.mxu0 %v425
    %3692 = vmatprep.subr.bf16.mxu0 0
    %3693 = vmatpush2.bf16.msra.mxu0 %v424
    %3694 = vmatprep.subr.bf16.mxu0 0
    %3695 = vmatpush2.bf16.msra.mxu0 %v423
    %3696 = vmatprep.mubr.bf16.mxu0 %v3601
    %3697 = vmatmul.mubr.bf16.gmra.mxu0 %v3600
    %v3698 = vpop.f32.mrf.mxu0
    %v3699 = vadd.f32 0.0, %v3698
    %v3700 = vpop.f32.mrf.mxu0
    %v3701 = vpop.f32.mrf.mxu0
    %v3702 = vadd.f32 0.0, %v3701
    %v3703 = vpop.f32.mrf.mxu0
    %3704 = vmatprep.mubr.bf16.mxu0 %v3605
    %3705 = vmatmul.mubr.bf16.gmra.mxu0 %v3604
    %v3706 = vpop.f32.mrf.mxu0
    %v3707 = vadd.f32 0.0, %v3706
    %v3708 = vpop.f32.mrf.mxu0
    %v3709 = vpop.f32.mrf.mxu0
    %v3710 = vadd.f32 0.0, %v3709
    %v3711 = vpop.f32.mrf.mxu0
    %3712 = vmatprep.mubr.bf16.mxu0 %v3609
    %3713 = vmatmul.mubr.bf16.gmra.mxu0 %v3608
    %v3714 = vpop.f32.mrf.mxu0
    %v3715 = vadd.f32 0.0, %v3714
    %v3716 = vpop.f32.mrf.mxu0
    %v3717 = vpop.f32.mrf.mxu0
    %v3718 = vadd.f32 0.0, %v3717
    %v3719 = vpop.f32.mrf.mxu0
    %3720 = vmatprep.mubr.bf16.mxu0 %v3613
    %3721 = vmatmul.mubr.bf16.gmra.mxu0 %v3612
    %v3722 = vpop.f32.mrf.mxu0
    %v3723 = vadd.f32 0.0, %v3722
    %v3724 = vpop.f32.mrf.mxu0
    %v3725 = vpop.f32.mrf.mxu0
    %v3726 = vadd.f32 0.0, %v3725
    %v3727 = vpop.f32.mrf.mxu0
    %3728 = vmatprep.mubr.bf16.mxu0 %v3617
    %3729 = vmatmul.mubr.bf16.gmra.mxu0 %v3616
    %v3730 = vpop.f32.mrf.mxu0
    %v3731 = vadd.f32 0.0, %v3730
    %v3732 = vpop.f32.mrf.mxu0
    %v3733 = vpop.f32.mrf.mxu0
    %v3734 = vadd.f32 0.0, %v3733
    %v3735 = vpop.f32.mrf.mxu0
    %3736 = vmatprep.mubr.bf16.mxu0 %v3621
    %3737 = vmatmul.mubr.bf16.gmra.mxu0 %v3620
    %v3738 = vpop.f32.mrf.mxu0
    %v3739 = vadd.f32 0.0, %v3738
    %v3740 = vpop.f32.mrf.mxu0
    %v3741 = vpop.f32.mrf.mxu0
    %v3742 = vadd.f32 0.0, %v3741
    %v3743 = vpop.f32.mrf.mxu0
    %3744 = vmatprep.mubr.bf16.mxu0 %v3625
    %3745 = vmatmul.mubr.bf16.gmra.mxu0 %v3624
    %v3746 = vpop.f32.mrf.mxu0
    %v3747 = vadd.f32 0.0, %v3746
    %v3748 = vpop.f32.mrf.mxu0
    %v3749 = vpop.f32.mrf.mxu0
    %v3750 = vadd.f32 0.0, %v3749
    %v3751 = vpop.f32.mrf.mxu0
    %3752 = vmatprep.mubr.bf16.mxu0 %v3629
    %3753 = vmatmul.mubr.bf16.gmra.mxu0 %v3628
    %v3754 = vpop.f32.mrf.mxu0
    %v3755 = vadd.f32 0.0, %v3754
    %v3756 = vpop.f32.mrf.mxu0
    %v3757 = vpop.f32.mrf.mxu0
    %v3758 = vpop.f32.mrf.mxu0
    %3759 = vdwg.mxu0
    %3760 = vmatprep.subr.bf16.mxu0 0
    %3761 = vmatpush1.bf16.msra.mxu0 %v438
    %3762 = vmatprep.subr.bf16.mxu0 0
    %3763 = vmatpush1.bf16.msra.mxu0 %v437
    %3764 = vmatprep.subr.bf16.mxu0 0
    %3765 = vmatpush1.bf16.msra.mxu0 %v436
    %3766 = vmatprep.subr.bf16.mxu0 0
    %3767 = vmatpush1.bf16.msra.mxu0 %v435
    %3768 = vmatprep.subr.bf16.mxu0 0
    %3769 = vmatpush1.bf16.msra.mxu0 %v434
    %3770 = vmatprep.subr.bf16.mxu0 0
    %3771 = vmatpush1.bf16.msra.mxu0 %v433
    %3772 = vmatprep.subr.bf16.mxu0 0
    %3773 = vmatpush1.bf16.msra.mxu0 %v432
    %3774 = vmatprep.subr.bf16.mxu0 0
    %3775 = vmatpush1.bf16.msra.mxu0 %v431
    %3776 = vmatprep.subr.bf16.mxu0 0
    %3777 = vmatpush2.bf16.msra.mxu0 %v446
    %3778 = vmatprep.subr.bf16.mxu0 0
    %3779 = vmatpush2.bf16.msra.mxu0 %v445
    %3780 = vmatprep.subr.bf16.mxu0 0
    %3781 = vmatpush2.bf16.msra.mxu0 %v444
    %3782 = vmatprep.subr.bf16.mxu0 0
    %3783 = vmatpush2.bf16.msra.mxu0 %v443
    %3784 = vmatprep.subr.bf16.mxu0 0
    %3785 = vmatpush2.bf16.msra.mxu0 %v442
    %3786 = vmatprep.subr.bf16.mxu0 0
    %3787 = vmatpush2.bf16.msra.mxu0 %v441
    %3788 = vmatprep.subr.bf16.mxu0 0
    %3789 = vmatpush2.bf16.msra.mxu0 %v440
    %3790 = vmatprep.subr.bf16.mxu0 0
    %3791 = vmatpush2.bf16.msra.mxu0 %v439
    %3792 = vmatprep.mubr.bf16.mxu0 %v3603
    %3793 = vmatmul.mubr.bf16.gmra.mxu0 %v3602
    %v3794 = vpop.f32.mrf.mxu0
    %v3795 = vadd.f32 %v3699, %v3794
    %v3796 = vpop.f32.mrf.mxu0
    %v3797 = vpop.f32.mrf.mxu0
    %v3798 = vadd.f32 %v3702, %v3797
    %v3799 = vpop.f32.mrf.mxu0
    %3800 = vmatprep.mubr.bf16.mxu0 %v3607
    %3801 = vmatmul.mubr.bf16.gmra.mxu0 %v3606
    %v3802 = vpop.f32.mrf.mxu0
    %v3803 = vadd.f32 %v3707, %v3802
    %v3804 = vpop.f32.mrf.mxu0
    %v3805 = vpop.f32.mrf.mxu0
    %v3806 = vadd.f32 %v3710, %v3805
    %v3807 = vpop.f32.mrf.mxu0
    %3808 = vmatprep.mubr.bf16.mxu0 %v3611
    %3809 = vmatmul.mubr.bf16.gmra.mxu0 %v3610
    %v3810 = vpop.f32.mrf.mxu0
    %v3811 = vadd.f32 %v3715, %v3810
    %v3812 = vpop.f32.mrf.mxu0
    %v3813 = vpop.f32.mrf.mxu0
    %v3814 = vadd.f32 %v3718, %v3813
    %v3815 = vpop.f32.mrf.mxu0
    %3816 = vmatprep.mubr.bf16.mxu0 %v3615
    %3817 = vmatmul.mubr.bf16.gmra.mxu0 %v3614
    %v3818 = vpop.f32.mrf.mxu0
    %v3819 = vadd.f32 %v3723, %v3818
    %v3820 = vpop.f32.mrf.mxu0
    %v3821 = vpop.f32.mrf.mxu0
    %v3822 = vadd.f32 %v3726, %v3821
    %v3823 = vpop.f32.mrf.mxu0
    %3824 = vmatprep.mubr.bf16.mxu0 %v3619
    %3825 = vmatmul.mubr.bf16.gmra.mxu0 %v3618
    %v3826 = vpop.f32.mrf.mxu0
    %v3827 = vadd.f32 %v3731, %v3826
    %v3828 = vpop.f32.mrf.mxu0
    %v3829 = vpop.f32.mrf.mxu0
    %v3830 = vadd.f32 %v3734, %v3829
    %v3831 = vpop.f32.mrf.mxu0
    %3832 = vmatprep.mubr.bf16.mxu0 %v3623
    %3833 = vmatmul.mubr.bf16.gmra.mxu0 %v3622
    %v3834 = vpop.f32.mrf.mxu0
    %v3835 = vadd.f32 %v3739, %v3834
    %v3836 = vpop.f32.mrf.mxu0
    %v3837 = vpop.f32.mrf.mxu0
    %v3838 = vadd.f32 %v3742, %v3837
    %v3839 = vpop.f32.mrf.mxu0
    %3840 = vmatprep.mubr.bf16.mxu0 %v3627
    %3841 = vmatmul.mubr.bf16.gmra.mxu0 %v3626
    %v3842 = vpop.f32.mrf.mxu0
    %v3843 = vadd.f32 %v3747, %v3842
    %v3844 = vpop.f32.mrf.mxu0
    %v3845 = vpop.f32.mrf.mxu0
    %v3846 = vadd.f32 %v3750, %v3845
    %v3847 = vpop.f32.mrf.mxu0
    %3848 = vmatprep.mubr.bf16.mxu0 %v3631
    %3849 = vmatmul.mubr.bf16.gmra.mxu0 %v3630
    %v3850 = vpop.f32.mrf.mxu0
    %v3851 = vadd.f32 %v3755, %v3850
    %v3852 = vpop.f32.mrf.mxu0
    %v3853 = vpop.f32.mrf.mxu0
    %v3854 = vpop.f32.mrf.mxu0
    %3855 = vdwg.mxu0
    %v3856 = vmax.f32 %v3456, %v3795
    %v3857 = vmax.f32 %v3457, %v3798
    %v3858 = vmax.f32 %v3458, %v3803
    %v3859 = vmax.f32 %v3459, %v3806
    %v3860 = vmax.f32 %v3460, %v3811
    %v3861 = vmax.f32 %v3461, %v3814
    %v3862 = vmax.f32 %v3462, %v3819
    %v3863 = vmax.f32 %v3463, %v3822
    %v3864 = vmax.f32 %v3464, %v3827
    %v3865 = vmax.f32 %v3465, %v3830
    %v3866 = vmax.f32 %v3466, %v3835
    %v3867 = vmax.f32 %v3467, %v3838
    %v3868 = vmax.f32 %v3468, %v3843
    %v3869 = vmax.f32 %v3469, %v3846
    %v3870 = vmax.f32 %v3470, %v3851
    %s3871 = scalar_lea.vmem %s0, 2304
    %v3872 = vld [vmem:[%s3871] sm:$0xff]
    %v3873 = vld [vmem:[%s3871 + $0x8] sm:$0xff]
    %v3874 = vld [vmem:[%s3871 + $0x10] sm:$0xff]
    %v3875 = vld [vmem:[%s3871 + $0x18] sm:$0xff]
    %v3876 = vld [vmem:[%s3871 + $0x20] sm:$0xff]
    %v3877 = vld [vmem:[%s3871 + $0x28] sm:$0xff]
    %v3878 = vld [vmem:[%s3871 + $0x30] sm:$0xff]
    %v3879 = vld [vmem:[%s3871 + $0x38] sm:$0xff]
    %v3880 = vld [vmem:[%s3871 + $0x40] sm:$0xff]
    %v3881 = vld [vmem:[%s3871 + $0x48] sm:$0xff]
    %v3882 = vld [vmem:[%s3871 + $0x50] sm:$0xff]
    %v3883 = vld [vmem:[%s3871 + $0x58] sm:$0xff]
    %v3884 = vld [vmem:[%s3871 + $0x60] sm:$0xff]
    %v3885 = vld [vmem:[%s3871 + $0x68] sm:$0xff]
    %v3886 = vld [vmem:[%s3871 + $0x70] sm:$0xff]
    %v3887 = vld [vmem:[%s3871 + $0x78] sm:$0xff]
    %v3888 = vld [vmem:[%s3871 + $0x80] sm:$0xff]
    %v3889 = vld [vmem:[%s3871 + $0x88] sm:$0xff]
    %v3890 = vld [vmem:[%s3871 + $0x90] sm:$0xff]
    %v3891 = vld [vmem:[%s3871 + $0x98] sm:$0xff]
    %v3892 = vld [vmem:[%s3871 + $0xa0] sm:$0xff]
    %v3893 = vld [vmem:[%s3871 + $0xa8] sm:$0xff]
    %v3894 = vld [vmem:[%s3871 + $0xb0] sm:$0xff]
    %v3895 = vld [vmem:[%s3871 + $0xb8] sm:$0xff]
    %v3896 = vld [vmem:[%s3871 + $0xc0] sm:$0xff]
    %v3897 = vld [vmem:[%s3871 + $0xc8] sm:$0xff]
    %v3898 = vld [vmem:[%s3871 + $0xd0] sm:$0xff]
    %v3899 = vld [vmem:[%s3871 + $0xd8] sm:$0xff]
    %v3900 = vld [vmem:[%s3871 + $0xe0] sm:$0xff]
    %v3901 = vld [vmem:[%s3871 + $0xe8] sm:$0xff]
    %v3902 = vld [vmem:[%s3871 + $0xf0] sm:$0xff]
    %v3903 = vld [vmem:[%s3871 + $0xf8] sm:$0xff]
    %v3936 = vunpack.c.l.b16 %v3872
    %v3937 = vunpack.c.h.b16 %v3872
    %v3938 = vunpack.c.l.b16 %v3873
    %v3939 = vunpack.c.h.b16 %v3873
    %v3940 = vunpack.c.l.b16 %v3874
    %v3941 = vunpack.c.h.b16 %v3874
    %v3942 = vunpack.c.l.b16 %v3875
    %v3943 = vunpack.c.h.b16 %v3875
    %v3944 = vunpack.c.l.b16 %v3876
    %v3945 = vunpack.c.h.b16 %v3876
    %v3946 = vunpack.c.l.b16 %v3877
    %v3947 = vunpack.c.h.b16 %v3877
    %v3948 = vunpack.c.l.b16 %v3878
    %v3949 = vunpack.c.h.b16 %v3878
    %v3950 = vunpack.c.l.b16 %v3879
    %v3951 = vunpack.c.h.b16 %v3879
    %v3952 = vunpack.c.l.b16 %v3880
    %v3953 = vunpack.c.h.b16 %v3880
    %v3954 = vunpack.c.l.b16 %v3881
    %v3955 = vunpack.c.h.b16 %v3881
    %v3956 = vunpack.c.l.b16 %v3882
    %v3957 = vunpack.c.h.b16 %v3882
    %v3958 = vunpack.c.l.b16 %v3883
    %v3959 = vunpack.c.h.b16 %v3883
    %v3960 = vunpack.c.l.b16 %v3884
    %v3961 = vunpack.c.h.b16 %v3884
    %v3962 = vunpack.c.l.b16 %v3885
    %v3963 = vunpack.c.h.b16 %v3885
    %v3964 = vunpack.c.l.b16 %v3886
    %v3965 = vunpack.c.h.b16 %v3886
    %v3966 = vunpack.c.l.b16 %v3887
    %v3967 = vunpack.c.h.b16 %v3887
    %v3968 = vunpack.c.l.b16 %v3888
    %v3969 = vunpack.c.h.b16 %v3888
    %v3970 = vunpack.c.l.b16 %v3889
    %v3971 = vunpack.c.h.b16 %v3889
    %v3972 = vunpack.c.l.b16 %v3890
    %v3973 = vunpack.c.h.b16 %v3890
    %v3974 = vunpack.c.l.b16 %v3891
    %v3975 = vunpack.c.h.b16 %v3891
    %v3976 = vunpack.c.l.b16 %v3892
    %v3977 = vunpack.c.h.b16 %v3892
    %v3978 = vunpack.c.l.b16 %v3893
    %v3979 = vunpack.c.h.b16 %v3893
    %v3980 = vunpack.c.l.b16 %v3894
    %v3981 = vunpack.c.h.b16 %v3894
    %v3982 = vunpack.c.l.b16 %v3895
    %v3983 = vunpack.c.h.b16 %v3895
    %v3984 = vunpack.c.l.b16 %v3896
    %v3985 = vunpack.c.h.b16 %v3896
    %v3986 = vunpack.c.l.b16 %v3897
    %v3987 = vunpack.c.h.b16 %v3897
    %v3988 = vunpack.c.l.b16 %v3898
    %v3989 = vunpack.c.h.b16 %v3898
    %v3990 = vunpack.c.l.b16 %v3899
    %v3991 = vunpack.c.h.b16 %v3899
    %v3992 = vunpack.c.l.b16 %v3900
    %v3993 = vunpack.c.h.b16 %v3900
    %v3994 = vunpack.c.l.b16 %v3901
    %v3995 = vunpack.c.h.b16 %v3901
    %v3996 = vunpack.c.l.b16 %v3902
    %v3997 = vunpack.c.h.b16 %v3902
    %v3998 = vunpack.c.l.b16 %v3903
    %v3999 = vunpack.c.h.b16 %v3903
    %v4000 = vpack.c.b16 %v3940, %v3936
    %v4001 = vpack.c.b16 %v3941, %v3937
    %v4002 = vpack.c.b16 %v3942, %v3938
    %v4003 = vpack.c.b16 %v3943, %v3939
    %v4004 = vpack.c.b16 %v3948, %v3944
    %v4005 = vpack.c.b16 %v3949, %v3945
    %v4006 = vpack.c.b16 %v3950, %v3946
    %v4007 = vpack.c.b16 %v3951, %v3947
    %v4008 = vpack.c.b16 %v3956, %v3952
    %v4009 = vpack.c.b16 %v3957, %v3953
    %v4010 = vpack.c.b16 %v3958, %v3954
    %v4011 = vpack.c.b16 %v3959, %v3955
    %v4012 = vpack.c.b16 %v3964, %v3960
    %v4013 = vpack.c.b16 %v3965, %v3961
    %v4014 = vpack.c.b16 %v3966, %v3962
    %v4015 = vpack.c.b16 %v3967, %v3963
    %v4016 = vpack.c.b16 %v3972, %v3968
    %v4017 = vpack.c.b16 %v3973, %v3969
    %v4018 = vpack.c.b16 %v3974, %v3970
    %v4019 = vpack.c.b16 %v3975, %v3971
    %v4020 = vpack.c.b16 %v3980, %v3976
    %v4021 = vpack.c.b16 %v3981, %v3977
    %v4022 = vpack.c.b16 %v3982, %v3978
    %v4023 = vpack.c.b16 %v3983, %v3979
    %v4024 = vpack.c.b16 %v3988, %v3984
    %v4025 = vpack.c.b16 %v3989, %v3985
    %v4026 = vpack.c.b16 %v3990, %v3986
    %v4027 = vpack.c.b16 %v3991, %v3987
    %v4028 = vpack.c.b16 %v3996, %v3992
    %v4029 = vpack.c.b16 %v3997, %v3993
    %v4030 = vpack.c.b16 %v3998, %v3994
    %v4031 = vpack.c.b16 %v3999, %v3995
    %4064 = vmatprep.subr.bf16.mxu0 0
    %4065 = vmatpush1.bf16.msra.mxu0 %v422
    %4066 = vmatprep.subr.bf16.mxu0 0
    %4067 = vmatpush1.bf16.msra.mxu0 %v421
    %4068 = vmatprep.subr.bf16.mxu0 0
    %4069 = vmatpush1.bf16.msra.mxu0 %v420
    %4070 = vmatprep.subr.bf16.mxu0 0
    %4071 = vmatpush1.bf16.msra.mxu0 %v419
    %4072 = vmatprep.subr.bf16.mxu0 0
    %4073 = vmatpush1.bf16.msra.mxu0 %v418
    %4074 = vmatprep.subr.bf16.mxu0 0
    %4075 = vmatpush1.bf16.msra.mxu0 %v417
    %4076 = vmatprep.subr.bf16.mxu0 0
    %4077 = vmatpush1.bf16.msra.mxu0 %v416
    %4078 = vmatprep.subr.bf16.mxu0 0
    %4079 = vmatpush1.bf16.msra.mxu0 %v415
    %4080 = vmatprep.subr.bf16.mxu0 0
    %4081 = vmatpush2.bf16.msra.mxu0 %v430
    %4082 = vmatprep.subr.bf16.mxu0 0
    %4083 = vmatpush2.bf16.msra.mxu0 %v429
    %4084 = vmatprep.subr.bf16.mxu0 0
    %4085 = vmatpush2.bf16.msra.mxu0 %v428
    %4086 = vmatprep.subr.bf16.mxu0 0
    %4087 = vmatpush2.bf16.msra.mxu0 %v427
    %4088 = vmatprep.subr.bf16.mxu0 0
    %4089 = vmatpush2.bf16.msra.mxu0 %v426
    %4090 = vmatprep.subr.bf16.mxu0 0
    %4091 = vmatpush2.bf16.msra.mxu0 %v425
    %4092 = vmatprep.subr.bf16.mxu0 0
    %4093 = vmatpush2.bf16.msra.mxu0 %v424
    %4094 = vmatprep.subr.bf16.mxu0 0
    %4095 = vmatpush2.bf16.msra.mxu0 %v423
    %4096 = vmatprep.mubr.bf16.mxu0 %v4001
    %4097 = vmatmul.mubr.bf16.gmra.mxu0 %v4000
    %v4098 = vpop.f32.mrf.mxu0
    %v4099 = vadd.f32 0.0, %v4098
    %v4100 = vpop.f32.mrf.mxu0
    %v4101 = vpop.f32.mrf.mxu0
    %v4102 = vadd.f32 0.0, %v4101
    %v4103 = vpop.f32.mrf.mxu0
    %4104 = vmatprep.mubr.bf16.mxu0 %v4005
    %4105 = vmatmul.mubr.bf16.gmra.mxu0 %v4004
    %v4106 = vpop.f32.mrf.mxu0
    %v4107 = vadd.f32 0.0, %v4106
    %v4108 = vpop.f32.mrf.mxu0
    %v4109 = vpop.f32.mrf.mxu0
    %v4110 = vadd.f32 0.0, %v4109
    %v4111 = vpop.f32.mrf.mxu0
    %4112 = vmatprep.mubr.bf16.mxu0 %v4009
    %4113 = vmatmul.mubr.bf16.gmra.mxu0 %v4008
    %v4114 = vpop.f32.mrf.mxu0
    %v4115 = vadd.f32 0.0, %v4114
    %v4116 = vpop.f32.mrf.mxu0
    %v4117 = vpop.f32.mrf.mxu0
    %v4118 = vadd.f32 0.0, %v4117
    %v4119 = vpop.f32.mrf.mxu0
    %4120 = vmatprep.mubr.bf16.mxu0 %v4013
    %4121 = vmatmul.mubr.bf16.gmra.mxu0 %v4012
    %v4122 = vpop.f32.mrf.mxu0
    %v4123 = vadd.f32 0.0, %v4122
    %v4124 = vpop.f32.mrf.mxu0
    %v4125 = vpop.f32.mrf.mxu0
    %v4126 = vadd.f32 0.0, %v4125
    %v4127 = vpop.f32.mrf.mxu0
    %4128 = vmatprep.mubr.bf16.mxu0 %v4017
    %4129 = vmatmul.mubr.bf16.gmra.mxu0 %v4016
    %v4130 = vpop.f32.mrf.mxu0
    %v4131 = vadd.f32 0.0, %v4130
    %v4132 = vpop.f32.mrf.mxu0
    %v4133 = vpop.f32.mrf.mxu0
    %v4134 = vadd.f32 0.0, %v4133
    %v4135 = vpop.f32.mrf.mxu0
    %4136 = vmatprep.mubr.bf16.mxu0 %v4021
    %4137 = vmatmul.mubr.bf16.gmra.mxu0 %v4020
    %v4138 = vpop.f32.mrf.mxu0
    %v4139 = vadd.f32 0.0, %v4138
    %v4140 = vpop.f32.mrf.mxu0
    %v4141 = vpop.f32.mrf.mxu0
    %v4142 = vadd.f32 0.0, %v4141
    %v4143 = vpop.f32.mrf.mxu0
    %4144 = vmatprep.mubr.bf16.mxu0 %v4025
    %4145 = vmatmul.mubr.bf16.gmra.mxu0 %v4024
    %v4146 = vpop.f32.mrf.mxu0
    %v4147 = vadd.f32 0.0, %v4146
    %v4148 = vpop.f32.mrf.mxu0
    %v4149 = vpop.f32.mrf.mxu0
    %v4150 = vadd.f32 0.0, %v4149
    %v4151 = vpop.f32.mrf.mxu0
    %4152 = vmatprep.mubr.bf16.mxu0 %v4029
    %4153 = vmatmul.mubr.bf16.gmra.mxu0 %v4028
    %v4154 = vpop.f32.mrf.mxu0
    %v4155 = vadd.f32 0.0, %v4154
    %v4156 = vpop.f32.mrf.mxu0
    %v4157 = vpop.f32.mrf.mxu0
    %v4158 = vpop.f32.mrf.mxu0
    %4159 = vdwg.mxu0
    %4160 = vmatprep.subr.bf16.mxu0 0
    %4161 = vmatpush1.bf16.msra.mxu0 %v438
    %4162 = vmatprep.subr.bf16.mxu0 0
    %4163 = vmatpush1.bf16.msra.mxu0 %v437
    %4164 = vmatprep.subr.bf16.mxu0 0
    %4165 = vmatpush1.bf16.msra.mxu0 %v436
    %4166 = vmatprep.subr.bf16.mxu0 0
    %4167 = vmatpush1.bf16.msra.mxu0 %v435
    %4168 = vmatprep.subr.bf16.mxu0 0
    %4169 = vmatpush1.bf16.msra.mxu0 %v434
    %4170 = vmatprep.subr.bf16.mxu0 0
    %4171 = vmatpush1.bf16.msra.mxu0 %v433
    %4172 = vmatprep.subr.bf16.mxu0 0
    %4173 = vmatpush1.bf16.msra.mxu0 %v432
    %4174 = vmatprep.subr.bf16.mxu0 0
    %4175 = vmatpush1.bf16.msra.mxu0 %v431
    %4176 = vmatprep.subr.bf16.mxu0 0
    %4177 = vmatpush2.bf16.msra.mxu0 %v446
    %4178 = vmatprep.subr.bf16.mxu0 0
    %4179 = vmatpush2.bf16.msra.mxu0 %v445
    %4180 = vmatprep.subr.bf16.mxu0 0
    %4181 = vmatpush2.bf16.msra.mxu0 %v444
    %4182 = vmatprep.subr.bf16.mxu0 0
    %4183 = vmatpush2.bf16.msra.mxu0 %v443
    %4184 = vmatprep.subr.bf16.mxu0 0
    %4185 = vmatpush2.bf16.msra.mxu0 %v442
    %4186 = vmatprep.subr.bf16.mxu0 0
    %4187 = vmatpush2.bf16.msra.mxu0 %v441
    %4188 = vmatprep.subr.bf16.mxu0 0
    %4189 = vmatpush2.bf16.msra.mxu0 %v440
    %4190 = vmatprep.subr.bf16.mxu0 0
    %4191 = vmatpush2.bf16.msra.mxu0 %v439
    %4192 = vmatprep.mubr.bf16.mxu0 %v4003
    %4193 = vmatmul.mubr.bf16.gmra.mxu0 %v4002
    %v4194 = vpop.f32.mrf.mxu0
    %v4195 = vadd.f32 %v4099, %v4194
    %v4196 = vpop.f32.mrf.mxu0
    %v4197 = vpop.f32.mrf.mxu0
    %v4198 = vadd.f32 %v4102, %v4197
    %v4199 = vpop.f32.mrf.mxu0
    %4200 = vmatprep.mubr.bf16.mxu0 %v4007
    %4201 = vmatmul.mubr.bf16.gmra.mxu0 %v4006
    %v4202 = vpop.f32.mrf.mxu0
    %v4203 = vadd.f32 %v4107, %v4202
    %v4204 = vpop.f32.mrf.mxu0
    %v4205 = vpop.f32.mrf.mxu0
    %v4206 = vadd.f32 %v4110, %v4205
    %v4207 = vpop.f32.mrf.mxu0
    %4208 = vmatprep.mubr.bf16.mxu0 %v4011
    %4209 = vmatmul.mubr.bf16.gmra.mxu0 %v4010
    %v4210 = vpop.f32.mrf.mxu0
    %v4211 = vadd.f32 %v4115, %v4210
    %v4212 = vpop.f32.mrf.mxu0
    %v4213 = vpop.f32.mrf.mxu0
    %v4214 = vadd.f32 %v4118, %v4213
    %v4215 = vpop.f32.mrf.mxu0
    %4216 = vmatprep.mubr.bf16.mxu0 %v4015
    %4217 = vmatmul.mubr.bf16.gmra.mxu0 %v4014
    %v4218 = vpop.f32.mrf.mxu0
    %v4219 = vadd.f32 %v4123, %v4218
    %v4220 = vpop.f32.mrf.mxu0
    %v4221 = vpop.f32.mrf.mxu0
    %v4222 = vadd.f32 %v4126, %v4221
    %v4223 = vpop.f32.mrf.mxu0
    %4224 = vmatprep.mubr.bf16.mxu0 %v4019
    %4225 = vmatmul.mubr.bf16.gmra.mxu0 %v4018
    %v4226 = vpop.f32.mrf.mxu0
    %v4227 = vadd.f32 %v4131, %v4226
    %v4228 = vpop.f32.mrf.mxu0
    %v4229 = vpop.f32.mrf.mxu0
    %v4230 = vadd.f32 %v4134, %v4229
    %v4231 = vpop.f32.mrf.mxu0
    %4232 = vmatprep.mubr.bf16.mxu0 %v4023
    %4233 = vmatmul.mubr.bf16.gmra.mxu0 %v4022
    %v4234 = vpop.f32.mrf.mxu0
    %v4235 = vadd.f32 %v4139, %v4234
    %v4236 = vpop.f32.mrf.mxu0
    %v4237 = vpop.f32.mrf.mxu0
    %v4238 = vadd.f32 %v4142, %v4237
    %v4239 = vpop.f32.mrf.mxu0
    %4240 = vmatprep.mubr.bf16.mxu0 %v4027
    %4241 = vmatmul.mubr.bf16.gmra.mxu0 %v4026
    %v4242 = vpop.f32.mrf.mxu0
    %v4243 = vadd.f32 %v4147, %v4242
    %v4244 = vpop.f32.mrf.mxu0
    %v4245 = vpop.f32.mrf.mxu0
    %v4246 = vadd.f32 %v4150, %v4245
    %v4247 = vpop.f32.mrf.mxu0
    %4248 = vmatprep.mubr.bf16.mxu0 %v4031
    %4249 = vmatmul.mubr.bf16.gmra.mxu0 %v4030
    %v4250 = vpop.f32.mrf.mxu0
    %v4251 = vadd.f32 %v4155, %v4250
    %v4252 = vpop.f32.mrf.mxu0
    %v4253 = vpop.f32.mrf.mxu0
    %v4254 = vpop.f32.mrf.mxu0
    %4255 = vdwg.mxu0
    %v4256 = vmax.f32 %v3856, %v4195
    %v4257 = vmax.f32 %v3857, %v4198
    %v4258 = vmax.f32 %v3858, %v4203
    %v4259 = vmax.f32 %v3859, %v4206
    %v4260 = vmax.f32 %v3860, %v4211
    %v4261 = vmax.f32 %v3861, %v4214
    %v4262 = vmax.f32 %v3862, %v4219
    %v4263 = vmax.f32 %v3863, %v4222
    %v4264 = vmax.f32 %v3864, %v4227
    %v4265 = vmax.f32 %v3865, %v4230
    %v4266 = vmax.f32 %v3866, %v4235
    %v4267 = vmax.f32 %v3867, %v4238
    %v4268 = vmax.f32 %v3868, %v4243
    %v4269 = vmax.f32 %v3869, %v4246
    %v4270 = vmax.f32 %v3870, %v4251
    %v4271 = vld [vmem:[%s2] sm:$0x1]
    %v4273 = vlaneseq
    %v4274 = vshrl.u32 %v4273, 7
    %v4275 = vsub.s32 0, %v4274
    %v4276 = vrot.slane %v4271, %v4275
    %v4278 = vadd.f32 %v4256, %v4276
    %v4279 = vadd.f32 %v4257, %v4276
    %v4280 = vadd.f32 %v4258, %v4276
    %v4281 = vadd.f32 %v4259, %v4276
    %v4282 = vadd.f32 %v4260, %v4276
    %v4283 = vadd.f32 %v4261, %v4276
    %v4284 = vadd.f32 %v4262, %v4276
    %v4285 = vadd.f32 %v4263, %v4276
    %v4286 = vadd.f32 %v4264, %v4276
    %v4287 = vadd.f32 %v4265, %v4276
    %v4288 = vadd.f32 %v4266, %v4276
    %v4289 = vadd.f32 %v4267, %v4276
    %v4290 = vadd.f32 %v4268, %v4276
    %v4291 = vadd.f32 %v4269, %v4276
    %v4292 = vadd.f32 %v4270, %v4276
    %v4293 = vmax.f32 %v4278, 0.0
    %v4294 = vmax.f32 %v4279, 0.0
    %v4295 = vmax.f32 %v4280, 0.0
    %v4296 = vmax.f32 %v4281, 0.0
    %v4297 = vmax.f32 %v4282, 0.0
    %v4298 = vmax.f32 %v4283, 0.0
    %v4299 = vmax.f32 %v4284, 0.0
    %v4300 = vmax.f32 %v4285, 0.0
    %v4301 = vmax.f32 %v4286, 0.0
    %v4302 = vmax.f32 %v4287, 0.0
    %v4303 = vmax.f32 %v4288, 0.0
    %v4304 = vmax.f32 %v4289, 0.0
    %v4305 = vmax.f32 %v4290, 0.0
    %v4306 = vmax.f32 %v4291, 0.0
    %v4307 = vmax.f32 %v4292, 0.0
    %v4308 = vpack.c.bf16 %v4294, %v4293
    %v4309 = vpack.c.bf16 %v4296, %v4295
    %v4310 = vpack.c.bf16 %v4298, %v4297
    %v4311 = vld [vmem:[%s3] sm:$0xf]
    %v4312 = vld [vmem:[%s3 + $0x4] sm:$0xf]
    %v4313 = vld [vmem:[%s3 + $0x8] sm:$0xf]
    %v4314 = vld [vmem:[%s3 + $0xc] sm:$0xf]
    %v4315 = vld [vmem:[%s3 + $0x10] sm:$0xf]
    %v4316 = vld [vmem:[%s3 + $0x14] sm:$0xf]
    %v4317 = vld [vmem:[%s3 + $0x18] sm:$0xf]
    %v4318 = vld [vmem:[%s3 + $0x1c] sm:$0xf]
    %v4319 = vpack.c.bf16 %v4295, %v4294
    %v4320 = vpack.c.bf16 %v4297, %v4296
    %v4321 = vpack.c.bf16 %v4299, %v4298
    %s4322 = scalar_lea.vmem %s3, 32
    %v4323 = vld [vmem:[%s4322] sm:$0xf]
    %v4324 = vld [vmem:[%s4322 + $0x4] sm:$0xf]
    %v4325 = vld [vmem:[%s4322 + $0x8] sm:$0xf]
    %v4326 = vld [vmem:[%s4322 + $0xc] sm:$0xf]
    %v4327 = vld [vmem:[%s4322 + $0x10] sm:$0xf]
    %v4328 = vld [vmem:[%s4322 + $0x14] sm:$0xf]
    %v4329 = vld [vmem:[%s4322 + $0x18] sm:$0xf]
    %v4330 = vld [vmem:[%s4322 + $0x1c] sm:$0xf]
    %v4339 = vunpack.c.l.b16 %v4323
    %v4340 = vunpack.c.l.b16 %v4324
    %v4341 = vunpack.c.l.b16 %v4325
    %v4342 = vunpack.c.l.b16 %v4326
    %v4343 = vunpack.c.l.b16 %v4327
    %v4344 = vunpack.c.l.b16 %v4328
    %v4345 = vunpack.c.l.b16 %v4329
    %v4346 = vunpack.c.l.b16 %v4330
    %v4347 = vpack.c.b16 %v4340, %v4339
    %v4348 = vpack.c.b16 %v4342, %v4341
    %v4349 = vpack.c.b16 %v4344, %v4343
    %v4350 = vpack.c.b16 %v4346, %v4345
    %vm4355 = vcmask 523264
    %v4357 = vsel %vm4355, %v4319, 0
    %v4360 = vsel %vm4355, %v4320, 0
    %v4363 = vsel %vm4355, %v4321, 0
    %4365 = vmatprep.subr.bf16.mxu0 0
    %4366 = vmatpush1.bf16.msra.mxu0 0
    %4367 = vmatprep.subr.bf16.mxu0 0
    %4368 = vmatpush1.bf16.msra.mxu0 0
    %4369 = vmatprep.subr.bf16.mxu0 0
    %4370 = vmatpush1.bf16.msra.mxu0 0
    %4371 = vmatprep.subr.bf16.mxu0 0
    %4372 = vmatpush1.bf16.msra.mxu0 0
    %4373 = vmatprep.subr.bf16.mxu0 0
    %4374 = vmatpush1.bf16.msra.mxu0 %v4350
    %4375 = vmatprep.subr.bf16.mxu0 0
    %4376 = vmatpush1.bf16.msra.mxu0 %v4349
    %4377 = vmatprep.subr.bf16.mxu0 0
    %4378 = vmatpush1.bf16.msra.mxu0 %v4348
    %4379 = vmatprep.subr.bf16.mxu0 0
    %4380 = vmatpush1.bf16.msra.mxu0 %v4347
    %4381 = vmatprep.subr.bf16.mxu0 0
    %4382 = vmatpush2.bf16.msra.mxu0 0
    %4383 = vmatprep.subr.bf16.mxu0 0
    %4384 = vmatpush2.bf16.msra.mxu0 0
    %4385 = vmatprep.subr.bf16.mxu0 0
    %4386 = vmatpush2.bf16.msra.mxu0 0
    %4387 = vmatprep.subr.bf16.mxu0 0
    %4388 = vmatpush2.bf16.msra.mxu0 0
    %4389 = vmatprep.subr.bf16.mxu0 0
    %4390 = vmatpush2.bf16.msra.mxu0 0
    %4391 = vmatprep.subr.bf16.mxu0 0
    %4392 = vmatpush2.bf16.msra.mxu0 0
    %4393 = vmatprep.subr.bf16.mxu0 0
    %4394 = vmatpush2.bf16.msra.mxu0 0
    %4395 = vmatprep.subr.bf16.mxu0 0
    %4396 = vmatpush2.bf16.msra.mxu0 0
    %4397 = vmatprep.mubr.bf16.mxu0 0
    %4398 = vmatmul.mubr.bf16.gmra.mxu0 %v4357
    %v4399 = vpop.f32.mrf.mxu0
    %v4400 = vadd.f32 0.0, %v4399
    %v4401 = vpop.f32.mrf.mxu0
    %v4402 = vpop.f32.mrf.mxu0
    %v4403 = vadd.f32 0.0, %v4402
    %v4404 = vpop.f32.mrf.mxu0
    %4405 = vmatprep.mubr.bf16.mxu0 0
    %4406 = vmatmul.mubr.bf16.gmra.mxu0 %v4360
    %v4407 = vpop.f32.mrf.mxu0
    %v4408 = vadd.f32 0.0, %v4407
    %v4409 = vpop.f32.mrf.mxu0
    %v4410 = vpop.f32.mrf.mxu0
    %v4411 = vadd.f32 0.0, %v4410
    %v4412 = vpop.f32.mrf.mxu0
    %4413 = vmatprep.mubr.bf16.mxu0 0
    %4414 = vmatmul.mubr.bf16.gmra.mxu0 %v4363
    %v4415 = vpop.f32.mrf.mxu0
    %v4416 = vadd.f32 0.0, %v4415
    %v4417 = vpop.f32.mrf.mxu0
    %v4418 = vpop.f32.mrf.mxu0
    %v4419 = vadd.f32 0.0, %v4418
    %v4420 = vpop.f32.mrf.mxu0
    %4421 = vdwg.mxu0
    %v4430 = vunpack.c.l.b16 %v4311
    %v4431 = vunpack.c.l.b16 %v4312
    %v4432 = vunpack.c.l.b16 %v4313
    %v4433 = vunpack.c.l.b16 %v4314
    %v4434 = vunpack.c.l.b16 %v4315
    %v4435 = vunpack.c.l.b16 %v4316
    %v4436 = vunpack.c.l.b16 %v4317
    %v4437 = vunpack.c.l.b16 %v4318
    %v4438 = vpack.c.b16 %v4431, %v4430
    %v4439 = vpack.c.b16 %v4433, %v4432
    %v4440 = vpack.c.b16 %v4435, %v4434
    %v4441 = vpack.c.b16 %v4437, %v4436
    %v4447 = vsel %vm4355, %v4308, 0
    %v4450 = vsel %vm4355, %v4309, 0
    %v4453 = vsel %vm4355, %v4310, 0
    %4455 = vmatprep.subr.bf16.mxu0 0
    %4456 = vmatpush1.bf16.msra.mxu0 0
    %4457 = vmatprep.subr.bf16.mxu0 0
    %4458 = vmatpush1.bf16.msra.mxu0 0
    %4459 = vmatprep.subr.bf16.mxu0 0
    %4460 = vmatpush1.bf16.msra.mxu0 0
    %4461 = vmatprep.subr.bf16.mxu0 0
    %4462 = vmatpush1.bf16.msra.mxu0 0
    %4463 = vmatprep.subr.bf16.mxu0 0
    %4464 = vmatpush1.bf16.msra.mxu0 %v4441
    %4465 = vmatprep.subr.bf16.mxu0 0
    %4466 = vmatpush1.bf16.msra.mxu0 %v4440
    %4467 = vmatprep.subr.bf16.mxu0 0
    %4468 = vmatpush1.bf16.msra.mxu0 %v4439
    %4469 = vmatprep.subr.bf16.mxu0 0
    %4470 = vmatpush1.bf16.msra.mxu0 %v4438
    %4471 = vmatprep.subr.bf16.mxu0 0
    %4472 = vmatpush2.bf16.msra.mxu0 0
    %4473 = vmatprep.subr.bf16.mxu0 0
    %4474 = vmatpush2.bf16.msra.mxu0 0
    %4475 = vmatprep.subr.bf16.mxu0 0
    %4476 = vmatpush2.bf16.msra.mxu0 0
    %4477 = vmatprep.subr.bf16.mxu0 0
    %4478 = vmatpush2.bf16.msra.mxu0 0
    %4479 = vmatprep.subr.bf16.mxu0 0
    %4480 = vmatpush2.bf16.msra.mxu0 0
    %4481 = vmatprep.subr.bf16.mxu0 0
    %4482 = vmatpush2.bf16.msra.mxu0 0
    %4483 = vmatprep.subr.bf16.mxu0 0
    %4484 = vmatpush2.bf16.msra.mxu0 0
    %4485 = vmatprep.subr.bf16.mxu0 0
    %4486 = vmatpush2.bf16.msra.mxu0 0
    %4487 = vmatprep.mubr.bf16.mxu0 0
    %4488 = vmatmul.mubr.bf16.gmra.mxu0 %v4447
    %v4489 = vpop.f32.mrf.mxu0
    %v4490 = vadd.f32 %v4400, %v4489
    %v4491 = vpop.f32.mrf.mxu0
    %v4492 = vpop.f32.mrf.mxu0
    %v4493 = vadd.f32 %v4403, %v4492
    %v4494 = vpop.f32.mrf.mxu0
    %4495 = vmatprep.mubr.bf16.mxu0 0
    %4496 = vmatmul.mubr.bf16.gmra.mxu0 %v4450
    %v4497 = vpop.f32.mrf.mxu0
    %v4498 = vadd.f32 %v4408, %v4497
    %v4499 = vpop.f32.mrf.mxu0
    %v4500 = vpop.f32.mrf.mxu0
    %v4501 = vadd.f32 %v4411, %v4500
    %v4502 = vpop.f32.mrf.mxu0
    %4503 = vmatprep.mubr.bf16.mxu0 0
    %4504 = vmatmul.mubr.bf16.gmra.mxu0 %v4453
    %v4505 = vpop.f32.mrf.mxu0
    %v4506 = vadd.f32 %v4416, %v4505
    %v4507 = vpop.f32.mrf.mxu0
    %v4508 = vpop.f32.mrf.mxu0
    %v4509 = vadd.f32 %v4419, %v4508
    %v4510 = vpop.f32.mrf.mxu0
    %4511 = vdwg.mxu0
    %v4512 = vpack.c.bf16 %v4300, %v4299
    %s4513 = scalar_lea.vmem %s3, 64
    %v4514 = vld [vmem:[%s4513] sm:$0xf]
    %v4515 = vld [vmem:[%s4513 + $0x4] sm:$0xf]
    %v4516 = vld [vmem:[%s4513 + $0x8] sm:$0xf]
    %v4517 = vld [vmem:[%s4513 + $0xc] sm:$0xf]
    %v4518 = vld [vmem:[%s4513 + $0x10] sm:$0xf]
    %v4519 = vld [vmem:[%s4513 + $0x14] sm:$0xf]
    %v4520 = vld [vmem:[%s4513 + $0x18] sm:$0xf]
    %v4521 = vld [vmem:[%s4513 + $0x1c] sm:$0xf]
    %v4530 = vunpack.c.l.b16 %v4514
    %v4531 = vunpack.c.l.b16 %v4515
    %v4532 = vunpack.c.l.b16 %v4516
    %v4533 = vunpack.c.l.b16 %v4517
    %v4534 = vunpack.c.l.b16 %v4518
    %v4535 = vunpack.c.l.b16 %v4519
    %v4536 = vunpack.c.l.b16 %v4520
    %v4537 = vunpack.c.l.b16 %v4521
    %v4538 = vpack.c.b16 %v4531, %v4530
    %v4539 = vpack.c.b16 %v4533, %v4532
    %v4540 = vpack.c.b16 %v4535, %v4534
    %v4541 = vpack.c.b16 %v4537, %v4536
    %v4547 = vsel %vm4355, %v4512, 0
    %4549 = vmatprep.subr.bf16.mxu0 0
    %4550 = vmatpush1.bf16.msra.mxu0 0
    %4551 = vmatprep.subr.bf16.mxu0 0
    %4552 = vmatpush1.bf16.msra.mxu0 0
    %4553 = vmatprep.subr.bf16.mxu0 0
    %4554 = vmatpush1.bf16.msra.mxu0 0
    %4555 = vmatprep.subr.bf16.mxu0 0
    %4556 = vmatpush1.bf16.msra.mxu0 0
    %4557 = vmatprep.subr.bf16.mxu0 0
    %4558 = vmatpush1.bf16.msra.mxu0 %v4541
    %4559 = vmatprep.subr.bf16.mxu0 0
    %4560 = vmatpush1.bf16.msra.mxu0 %v4540
    %4561 = vmatprep.subr.bf16.mxu0 0
    %4562 = vmatpush1.bf16.msra.mxu0 %v4539
    %4563 = vmatprep.subr.bf16.mxu0 0
    %4564 = vmatpush1.bf16.msra.mxu0 %v4538
    %4565 = vmatprep.subr.bf16.mxu0 0
    %4566 = vmatpush2.bf16.msra.mxu0 0
    %4567 = vmatprep.subr.bf16.mxu0 0
    %4568 = vmatpush2.bf16.msra.mxu0 0
    %4569 = vmatprep.subr.bf16.mxu0 0
    %4570 = vmatpush2.bf16.msra.mxu0 0
    %4571 = vmatprep.subr.bf16.mxu0 0
    %4572 = vmatpush2.bf16.msra.mxu0 0
    %4573 = vmatprep.subr.bf16.mxu0 0
    %4574 = vmatpush2.bf16.msra.mxu0 0
    %4575 = vmatprep.subr.bf16.mxu0 0
    %4576 = vmatpush2.bf16.msra.mxu0 0
    %4577 = vmatprep.subr.bf16.mxu0 0
    %4578 = vmatpush2.bf16.msra.mxu0 0
    %4579 = vmatprep.subr.bf16.mxu0 0
    %4580 = vmatpush2.bf16.msra.mxu0 0
    %4581 = vmatprep.mubr.bf16.mxu0 0
    %4582 = vmatmul.mubr.bf16.gmra.mxu0 %v4450
    %v4583 = vpop.f32.mrf.mxu0
    %v4584 = vadd.f32 0.0, %v4583
    %v4585 = vpop.f32.mrf.mxu0
    %v4586 = vpop.f32.mrf.mxu0
    %v4587 = vadd.f32 0.0, %v4586
    %v4588 = vpop.f32.mrf.mxu0
    %4589 = vmatprep.mubr.bf16.mxu0 0
    %4590 = vmatmul.mubr.bf16.gmra.mxu0 %v4453
    %v4591 = vpop.f32.mrf.mxu0
    %v4592 = vadd.f32 0.0, %v4591
    %v4593 = vpop.f32.mrf.mxu0
    %v4594 = vpop.f32.mrf.mxu0
    %v4595 = vadd.f32 0.0, %v4594
    %v4596 = vpop.f32.mrf.mxu0
    %4597 = vmatprep.mubr.bf16.mxu0 0
    %4598 = vmatmul.mubr.bf16.gmra.mxu0 %v4547
    %v4599 = vpop.f32.mrf.mxu0
    %v4600 = vadd.f32 0.0, %v4599
    %v4601 = vpop.f32.mrf.mxu0
    %v4602 = vpop.f32.mrf.mxu0
    %v4603 = vadd.f32 0.0, %v4602
    %v4604 = vpop.f32.mrf.mxu0
    %4605 = vdwg.mxu0
    %v4606 = vadd.f32 %v4490, %v4584
    %v4607 = vadd.f32 %v4493, %v4587
    %v4608 = vadd.f32 %v4498, %v4592
    %v4609 = vadd.f32 %v4501, %v4595
    %v4610 = vadd.f32 %v4506, %v4600
    %v4611 = vadd.f32 %v4509, %v4603
    %v4612 = vpack.c.bf16 %v4301, %v4300
    %s4613 = scalar_lea.vmem %s3, 96
    %v4614 = vld [vmem:[%s4613] sm:$0xf]
    %v4615 = vld [vmem:[%s4613 + $0x4] sm:$0xf]
    %v4616 = vld [vmem:[%s4613 + $0x8] sm:$0xf]
    %v4617 = vld [vmem:[%s4613 + $0xc] sm:$0xf]
    %v4618 = vld [vmem:[%s4613 + $0x10] sm:$0xf]
    %v4619 = vld [vmem:[%s4613 + $0x14] sm:$0xf]
    %v4620 = vld [vmem:[%s4613 + $0x18] sm:$0xf]
    %v4621 = vld [vmem:[%s4613 + $0x1c] sm:$0xf]
    %v4630 = vunpack.c.l.b16 %v4614
    %v4631 = vunpack.c.l.b16 %v4615
    %v4632 = vunpack.c.l.b16 %v4616
    %v4633 = vunpack.c.l.b16 %v4617
    %v4634 = vunpack.c.l.b16 %v4618
    %v4635 = vunpack.c.l.b16 %v4619
    %v4636 = vunpack.c.l.b16 %v4620
    %v4637 = vunpack.c.l.b16 %v4621
    %v4638 = vpack.c.b16 %v4631, %v4630
    %v4639 = vpack.c.b16 %v4633, %v4632
    %v4640 = vpack.c.b16 %v4635, %v4634
    %v4641 = vpack.c.b16 %v4637, %v4636
    %v4647 = vsel %vm4355, %v4612, 0
    %4649 = vmatprep.subr.bf16.mxu0 0
    %4650 = vmatpush1.bf16.msra.mxu0 0
    %4651 = vmatprep.subr.bf16.mxu0 0
    %4652 = vmatpush1.bf16.msra.mxu0 0
    %4653 = vmatprep.subr.bf16.mxu0 0
    %4654 = vmatpush1.bf16.msra.mxu0 0
    %4655 = vmatprep.subr.bf16.mxu0 0
    %4656 = vmatpush1.bf16.msra.mxu0 0
    %4657 = vmatprep.subr.bf16.mxu0 0
    %4658 = vmatpush1.bf16.msra.mxu0 %v4641
    %4659 = vmatprep.subr.bf16.mxu0 0
    %4660 = vmatpush1.bf16.msra.mxu0 %v4640
    %4661 = vmatprep.subr.bf16.mxu0 0
    %4662 = vmatpush1.bf16.msra.mxu0 %v4639
    %4663 = vmatprep.subr.bf16.mxu0 0
    %4664 = vmatpush1.bf16.msra.mxu0 %v4638
    %4665 = vmatprep.subr.bf16.mxu0 0
    %4666 = vmatpush2.bf16.msra.mxu0 0
    %4667 = vmatprep.subr.bf16.mxu0 0
    %4668 = vmatpush2.bf16.msra.mxu0 0
    %4669 = vmatprep.subr.bf16.mxu0 0
    %4670 = vmatpush2.bf16.msra.mxu0 0
    %4671 = vmatprep.subr.bf16.mxu0 0
    %4672 = vmatpush2.bf16.msra.mxu0 0
    %4673 = vmatprep.subr.bf16.mxu0 0
    %4674 = vmatpush2.bf16.msra.mxu0 0
    %4675 = vmatprep.subr.bf16.mxu0 0
    %4676 = vmatpush2.bf16.msra.mxu0 0
    %4677 = vmatprep.subr.bf16.mxu0 0
    %4678 = vmatpush2.bf16.msra.mxu0 0
    %4679 = vmatprep.subr.bf16.mxu0 0
    %4680 = vmatpush2.bf16.msra.mxu0 0
    %4681 = vmatprep.mubr.bf16.mxu0 0
    %4682 = vmatmul.mubr.bf16.gmra.mxu0 %v4360
    %v4683 = vpop.f32.mrf.mxu0
    %v4684 = vadd.f32 0.0, %v4683
    %v4685 = vpop.f32.mrf.mxu0
    %v4686 = vpop.f32.mrf.mxu0
    %v4687 = vadd.f32 0.0, %v4686
    %v4688 = vpop.f32.mrf.mxu0
    %4689 = vmatprep.mubr.bf16.mxu0 0
    %4690 = vmatmul.mubr.bf16.gmra.mxu0 %v4363
    %v4691 = vpop.f32.mrf.mxu0
    %v4692 = vadd.f32 0.0, %v4691
    %v4693 = vpop.f32.mrf.mxu0
    %v4694 = vpop.f32.mrf.mxu0
    %v4695 = vadd.f32 0.0, %v4694
    %v4696 = vpop.f32.mrf.mxu0
    %4697 = vmatprep.mubr.bf16.mxu0 0
    %4698 = vmatmul.mubr.bf16.gmra.mxu0 %v4647
    %v4699 = vpop.f32.mrf.mxu0
    %v4700 = vadd.f32 0.0, %v4699
    %v4701 = vpop.f32.mrf.mxu0
    %v4702 = vpop.f32.mrf.mxu0
    %v4703 = vadd.f32 0.0, %v4702
    %v4704 = vpop.f32.mrf.mxu0
    %4705 = vdwg.mxu0
    %v4706 = vadd.f32 %v4606, %v4684
    %v4707 = vadd.f32 %v4607, %v4687
    %v4708 = vadd.f32 %v4608, %v4692
    %v4709 = vadd.f32 %v4609, %v4695
    %v4710 = vadd.f32 %v4610, %v4700
    %v4711 = vadd.f32 %v4611, %v4703
    %v4712 = vpack.c.bf16 %v4302, %v4301
    %s4713 = scalar_lea.vmem %s3, 128
    %v4714 = vld [vmem:[%s4713] sm:$0xf]
    %v4715 = vld [vmem:[%s4713 + $0x4] sm:$0xf]
    %v4716 = vld [vmem:[%s4713 + $0x8] sm:$0xf]
    %v4717 = vld [vmem:[%s4713 + $0xc] sm:$0xf]
    %v4718 = vld [vmem:[%s4713 + $0x10] sm:$0xf]
    %v4719 = vld [vmem:[%s4713 + $0x14] sm:$0xf]
    %v4720 = vld [vmem:[%s4713 + $0x18] sm:$0xf]
    %v4721 = vld [vmem:[%s4713 + $0x1c] sm:$0xf]
    %v4730 = vunpack.c.l.b16 %v4714
    %v4731 = vunpack.c.l.b16 %v4715
    %v4732 = vunpack.c.l.b16 %v4716
    %v4733 = vunpack.c.l.b16 %v4717
    %v4734 = vunpack.c.l.b16 %v4718
    %v4735 = vunpack.c.l.b16 %v4719
    %v4736 = vunpack.c.l.b16 %v4720
    %v4737 = vunpack.c.l.b16 %v4721
    %v4738 = vpack.c.b16 %v4731, %v4730
    %v4739 = vpack.c.b16 %v4733, %v4732
    %v4740 = vpack.c.b16 %v4735, %v4734
    %v4741 = vpack.c.b16 %v4737, %v4736
    %v4747 = vsel %vm4355, %v4712, 0
    %4749 = vmatprep.subr.bf16.mxu0 0
    %4750 = vmatpush1.bf16.msra.mxu0 0
    %4751 = vmatprep.subr.bf16.mxu0 0
    %4752 = vmatpush1.bf16.msra.mxu0 0
    %4753 = vmatprep.subr.bf16.mxu0 0
    %4754 = vmatpush1.bf16.msra.mxu0 0
    %4755 = vmatprep.subr.bf16.mxu0 0
    %4756 = vmatpush1.bf16.msra.mxu0 0
    %4757 = vmatprep.subr.bf16.mxu0 0
    %4758 = vmatpush1.bf16.msra.mxu0 %v4741
    %4759 = vmatprep.subr.bf16.mxu0 0
    %4760 = vmatpush1.bf16.msra.mxu0 %v4740
    %4761 = vmatprep.subr.bf16.mxu0 0
    %4762 = vmatpush1.bf16.msra.mxu0 %v4739
    %4763 = vmatprep.subr.bf16.mxu0 0
    %4764 = vmatpush1.bf16.msra.mxu0 %v4738
    %4765 = vmatprep.subr.bf16.mxu0 0
    %4766 = vmatpush2.bf16.msra.mxu0 0
    %4767 = vmatprep.subr.bf16.mxu0 0
    %4768 = vmatpush2.bf16.msra.mxu0 0
    %4769 = vmatprep.subr.bf16.mxu0 0
    %4770 = vmatpush2.bf16.msra.mxu0 0
    %4771 = vmatprep.subr.bf16.mxu0 0
    %4772 = vmatpush2.bf16.msra.mxu0 0
    %4773 = vmatprep.subr.bf16.mxu0 0
    %4774 = vmatpush2.bf16.msra.mxu0 0
    %4775 = vmatprep.subr.bf16.mxu0 0
    %4776 = vmatpush2.bf16.msra.mxu0 0
    %4777 = vmatprep.subr.bf16.mxu0 0
    %4778 = vmatpush2.bf16.msra.mxu0 0
    %4779 = vmatprep.subr.bf16.mxu0 0
    %4780 = vmatpush2.bf16.msra.mxu0 0
    %4781 = vmatprep.mubr.bf16.mxu0 0
    %4782 = vmatmul.mubr.bf16.gmra.mxu0 %v4453
    %v4783 = vpop.f32.mrf.mxu0
    %v4784 = vadd.f32 0.0, %v4783
    %v4785 = vpop.f32.mrf.mxu0
    %v4786 = vpop.f32.mrf.mxu0
    %v4787 = vadd.f32 0.0, %v4786
    %v4788 = vpop.f32.mrf.mxu0
    %4789 = vmatprep.mubr.bf16.mxu0 0
    %4790 = vmatmul.mubr.bf16.gmra.mxu0 %v4547
    %v4791 = vpop.f32.mrf.mxu0
    %v4792 = vadd.f32 0.0, %v4791
    %v4793 = vpop.f32.mrf.mxu0
    %v4794 = vpop.f32.mrf.mxu0
    %v4795 = vadd.f32 0.0, %v4794
    %v4796 = vpop.f32.mrf.mxu0
    %4797 = vmatprep.mubr.bf16.mxu0 0
    %4798 = vmatmul.mubr.bf16.gmra.mxu0 %v4747
    %v4799 = vpop.f32.mrf.mxu0
    %v4800 = vadd.f32 0.0, %v4799
    %v4801 = vpop.f32.mrf.mxu0
    %v4802 = vpop.f32.mrf.mxu0
    %v4803 = vadd.f32 0.0, %v4802
    %v4804 = vpop.f32.mrf.mxu0
    %4805 = vdwg.mxu0
    %v4806 = vadd.f32 %v4706, %v4784
    %v4807 = vadd.f32 %v4707, %v4787
    %v4808 = vadd.f32 %v4708, %v4792
    %v4809 = vadd.f32 %v4709, %v4795
    %v4810 = vadd.f32 %v4710, %v4800
    %v4811 = vadd.f32 %v4711, %v4803
    %v4812 = vpack.c.bf16 %v4303, %v4302
    %s4813 = scalar_lea.vmem %s3, 160
    %v4814 = vld [vmem:[%s4813] sm:$0xf]
    %v4815 = vld [vmem:[%s4813 + $0x4] sm:$0xf]
    %v4816 = vld [vmem:[%s4813 + $0x8] sm:$0xf]
    %v4817 = vld [vmem:[%s4813 + $0xc] sm:$0xf]
    %v4818 = vld [vmem:[%s4813 + $0x10] sm:$0xf]
    %v4819 = vld [vmem:[%s4813 + $0x14] sm:$0xf]
    %v4820 = vld [vmem:[%s4813 + $0x18] sm:$0xf]
    %v4821 = vld [vmem:[%s4813 + $0x1c] sm:$0xf]
    %v4830 = vunpack.c.l.b16 %v4814
    %v4831 = vunpack.c.l.b16 %v4815
    %v4832 = vunpack.c.l.b16 %v4816
    %v4833 = vunpack.c.l.b16 %v4817
    %v4834 = vunpack.c.l.b16 %v4818
    %v4835 = vunpack.c.l.b16 %v4819
    %v4836 = vunpack.c.l.b16 %v4820
    %v4837 = vunpack.c.l.b16 %v4821
    %v4838 = vpack.c.b16 %v4831, %v4830
    %v4839 = vpack.c.b16 %v4833, %v4832
    %v4840 = vpack.c.b16 %v4835, %v4834
    %v4841 = vpack.c.b16 %v4837, %v4836
    %v4847 = vsel %vm4355, %v4812, 0
    %4849 = vmatprep.subr.bf16.mxu0 0
    %4850 = vmatpush1.bf16.msra.mxu0 0
    %4851 = vmatprep.subr.bf16.mxu0 0
    %4852 = vmatpush1.bf16.msra.mxu0 0
    %4853 = vmatprep.subr.bf16.mxu0 0
    %4854 = vmatpush1.bf16.msra.mxu0 0
    %4855 = vmatprep.subr.bf16.mxu0 0
    %4856 = vmatpush1.bf16.msra.mxu0 0
    %4857 = vmatprep.subr.bf16.mxu0 0
    %4858 = vmatpush1.bf16.msra.mxu0 %v4841
    %4859 = vmatprep.subr.bf16.mxu0 0
    %4860 = vmatpush1.bf16.msra.mxu0 %v4840
    %4861 = vmatprep.subr.bf16.mxu0 0
    %4862 = vmatpush1.bf16.msra.mxu0 %v4839
    %4863 = vmatprep.subr.bf16.mxu0 0
    %4864 = vmatpush1.bf16.msra.mxu0 %v4838
    %4865 = vmatprep.subr.bf16.mxu0 0
    %4866 = vmatpush2.bf16.msra.mxu0 0
    %4867 = vmatprep.subr.bf16.mxu0 0
    %4868 = vmatpush2.bf16.msra.mxu0 0
    %4869 = vmatprep.subr.bf16.mxu0 0
    %4870 = vmatpush2.bf16.msra.mxu0 0
    %4871 = vmatprep.subr.bf16.mxu0 0
    %4872 = vmatpush2.bf16.msra.mxu0 0
    %4873 = vmatprep.subr.bf16.mxu0 0
    %4874 = vmatpush2.bf16.msra.mxu0 0
    %4875 = vmatprep.subr.bf16.mxu0 0
    %4876 = vmatpush2.bf16.msra.mxu0 0
    %4877 = vmatprep.subr.bf16.mxu0 0
    %4878 = vmatpush2.bf16.msra.mxu0 0
    %4879 = vmatprep.subr.bf16.mxu0 0
    %4880 = vmatpush2.bf16.msra.mxu0 0
    %4881 = vmatprep.mubr.bf16.mxu0 0
    %4882 = vmatmul.mubr.bf16.gmra.mxu0 %v4363
    %v4883 = vpop.f32.mrf.mxu0
    %v4884 = vadd.f32 0.0, %v4883
    %v4885 = vpop.f32.mrf.mxu0
    %v4886 = vpop.f32.mrf.mxu0
    %v4887 = vadd.f32 0.0, %v4886
    %v4888 = vpop.f32.mrf.mxu0
    %4889 = vmatprep.mubr.bf16.mxu0 0
    %4890 = vmatmul.mubr.bf16.gmra.mxu0 %v4647
    %v4891 = vpop.f32.mrf.mxu0
    %v4892 = vadd.f32 0.0, %v4891
    %v4893 = vpop.f32.mrf.mxu0
    %v4894 = vpop.f32.mrf.mxu0
    %v4895 = vadd.f32 0.0, %v4894
    %v4896 = vpop.f32.mrf.mxu0
    %4897 = vmatprep.mubr.bf16.mxu0 0
    %4898 = vmatmul.mubr.bf16.gmra.mxu0 %v4847
    %v4899 = vpop.f32.mrf.mxu0
    %v4900 = vadd.f32 0.0, %v4899
    %v4901 = vpop.f32.mrf.mxu0
    %v4902 = vpop.f32.mrf.mxu0
    %v4903 = vadd.f32 0.0, %v4902
    %v4904 = vpop.f32.mrf.mxu0
    %4905 = vdwg.mxu0
    %v4906 = vadd.f32 %v4806, %v4884
    %v4907 = vadd.f32 %v4807, %v4887
    %v4908 = vadd.f32 %v4808, %v4892
    %v4909 = vadd.f32 %v4809, %v4895
    %v4910 = vadd.f32 %v4810, %v4900
    %v4911 = vadd.f32 %v4811, %v4903
    %v4912 = vpack.c.bf16 %v4304, %v4303
    %s4913 = scalar_lea.vmem %s3, 192
    %v4914 = vld [vmem:[%s4913] sm:$0xf]
    %v4915 = vld [vmem:[%s4913 + $0x4] sm:$0xf]
    %v4916 = vld [vmem:[%s4913 + $0x8] sm:$0xf]
    %v4917 = vld [vmem:[%s4913 + $0xc] sm:$0xf]
    %v4918 = vld [vmem:[%s4913 + $0x10] sm:$0xf]
    %v4919 = vld [vmem:[%s4913 + $0x14] sm:$0xf]
    %v4920 = vld [vmem:[%s4913 + $0x18] sm:$0xf]
    %v4921 = vld [vmem:[%s4913 + $0x1c] sm:$0xf]
    %v4930 = vunpack.c.l.b16 %v4914
    %v4931 = vunpack.c.l.b16 %v4915
    %v4932 = vunpack.c.l.b16 %v4916
    %v4933 = vunpack.c.l.b16 %v4917
    %v4934 = vunpack.c.l.b16 %v4918
    %v4935 = vunpack.c.l.b16 %v4919
    %v4936 = vunpack.c.l.b16 %v4920
    %v4937 = vunpack.c.l.b16 %v4921
    %v4938 = vpack.c.b16 %v4931, %v4930
    %v4939 = vpack.c.b16 %v4933, %v4932
    %v4940 = vpack.c.b16 %v4935, %v4934
    %v4941 = vpack.c.b16 %v4937, %v4936
    %v4947 = vsel %vm4355, %v4912, 0
    %4949 = vmatprep.subr.bf16.mxu0 0
    %4950 = vmatpush1.bf16.msra.mxu0 0
    %4951 = vmatprep.subr.bf16.mxu0 0
    %4952 = vmatpush1.bf16.msra.mxu0 0
    %4953 = vmatprep.subr.bf16.mxu0 0
    %4954 = vmatpush1.bf16.msra.mxu0 0
    %4955 = vmatprep.subr.bf16.mxu0 0
    %4956 = vmatpush1.bf16.msra.mxu0 0
    %4957 = vmatprep.subr.bf16.mxu0 0
    %4958 = vmatpush1.bf16.msra.mxu0 %v4941
    %4959 = vmatprep.subr.bf16.mxu0 0
    %4960 = vmatpush1.bf16.msra.mxu0 %v4940
    %4961 = vmatprep.subr.bf16.mxu0 0
    %4962 = vmatpush1.bf16.msra.mxu0 %v4939
    %4963 = vmatprep.subr.bf16.mxu0 0
    %4964 = vmatpush1.bf16.msra.mxu0 %v4938
    %4965 = vmatprep.subr.bf16.mxu0 0
    %4966 = vmatpush2.bf16.msra.mxu0 0
    %4967 = vmatprep.subr.bf16.mxu0 0
    %4968 = vmatpush2.bf16.msra.mxu0 0
    %4969 = vmatprep.subr.bf16.mxu0 0
    %4970 = vmatpush2.bf16.msra.mxu0 0
    %4971 = vmatprep.subr.bf16.mxu0 0
    %4972 = vmatpush2.bf16.msra.mxu0 0
    %4973 = vmatprep.subr.bf16.mxu0 0
    %4974 = vmatpush2.bf16.msra.mxu0 0
    %4975 = vmatprep.subr.bf16.mxu0 0
    %4976 = vmatpush2.bf16.msra.mxu0 0
    %4977 = vmatprep.subr.bf16.mxu0 0
    %4978 = vmatpush2.bf16.msra.mxu0 0
    %4979 = vmatprep.subr.bf16.mxu0 0
    %4980 = vmatpush2.bf16.msra.mxu0 0
    %4981 = vmatprep.mubr.bf16.mxu0 0
    %4982 = vmatmul.mubr.bf16.gmra.mxu0 %v4547
    %v4983 = vpop.f32.mrf.mxu0
    %v4984 = vadd.f32 0.0, %v4983
    %v4985 = vpop.f32.mrf.mxu0
    %v4986 = vpop.f32.mrf.mxu0
    %v4987 = vadd.f32 0.0, %v4986
    %v4988 = vpop.f32.mrf.mxu0
    %4989 = vmatprep.mubr.bf16.mxu0 0
    %4990 = vmatmul.mubr.bf16.gmra.mxu0 %v4747
    %v4991 = vpop.f32.mrf.mxu0
    %v4992 = vadd.f32 0.0, %v4991
    %v4993 = vpop.f32.mrf.mxu0
    %v4994 = vpop.f32.mrf.mxu0
    %v4995 = vadd.f32 0.0, %v4994
    %v4996 = vpop.f32.mrf.mxu0
    %4997 = vmatprep.mubr.bf16.mxu0 0
    %4998 = vmatmul.mubr.bf16.gmra.mxu0 %v4947
    %v4999 = vpop.f32.mrf.mxu0
    %v5000 = vadd.f32 0.0, %v4999
    %v5001 = vpop.f32.mrf.mxu0
    %v5002 = vpop.f32.mrf.mxu0
    %v5003 = vadd.f32 0.0, %v5002
    %v5004 = vpop.f32.mrf.mxu0
    %5005 = vdwg.mxu0
    %v5006 = vadd.f32 %v4906, %v4984
    %v5007 = vadd.f32 %v4907, %v4987
    %v5008 = vadd.f32 %v4908, %v4992
    %v5009 = vadd.f32 %v4909, %v4995
    %v5010 = vadd.f32 %v4910, %v5000
    %v5011 = vadd.f32 %v4911, %v5003
    %v5012 = vpack.c.bf16 %v4305, %v4304
    %s5013 = scalar_lea.vmem %s3, 224
    %v5014 = vld [vmem:[%s5013] sm:$0xf]
    %v5015 = vld [vmem:[%s5013 + $0x4] sm:$0xf]
    %v5016 = vld [vmem:[%s5013 + $0x8] sm:$0xf]
    %v5017 = vld [vmem:[%s5013 + $0xc] sm:$0xf]
    %v5018 = vld [vmem:[%s5013 + $0x10] sm:$0xf]
    %v5019 = vld [vmem:[%s5013 + $0x14] sm:$0xf]
    %v5020 = vld [vmem:[%s5013 + $0x18] sm:$0xf]
    %v5021 = vld [vmem:[%s5013 + $0x1c] sm:$0xf]
    %v5030 = vunpack.c.l.b16 %v5014
    %v5031 = vunpack.c.l.b16 %v5015
    %v5032 = vunpack.c.l.b16 %v5016
    %v5033 = vunpack.c.l.b16 %v5017
    %v5034 = vunpack.c.l.b16 %v5018
    %v5035 = vunpack.c.l.b16 %v5019
    %v5036 = vunpack.c.l.b16 %v5020
    %v5037 = vunpack.c.l.b16 %v5021
    %v5038 = vpack.c.b16 %v5031, %v5030
    %v5039 = vpack.c.b16 %v5033, %v5032
    %v5040 = vpack.c.b16 %v5035, %v5034
    %v5041 = vpack.c.b16 %v5037, %v5036
    %v5047 = vsel %vm4355, %v5012, 0
    %5049 = vmatprep.subr.bf16.mxu0 0
    %5050 = vmatpush1.bf16.msra.mxu0 0
    %5051 = vmatprep.subr.bf16.mxu0 0
    %5052 = vmatpush1.bf16.msra.mxu0 0
    %5053 = vmatprep.subr.bf16.mxu0 0
    %5054 = vmatpush1.bf16.msra.mxu0 0
    %5055 = vmatprep.subr.bf16.mxu0 0
    %5056 = vmatpush1.bf16.msra.mxu0 0
    %5057 = vmatprep.subr.bf16.mxu0 0
    %5058 = vmatpush1.bf16.msra.mxu0 %v5041
    %5059 = vmatprep.subr.bf16.mxu0 0
    %5060 = vmatpush1.bf16.msra.mxu0 %v5040
    %5061 = vmatprep.subr.bf16.mxu0 0
    %5062 = vmatpush1.bf16.msra.mxu0 %v5039
    %5063 = vmatprep.subr.bf16.mxu0 0
    %5064 = vmatpush1.bf16.msra.mxu0 %v5038
    %5065 = vmatprep.subr.bf16.mxu0 0
    %5066 = vmatpush2.bf16.msra.mxu0 0
    %5067 = vmatprep.subr.bf16.mxu0 0
    %5068 = vmatpush2.bf16.msra.mxu0 0
    %5069 = vmatprep.subr.bf16.mxu0 0
    %5070 = vmatpush2.bf16.msra.mxu0 0
    %5071 = vmatprep.subr.bf16.mxu0 0
    %5072 = vmatpush2.bf16.msra.mxu0 0
    %5073 = vmatprep.subr.bf16.mxu0 0
    %5074 = vmatpush2.bf16.msra.mxu0 0
    %5075 = vmatprep.subr.bf16.mxu0 0
    %5076 = vmatpush2.bf16.msra.mxu0 0
    %5077 = vmatprep.subr.bf16.mxu0 0
    %5078 = vmatpush2.bf16.msra.mxu0 0
    %5079 = vmatprep.subr.bf16.mxu0 0
    %5080 = vmatpush2.bf16.msra.mxu0 0
    %5081 = vmatprep.mubr.bf16.mxu0 0
    %5082 = vmatmul.mubr.bf16.gmra.mxu0 %v4647
    %v5083 = vpop.f32.mrf.mxu0
    %v5084 = vadd.f32 0.0, %v5083
    %v5085 = vpop.f32.mrf.mxu0
    %v5086 = vpop.f32.mrf.mxu0
    %v5087 = vadd.f32 0.0, %v5086
    %v5088 = vpop.f32.mrf.mxu0
    %5089 = vmatprep.mubr.bf16.mxu0 0
    %5090 = vmatmul.mubr.bf16.gmra.mxu0 %v4847
    %v5091 = vpop.f32.mrf.mxu0
    %v5092 = vadd.f32 0.0, %v5091
    %v5093 = vpop.f32.mrf.mxu0
    %v5094 = vpop.f32.mrf.mxu0
    %v5095 = vadd.f32 0.0, %v5094
    %v5096 = vpop.f32.mrf.mxu0
    %5097 = vmatprep.mubr.bf16.mxu0 0
    %5098 = vmatmul.mubr.bf16.gmra.mxu0 %v5047
    %v5099 = vpop.f32.mrf.mxu0
    %v5100 = vadd.f32 0.0, %v5099
    %v5101 = vpop.f32.mrf.mxu0
    %v5102 = vpop.f32.mrf.mxu0
    %v5103 = vadd.f32 0.0, %v5102
    %v5104 = vpop.f32.mrf.mxu0
    %5105 = vdwg.mxu0
    %v5106 = vadd.f32 %v5006, %v5084
    %v5107 = vadd.f32 %v5007, %v5087
    %v5108 = vadd.f32 %v5008, %v5092
    %v5109 = vadd.f32 %v5009, %v5095
    %v5110 = vadd.f32 %v5010, %v5100
    %v5111 = vadd.f32 %v5011, %v5103
    %v5112 = vpack.c.bf16 %v4306, %v4305
    %s5113 = scalar_lea.vmem %s3, 256
    %v5114 = vld [vmem:[%s5113] sm:$0xf]
    %v5115 = vld [vmem:[%s5113 + $0x4] sm:$0xf]
    %v5116 = vld [vmem:[%s5113 + $0x8] sm:$0xf]
    %v5117 = vld [vmem:[%s5113 + $0xc] sm:$0xf]
    %v5118 = vld [vmem:[%s5113 + $0x10] sm:$0xf]
    %v5119 = vld [vmem:[%s5113 + $0x14] sm:$0xf]
    %v5120 = vld [vmem:[%s5113 + $0x18] sm:$0xf]
    %v5121 = vld [vmem:[%s5113 + $0x1c] sm:$0xf]
    %v5130 = vunpack.c.l.b16 %v5114
    %v5131 = vunpack.c.l.b16 %v5115
    %v5132 = vunpack.c.l.b16 %v5116
    %v5133 = vunpack.c.l.b16 %v5117
    %v5134 = vunpack.c.l.b16 %v5118
    %v5135 = vunpack.c.l.b16 %v5119
    %v5136 = vunpack.c.l.b16 %v5120
    %v5137 = vunpack.c.l.b16 %v5121
    %v5138 = vpack.c.b16 %v5131, %v5130
    %v5139 = vpack.c.b16 %v5133, %v5132
    %v5140 = vpack.c.b16 %v5135, %v5134
    %v5141 = vpack.c.b16 %v5137, %v5136
    %v5147 = vsel %vm4355, %v5112, 0
    %5149 = vmatprep.subr.bf16.mxu0 0
    %5150 = vmatpush1.bf16.msra.mxu0 0
    %5151 = vmatprep.subr.bf16.mxu0 0
    %5152 = vmatpush1.bf16.msra.mxu0 0
    %5153 = vmatprep.subr.bf16.mxu0 0
    %5154 = vmatpush1.bf16.msra.mxu0 0
    %5155 = vmatprep.subr.bf16.mxu0 0
    %5156 = vmatpush1.bf16.msra.mxu0 0
    %5157 = vmatprep.subr.bf16.mxu0 0
    %5158 = vmatpush1.bf16.msra.mxu0 %v5141
    %5159 = vmatprep.subr.bf16.mxu0 0
    %5160 = vmatpush1.bf16.msra.mxu0 %v5140
    %5161 = vmatprep.subr.bf16.mxu0 0
    %5162 = vmatpush1.bf16.msra.mxu0 %v5139
    %5163 = vmatprep.subr.bf16.mxu0 0
    %5164 = vmatpush1.bf16.msra.mxu0 %v5138
    %5165 = vmatprep.subr.bf16.mxu0 0
    %5166 = vmatpush2.bf16.msra.mxu0 0
    %5167 = vmatprep.subr.bf16.mxu0 0
    %5168 = vmatpush2.bf16.msra.mxu0 0
    %5169 = vmatprep.subr.bf16.mxu0 0
    %5170 = vmatpush2.bf16.msra.mxu0 0
    %5171 = vmatprep.subr.bf16.mxu0 0
    %5172 = vmatpush2.bf16.msra.mxu0 0
    %5173 = vmatprep.subr.bf16.mxu0 0
    %5174 = vmatpush2.bf16.msra.mxu0 0
    %5175 = vmatprep.subr.bf16.mxu0 0
    %5176 = vmatpush2.bf16.msra.mxu0 0
    %5177 = vmatprep.subr.bf16.mxu0 0
    %5178 = vmatpush2.bf16.msra.mxu0 0
    %5179 = vmatprep.subr.bf16.mxu0 0
    %5180 = vmatpush2.bf16.msra.mxu0 0
    %5181 = vmatprep.mubr.bf16.mxu0 0
    %5182 = vmatmul.mubr.bf16.gmra.mxu0 %v4747
    %v5183 = vpop.f32.mrf.mxu0
    %v5184 = vadd.f32 0.0, %v5183
    %v5185 = vpop.f32.mrf.mxu0
    %v5186 = vpop.f32.mrf.mxu0
    %v5187 = vadd.f32 0.0, %v5186
    %v5188 = vpop.f32.mrf.mxu0
    %5189 = vmatprep.mubr.bf16.mxu0 0
    %5190 = vmatmul.mubr.bf16.gmra.mxu0 %v4947
    %v5191 = vpop.f32.mrf.mxu0
    %v5192 = vadd.f32 0.0, %v5191
    %v5193 = vpop.f32.mrf.mxu0
    %v5194 = vpop.f32.mrf.mxu0
    %v5195 = vadd.f32 0.0, %v5194
    %v5196 = vpop.f32.mrf.mxu0
    %5197 = vmatprep.mubr.bf16.mxu0 0
    %5198 = vmatmul.mubr.bf16.gmra.mxu0 %v5147
    %v5199 = vpop.f32.mrf.mxu0
    %v5200 = vadd.f32 0.0, %v5199
    %v5201 = vpop.f32.mrf.mxu0
    %v5202 = vpop.f32.mrf.mxu0
    %v5203 = vadd.f32 0.0, %v5202
    %v5204 = vpop.f32.mrf.mxu0
    %5205 = vdwg.mxu0
    %v5206 = vadd.f32 %v5106, %v5184
    %v5207 = vadd.f32 %v5107, %v5187
    %v5208 = vadd.f32 %v5108, %v5192
    %v5209 = vadd.f32 %v5109, %v5195
    %v5210 = vadd.f32 %v5110, %v5200
    %v5211 = vadd.f32 %v5111, %v5203
    %v5212 = vpack.c.bf16 %v4307, %v4306
    %s5213 = scalar_lea.vmem %s3, 288
    %v5214 = vld [vmem:[%s5213] sm:$0xf]
    %v5215 = vld [vmem:[%s5213 + $0x4] sm:$0xf]
    %v5216 = vld [vmem:[%s5213 + $0x8] sm:$0xf]
    %v5217 = vld [vmem:[%s5213 + $0xc] sm:$0xf]
    %v5218 = vld [vmem:[%s5213 + $0x10] sm:$0xf]
    %v5219 = vld [vmem:[%s5213 + $0x14] sm:$0xf]
    %v5220 = vld [vmem:[%s5213 + $0x18] sm:$0xf]
    %v5221 = vld [vmem:[%s5213 + $0x1c] sm:$0xf]
    %v5230 = vunpack.c.l.b16 %v5214
    %v5231 = vunpack.c.l.b16 %v5215
    %v5232 = vunpack.c.l.b16 %v5216
    %v5233 = vunpack.c.l.b16 %v5217
    %v5234 = vunpack.c.l.b16 %v5218
    %v5235 = vunpack.c.l.b16 %v5219
    %v5236 = vunpack.c.l.b16 %v5220
    %v5237 = vunpack.c.l.b16 %v5221
    %v5238 = vpack.c.b16 %v5231, %v5230
    %v5239 = vpack.c.b16 %v5233, %v5232
    %v5240 = vpack.c.b16 %v5235, %v5234
    %v5241 = vpack.c.b16 %v5237, %v5236
    %v5247 = vsel %vm4355, %v5212, 0
    %5249 = vmatprep.subr.bf16.mxu0 0
    %5250 = vmatpush1.bf16.msra.mxu0 0
    %5251 = vmatprep.subr.bf16.mxu0 0
    %5252 = vmatpush1.bf16.msra.mxu0 0
    %5253 = vmatprep.subr.bf16.mxu0 0
    %5254 = vmatpush1.bf16.msra.mxu0 0
    %5255 = vmatprep.subr.bf16.mxu0 0
    %5256 = vmatpush1.bf16.msra.mxu0 0
    %5257 = vmatprep.subr.bf16.mxu0 0
    %5258 = vmatpush1.bf16.msra.mxu0 %v5241
    %5259 = vmatprep.subr.bf16.mxu0 0
    %5260 = vmatpush1.bf16.msra.mxu0 %v5240
    %5261 = vmatprep.subr.bf16.mxu0 0
    %5262 = vmatpush1.bf16.msra.mxu0 %v5239
    %5263 = vmatprep.subr.bf16.mxu0 0
    %5264 = vmatpush1.bf16.msra.mxu0 %v5238
    %5265 = vmatprep.subr.bf16.mxu0 0
    %5266 = vmatpush2.bf16.msra.mxu0 0
    %5267 = vmatprep.subr.bf16.mxu0 0
    %5268 = vmatpush2.bf16.msra.mxu0 0
    %5269 = vmatprep.subr.bf16.mxu0 0
    %5270 = vmatpush2.bf16.msra.mxu0 0
    %5271 = vmatprep.subr.bf16.mxu0 0
    %5272 = vmatpush2.bf16.msra.mxu0 0
    %5273 = vmatprep.subr.bf16.mxu0 0
    %5274 = vmatpush2.bf16.msra.mxu0 0
    %5275 = vmatprep.subr.bf16.mxu0 0
    %5276 = vmatpush2.bf16.msra.mxu0 0
    %5277 = vmatprep.subr.bf16.mxu0 0
    %5278 = vmatpush2.bf16.msra.mxu0 0
    %5279 = vmatprep.subr.bf16.mxu0 0
    %5280 = vmatpush2.bf16.msra.mxu0 0
    %5281 = vmatprep.mubr.bf16.mxu0 0
    %5282 = vmatmul.mubr.bf16.gmra.mxu0 %v4847
    %v5283 = vpop.f32.mrf.mxu0
    %v5284 = vadd.f32 0.0, %v5283
    %v5285 = vpop.f32.mrf.mxu0
    %v5286 = vpop.f32.mrf.mxu0
    %v5287 = vadd.f32 0.0, %v5286
    %v5288 = vpop.f32.mrf.mxu0
    %5289 = vmatprep.mubr.bf16.mxu0 0
    %5290 = vmatmul.mubr.bf16.gmra.mxu0 %v5047
    %v5291 = vpop.f32.mrf.mxu0
    %v5292 = vadd.f32 0.0, %v5291
    %v5293 = vpop.f32.mrf.mxu0
    %v5294 = vpop.f32.mrf.mxu0
    %v5295 = vadd.f32 0.0, %v5294
    %v5296 = vpop.f32.mrf.mxu0
    %5297 = vmatprep.mubr.bf16.mxu0 0
    %5298 = vmatmul.mubr.bf16.gmra.mxu0 %v5247
    %v5299 = vpop.f32.mrf.mxu0
    %v5300 = vadd.f32 0.0, %v5299
    %v5301 = vpop.f32.mrf.mxu0
    %v5302 = vpop.f32.mrf.mxu0
    %v5303 = vadd.f32 0.0, %v5302
    %v5304 = vpop.f32.mrf.mxu0
    %5305 = vdwg.mxu0
    %v5306 = vadd.f32 %v5206, %v5284
    %v5307 = vadd.f32 %v5207, %v5287
    %v5308 = vadd.f32 %v5208, %v5292
    %v5309 = vadd.f32 %v5209, %v5295
    %v5310 = vadd.f32 %v5210, %v5300
    %v5311 = vadd.f32 %v5211, %v5303
    %v5312 = vld [vmem:[%s4] sm:$0x1]
    %v5314 = vlaneseq
    %v5315 = vshrl.u32 %v5314, 7
    %v5316 = vsub.s32 0, %v5315
    %v5317 = vrot.slane %v5312, %v5316
    %v5319 = vadd.f32 %v5306, %v5317
    %v5320 = vadd.f32 %v5307, %v5317
    %v5321 = vadd.f32 %v5308, %v5317
    %v5322 = vadd.f32 %v5309, %v5317
    %v5323 = vadd.f32 %v5310, %v5317
    %v5324 = vadd.f32 %v5311, %v5317
    %v5325 = vmax.f32 %v5319, 0.0
    %v5326 = vmax.f32 %v5320, 0.0
    %v5327 = vmax.f32 %v5321, 0.0
    %v5328 = vmax.f32 %v5322, 0.0
    %v5329 = vmax.f32 %v5323, 0.0
    %v5330 = vmax.f32 %v5324, 0.0
    %v5331 = vmax.f32 %v5325, %v5326
    %v5332 = vpack.c.bf16 %v5331, %v5331
    %v5333 = vld [vmem:[%s5] sm:$0xff]
    %v5334 = vld [vmem:[%s5 + $0x8] sm:$0xff]
    %v5335 = vld [vmem:[%s5 + $0x10] sm:$0xff]
    %v5336 = vld [vmem:[%s5 + $0x18] sm:$0xff]
    %v5337 = vld [vmem:[%s5 + $0x20] sm:$0xff]
    %v5338 = vld [vmem:[%s5 + $0x28] sm:$0xff]
    %v5339 = vld [vmem:[%s5 + $0x30] sm:$0xff]
    %v5340 = vld [vmem:[%s5 + $0x38] sm:$0xff]
    %v5341 = vld [vmem:[%s5 + $0x40] sm:$0xff]
    %v5342 = vld [vmem:[%s5 + $0x48] sm:$0xff]
    %v5343 = vld [vmem:[%s5 + $0x50] sm:$0xff]
    %v5344 = vld [vmem:[%s5 + $0x58] sm:$0xff]
    %v5345 = vld [vmem:[%s5 + $0x60] sm:$0xff]
    %v5346 = vld [vmem:[%s5 + $0x68] sm:$0xff]
    %v5347 = vld [vmem:[%s5 + $0x70] sm:$0xff]
    %v5348 = vld [vmem:[%s5 + $0x78] sm:$0xff]
    %v5349 = vld [vmem:[%s6] sm:$0xff]
    %v5350 = vld [vmem:[%s6 + $0x8] sm:$0xff]
    %v5351 = vld [vmem:[%s6 + $0x10] sm:$0xff]
    %v5352 = vld [vmem:[%s6 + $0x18] sm:$0xff]
    %v5353 = vld [vmem:[%s6 + $0x20] sm:$0xff]
    %v5354 = vld [vmem:[%s6 + $0x28] sm:$0xff]
    %v5355 = vld [vmem:[%s6 + $0x30] sm:$0xff]
    %v5356 = vld [vmem:[%s6 + $0x38] sm:$0xff]
    %v5357 = vld [vmem:[%s6 + $0x40] sm:$0xff]
    %v5358 = vld [vmem:[%s6 + $0x48] sm:$0xff]
    %v5359 = vld [vmem:[%s6 + $0x50] sm:$0xff]
    %v5360 = vld [vmem:[%s6 + $0x58] sm:$0xff]
    %v5361 = vld [vmem:[%s6 + $0x60] sm:$0xff]
    %v5362 = vld [vmem:[%s6 + $0x68] sm:$0xff]
    %v5363 = vld [vmem:[%s6 + $0x70] sm:$0xff]
    %v5364 = vld [vmem:[%s6 + $0x78] sm:$0xff]
    %v5365 = vld [vmem:[%s6 + $0x80] sm:$0xff]
    %v5366 = vld [vmem:[%s6 + $0x88] sm:$0xff]
    %v5367 = vld [vmem:[%s6 + $0x90] sm:$0xff]
    %v5368 = vld [vmem:[%s6 + $0x98] sm:$0xff]
    %v5369 = vld [vmem:[%s6 + $0xa0] sm:$0xff]
    %v5370 = vld [vmem:[%s6 + $0xa8] sm:$0xff]
    %v5371 = vld [vmem:[%s6 + $0xb0] sm:$0xff]
    %v5372 = vld [vmem:[%s6 + $0xb8] sm:$0xff]
    %v5373 = vld [vmem:[%s6 + $0xc0] sm:$0xff]
    %v5374 = vld [vmem:[%s6 + $0xc8] sm:$0xff]
    %v5375 = vld [vmem:[%s6 + $0xd0] sm:$0xff]
    %v5376 = vld [vmem:[%s6 + $0xd8] sm:$0xff]
    %v5377 = vld [vmem:[%s6 + $0xe0] sm:$0xff]
    %v5378 = vld [vmem:[%s6 + $0xe8] sm:$0xff]
    %v5379 = vld [vmem:[%s6 + $0xf0] sm:$0xff]
    %v5380 = vld [vmem:[%s6 + $0xf8] sm:$0xff]
    %v5381 = vld [vmem:[%s6 + $0x100] sm:$0xff]
    %v5382 = vld [vmem:[%s6 + $0x108] sm:$0xff]
    %v5383 = vld [vmem:[%s6 + $0x110] sm:$0xff]
    %v5384 = vld [vmem:[%s6 + $0x118] sm:$0xff]
    %v5385 = vld [vmem:[%s6 + $0x120] sm:$0xff]
    %v5386 = vld [vmem:[%s6 + $0x128] sm:$0xff]
    %v5387 = vld [vmem:[%s6 + $0x130] sm:$0xff]
    %v5388 = vld [vmem:[%s6 + $0x138] sm:$0xff]
    %v5389 = vld [vmem:[%s6 + $0x140] sm:$0xff]
    %v5390 = vld [vmem:[%s6 + $0x148] sm:$0xff]
    %v5391 = vld [vmem:[%s6 + $0x150] sm:$0xff]
    %v5392 = vld [vmem:[%s6 + $0x158] sm:$0xff]
    %v5393 = vld [vmem:[%s6 + $0x160] sm:$0xff]
    %v5394 = vld [vmem:[%s6 + $0x168] sm:$0xff]
    %v5395 = vld [vmem:[%s6 + $0x170] sm:$0xff]
    %v5396 = vld [vmem:[%s6 + $0x178] sm:$0xff]
    %v5397 = vld [vmem:[%s6 + $0x180] sm:$0xff]
    %v5398 = vld [vmem:[%s6 + $0x188] sm:$0xff]
    %v5399 = vld [vmem:[%s6 + $0x190] sm:$0xff]
    %v5400 = vld [vmem:[%s6 + $0x198] sm:$0xff]
    %v5401 = vld [vmem:[%s6 + $0x1a0] sm:$0xff]
    %v5402 = vld [vmem:[%s6 + $0x1a8] sm:$0xff]
    %v5403 = vld [vmem:[%s6 + $0x1b0] sm:$0xff]
    %v5404 = vld [vmem:[%s6 + $0x1b8] sm:$0xff]
    %v5405 = vld [vmem:[%s6 + $0x1c0] sm:$0xff]
    %v5406 = vld [vmem:[%s6 + $0x1c8] sm:$0xff]
    %v5407 = vld [vmem:[%s6 + $0x1d0] sm:$0xff]
    %v5408 = vld [vmem:[%s6 + $0x1d8] sm:$0xff]
    %v5409 = vld [vmem:[%s6 + $0x1e0] sm:$0xff]
    %v5410 = vld [vmem:[%s6 + $0x1e8] sm:$0xff]
    %v5411 = vld [vmem:[%s6 + $0x1f0] sm:$0xff]
    %v5412 = vld [vmem:[%s6 + $0x1f8] sm:$0xff]
    %v5413 = vld [vmem:[%s6 + $0x200] sm:$0xff]
    %v5414 = vld [vmem:[%s6 + $0x208] sm:$0xff]
    %v5415 = vld [vmem:[%s6 + $0x210] sm:$0xff]
    %v5416 = vld [vmem:[%s6 + $0x218] sm:$0xff]
    %v5417 = vld [vmem:[%s6 + $0x220] sm:$0xff]
    %v5418 = vld [vmem:[%s6 + $0x228] sm:$0xff]
    %v5419 = vld [vmem:[%s6 + $0x230] sm:$0xff]
    %v5420 = vld [vmem:[%s6 + $0x238] sm:$0xff]
    %v5421 = vld [vmem:[%s6 + $0x240] sm:$0xff]
    %v5422 = vld [vmem:[%s6 + $0x248] sm:$0xff]
    %v5423 = vld [vmem:[%s6 + $0x250] sm:$0xff]
    %v5424 = vld [vmem:[%s6 + $0x258] sm:$0xff]
    %v5425 = vld [vmem:[%s6 + $0x260] sm:$0xff]
    %v5426 = vld [vmem:[%s6 + $0x268] sm:$0xff]
    %v5427 = vld [vmem:[%s6 + $0x270] sm:$0xff]
    %v5428 = vld [vmem:[%s6 + $0x278] sm:$0xff]
    %v5429 = vld [vmem:[%s6 + $0x280] sm:$0xff]
    %v5430 = vld [vmem:[%s6 + $0x288] sm:$0xff]
    %v5431 = vld [vmem:[%s6 + $0x290] sm:$0xff]
    %v5432 = vld [vmem:[%s6 + $0x298] sm:$0xff]
    %v5433 = vld [vmem:[%s6 + $0x2a0] sm:$0xff]
    %v5434 = vld [vmem:[%s6 + $0x2a8] sm:$0xff]
    %v5435 = vld [vmem:[%s6 + $0x2b0] sm:$0xff]
    %v5436 = vld [vmem:[%s6 + $0x2b8] sm:$0xff]
    %v5437 = vld [vmem:[%s6 + $0x2c0] sm:$0xff]
    %v5438 = vld [vmem:[%s6 + $0x2c8] sm:$0xff]
    %v5439 = vld [vmem:[%s6 + $0x2d0] sm:$0xff]
    %v5440 = vld [vmem:[%s6 + $0x2d8] sm:$0xff]
    %v5441 = vld [vmem:[%s6 + $0x2e0] sm:$0xff]
    %v5442 = vld [vmem:[%s6 + $0x2e8] sm:$0xff]
    %v5443 = vld [vmem:[%s6 + $0x2f0] sm:$0xff]
    %v5444 = vld [vmem:[%s6 + $0x2f8] sm:$0xff]
    %v5445 = vld [vmem:[%s6 + $0x300] sm:$0xff]
    %v5446 = vld [vmem:[%s6 + $0x308] sm:$0xff]
    %v5447 = vld [vmem:[%s6 + $0x310] sm:$0xff]
    %v5448 = vld [vmem:[%s6 + $0x318] sm:$0xff]
    %v5449 = vld [vmem:[%s6 + $0x320] sm:$0xff]
    %v5450 = vld [vmem:[%s6 + $0x328] sm:$0xff]
    %v5451 = vld [vmem:[%s6 + $0x330] sm:$0xff]
    %v5452 = vld [vmem:[%s6 + $0x338] sm:$0xff]
    %v5453 = vld [vmem:[%s6 + $0x340] sm:$0xff]
    %v5454 = vld [vmem:[%s6 + $0x348] sm:$0xff]
    %v5455 = vld [vmem:[%s6 + $0x350] sm:$0xff]
    %v5456 = vld [vmem:[%s6 + $0x358] sm:$0xff]
    %v5457 = vld [vmem:[%s6 + $0x360] sm:$0xff]
    %v5458 = vld [vmem:[%s6 + $0x368] sm:$0xff]
    %v5459 = vld [vmem:[%s6 + $0x370] sm:$0xff]
    %v5460 = vld [vmem:[%s6 + $0x378] sm:$0xff]
    %v5461 = vld [vmem:[%s6 + $0x380] sm:$0xff]
    %v5462 = vld [vmem:[%s6 + $0x388] sm:$0xff]
    %v5463 = vld [vmem:[%s6 + $0x390] sm:$0xff]
    %v5464 = vld [vmem:[%s6 + $0x398] sm:$0xff]
    %v5465 = vld [vmem:[%s6 + $0x3a0] sm:$0xff]
    %v5466 = vld [vmem:[%s6 + $0x3a8] sm:$0xff]
    %v5467 = vld [vmem:[%s6 + $0x3b0] sm:$0xff]
    %v5468 = vld [vmem:[%s6 + $0x3b8] sm:$0xff]
    %v5469 = vld [vmem:[%s6 + $0x3c0] sm:$0xff]
    %v5470 = vld [vmem:[%s6 + $0x3c8] sm:$0xff]
    %v5471 = vld [vmem:[%s6 + $0x3d0] sm:$0xff]
    %v5472 = vld [vmem:[%s6 + $0x3d8] sm:$0xff]
    %v5473 = vld [vmem:[%s6 + $0x3e0] sm:$0xff]
    %v5474 = vld [vmem:[%s6 + $0x3e8] sm:$0xff]
    %v5475 = vld [vmem:[%s6 + $0x3f0] sm:$0xff]
    %v5476 = vld [vmem:[%s6 + $0x3f8] sm:$0xff]
    %v5605 = vunpack.c.l.b16 %v5349
    %v5606 = vunpack.c.h.b16 %v5349
    %v5607 = vunpack.c.l.b16 %v5350
    %v5608 = vunpack.c.h.b16 %v5350
    %v5609 = vunpack.c.l.b16 %v5351
    %v5610 = vunpack.c.h.b16 %v5351
    %v5611 = vunpack.c.l.b16 %v5352
    %v5612 = vunpack.c.h.b16 %v5352
    %v5613 = vunpack.c.l.b16 %v5353
    %v5614 = vunpack.c.h.b16 %v5353
    %v5615 = vunpack.c.l.b16 %v5354
    %v5616 = vunpack.c.h.b16 %v5354
    %v5617 = vunpack.c.l.b16 %v5355
    %v5618 = vunpack.c.h.b16 %v5355
    %v5619 = vunpack.c.l.b16 %v5356
    %v5620 = vunpack.c.h.b16 %v5356
    %v5621 = vunpack.c.l.b16 %v5357
    %v5622 = vunpack.c.h.b16 %v5357
    %v5623 = vunpack.c.l.b16 %v5358
    %v5624 = vunpack.c.h.b16 %v5358
    %v5625 = vunpack.c.l.b16 %v5359
    %v5626 = vunpack.c.h.b16 %v5359
    %v5627 = vunpack.c.l.b16 %v5360
    %v5628 = vunpack.c.h.b16 %v5360
    %v5629 = vunpack.c.l.b16 %v5361
    %v5630 = vunpack.c.h.b16 %v5361
    %v5631 = vunpack.c.l.b16 %v5362
    %v5632 = vunpack.c.h.b16 %v5362
    %v5633 = vunpack.c.l.b16 %v5363
    %v5634 = vunpack.c.h.b16 %v5363
    %v5635 = vunpack.c.l.b16 %v5364
    %v5636 = vunpack.c.h.b16 %v5364
    %v5637 = vunpack.c.l.b16 %v5365
    %v5638 = vunpack.c.h.b16 %v5365
    %v5639 = vunpack.c.l.b16 %v5366
    %v5640 = vunpack.c.h.b16 %v5366
    %v5641 = vunpack.c.l.b16 %v5367
    %v5642 = vunpack.c.h.b16 %v5367
    %v5643 = vunpack.c.l.b16 %v5368
    %v5644 = vunpack.c.h.b16 %v5368
    %v5645 = vunpack.c.l.b16 %v5369
    %v5646 = vunpack.c.h.b16 %v5369
    %v5647 = vunpack.c.l.b16 %v5370
    %v5648 = vunpack.c.h.b16 %v5370
    %v5649 = vunpack.c.l.b16 %v5371
    %v5650 = vunpack.c.h.b16 %v5371
    %v5651 = vunpack.c.l.b16 %v5372
    %v5652 = vunpack.c.h.b16 %v5372
    %v5653 = vunpack.c.l.b16 %v5373
    %v5654 = vunpack.c.h.b16 %v5373
    %v5655 = vunpack.c.l.b16 %v5374
    %v5656 = vunpack.c.h.b16 %v5374
    %v5657 = vunpack.c.l.b16 %v5375
    %v5658 = vunpack.c.h.b16 %v5375
    %v5659 = vunpack.c.l.b16 %v5376
    %v5660 = vunpack.c.h.b16 %v5376
    %v5661 = vunpack.c.l.b16 %v5377
    %v5662 = vunpack.c.h.b16 %v5377
    %v5663 = vunpack.c.l.b16 %v5378
    %v5664 = vunpack.c.h.b16 %v5378
    %v5665 = vunpack.c.l.b16 %v5379
    %v5666 = vunpack.c.h.b16 %v5379
    %v5667 = vunpack.c.l.b16 %v5380
    %v5668 = vunpack.c.h.b16 %v5380
    %v5669 = vunpack.c.l.b16 %v5381
    %v5670 = vunpack.c.h.b16 %v5381
    %v5671 = vunpack.c.l.b16 %v5382
    %v5672 = vunpack.c.h.b16 %v5382
    %v5673 = vunpack.c.l.b16 %v5383
    %v5674 = vunpack.c.h.b16 %v5383
    %v5675 = vunpack.c.l.b16 %v5384
    %v5676 = vunpack.c.h.b16 %v5384
    %v5677 = vunpack.c.l.b16 %v5385
    %v5678 = vunpack.c.h.b16 %v5385
    %v5679 = vunpack.c.l.b16 %v5386
    %v5680 = vunpack.c.h.b16 %v5386
    %v5681 = vunpack.c.l.b16 %v5387
    %v5682 = vunpack.c.h.b16 %v5387
    %v5683 = vunpack.c.l.b16 %v5388
    %v5684 = vunpack.c.h.b16 %v5388
    %v5685 = vunpack.c.l.b16 %v5389
    %v5686 = vunpack.c.h.b16 %v5389
    %v5687 = vunpack.c.l.b16 %v5390
    %v5688 = vunpack.c.h.b16 %v5390
    %v5689 = vunpack.c.l.b16 %v5391
    %v5690 = vunpack.c.h.b16 %v5391
    %v5691 = vunpack.c.l.b16 %v5392
    %v5692 = vunpack.c.h.b16 %v5392
    %v5693 = vunpack.c.l.b16 %v5393
    %v5694 = vunpack.c.h.b16 %v5393
    %v5695 = vunpack.c.l.b16 %v5394
    %v5696 = vunpack.c.h.b16 %v5394
    %v5697 = vunpack.c.l.b16 %v5395
    %v5698 = vunpack.c.h.b16 %v5395
    %v5699 = vunpack.c.l.b16 %v5396
    %v5700 = vunpack.c.h.b16 %v5396
    %v5701 = vunpack.c.l.b16 %v5397
    %v5702 = vunpack.c.h.b16 %v5397
    %v5703 = vunpack.c.l.b16 %v5398
    %v5704 = vunpack.c.h.b16 %v5398
    %v5705 = vunpack.c.l.b16 %v5399
    %v5706 = vunpack.c.h.b16 %v5399
    %v5707 = vunpack.c.l.b16 %v5400
    %v5708 = vunpack.c.h.b16 %v5400
    %v5709 = vunpack.c.l.b16 %v5401
    %v5710 = vunpack.c.h.b16 %v5401
    %v5711 = vunpack.c.l.b16 %v5402
    %v5712 = vunpack.c.h.b16 %v5402
    %v5713 = vunpack.c.l.b16 %v5403
    %v5714 = vunpack.c.h.b16 %v5403
    %v5715 = vunpack.c.l.b16 %v5404
    %v5716 = vunpack.c.h.b16 %v5404
    %v5717 = vunpack.c.l.b16 %v5405
    %v5718 = vunpack.c.h.b16 %v5405
    %v5719 = vunpack.c.l.b16 %v5406
    %v5720 = vunpack.c.h.b16 %v5406
    %v5721 = vunpack.c.l.b16 %v5407
    %v5722 = vunpack.c.h.b16 %v5407
    %v5723 = vunpack.c.l.b16 %v5408
    %v5724 = vunpack.c.h.b16 %v5408
    %v5725 = vunpack.c.l.b16 %v5409
    %v5726 = vunpack.c.h.b16 %v5409
    %v5727 = vunpack.c.l.b16 %v5410
    %v5728 = vunpack.c.h.b16 %v5410
    %v5729 = vunpack.c.l.b16 %v5411
    %v5730 = vunpack.c.h.b16 %v5411
    %v5731 = vunpack.c.l.b16 %v5412
    %v5732 = vunpack.c.h.b16 %v5412
    %v5733 = vunpack.c.l.b16 %v5413
    %v5734 = vunpack.c.h.b16 %v5413
    %v5735 = vunpack.c.l.b16 %v5414
    %v5736 = vunpack.c.h.b16 %v5414
    %v5737 = vunpack.c.l.b16 %v5415
    %v5738 = vunpack.c.h.b16 %v5415
    %v5739 = vunpack.c.l.b16 %v5416
    %v5740 = vunpack.c.h.b16 %v5416
    %v5741 = vunpack.c.l.b16 %v5417
    %v5742 = vunpack.c.h.b16 %v5417
    %v5743 = vunpack.c.l.b16 %v5418
    %v5744 = vunpack.c.h.b16 %v5418
    %v5745 = vunpack.c.l.b16 %v5419
    %v5746 = vunpack.c.h.b16 %v5419
    %v5747 = vunpack.c.l.b16 %v5420
    %v5748 = vunpack.c.h.b16 %v5420
    %v5749 = vunpack.c.l.b16 %v5421
    %v5750 = vunpack.c.h.b16 %v5421
    %v5751 = vunpack.c.l.b16 %v5422
    %v5752 = vunpack.c.h.b16 %v5422
    %v5753 = vunpack.c.l.b16 %v5423
    %v5754 = vunpack.c.h.b16 %v5423
    %v5755 = vunpack.c.l.b16 %v5424
    %v5756 = vunpack.c.h.b16 %v5424
    %v5757 = vunpack.c.l.b16 %v5425
    %v5758 = vunpack.c.h.b16 %v5425
    %v5759 = vunpack.c.l.b16 %v5426
    %v5760 = vunpack.c.h.b16 %v5426
    %v5761 = vunpack.c.l.b16 %v5427
    %v5762 = vunpack.c.h.b16 %v5427
    %v5763 = vunpack.c.l.b16 %v5428
    %v5764 = vunpack.c.h.b16 %v5428
    %v5765 = vunpack.c.l.b16 %v5429
    %v5766 = vunpack.c.h.b16 %v5429
    %v5767 = vunpack.c.l.b16 %v5430
    %v5768 = vunpack.c.h.b16 %v5430
    %v5769 = vunpack.c.l.b16 %v5431
    %v5770 = vunpack.c.h.b16 %v5431
    %v5771 = vunpack.c.l.b16 %v5432
    %v5772 = vunpack.c.h.b16 %v5432
    %v5773 = vunpack.c.l.b16 %v5433
    %v5774 = vunpack.c.h.b16 %v5433
    %v5775 = vunpack.c.l.b16 %v5434
    %v5776 = vunpack.c.h.b16 %v5434
    %v5777 = vunpack.c.l.b16 %v5435
    %v5778 = vunpack.c.h.b16 %v5435
    %v5779 = vunpack.c.l.b16 %v5436
    %v5780 = vunpack.c.h.b16 %v5436
    %v5781 = vunpack.c.l.b16 %v5437
    %v5782 = vunpack.c.h.b16 %v5437
    %v5783 = vunpack.c.l.b16 %v5438
    %v5784 = vunpack.c.h.b16 %v5438
    %v5785 = vunpack.c.l.b16 %v5439
    %v5786 = vunpack.c.h.b16 %v5439
    %v5787 = vunpack.c.l.b16 %v5440
    %v5788 = vunpack.c.h.b16 %v5440
    %v5789 = vunpack.c.l.b16 %v5441
    %v5790 = vunpack.c.h.b16 %v5441
    %v5791 = vunpack.c.l.b16 %v5442
    %v5792 = vunpack.c.h.b16 %v5442
    %v5793 = vunpack.c.l.b16 %v5443
    %v5794 = vunpack.c.h.b16 %v5443
    %v5795 = vunpack.c.l.b16 %v5444
    %v5796 = vunpack.c.h.b16 %v5444
    %v5797 = vunpack.c.l.b16 %v5445
    %v5798 = vunpack.c.h.b16 %v5445
    %v5799 = vunpack.c.l.b16 %v5446
    %v5800 = vunpack.c.h.b16 %v5446
    %v5801 = vunpack.c.l.b16 %v5447
    %v5802 = vunpack.c.h.b16 %v5447
    %v5803 = vunpack.c.l.b16 %v5448
    %v5804 = vunpack.c.h.b16 %v5448
    %v5805 = vunpack.c.l.b16 %v5449
    %v5806 = vunpack.c.h.b16 %v5449
    %v5807 = vunpack.c.l.b16 %v5450
    %v5808 = vunpack.c.h.b16 %v5450
    %v5809 = vunpack.c.l.b16 %v5451
    %v5810 = vunpack.c.h.b16 %v5451
    %v5811 = vunpack.c.l.b16 %v5452
    %v5812 = vunpack.c.h.b16 %v5452
    %v5813 = vunpack.c.l.b16 %v5453
    %v5814 = vunpack.c.h.b16 %v5453
    %v5815 = vunpack.c.l.b16 %v5454
    %v5816 = vunpack.c.h.b16 %v5454
    %v5817 = vunpack.c.l.b16 %v5455
    %v5818 = vunpack.c.h.b16 %v5455
    %v5819 = vunpack.c.l.b16 %v5456
    %v5820 = vunpack.c.h.b16 %v5456
    %v5821 = vunpack.c.l.b16 %v5457
    %v5822 = vunpack.c.h.b16 %v5457
    %v5823 = vunpack.c.l.b16 %v5458
    %v5824 = vunpack.c.h.b16 %v5458
    %v5825 = vunpack.c.l.b16 %v5459
    %v5826 = vunpack.c.h.b16 %v5459
    %v5827 = vunpack.c.l.b16 %v5460
    %v5828 = vunpack.c.h.b16 %v5460
    %v5829 = vunpack.c.l.b16 %v5461
    %v5830 = vunpack.c.h.b16 %v5461
    %v5831 = vunpack.c.l.b16 %v5462
    %v5832 = vunpack.c.h.b16 %v5462
    %v5833 = vunpack.c.l.b16 %v5463
    %v5834 = vunpack.c.h.b16 %v5463
    %v5835 = vunpack.c.l.b16 %v5464
    %v5836 = vunpack.c.h.b16 %v5464
    %v5837 = vunpack.c.l.b16 %v5465
    %v5838 = vunpack.c.h.b16 %v5465
    %v5839 = vunpack.c.l.b16 %v5466
    %v5840 = vunpack.c.h.b16 %v5466
    %v5841 = vunpack.c.l.b16 %v5467
    %v5842 = vunpack.c.h.b16 %v5467
    %v5843 = vunpack.c.l.b16 %v5468
    %v5844 = vunpack.c.h.b16 %v5468
    %v5845 = vunpack.c.l.b16 %v5469
    %v5846 = vunpack.c.h.b16 %v5469
    %v5847 = vunpack.c.l.b16 %v5470
    %v5848 = vunpack.c.h.b16 %v5470
    %v5849 = vunpack.c.l.b16 %v5471
    %v5850 = vunpack.c.h.b16 %v5471
    %v5851 = vunpack.c.l.b16 %v5472
    %v5852 = vunpack.c.h.b16 %v5472
    %v5853 = vunpack.c.l.b16 %v5473
    %v5854 = vunpack.c.h.b16 %v5473
    %v5855 = vunpack.c.l.b16 %v5474
    %v5856 = vunpack.c.h.b16 %v5474
    %v5857 = vunpack.c.l.b16 %v5475
    %v5858 = vunpack.c.h.b16 %v5475
    %v5859 = vunpack.c.l.b16 %v5476
    %v5860 = vunpack.c.h.b16 %v5476
    %v5861 = vpack.c.b16 %v5613, %v5605
    %v5862 = vpack.c.b16 %v5614, %v5606
    %v5863 = vpack.c.b16 %v5615, %v5607
    %v5864 = vpack.c.b16 %v5616, %v5608
    %v5865 = vpack.c.b16 %v5617, %v5609
    %v5866 = vpack.c.b16 %v5618, %v5610
    %v5867 = vpack.c.b16 %v5619, %v5611
    %v5868 = vpack.c.b16 %v5620, %v5612
    %v5869 = vpack.c.b16 %v5629, %v5621
    %v5870 = vpack.c.b16 %v5630, %v5622
    %v5871 = vpack.c.b16 %v5631, %v5623
    %v5872 = vpack.c.b16 %v5632, %v5624
    %v5873 = vpack.c.b16 %v5633, %v5625
    %v5874 = vpack.c.b16 %v5634, %v5626
    %v5875 = vpack.c.b16 %v5635, %v5627
    %v5876 = vpack.c.b16 %v5636, %v5628
    %v5877 = vpack.c.b16 %v5645, %v5637
    %v5878 = vpack.c.b16 %v5646, %v5638
    %v5879 = vpack.c.b16 %v5647, %v5639
    %v5880 = vpack.c.b16 %v5648, %v5640
    %v5881 = vpack.c.b16 %v5649, %v5641
    %v5882 = vpack.c.b16 %v5650, %v5642
    %v5883 = vpack.c.b16 %v5651, %v5643
    %v5884 = vpack.c.b16 %v5652, %v5644
    %v5885 = vpack.c.b16 %v5661, %v5653
    %v5886 = vpack.c.b16 %v5662, %v5654
    %v5887 = vpack.c.b16 %v5663, %v5655
    %v5888 = vpack.c.b16 %v5664, %v5656
    %v5889 = vpack.c.b16 %v5665, %v5657
    %v5890 = vpack.c.b16 %v5666, %v5658
    %v5891 = vpack.c.b16 %v5667, %v5659
    %v5892 = vpack.c.b16 %v5668, %v5660
    %v5893 = vpack.c.b16 %v5677, %v5669
    %v5894 = vpack.c.b16 %v5678, %v5670
    %v5895 = vpack.c.b16 %v5679, %v5671
    %v5896 = vpack.c.b16 %v5680, %v5672
    %v5897 = vpack.c.b16 %v5681, %v5673
    %v5898 = vpack.c.b16 %v5682, %v5674
    %v5899 = vpack.c.b16 %v5683, %v5675
    %v5900 = vpack.c.b16 %v5684, %v5676
    %v5901 = vpack.c.b16 %v5693, %v5685
    %v5902 = vpack.c.b16 %v5694, %v5686
    %v5903 = vpack.c.b16 %v5695, %v5687
    %v5904 = vpack.c.b16 %v5696, %v5688
    %v5905 = vpack.c.b16 %v5697, %v5689
    %v5906 = vpack.c.b16 %v5698, %v5690
    %v5907 = vpack.c.b16 %v5699, %v5691
    %v5908 = vpack.c.b16 %v5700, %v5692
    %v5909 = vpack.c.b16 %v5709, %v5701
    %v5910 = vpack.c.b16 %v5710, %v5702
    %v5911 = vpack.c.b16 %v5711, %v5703
    %v5912 = vpack.c.b16 %v5712, %v5704
    %v5913 = vpack.c.b16 %v5713, %v5705
    %v5914 = vpack.c.b16 %v5714, %v5706
    %v5915 = vpack.c.b16 %v5715, %v5707
    %v5916 = vpack.c.b16 %v5716, %v5708
    %v5917 = vpack.c.b16 %v5725, %v5717
    %v5918 = vpack.c.b16 %v5726, %v5718
    %v5919 = vpack.c.b16 %v5727, %v5719
    %v5920 = vpack.c.b16 %v5728, %v5720
    %v5921 = vpack.c.b16 %v5729, %v5721
    %v5922 = vpack.c.b16 %v5730, %v5722
    %v5923 = vpack.c.b16 %v5731, %v5723
    %v5924 = vpack.c.b16 %v5732, %v5724
    %v5925 = vpack.c.b16 %v5741, %v5733
    %v5926 = vpack.c.b16 %v5742, %v5734
    %v5927 = vpack.c.b16 %v5743, %v5735
    %v5928 = vpack.c.b16 %v5744, %v5736
    %v5929 = vpack.c.b16 %v5745, %v5737
    %v5930 = vpack.c.b16 %v5746, %v5738
    %v5931 = vpack.c.b16 %v5747, %v5739
    %v5932 = vpack.c.b16 %v5748, %v5740
    %v5933 = vpack.c.b16 %v5757, %v5749
    %v5934 = vpack.c.b16 %v5758, %v5750
    %v5935 = vpack.c.b16 %v5759, %v5751
    %v5936 = vpack.c.b16 %v5760, %v5752
    %v5937 = vpack.c.b16 %v5761, %v5753
    %v5938 = vpack.c.b16 %v5762, %v5754
    %v5939 = vpack.c.b16 %v5763, %v5755
    %v5940 = vpack.c.b16 %v5764, %v5756
    %v5941 = vpack.c.b16 %v5773, %v5765
    %v5942 = vpack.c.b16 %v5774, %v5766
    %v5943 = vpack.c.b16 %v5775, %v5767
    %v5944 = vpack.c.b16 %v5776, %v5768
    %v5945 = vpack.c.b16 %v5777, %v5769
    %v5946 = vpack.c.b16 %v5778, %v5770
    %v5947 = vpack.c.b16 %v5779, %v5771
    %v5948 = vpack.c.b16 %v5780, %v5772
    %v5949 = vpack.c.b16 %v5789, %v5781
    %v5950 = vpack.c.b16 %v5790, %v5782
    %v5951 = vpack.c.b16 %v5791, %v5783
    %v5952 = vpack.c.b16 %v5792, %v5784
    %v5953 = vpack.c.b16 %v5793, %v5785
    %v5954 = vpack.c.b16 %v5794, %v5786
    %v5955 = vpack.c.b16 %v5795, %v5787
    %v5956 = vpack.c.b16 %v5796, %v5788
    %v5957 = vpack.c.b16 %v5805, %v5797
    %v5958 = vpack.c.b16 %v5806, %v5798
    %v5959 = vpack.c.b16 %v5807, %v5799
    %v5960 = vpack.c.b16 %v5808, %v5800
    %v5961 = vpack.c.b16 %v5809, %v5801
    %v5962 = vpack.c.b16 %v5810, %v5802
    %v5963 = vpack.c.b16 %v5811, %v5803
    %v5964 = vpack.c.b16 %v5812, %v5804
    %v5965 = vpack.c.b16 %v5821, %v5813
    %v5966 = vpack.c.b16 %v5822, %v5814
    %v5967 = vpack.c.b16 %v5823, %v5815
    %v5968 = vpack.c.b16 %v5824, %v5816
    %v5969 = vpack.c.b16 %v5825, %v5817
    %v5970 = vpack.c.b16 %v5826, %v5818
    %v5971 = vpack.c.b16 %v5827, %v5819
    %v5972 = vpack.c.b16 %v5828, %v5820
    %v5973 = vpack.c.b16 %v5837, %v5829
    %v5974 = vpack.c.b16 %v5838, %v5830
    %v5975 = vpack.c.b16 %v5839, %v5831
    %v5976 = vpack.c.b16 %v5840, %v5832
    %v5977 = vpack.c.b16 %v5841, %v5833
    %v5978 = vpack.c.b16 %v5842, %v5834
    %v5979 = vpack.c.b16 %v5843, %v5835
    %v5980 = vpack.c.b16 %v5844, %v5836
    %v5981 = vpack.c.b16 %v5853, %v5845
    %v5982 = vpack.c.b16 %v5854, %v5846
    %v5983 = vpack.c.b16 %v5855, %v5847
    %v5984 = vpack.c.b16 %v5856, %v5848
    %v5985 = vpack.c.b16 %v5857, %v5849
    %v5986 = vpack.c.b16 %v5858, %v5850
    %v5987 = vpack.c.b16 %v5859, %v5851
    %v5988 = vpack.c.b16 %v5860, %v5852
    %6117 = vmatprep.subr.bf16.mxu0 %v5918
    %6118 = vmatpush1.bf16.msra.mxu0 %v5917
    %6119 = vmatprep.subr.bf16.mxu0 %v5910
    %6120 = vmatpush1.bf16.msra.mxu0 %v5909
    %6121 = vmatprep.subr.bf16.mxu0 %v5902
    %6122 = vmatpush1.bf16.msra.mxu0 %v5901
    %6123 = vmatprep.subr.bf16.mxu0 %v5894
    %6124 = vmatpush1.bf16.msra.mxu0 %v5893
    %6125 = vmatprep.subr.bf16.mxu0 %v5886
    %6126 = vmatpush1.bf16.msra.mxu0 %v5885
    %6127 = vmatprep.subr.bf16.mxu0 %v5878
    %6128 = vmatpush1.bf16.msra.mxu0 %v5877
    %6129 = vmatprep.subr.bf16.mxu0 %v5870
    %6130 = vmatpush1.bf16.msra.mxu0 %v5869
    %6131 = vmatprep.subr.bf16.mxu0 %v5862
    %6132 = vmatpush1.bf16.msra.mxu0 %v5861
    %6133 = vmatprep.subr.bf16.mxu0 %v5982
    %6134 = vmatpush2.bf16.msra.mxu0 %v5981
    %6135 = vmatprep.subr.bf16.mxu0 %v5974
    %6136 = vmatpush2.bf16.msra.mxu0 %v5973
    %6137 = vmatprep.subr.bf16.mxu0 %v5966
    %6138 = vmatpush2.bf16.msra.mxu0 %v5965
    %6139 = vmatprep.subr.bf16.mxu0 %v5958
    %6140 = vmatpush2.bf16.msra.mxu0 %v5957
    %6141 = vmatprep.subr.bf16.mxu0 %v5950
    %6142 = vmatpush2.bf16.msra.mxu0 %v5949
    %6143 = vmatprep.subr.bf16.mxu0 %v5942
    %6144 = vmatpush2.bf16.msra.mxu0 %v5941
    %6145 = vmatprep.subr.bf16.mxu0 %v5934
    %6146 = vmatpush2.bf16.msra.mxu0 %v5933
    %6147 = vmatprep.subr.bf16.mxu0 %v5926
    %6148 = vmatpush2.bf16.msra.mxu0 %v5925
    %6149 = vmatprep.mubr.bf16.mxu0 0
    %6150 = vmatmul.mubr.bf16.gmra.mxu0 0
    %v6151 = vpop.f32.mrf.mxu0
    %v6152 = vadd.f32 0.0, %v6151
    %v6153 = vpop.f32.mrf.mxu0
    %v6154 = vadd.f32 0.0, %v6153
    %v6155 = vpop.f32.mrf.mxu0
    %v6156 = vpop.f32.mrf.mxu0
    %6157 = vdwg.mxu0
    %6158 = vmatprep.subr.bf16.mxu0 %v5920
    %6159 = vmatpush1.bf16.msra.mxu0 %v5919
    %6160 = vmatprep.subr.bf16.mxu0 %v5912
    %6161 = vmatpush1.bf16.msra.mxu0 %v5911
    %6162 = vmatprep.subr.bf16.mxu0 %v5904
    %6163 = vmatpush1.bf16.msra.mxu0 %v5903
    %6164 = vmatprep.subr.bf16.mxu0 %v5896
    %6165 = vmatpush1.bf16.msra.mxu0 %v5895
    %6166 = vmatprep.subr.bf16.mxu0 %v5888
    %6167 = vmatpush1.bf16.msra.mxu0 %v5887
    %6168 = vmatprep.subr.bf16.mxu0 %v5880
    %6169 = vmatpush1.bf16.msra.mxu0 %v5879
    %6170 = vmatprep.subr.bf16.mxu0 %v5872
    %6171 = vmatpush1.bf16.msra.mxu0 %v5871
    %6172 = vmatprep.subr.bf16.mxu0 %v5864
    %6173 = vmatpush1.bf16.msra.mxu0 %v5863
    %6174 = vmatprep.subr.bf16.mxu0 %v5984
    %6175 = vmatpush2.bf16.msra.mxu0 %v5983
    %6176 = vmatprep.subr.bf16.mxu0 %v5976
    %6177 = vmatpush2.bf16.msra.mxu0 %v5975
    %6178 = vmatprep.subr.bf16.mxu0 %v5968
    %6179 = vmatpush2.bf16.msra.mxu0 %v5967
    %6180 = vmatprep.subr.bf16.mxu0 %v5960
    %6181 = vmatpush2.bf16.msra.mxu0 %v5959
    %6182 = vmatprep.subr.bf16.mxu0 %v5952
    %6183 = vmatpush2.bf16.msra.mxu0 %v5951
    %6184 = vmatprep.subr.bf16.mxu0 %v5944
    %6185 = vmatpush2.bf16.msra.mxu0 %v5943
    %6186 = vmatprep.subr.bf16.mxu0 %v5936
    %6187 = vmatpush2.bf16.msra.mxu0 %v5935
    %6188 = vmatprep.subr.bf16.mxu0 %v5928
    %6189 = vmatpush2.bf16.msra.mxu0 %v5927
    %6190 = vmatprep.mubr.bf16.mxu0 0
    %6191 = vmatmul.mubr.bf16.gmra.mxu0 0
    %v6192 = vpop.f32.mrf.mxu0
    %v6193 = vadd.f32 0.0, %v6192
    %v6194 = vpop.f32.mrf.mxu0
    %v6195 = vadd.f32 0.0, %v6194
    %v6196 = vpop.f32.mrf.mxu0
    %v6197 = vpop.f32.mrf.mxu0
    %6198 = vdwg.mxu0
    %6199 = vmatprep.subr.bf16.mxu0 %v5922
    %6200 = vmatpush1.bf16.msra.mxu0 %v5921
    %6201 = vmatprep.subr.bf16.mxu0 %v5914
    %6202 = vmatpush1.bf16.msra.mxu0 %v5913
    %6203 = vmatprep.subr.bf16.mxu0 %v5906
    %6204 = vmatpush1.bf16.msra.mxu0 %v5905
    %6205 = vmatprep.subr.bf16.mxu0 %v5898
    %6206 = vmatpush1.bf16.msra.mxu0 %v5897
    %6207 = vmatprep.subr.bf16.mxu0 %v5890
    %6208 = vmatpush1.bf16.msra.mxu0 %v5889
    %6209 = vmatprep.subr.bf16.mxu0 %v5882
    %6210 = vmatpush1.bf16.msra.mxu0 %v5881
    %6211 = vmatprep.subr.bf16.mxu0 %v5874
    %6212 = vmatpush1.bf16.msra.mxu0 %v5873
    %6213 = vmatprep.subr.bf16.mxu0 %v5866
    %6214 = vmatpush1.bf16.msra.mxu0 %v5865
    %6215 = vmatprep.subr.bf16.mxu0 %v5986
    %6216 = vmatpush2.bf16.msra.mxu0 %v5985
    %6217 = vmatprep.subr.bf16.mxu0 %v5978
    %6218 = vmatpush2.bf16.msra.mxu0 %v5977
    %6219 = vmatprep.subr.bf16.mxu0 %v5970
    %6220 = vmatpush2.bf16.msra.mxu0 %v5969
    %6221 = vmatprep.subr.bf16.mxu0 %v5962
    %6222 = vmatpush2.bf16.msra.mxu0 %v5961
    %6223 = vmatprep.subr.bf16.mxu0 %v5954
    %6224 = vmatpush2.bf16.msra.mxu0 %v5953
    %6225 = vmatprep.subr.bf16.mxu0 %v5946
    %6226 = vmatpush2.bf16.msra.mxu0 %v5945
    %6227 = vmatprep.subr.bf16.mxu0 %v5938
    %6228 = vmatpush2.bf16.msra.mxu0 %v5937
    %6229 = vmatprep.subr.bf16.mxu0 %v5930
    %6230 = vmatpush2.bf16.msra.mxu0 %v5929
    %6231 = vmatprep.mubr.bf16.mxu0 0
    %6232 = vmatmul.mubr.bf16.gmra.mxu0 0
    %v6233 = vpop.f32.mrf.mxu0
    %v6234 = vadd.f32 0.0, %v6233
    %v6235 = vpop.f32.mrf.mxu0
    %v6236 = vadd.f32 0.0, %v6235
    %v6237 = vpop.f32.mrf.mxu0
    %v6238 = vpop.f32.mrf.mxu0
    %6239 = vdwg.mxu0
    %6240 = vmatprep.subr.bf16.mxu0 %v5924
    %6241 = vmatpush1.bf16.msra.mxu0 %v5923
    %6242 = vmatprep.subr.bf16.mxu0 %v5916
    %6243 = vmatpush1.bf16.msra.mxu0 %v5915
    %6244 = vmatprep.subr.bf16.mxu0 %v5908
    %6245 = vmatpush1.bf16.msra.mxu0 %v5907
    %6246 = vmatprep.subr.bf16.mxu0 %v5900
    %6247 = vmatpush1.bf16.msra.mxu0 %v5899
    %6248 = vmatprep.subr.bf16.mxu0 %v5892
    %6249 = vmatpush1.bf16.msra.mxu0 %v5891
    %6250 = vmatprep.subr.bf16.mxu0 %v5884
    %6251 = vmatpush1.bf16.msra.mxu0 %v5883
    %6252 = vmatprep.subr.bf16.mxu0 %v5876
    %6253 = vmatpush1.bf16.msra.mxu0 %v5875
    %6254 = vmatprep.subr.bf16.mxu0 %v5868
    %6255 = vmatpush1.bf16.msra.mxu0 %v5867
    %6256 = vmatprep.subr.bf16.mxu0 %v5988
    %6257 = vmatpush2.bf16.msra.mxu0 %v5987
    %6258 = vmatprep.subr.bf16.mxu0 %v5980
    %6259 = vmatpush2.bf16.msra.mxu0 %v5979
    %6260 = vmatprep.subr.bf16.mxu0 %v5972
    %6261 = vmatpush2.bf16.msra.mxu0 %v5971
    %6262 = vmatprep.subr.bf16.mxu0 %v5964
    %6263 = vmatpush2.bf16.msra.mxu0 %v5963
    %6264 = vmatprep.subr.bf16.mxu0 %v5956
    %6265 = vmatpush2.bf16.msra.mxu0 %v5955
    %6266 = vmatprep.subr.bf16.mxu0 %v5948
    %6267 = vmatpush2.bf16.msra.mxu0 %v5947
    %6268 = vmatprep.subr.bf16.mxu0 %v5940
    %6269 = vmatpush2.bf16.msra.mxu0 %v5939
    %6270 = vmatprep.subr.bf16.mxu0 %v5932
    %6271 = vmatpush2.bf16.msra.mxu0 %v5931
    %6272 = vmatprep.mubr.bf16.mxu0 0
    %6273 = vmatmul.mubr.bf16.gmra.mxu0 0
    %v6274 = vpop.f32.mrf.mxu0
    %v6275 = vadd.f32 0.0, %v6274
    %v6276 = vpop.f32.mrf.mxu0
    %v6277 = vadd.f32 0.0, %v6276
    %v6278 = vpop.f32.mrf.mxu0
    %v6279 = vpop.f32.mrf.mxu0
    %6280 = vdwg.mxu0
    %v6297 = vunpack.c.l.b16 %v5333
    %v6298 = vunpack.c.h.b16 %v5333
    %v6299 = vunpack.c.l.b16 %v5334
    %v6300 = vunpack.c.h.b16 %v5334
    %v6301 = vunpack.c.l.b16 %v5335
    %v6302 = vunpack.c.h.b16 %v5335
    %v6303 = vunpack.c.l.b16 %v5336
    %v6304 = vunpack.c.h.b16 %v5336
    %v6305 = vunpack.c.l.b16 %v5337
    %v6306 = vunpack.c.h.b16 %v5337
    %v6307 = vunpack.c.l.b16 %v5338
    %v6308 = vunpack.c.h.b16 %v5338
    %v6309 = vunpack.c.l.b16 %v5339
    %v6310 = vunpack.c.h.b16 %v5339
    %v6311 = vunpack.c.l.b16 %v5340
    %v6312 = vunpack.c.h.b16 %v5340
    %v6313 = vunpack.c.l.b16 %v5341
    %v6314 = vunpack.c.h.b16 %v5341
    %v6315 = vunpack.c.l.b16 %v5342
    %v6316 = vunpack.c.h.b16 %v5342
    %v6317 = vunpack.c.l.b16 %v5343
    %v6318 = vunpack.c.h.b16 %v5343
    %v6319 = vunpack.c.l.b16 %v5344
    %v6320 = vunpack.c.h.b16 %v5344
    %v6321 = vunpack.c.l.b16 %v5345
    %v6322 = vunpack.c.h.b16 %v5345
    %v6323 = vunpack.c.l.b16 %v5346
    %v6324 = vunpack.c.h.b16 %v5346
    %v6325 = vunpack.c.l.b16 %v5347
    %v6326 = vunpack.c.h.b16 %v5347
    %v6327 = vunpack.c.l.b16 %v5348
    %v6328 = vunpack.c.h.b16 %v5348
    %v6329 = vpack.c.b16 %v6305, %v6297
    %v6330 = vpack.c.b16 %v6306, %v6298
    %v6331 = vpack.c.b16 %v6307, %v6299
    %v6332 = vpack.c.b16 %v6308, %v6300
    %v6333 = vpack.c.b16 %v6309, %v6301
    %v6334 = vpack.c.b16 %v6310, %v6302
    %v6335 = vpack.c.b16 %v6311, %v6303
    %v6336 = vpack.c.b16 %v6312, %v6304
    %v6337 = vpack.c.b16 %v6321, %v6313
    %v6338 = vpack.c.b16 %v6322, %v6314
    %v6339 = vpack.c.b16 %v6323, %v6315
    %v6340 = vpack.c.b16 %v6324, %v6316
    %v6341 = vpack.c.b16 %v6325, %v6317
    %v6342 = vpack.c.b16 %v6326, %v6318
    %v6343 = vpack.c.b16 %v6327, %v6319
    %v6344 = vpack.c.b16 %v6328, %v6320
    %vm6361 = vcmask 261120
    %v6363 = vsel %vm6361, %v5332, 0
    %6365 = vmatprep.subr.bf16.mxu0 0
    %6366 = vmatpush1.bf16.msra.mxu0 0
    %6367 = vmatprep.subr.bf16.mxu0 0
    %6368 = vmatpush1.bf16.msra.mxu0 0
    %6369 = vmatprep.subr.bf16.mxu0 0
    %6370 = vmatpush1.bf16.msra.mxu0 0
    %6371 = vmatprep.subr.bf16.mxu0 0
    %6372 = vmatpush1.bf16.msra.mxu0 0
    %6373 = vmatprep.subr.bf16.mxu0 0
    %6374 = vmatpush1.bf16.msra.mxu0 0
    %6375 = vmatprep.subr.bf16.mxu0 0
    %6376 = vmatpush1.bf16.msra.mxu0 0
    %6377 = vmatprep.subr.bf16.mxu0 %v6338
    %6378 = vmatpush1.bf16.msra.mxu0 %v6337
    %6379 = vmatprep.subr.bf16.mxu0 %v6330
    %6380 = vmatpush1.bf16.msra.mxu0 %v6329
    %6381 = vmatprep.subr.bf16.mxu0 0
    %6382 = vmatpush2.bf16.msra.mxu0 0
    %6383 = vmatprep.subr.bf16.mxu0 0
    %6384 = vmatpush2.bf16.msra.mxu0 0
    %6385 = vmatprep.subr.bf16.mxu0 0
    %6386 = vmatpush2.bf16.msra.mxu0 0
    %6387 = vmatprep.subr.bf16.mxu0 0
    %6388 = vmatpush2.bf16.msra.mxu0 0
    %6389 = vmatprep.subr.bf16.mxu0 0
    %6390 = vmatpush2.bf16.msra.mxu0 0
    %6391 = vmatprep.subr.bf16.mxu0 0
    %6392 = vmatpush2.bf16.msra.mxu0 0
    %6393 = vmatprep.subr.bf16.mxu0 0
    %6394 = vmatpush2.bf16.msra.mxu0 0
    %6395 = vmatprep.subr.bf16.mxu0 0
    %6396 = vmatpush2.bf16.msra.mxu0 0
    %6397 = vmatprep.mubr.bf16.mxu0 0
    %6398 = vmatmul.mubr.bf16.gmra.mxu0 %v6363
    %v6399 = vpop.f32.mrf.mxu0
    %v6400 = vadd.f32 %v6152, %v6399
    %v6401 = vpop.f32.mrf.mxu0
    %v6402 = vadd.f32 %v6154, %v6401
    %v6403 = vpop.f32.mrf.mxu0
    %v6404 = vpop.f32.mrf.mxu0
    %6405 = vdwg.mxu0
    %6406 = vmatprep.subr.bf16.mxu0 0
    %6407 = vmatpush1.bf16.msra.mxu0 0
    %6408 = vmatprep.subr.bf16.mxu0 0
    %6409 = vmatpush1.bf16.msra.mxu0 0
    %6410 = vmatprep.subr.bf16.mxu0 0
    %6411 = vmatpush1.bf16.msra.mxu0 0
    %6412 = vmatprep.subr.bf16.mxu0 0
    %6413 = vmatpush1.bf16.msra.mxu0 0
    %6414 = vmatprep.subr.bf16.mxu0 0
    %6415 = vmatpush1.bf16.msra.mxu0 0
    %6416 = vmatprep.subr.bf16.mxu0 0
    %6417 = vmatpush1.bf16.msra.mxu0 0
    %6418 = vmatprep.subr.bf16.mxu0 %v6340
    %6419 = vmatpush1.bf16.msra.mxu0 %v6339
    %6420 = vmatprep.subr.bf16.mxu0 %v6332
    %6421 = vmatpush1.bf16.msra.mxu0 %v6331
    %6422 = vmatprep.subr.bf16.mxu0 0
    %6423 = vmatpush2.bf16.msra.mxu0 0
    %6424 = vmatprep.subr.bf16.mxu0 0
    %6425 = vmatpush2.bf16.msra.mxu0 0
    %6426 = vmatprep.subr.bf16.mxu0 0
    %6427 = vmatpush2.bf16.msra.mxu0 0
    %6428 = vmatprep.subr.bf16.mxu0 0
    %6429 = vmatpush2.bf16.msra.mxu0 0
    %6430 = vmatprep.subr.bf16.mxu0 0
    %6431 = vmatpush2.bf16.msra.mxu0 0
    %6432 = vmatprep.subr.bf16.mxu0 0
    %6433 = vmatpush2.bf16.msra.mxu0 0
    %6434 = vmatprep.subr.bf16.mxu0 0
    %6435 = vmatpush2.bf16.msra.mxu0 0
    %6436 = vmatprep.subr.bf16.mxu0 0
    %6437 = vmatpush2.bf16.msra.mxu0 0
    %6438 = vmatprep.mubr.bf16.mxu0 0
    %6439 = vmatmul.mubr.bf16.gmra.mxu0 %v6363
    %v6440 = vpop.f32.mrf.mxu0
    %v6441 = vadd.f32 %v6193, %v6440
    %v6442 = vpop.f32.mrf.mxu0
    %v6443 = vadd.f32 %v6195, %v6442
    %v6444 = vpop.f32.mrf.mxu0
    %v6445 = vpop.f32.mrf.mxu0
    %6446 = vdwg.mxu0
    %6447 = vmatprep.subr.bf16.mxu0 0
    %6448 = vmatpush1.bf16.msra.mxu0 0
    %6449 = vmatprep.subr.bf16.mxu0 0
    %6450 = vmatpush1.bf16.msra.mxu0 0
    %6451 = vmatprep.subr.bf16.mxu0 0
    %6452 = vmatpush1.bf16.msra.mxu0 0
    %6453 = vmatprep.subr.bf16.mxu0 0
    %6454 = vmatpush1.bf16.msra.mxu0 0
    %6455 = vmatprep.subr.bf16.mxu0 0
    %6456 = vmatpush1.bf16.msra.mxu0 0
    %6457 = vmatprep.subr.bf16.mxu0 0
    %6458 = vmatpush1.bf16.msra.mxu0 0
    %6459 = vmatprep.subr.bf16.mxu0 %v6342
    %6460 = vmatpush1.bf16.msra.mxu0 %v6341
    %6461 = vmatprep.subr.bf16.mxu0 %v6334
    %6462 = vmatpush1.bf16.msra.mxu0 %v6333
    %6463 = vmatprep.subr.bf16.mxu0 0
    %6464 = vmatpush2.bf16.msra.mxu0 0
    %6465 = vmatprep.subr.bf16.mxu0 0
    %6466 = vmatpush2.bf16.msra.mxu0 0
    %6467 = vmatprep.subr.bf16.mxu0 0
    %6468 = vmatpush2.bf16.msra.mxu0 0
    %6469 = vmatprep.subr.bf16.mxu0 0
    %6470 = vmatpush2.bf16.msra.mxu0 0
    %6471 = vmatprep.subr.bf16.mxu0 0
    %6472 = vmatpush2.bf16.msra.mxu0 0
    %6473 = vmatprep.subr.bf16.mxu0 0
    %6474 = vmatpush2.bf16.msra.mxu0 0
    %6475 = vmatprep.subr.bf16.mxu0 0
    %6476 = vmatpush2.bf16.msra.mxu0 0
    %6477 = vmatprep.subr.bf16.mxu0 0
    %6478 = vmatpush2.bf16.msra.mxu0 0
    %6479 = vmatprep.mubr.bf16.mxu0 0
    %6480 = vmatmul.mubr.bf16.gmra.mxu0 %v6363
    %v6481 = vpop.f32.mrf.mxu0
    %v6482 = vadd.f32 %v6234, %v6481
    %v6483 = vpop.f32.mrf.mxu0
    %v6484 = vadd.f32 %v6236, %v6483
    %v6485 = vpop.f32.mrf.mxu0
    %v6486 = vpop.f32.mrf.mxu0
    %6487 = vdwg.mxu0
    %6488 = vmatprep.subr.bf16.mxu0 0
    %6489 = vmatpush1.bf16.msra.mxu0 0
    %6490 = vmatprep.subr.bf16.mxu0 0
    %6491 = vmatpush1.bf16.msra.mxu0 0
    %6492 = vmatprep.subr.bf16.mxu0 0
    %6493 = vmatpush1.bf16.msra.mxu0 0
    %6494 = vmatprep.subr.bf16.mxu0 0
    %6495 = vmatpush1.bf16.msra.mxu0 0
    %6496 = vmatprep.subr.bf16.mxu0 0
    %6497 = vmatpush1.bf16.msra.mxu0 0
    %6498 = vmatprep.subr.bf16.mxu0 0
    %6499 = vmatpush1.bf16.msra.mxu0 0
    %6500 = vmatprep.subr.bf16.mxu0 %v6344
    %6501 = vmatpush1.bf16.msra.mxu0 %v6343
    %6502 = vmatprep.subr.bf16.mxu0 %v6336
    %6503 = vmatpush1.bf16.msra.mxu0 %v6335
    %6504 = vmatprep.subr.bf16.mxu0 0
    %6505 = vmatpush2.bf16.msra.mxu0 0
    %6506 = vmatprep.subr.bf16.mxu0 0
    %6507 = vmatpush2.bf16.msra.mxu0 0
    %6508 = vmatprep.subr.bf16.mxu0 0
    %6509 = vmatpush2.bf16.msra.mxu0 0
    %6510 = vmatprep.subr.bf16.mxu0 0
    %6511 = vmatpush2.bf16.msra.mxu0 0
    %6512 = vmatprep.subr.bf16.mxu0 0
    %6513 = vmatpush2.bf16.msra.mxu0 0
    %6514 = vmatprep.subr.bf16.mxu0 0
    %6515 = vmatpush2.bf16.msra.mxu0 0
    %6516 = vmatprep.subr.bf16.mxu0 0
    %6517 = vmatpush2.bf16.msra.mxu0 0
    %6518 = vmatprep.subr.bf16.mxu0 0
    %6519 = vmatpush2.bf16.msra.mxu0 0
    %6520 = vmatprep.mubr.bf16.mxu0 0
    %6521 = vmatmul.mubr.bf16.gmra.mxu0 %v6363
    %v6522 = vpop.f32.mrf.mxu0
    %v6523 = vadd.f32 %v6275, %v6522
    %v6524 = vpop.f32.mrf.mxu0
    %v6525 = vadd.f32 %v6277, %v6524
    %v6526 = vpop.f32.mrf.mxu0
    %v6527 = vpop.f32.mrf.mxu0
    %6528 = vdwg.mxu0
    %v6529 = vld [vmem:[%s7] sm:$0xff]
    %v6531 = vlaneseq
    %v6532 = vshrl.u32 %v6531, 7
    %v6533 = vsub.s32 0, %v6532
    %v6534 = vrot.slane %v6529, %v6533
    %v6535 = vlaneseq
    %v6536 = vshrl.u32 %v6535, 7
    %v6537 = vsub.s32 1, %v6536
    %v6538 = vrot.slane %v6529, %v6537
    %v6539 = vlaneseq
    %v6540 = vshrl.u32 %v6539, 7
    %v6541 = vsub.s32 2, %v6540
    %v6542 = vrot.slane %v6529, %v6541
    %v6543 = vlaneseq
    %v6544 = vshrl.u32 %v6543, 7
    %v6545 = vsub.s32 3, %v6544
    %v6546 = vrot.slane %v6529, %v6545
    %v6547 = vlaneseq
    %v6548 = vshrl.u32 %v6547, 7
    %v6549 = vsub.s32 4, %v6548
    %v6550 = vrot.slane %v6529, %v6549
    %v6551 = vlaneseq
    %v6552 = vshrl.u32 %v6551, 7
    %v6553 = vsub.s32 5, %v6552
    %v6554 = vrot.slane %v6529, %v6553
    %v6555 = vlaneseq
    %v6556 = vshrl.u32 %v6555, 7
    %v6557 = vsub.s32 6, %v6556
    %v6558 = vrot.slane %v6529, %v6557
    %v6559 = vlaneseq
    %v6560 = vshrl.u32 %v6559, 7
    %v6561 = vsub.s32 7, %v6560
    %v6562 = vrot.slane %v6529, %v6561
    %v6571 = vadd.f32 %v6400, %v6534
    %v6572 = vadd.f32 %v6402, %v6538
    %v6573 = vadd.f32 %v6441, %v6542
    %v6574 = vadd.f32 %v6443, %v6546
    %v6575 = vadd.f32 %v6482, %v6550
    %v6576 = vadd.f32 %v6484, %v6554
    %v6577 = vadd.f32 %v6523, %v6558
    %v6578 = vadd.f32 %v6525, %v6562
    %v6579 = vxor.u32 %v6571, 2147483648
    %v6580 = vxor.u32 %v6572, 2147483648
    %v6581 = vmul.f32 %v6579, 1.442695
    %v6582 = vpow.pop %v6581
    %v6583 = vmul.f32 %v6580, 1.442695
    %v6584 = vpow.pop %v6583
    %v6585 = vadd.f32 %v6582, 1.0
    %v6586 = vadd.f32 %v6584, 1.0
    %v6587 = vrcp.pop %v6585
    %v6588 = vmul.f32 1.0, %v6587
    %v6589 = vrcp.pop %v6586
    %v6590 = vmul.f32 1.0, %v6589
    %v6591 = vxor.u32 %v6573, 2147483648
    %v6592 = vxor.u32 %v6574, 2147483648
    %v6593 = vmul.f32 %v6591, 1.442695
    %v6594 = vpow.pop %v6593
    %v6595 = vmul.f32 %v6592, 1.442695
    %v6596 = vpow.pop %v6595
    %v6597 = vadd.f32 %v6594, 1.0
    %v6598 = vadd.f32 %v6596, 1.0
    %v6599 = vrcp.pop %v6597
    %v6600 = vmul.f32 1.0, %v6599
    %v6601 = vrcp.pop %v6598
    %v6602 = vmul.f32 1.0, %v6601
    %v6603 = vtanh.pop %v6575
    %v6604 = vtanh.pop %v6576
    %v6605 = vxor.u32 %v6577, 2147483648
    %v6606 = vxor.u32 %v6578, 2147483648
    %v6607 = vmul.f32 %v6605, 1.442695
    %v6608 = vpow.pop %v6607
    %v6609 = vmul.f32 %v6606, 1.442695
    %v6610 = vpow.pop %v6609
    %v6611 = vadd.f32 %v6608, 1.0
    %v6612 = vadd.f32 %v6610, 1.0
    %v6613 = vrcp.pop %v6611
    %v6614 = vmul.f32 1.0, %v6613
    %v6615 = vrcp.pop %v6612
    %v6616 = vmul.f32 1.0, %v6615
    %v6617 = vmul.f32 %v6600, 0.0
    %v6618 = vmul.f32 %v6602, 0.0
    %v6619 = vmul.f32 %v6588, %v6603
    %v6620 = vmul.f32 %v6590, %v6604
    %v6621 = vadd.f32 %v6617, %v6619
    %v6622 = vadd.f32 %v6618, %v6620
    %v6623 = vtanh.pop %v6621
    %v6624 = vtanh.pop %v6622
    %v6625 = vmul.f32 %v6614, %v6623
    %v6626 = vmul.f32 %v6616, %v6624
    %v6627 = vmax.f32 %v5327, %v5328
    %v6628 = vpack.c.bf16 %v6627, %v6627
    %v6629 = vpack.c.bf16 %v6625, %v6625
    %v6630 = vpack.c.bf16 %v6626, %v6626
    %6631 = vmatprep.subr.bf16.mxu0 %v5918
    %6632 = vmatpush1.bf16.msra.mxu0 %v5917
    %6633 = vmatprep.subr.bf16.mxu0 %v5910
    %6634 = vmatpush1.bf16.msra.mxu0 %v5909
    %6635 = vmatprep.subr.bf16.mxu0 %v5902
    %6636 = vmatpush1.bf16.msra.mxu0 %v5901
    %6637 = vmatprep.subr.bf16.mxu0 %v5894
    %6638 = vmatpush1.bf16.msra.mxu0 %v5893
    %6639 = vmatprep.subr.bf16.mxu0 %v5886
    %6640 = vmatpush1.bf16.msra.mxu0 %v5885
    %6641 = vmatprep.subr.bf16.mxu0 %v5878
    %6642 = vmatpush1.bf16.msra.mxu0 %v5877
    %6643 = vmatprep.subr.bf16.mxu0 %v5870
    %6644 = vmatpush1.bf16.msra.mxu0 %v5869
    %6645 = vmatprep.subr.bf16.mxu0 %v5862
    %6646 = vmatpush1.bf16.msra.mxu0 %v5861
    %6647 = vmatprep.subr.bf16.mxu0 %v5982
    %6648 = vmatpush2.bf16.msra.mxu0 %v5981
    %6649 = vmatprep.subr.bf16.mxu0 %v5974
    %6650 = vmatpush2.bf16.msra.mxu0 %v5973
    %6651 = vmatprep.subr.bf16.mxu0 %v5966
    %6652 = vmatpush2.bf16.msra.mxu0 %v5965
    %6653 = vmatprep.subr.bf16.mxu0 %v5958
    %6654 = vmatpush2.bf16.msra.mxu0 %v5957
    %6655 = vmatprep.subr.bf16.mxu0 %v5950
    %6656 = vmatpush2.bf16.msra.mxu0 %v5949
    %6657 = vmatprep.subr.bf16.mxu0 %v5942
    %6658 = vmatpush2.bf16.msra.mxu0 %v5941
    %6659 = vmatprep.subr.bf16.mxu0 %v5934
    %6660 = vmatpush2.bf16.msra.mxu0 %v5933
    %6661 = vmatprep.subr.bf16.mxu0 %v5926
    %6662 = vmatpush2.bf16.msra.mxu0 %v5925
    %6663 = vmatprep.mubr.bf16.mxu0 %v6630
    %6664 = vmatmul.mubr.bf16.gmra.mxu0 %v6629
    %v6665 = vpop.f32.mrf.mxu0
    %v6666 = vadd.f32 0.0, %v6665
    %v6667 = vpop.f32.mrf.mxu0
    %v6668 = vadd.f32 0.0, %v6667
    %v6669 = vpop.f32.mrf.mxu0
    %v6670 = vpop.f32.mrf.mxu0
    %6671 = vdwg.mxu0
    %6672 = vmatprep.subr.bf16.mxu0 %v5920
    %6673 = vmatpush1.bf16.msra.mxu0 %v5919
    %6674 = vmatprep.subr.bf16.mxu0 %v5912
    %6675 = vmatpush1.bf16.msra.mxu0 %v5911
    %6676 = vmatprep.subr.bf16.mxu0 %v5904
    %6677 = vmatpush1.bf16.msra.mxu0 %v5903
    %6678 = vmatprep.subr.bf16.mxu0 %v5896
    %6679 = vmatpush1.bf16.msra.mxu0 %v5895
    %6680 = vmatprep.subr.bf16.mxu0 %v5888
    %6681 = vmatpush1.bf16.msra.mxu0 %v5887
    %6682 = vmatprep.subr.bf16.mxu0 %v5880
    %6683 = vmatpush1.bf16.msra.mxu0 %v5879
    %6684 = vmatprep.subr.bf16.mxu0 %v5872
    %6685 = vmatpush1.bf16.msra.mxu0 %v5871
    %6686 = vmatprep.subr.bf16.mxu0 %v5864
    %6687 = vmatpush1.bf16.msra.mxu0 %v5863
    %6688 = vmatprep.subr.bf16.mxu0 %v5984
    %6689 = vmatpush2.bf16.msra.mxu0 %v5983
    %6690 = vmatprep.subr.bf16.mxu0 %v5976
    %6691 = vmatpush2.bf16.msra.mxu0 %v5975
    %6692 = vmatprep.subr.bf16.mxu0 %v5968
    %6693 = vmatpush2.bf16.msra.mxu0 %v5967
    %6694 = vmatprep.subr.bf16.mxu0 %v5960
    %6695 = vmatpush2.bf16.msra.mxu0 %v5959
    %6696 = vmatprep.subr.bf16.mxu0 %v5952
    %6697 = vmatpush2.bf16.msra.mxu0 %v5951
    %6698 = vmatprep.subr.bf16.mxu0 %v5944
    %6699 = vmatpush2.bf16.msra.mxu0 %v5943
    %6700 = vmatprep.subr.bf16.mxu0 %v5936
    %6701 = vmatpush2.bf16.msra.mxu0 %v5935
    %6702 = vmatprep.subr.bf16.mxu0 %v5928
    %6703 = vmatpush2.bf16.msra.mxu0 %v5927
    %6704 = vmatprep.mubr.bf16.mxu0 %v6630
    %6705 = vmatmul.mubr.bf16.gmra.mxu0 %v6629
    %v6706 = vpop.f32.mrf.mxu0
    %v6707 = vadd.f32 0.0, %v6706
    %v6708 = vpop.f32.mrf.mxu0
    %v6709 = vadd.f32 0.0, %v6708
    %v6710 = vpop.f32.mrf.mxu0
    %v6711 = vpop.f32.mrf.mxu0
    %6712 = vdwg.mxu0
    %6713 = vmatprep.subr.bf16.mxu0 %v5922
    %6714 = vmatpush1.bf16.msra.mxu0 %v5921
    %6715 = vmatprep.subr.bf16.mxu0 %v5914
    %6716 = vmatpush1.bf16.msra.mxu0 %v5913
    %6717 = vmatprep.subr.bf16.mxu0 %v5906
    %6718 = vmatpush1.bf16.msra.mxu0 %v5905
    %6719 = vmatprep.subr.bf16.mxu0 %v5898
    %6720 = vmatpush1.bf16.msra.mxu0 %v5897
    %6721 = vmatprep.subr.bf16.mxu0 %v5890
    %6722 = vmatpush1.bf16.msra.mxu0 %v5889
    %6723 = vmatprep.subr.bf16.mxu0 %v5882
    %6724 = vmatpush1.bf16.msra.mxu0 %v5881
    %6725 = vmatprep.subr.bf16.mxu0 %v5874
    %6726 = vmatpush1.bf16.msra.mxu0 %v5873
    %6727 = vmatprep.subr.bf16.mxu0 %v5866
    %6728 = vmatpush1.bf16.msra.mxu0 %v5865
    %6729 = vmatprep.subr.bf16.mxu0 %v5986
    %6730 = vmatpush2.bf16.msra.mxu0 %v5985
    %6731 = vmatprep.subr.bf16.mxu0 %v5978
    %6732 = vmatpush2.bf16.msra.mxu0 %v5977
    %6733 = vmatprep.subr.bf16.mxu0 %v5970
    %6734 = vmatpush2.bf16.msra.mxu0 %v5969
    %6735 = vmatprep.subr.bf16.mxu0 %v5962
    %6736 = vmatpush2.bf16.msra.mxu0 %v5961
    %6737 = vmatprep.subr.bf16.mxu0 %v5954
    %6738 = vmatpush2.bf16.msra.mxu0 %v5953
    %6739 = vmatprep.subr.bf16.mxu0 %v5946
    %6740 = vmatpush2.bf16.msra.mxu0 %v5945
    %6741 = vmatprep.subr.bf16.mxu0 %v5938
    %6742 = vmatpush2.bf16.msra.mxu0 %v5937
    %6743 = vmatprep.subr.bf16.mxu0 %v5930
    %6744 = vmatpush2.bf16.msra.mxu0 %v5929
    %6745 = vmatprep.mubr.bf16.mxu0 %v6630
    %6746 = vmatmul.mubr.bf16.gmra.mxu0 %v6629
    %v6747 = vpop.f32.mrf.mxu0
    %v6748 = vadd.f32 0.0, %v6747
    %v6749 = vpop.f32.mrf.mxu0
    %v6750 = vadd.f32 0.0, %v6749
    %v6751 = vpop.f32.mrf.mxu0
    %v6752 = vpop.f32.mrf.mxu0
    %6753 = vdwg.mxu0
    %6754 = vmatprep.subr.bf16.mxu0 %v5924
    %6755 = vmatpush1.bf16.msra.mxu0 %v5923
    %6756 = vmatprep.subr.bf16.mxu0 %v5916
    %6757 = vmatpush1.bf16.msra.mxu0 %v5915
    %6758 = vmatprep.subr.bf16.mxu0 %v5908
    %6759 = vmatpush1.bf16.msra.mxu0 %v5907
    %6760 = vmatprep.subr.bf16.mxu0 %v5900
    %6761 = vmatpush1.bf16.msra.mxu0 %v5899
    %6762 = vmatprep.subr.bf16.mxu0 %v5892
    %6763 = vmatpush1.bf16.msra.mxu0 %v5891
    %6764 = vmatprep.subr.bf16.mxu0 %v5884
    %6765 = vmatpush1.bf16.msra.mxu0 %v5883
    %6766 = vmatprep.subr.bf16.mxu0 %v5876
    %6767 = vmatpush1.bf16.msra.mxu0 %v5875
    %6768 = vmatprep.subr.bf16.mxu0 %v5868
    %6769 = vmatpush1.bf16.msra.mxu0 %v5867
    %6770 = vmatprep.subr.bf16.mxu0 %v5988
    %6771 = vmatpush2.bf16.msra.mxu0 %v5987
    %6772 = vmatprep.subr.bf16.mxu0 %v5980
    %6773 = vmatpush2.bf16.msra.mxu0 %v5979
    %6774 = vmatprep.subr.bf16.mxu0 %v5972
    %6775 = vmatpush2.bf16.msra.mxu0 %v5971
    %6776 = vmatprep.subr.bf16.mxu0 %v5964
    %6777 = vmatpush2.bf16.msra.mxu0 %v5963
    %6778 = vmatprep.subr.bf16.mxu0 %v5956
    %6779 = vmatpush2.bf16.msra.mxu0 %v5955
    %6780 = vmatprep.subr.bf16.mxu0 %v5948
    %6781 = vmatpush2.bf16.msra.mxu0 %v5947
    %6782 = vmatprep.subr.bf16.mxu0 %v5940
    %6783 = vmatpush2.bf16.msra.mxu0 %v5939
    %6784 = vmatprep.subr.bf16.mxu0 %v5932
    %6785 = vmatpush2.bf16.msra.mxu0 %v5931
    %6786 = vmatprep.mubr.bf16.mxu0 %v6630
    %6787 = vmatmul.mubr.bf16.gmra.mxu0 %v6629
    %v6788 = vpop.f32.mrf.mxu0
    %v6789 = vadd.f32 0.0, %v6788
    %v6790 = vpop.f32.mrf.mxu0
    %v6791 = vadd.f32 0.0, %v6790
    %v6792 = vpop.f32.mrf.mxu0
    %v6793 = vpop.f32.mrf.mxu0
    %6794 = vdwg.mxu0
    %v6796 = vsel %vm6361, %v6628, 0
    %6798 = vmatprep.subr.bf16.mxu0 0
    %6799 = vmatpush1.bf16.msra.mxu0 0
    %6800 = vmatprep.subr.bf16.mxu0 0
    %6801 = vmatpush1.bf16.msra.mxu0 0
    %6802 = vmatprep.subr.bf16.mxu0 0
    %6803 = vmatpush1.bf16.msra.mxu0 0
    %6804 = vmatprep.subr.bf16.mxu0 0
    %6805 = vmatpush1.bf16.msra.mxu0 0
    %6806 = vmatprep.subr.bf16.mxu0 0
    %6807 = vmatpush1.bf16.msra.mxu0 0
    %6808 = vmatprep.subr.bf16.mxu0 0
    %6809 = vmatpush1.bf16.msra.mxu0 0
    %6810 = vmatprep.subr.bf16.mxu0 %v6338
    %6811 = vmatpush1.bf16.msra.mxu0 %v6337
    %6812 = vmatprep.subr.bf16.mxu0 %v6330
    %6813 = vmatpush1.bf16.msra.mxu0 %v6329
    %6814 = vmatprep.subr.bf16.mxu0 0
    %6815 = vmatpush2.bf16.msra.mxu0 0
    %6816 = vmatprep.subr.bf16.mxu0 0
    %6817 = vmatpush2.bf16.msra.mxu0 0
    %6818 = vmatprep.subr.bf16.mxu0 0
    %6819 = vmatpush2.bf16.msra.mxu0 0
    %6820 = vmatprep.subr.bf16.mxu0 0
    %6821 = vmatpush2.bf16.msra.mxu0 0
    %6822 = vmatprep.subr.bf16.mxu0 0
    %6823 = vmatpush2.bf16.msra.mxu0 0
    %6824 = vmatprep.subr.bf16.mxu0 0
    %6825 = vmatpush2.bf16.msra.mxu0 0
    %6826 = vmatprep.subr.bf16.mxu0 0
    %6827 = vmatpush2.bf16.msra.mxu0 0
    %6828 = vmatprep.subr.bf16.mxu0 0
    %6829 = vmatpush2.bf16.msra.mxu0 0
    %6830 = vmatprep.mubr.bf16.mxu0 0
    %6831 = vmatmul.mubr.bf16.gmra.mxu0 %v6796
    %v6832 = vpop.f32.mrf.mxu0
    %v6833 = vadd.f32 %v6666, %v6832
    %v6834 = vpop.f32.mrf.mxu0
    %v6835 = vadd.f32 %v6668, %v6834
    %v6836 = vpop.f32.mrf.mxu0
    %v6837 = vpop.f32.mrf.mxu0
    %6838 = vdwg.mxu0
    %6839 = vmatprep.subr.bf16.mxu0 0
    %6840 = vmatpush1.bf16.msra.mxu0 0
    %6841 = vmatprep.subr.bf16.mxu0 0
    %6842 = vmatpush1.bf16.msra.mxu0 0
    %6843 = vmatprep.subr.bf16.mxu0 0
    %6844 = vmatpush1.bf16.msra.mxu0 0
    %6845 = vmatprep.subr.bf16.mxu0 0
    %6846 = vmatpush1.bf16.msra.mxu0 0
    %6847 = vmatprep.subr.bf16.mxu0 0
    %6848 = vmatpush1.bf16.msra.mxu0 0
    %6849 = vmatprep.subr.bf16.mxu0 0
    %6850 = vmatpush1.bf16.msra.mxu0 0
    %6851 = vmatprep.subr.bf16.mxu0 %v6340
    %6852 = vmatpush1.bf16.msra.mxu0 %v6339
    %6853 = vmatprep.subr.bf16.mxu0 %v6332
    %6854 = vmatpush1.bf16.msra.mxu0 %v6331
    %6855 = vmatprep.subr.bf16.mxu0 0
    %6856 = vmatpush2.bf16.msra.mxu0 0
    %6857 = vmatprep.subr.bf16.mxu0 0
    %6858 = vmatpush2.bf16.msra.mxu0 0
    %6859 = vmatprep.subr.bf16.mxu0 0
    %6860 = vmatpush2.bf16.msra.mxu0 0
    %6861 = vmatprep.subr.bf16.mxu0 0
    %6862 = vmatpush2.bf16.msra.mxu0 0
    %6863 = vmatprep.subr.bf16.mxu0 0
    %6864 = vmatpush2.bf16.msra.mxu0 0
    %6865 = vmatprep.subr.bf16.mxu0 0
    %6866 = vmatpush2.bf16.msra.mxu0 0
    %6867 = vmatprep.subr.bf16.mxu0 0
    %6868 = vmatpush2.bf16.msra.mxu0 0
    %6869 = vmatprep.subr.bf16.mxu0 0
    %6870 = vmatpush2.bf16.msra.mxu0 0
    %6871 = vmatprep.mubr.bf16.mxu0 0
    %6872 = vmatmul.mubr.bf16.gmra.mxu0 %v6796
    %v6873 = vpop.f32.mrf.mxu0
    %v6874 = vadd.f32 %v6707, %v6873
    %v6875 = vpop.f32.mrf.mxu0
    %v6876 = vadd.f32 %v6709, %v6875
    %v6877 = vpop.f32.mrf.mxu0
    %v6878 = vpop.f32.mrf.mxu0
    %6879 = vdwg.mxu0
    %6880 = vmatprep.subr.bf16.mxu0 0
    %6881 = vmatpush1.bf16.msra.mxu0 0
    %6882 = vmatprep.subr.bf16.mxu0 0
    %6883 = vmatpush1.bf16.msra.mxu0 0
    %6884 = vmatprep.subr.bf16.mxu0 0
    %6885 = vmatpush1.bf16.msra.mxu0 0
    %6886 = vmatprep.subr.bf16.mxu0 0
    %6887 = vmatpush1.bf16.msra.mxu0 0
    %6888 = vmatprep.subr.bf16.mxu0 0
    %6889 = vmatpush1.bf16.msra.mxu0 0
    %6890 = vmatprep.subr.bf16.mxu0 0
    %6891 = vmatpush1.bf16.msra.mxu0 0
    %6892 = vmatprep.subr.bf16.mxu0 %v6342
    %6893 = vmatpush1.bf16.msra.mxu0 %v6341
    %6894 = vmatprep.subr.bf16.mxu0 %v6334
    %6895 = vmatpush1.bf16.msra.mxu0 %v6333
    %6896 = vmatprep.subr.bf16.mxu0 0
    %6897 = vmatpush2.bf16.msra.mxu0 0
    %6898 = vmatprep.subr.bf16.mxu0 0
    %6899 = vmatpush2.bf16.msra.mxu0 0
    %6900 = vmatprep.subr.bf16.mxu0 0
    %6901 = vmatpush2.bf16.msra.mxu0 0
    %6902 = vmatprep.subr.bf16.mxu0 0
    %6903 = vmatpush2.bf16.msra.mxu0 0
    %6904 = vmatprep.subr.bf16.mxu0 0
    %6905 = vmatpush2.bf16.msra.mxu0 0
    %6906 = vmatprep.subr.bf16.mxu0 0
    %6907 = vmatpush2.bf16.msra.mxu0 0
    %6908 = vmatprep.subr.bf16.mxu0 0
    %6909 = vmatpush2.bf16.msra.mxu0 0
    %6910 = vmatprep.subr.bf16.mxu0 0
    %6911 = vmatpush2.bf16.msra.mxu0 0
    %6912 = vmatprep.mubr.bf16.mxu0 0
    %6913 = vmatmul.mubr.bf16.gmra.mxu0 %v6796
    %v6914 = vpop.f32.mrf.mxu0
    %v6915 = vadd.f32 %v6748, %v6914
    %v6916 = vpop.f32.mrf.mxu0
    %v6917 = vadd.f32 %v6750, %v6916
    %v6918 = vpop.f32.mrf.mxu0
    %v6919 = vpop.f32.mrf.mxu0
    %6920 = vdwg.mxu0
    %6921 = vmatprep.subr.bf16.mxu0 0
    %6922 = vmatpush1.bf16.msra.mxu0 0
    %6923 = vmatprep.subr.bf16.mxu0 0
    %6924 = vmatpush1.bf16.msra.mxu0 0
    %6925 = vmatprep.subr.bf16.mxu0 0
    %6926 = vmatpush1.bf16.msra.mxu0 0
    %6927 = vmatprep.subr.bf16.mxu0 0
    %6928 = vmatpush1.bf16.msra.mxu0 0
    %6929 = vmatprep.subr.bf16.mxu0 0
    %6930 = vmatpush1.bf16.msra.mxu0 0
    %6931 = vmatprep.subr.bf16.mxu0 0
    %6932 = vmatpush1.bf16.msra.mxu0 0
    %6933 = vmatprep.subr.bf16.mxu0 %v6344
    %6934 = vmatpush1.bf16.msra.mxu0 %v6343
    %6935 = vmatprep.subr.bf16.mxu0 %v6336
    %6936 = vmatpush1.bf16.msra.mxu0 %v6335
    %6937 = vmatprep.subr.bf16.mxu0 0
    %6938 = vmatpush2.bf16.msra.mxu0 0
    %6939 = vmatprep.subr.bf16.mxu0 0
    %6940 = vmatpush2.bf16.msra.mxu0 0
    %6941 = vmatprep.subr.bf16.mxu0 0
    %6942 = vmatpush2.bf16.msra.mxu0 0
    %6943 = vmatprep.subr.bf16.mxu0 0
    %6944 = vmatpush2.bf16.msra.mxu0 0
    %6945 = vmatprep.subr.bf16.mxu0 0
    %6946 = vmatpush2.bf16.msra.mxu0 0
    %6947 = vmatprep.subr.bf16.mxu0 0
    %6948 = vmatpush2.bf16.msra.mxu0 0
    %6949 = vmatprep.subr.bf16.mxu0 0
    %6950 = vmatpush2.bf16.msra.mxu0 0
    %6951 = vmatprep.subr.bf16.mxu0 0
    %6952 = vmatpush2.bf16.msra.mxu0 0
    %6953 = vmatprep.mubr.bf16.mxu0 0
    %6954 = vmatmul.mubr.bf16.gmra.mxu0 %v6796
    %v6955 = vpop.f32.mrf.mxu0
    %v6956 = vadd.f32 %v6789, %v6955
    %v6957 = vpop.f32.mrf.mxu0
    %v6958 = vadd.f32 %v6791, %v6957
    %v6959 = vpop.f32.mrf.mxu0
    %v6960 = vpop.f32.mrf.mxu0
    %6961 = vdwg.mxu0
    %v6962 = vadd.f32 %v6833, %v6534
    %v6963 = vadd.f32 %v6835, %v6538
    %v6964 = vadd.f32 %v6874, %v6542
    %v6965 = vadd.f32 %v6876, %v6546
    %v6966 = vadd.f32 %v6915, %v6550
    %v6967 = vadd.f32 %v6917, %v6554
    %v6968 = vadd.f32 %v6956, %v6558
    %v6969 = vadd.f32 %v6958, %v6562
    %v6970 = vxor.u32 %v6962, 2147483648
    %v6971 = vxor.u32 %v6963, 2147483648
    %v6972 = vmul.f32 %v6970, 1.442695
    %v6973 = vpow.pop %v6972
    %v6974 = vmul.f32 %v6971, 1.442695
    %v6975 = vpow.pop %v6974
    %v6976 = vadd.f32 %v6973, 1.0
    %v6977 = vadd.f32 %v6975, 1.0
    %v6978 = vrcp.pop %v6976
    %v6979 = vmul.f32 1.0, %v6978
    %v6980 = vrcp.pop %v6977
    %v6981 = vmul.f32 1.0, %v6980
    %v6982 = vxor.u32 %v6964, 2147483648
    %v6983 = vxor.u32 %v6965, 2147483648
    %v6984 = vmul.f32 %v6982, 1.442695
    %v6985 = vpow.pop %v6984
    %v6986 = vmul.f32 %v6983, 1.442695
    %v6987 = vpow.pop %v6986
    %v6988 = vadd.f32 %v6985, 1.0
    %v6989 = vadd.f32 %v6987, 1.0
    %v6990 = vrcp.pop %v6988
    %v6991 = vmul.f32 1.0, %v6990
    %v6992 = vrcp.pop %v6989
    %v6993 = vmul.f32 1.0, %v6992
    %v6994 = vtanh.pop %v6966
    %v6995 = vtanh.pop %v6967
    %v6996 = vxor.u32 %v6968, 2147483648
    %v6997 = vxor.u32 %v6969, 2147483648
    %v6998 = vmul.f32 %v6996, 1.442695
    %v6999 = vpow.pop %v6998
    %v7000 = vmul.f32 %v6997, 1.442695
    %v7001 = vpow.pop %v7000
    %v7002 = vadd.f32 %v6999, 1.0
    %v7003 = vadd.f32 %v7001, 1.0
    %v7004 = vrcp.pop %v7002
    %v7005 = vmul.f32 1.0, %v7004
    %v7006 = vrcp.pop %v7003
    %v7007 = vmul.f32 1.0, %v7006
    %v7008 = vmul.f32 %v6991, %v6621
    %v7009 = vmul.f32 %v6993, %v6622
    %v7010 = vmul.f32 %v6979, %v6994
    %v7011 = vmul.f32 %v6981, %v6995
    %v7012 = vadd.f32 %v7008, %v7010
    %v7013 = vadd.f32 %v7009, %v7011
    %v7014 = vtanh.pop %v7012
    %v7015 = vtanh.pop %v7013
    %v7016 = vmul.f32 %v7005, %v7014
    %v7017 = vmul.f32 %v7007, %v7015
    %v7018 = vmax.f32 %v5329, %v5330
    %v7019 = vpack.c.bf16 %v7018, %v7018
    %v7020 = vpack.c.bf16 %v7016, %v7016
    %v7021 = vpack.c.bf16 %v7017, %v7017
    %7022 = vmatprep.subr.bf16.mxu0 %v5918
    %7023 = vmatpush1.bf16.msra.mxu0 %v5917
    %7024 = vmatprep.subr.bf16.mxu0 %v5910
    %7025 = vmatpush1.bf16.msra.mxu0 %v5909
    %7026 = vmatprep.subr.bf16.mxu0 %v5902
    %7027 = vmatpush1.bf16.msra.mxu0 %v5901
    %7028 = vmatprep.subr.bf16.mxu0 %v5894
    %7029 = vmatpush1.bf16.msra.mxu0 %v5893
    %7030 = vmatprep.subr.bf16.mxu0 %v5886
    %7031 = vmatpush1.bf16.msra.mxu0 %v5885
    %7032 = vmatprep.subr.bf16.mxu0 %v5878
    %7033 = vmatpush1.bf16.msra.mxu0 %v5877
    %7034 = vmatprep.subr.bf16.mxu0 %v5870
    %7035 = vmatpush1.bf16.msra.mxu0 %v5869
    %7036 = vmatprep.subr.bf16.mxu0 %v5862
    %7037 = vmatpush1.bf16.msra.mxu0 %v5861
    %7038 = vmatprep.subr.bf16.mxu0 %v5982
    %7039 = vmatpush2.bf16.msra.mxu0 %v5981
    %7040 = vmatprep.subr.bf16.mxu0 %v5974
    %7041 = vmatpush2.bf16.msra.mxu0 %v5973
    %7042 = vmatprep.subr.bf16.mxu0 %v5966
    %7043 = vmatpush2.bf16.msra.mxu0 %v5965
    %7044 = vmatprep.subr.bf16.mxu0 %v5958
    %7045 = vmatpush2.bf16.msra.mxu0 %v5957
    %7046 = vmatprep.subr.bf16.mxu0 %v5950
    %7047 = vmatpush2.bf16.msra.mxu0 %v5949
    %7048 = vmatprep.subr.bf16.mxu0 %v5942
    %7049 = vmatpush2.bf16.msra.mxu0 %v5941
    %7050 = vmatprep.subr.bf16.mxu0 %v5934
    %7051 = vmatpush2.bf16.msra.mxu0 %v5933
    %7052 = vmatprep.subr.bf16.mxu0 %v5926
    %7053 = vmatpush2.bf16.msra.mxu0 %v5925
    %7054 = vmatprep.mubr.bf16.mxu0 %v7021
    %7055 = vmatmul.mubr.bf16.gmra.mxu0 %v7020
    %v7056 = vpop.f32.mrf.mxu0
    %v7057 = vadd.f32 0.0, %v7056
    %v7058 = vpop.f32.mrf.mxu0
    %v7059 = vadd.f32 0.0, %v7058
    %v7060 = vpop.f32.mrf.mxu0
    %v7061 = vpop.f32.mrf.mxu0
    %7062 = vdwg.mxu0
    %7063 = vmatprep.subr.bf16.mxu0 %v5920
    %7064 = vmatpush1.bf16.msra.mxu0 %v5919
    %7065 = vmatprep.subr.bf16.mxu0 %v5912
    %7066 = vmatpush1.bf16.msra.mxu0 %v5911
    %7067 = vmatprep.subr.bf16.mxu0 %v5904
    %7068 = vmatpush1.bf16.msra.mxu0 %v5903
    %7069 = vmatprep.subr.bf16.mxu0 %v5896
    %7070 = vmatpush1.bf16.msra.mxu0 %v5895
    %7071 = vmatprep.subr.bf16.mxu0 %v5888
    %7072 = vmatpush1.bf16.msra.mxu0 %v5887
    %7073 = vmatprep.subr.bf16.mxu0 %v5880
    %7074 = vmatpush1.bf16.msra.mxu0 %v5879
    %7075 = vmatprep.subr.bf16.mxu0 %v5872
    %7076 = vmatpush1.bf16.msra.mxu0 %v5871
    %7077 = vmatprep.subr.bf16.mxu0 %v5864
    %7078 = vmatpush1.bf16.msra.mxu0 %v5863
    %7079 = vmatprep.subr.bf16.mxu0 %v5984
    %7080 = vmatpush2.bf16.msra.mxu0 %v5983
    %7081 = vmatprep.subr.bf16.mxu0 %v5976
    %7082 = vmatpush2.bf16.msra.mxu0 %v5975
    %7083 = vmatprep.subr.bf16.mxu0 %v5968
    %7084 = vmatpush2.bf16.msra.mxu0 %v5967
    %7085 = vmatprep.subr.bf16.mxu0 %v5960
    %7086 = vmatpush2.bf16.msra.mxu0 %v5959
    %7087 = vmatprep.subr.bf16.mxu0 %v5952
    %7088 = vmatpush2.bf16.msra.mxu0 %v5951
    %7089 = vmatprep.subr.bf16.mxu0 %v5944
    %7090 = vmatpush2.bf16.msra.mxu0 %v5943
    %7091 = vmatprep.subr.bf16.mxu0 %v5936
    %7092 = vmatpush2.bf16.msra.mxu0 %v5935
    %7093 = vmatprep.subr.bf16.mxu0 %v5928
    %7094 = vmatpush2.bf16.msra.mxu0 %v5927
    %7095 = vmatprep.mubr.bf16.mxu0 %v7021
    %7096 = vmatmul.mubr.bf16.gmra.mxu0 %v7020
    %v7097 = vpop.f32.mrf.mxu0
    %v7098 = vadd.f32 0.0, %v7097
    %v7099 = vpop.f32.mrf.mxu0
    %v7100 = vadd.f32 0.0, %v7099
    %v7101 = vpop.f32.mrf.mxu0
    %v7102 = vpop.f32.mrf.mxu0
    %7103 = vdwg.mxu0
    %7104 = vmatprep.subr.bf16.mxu0 %v5922
    %7105 = vmatpush1.bf16.msra.mxu0 %v5921
    %7106 = vmatprep.subr.bf16.mxu0 %v5914
    %7107 = vmatpush1.bf16.msra.mxu0 %v5913
    %7108 = vmatprep.subr.bf16.mxu0 %v5906
    %7109 = vmatpush1.bf16.msra.mxu0 %v5905
    %7110 = vmatprep.subr.bf16.mxu0 %v5898
    %7111 = vmatpush1.bf16.msra.mxu0 %v5897
    %7112 = vmatprep.subr.bf16.mxu0 %v5890
    %7113 = vmatpush1.bf16.msra.mxu0 %v5889
    %7114 = vmatprep.subr.bf16.mxu0 %v5882
    %7115 = vmatpush1.bf16.msra.mxu0 %v5881
    %7116 = vmatprep.subr.bf16.mxu0 %v5874
    %7117 = vmatpush1.bf16.msra.mxu0 %v5873
    %7118 = vmatprep.subr.bf16.mxu0 %v5866
    %7119 = vmatpush1.bf16.msra.mxu0 %v5865
    %7120 = vmatprep.subr.bf16.mxu0 %v5986
    %7121 = vmatpush2.bf16.msra.mxu0 %v5985
    %7122 = vmatprep.subr.bf16.mxu0 %v5978
    %7123 = vmatpush2.bf16.msra.mxu0 %v5977
    %7124 = vmatprep.subr.bf16.mxu0 %v5970
    %7125 = vmatpush2.bf16.msra.mxu0 %v5969
    %7126 = vmatprep.subr.bf16.mxu0 %v5962
    %7127 = vmatpush2.bf16.msra.mxu0 %v5961
    %7128 = vmatprep.subr.bf16.mxu0 %v5954
    %7129 = vmatpush2.bf16.msra.mxu0 %v5953
    %7130 = vmatprep.subr.bf16.mxu0 %v5946
    %7131 = vmatpush2.bf16.msra.mxu0 %v5945
    %7132 = vmatprep.subr.bf16.mxu0 %v5938
    %7133 = vmatpush2.bf16.msra.mxu0 %v5937
    %7134 = vmatprep.subr.bf16.mxu0 %v5930
    %7135 = vmatpush2.bf16.msra.mxu0 %v5929
    %7136 = vmatprep.mubr.bf16.mxu0 %v7021
    %7137 = vmatmul.mubr.bf16.gmra.mxu0 %v7020
    %v7138 = vpop.f32.mrf.mxu0
    %v7139 = vadd.f32 0.0, %v7138
    %v7140 = vpop.f32.mrf.mxu0
    %v7141 = vadd.f32 0.0, %v7140
    %v7142 = vpop.f32.mrf.mxu0
    %v7143 = vpop.f32.mrf.mxu0
    %7144 = vdwg.mxu0
    %v7146 = vsel %vm6361, %v7019, 0
    %7148 = vmatprep.subr.bf16.mxu0 0
    %7149 = vmatpush1.bf16.msra.mxu0 0
    %7150 = vmatprep.subr.bf16.mxu0 0
    %7151 = vmatpush1.bf16.msra.mxu0 0
    %7152 = vmatprep.subr.bf16.mxu0 0
    %7153 = vmatpush1.bf16.msra.mxu0 0
    %7154 = vmatprep.subr.bf16.mxu0 0
    %7155 = vmatpush1.bf16.msra.mxu0 0
    %7156 = vmatprep.subr.bf16.mxu0 0
    %7157 = vmatpush1.bf16.msra.mxu0 0
    %7158 = vmatprep.subr.bf16.mxu0 0
    %7159 = vmatpush1.bf16.msra.mxu0 0
    %7160 = vmatprep.subr.bf16.mxu0 %v6338
    %7161 = vmatpush1.bf16.msra.mxu0 %v6337
    %7162 = vmatprep.subr.bf16.mxu0 %v6330
    %7163 = vmatpush1.bf16.msra.mxu0 %v6329
    %7164 = vmatprep.subr.bf16.mxu0 0
    %7165 = vmatpush2.bf16.msra.mxu0 0
    %7166 = vmatprep.subr.bf16.mxu0 0
    %7167 = vmatpush2.bf16.msra.mxu0 0
    %7168 = vmatprep.subr.bf16.mxu0 0
    %7169 = vmatpush2.bf16.msra.mxu0 0
    %7170 = vmatprep.subr.bf16.mxu0 0
    %7171 = vmatpush2.bf16.msra.mxu0 0
    %7172 = vmatprep.subr.bf16.mxu0 0
    %7173 = vmatpush2.bf16.msra.mxu0 0
    %7174 = vmatprep.subr.bf16.mxu0 0
    %7175 = vmatpush2.bf16.msra.mxu0 0
    %7176 = vmatprep.subr.bf16.mxu0 0
    %7177 = vmatpush2.bf16.msra.mxu0 0
    %7178 = vmatprep.subr.bf16.mxu0 0
    %7179 = vmatpush2.bf16.msra.mxu0 0
    %7180 = vmatprep.mubr.bf16.mxu0 0
    %7181 = vmatmul.mubr.bf16.gmra.mxu0 %v7146
    %v7182 = vpop.f32.mrf.mxu0
    %v7183 = vadd.f32 %v7057, %v7182
    %v7184 = vpop.f32.mrf.mxu0
    %v7185 = vadd.f32 %v7059, %v7184
    %v7186 = vpop.f32.mrf.mxu0
    %v7187 = vpop.f32.mrf.mxu0
    %7188 = vdwg.mxu0
    %7189 = vmatprep.subr.bf16.mxu0 0
    %7190 = vmatpush1.bf16.msra.mxu0 0
    %7191 = vmatprep.subr.bf16.mxu0 0
    %7192 = vmatpush1.bf16.msra.mxu0 0
    %7193 = vmatprep.subr.bf16.mxu0 0
    %7194 = vmatpush1.bf16.msra.mxu0 0
    %7195 = vmatprep.subr.bf16.mxu0 0
    %7196 = vmatpush1.bf16.msra.mxu0 0
    %7197 = vmatprep.subr.bf16.mxu0 0
    %7198 = vmatpush1.bf16.msra.mxu0 0
    %7199 = vmatprep.subr.bf16.mxu0 0
    %7200 = vmatpush1.bf16.msra.mxu0 0
    %7201 = vmatprep.subr.bf16.mxu0 %v6340
    %7202 = vmatpush1.bf16.msra.mxu0 %v6339
    %7203 = vmatprep.subr.bf16.mxu0 %v6332
    %7204 = vmatpush1.bf16.msra.mxu0 %v6331
    %7205 = vmatprep.subr.bf16.mxu0 0
    %7206 = vmatpush2.bf16.msra.mxu0 0
    %7207 = vmatprep.subr.bf16.mxu0 0
    %7208 = vmatpush2.bf16.msra.mxu0 0
    %7209 = vmatprep.subr.bf16.mxu0 0
    %7210 = vmatpush2.bf16.msra.mxu0 0
    %7211 = vmatprep.subr.bf16.mxu0 0
    %7212 = vmatpush2.bf16.msra.mxu0 0
    %7213 = vmatprep.subr.bf16.mxu0 0
    %7214 = vmatpush2.bf16.msra.mxu0 0
    %7215 = vmatprep.subr.bf16.mxu0 0
    %7216 = vmatpush2.bf16.msra.mxu0 0
    %7217 = vmatprep.subr.bf16.mxu0 0
    %7218 = vmatpush2.bf16.msra.mxu0 0
    %7219 = vmatprep.subr.bf16.mxu0 0
    %7220 = vmatpush2.bf16.msra.mxu0 0
    %7221 = vmatprep.mubr.bf16.mxu0 0
    %7222 = vmatmul.mubr.bf16.gmra.mxu0 %v7146
    %v7223 = vpop.f32.mrf.mxu0
    %v7224 = vadd.f32 %v7098, %v7223
    %v7225 = vpop.f32.mrf.mxu0
    %v7226 = vadd.f32 %v7100, %v7225
    %v7227 = vpop.f32.mrf.mxu0
    %v7228 = vpop.f32.mrf.mxu0
    %7229 = vdwg.mxu0
    %7230 = vmatprep.subr.bf16.mxu0 0
    %7231 = vmatpush1.bf16.msra.mxu0 0
    %7232 = vmatprep.subr.bf16.mxu0 0
    %7233 = vmatpush1.bf16.msra.mxu0 0
    %7234 = vmatprep.subr.bf16.mxu0 0
    %7235 = vmatpush1.bf16.msra.mxu0 0
    %7236 = vmatprep.subr.bf16.mxu0 0
    %7237 = vmatpush1.bf16.msra.mxu0 0
    %7238 = vmatprep.subr.bf16.mxu0 0
    %7239 = vmatpush1.bf16.msra.mxu0 0
    %7240 = vmatprep.subr.bf16.mxu0 0
    %7241 = vmatpush1.bf16.msra.mxu0 0
    %7242 = vmatprep.subr.bf16.mxu0 %v6342
    %7243 = vmatpush1.bf16.msra.mxu0 %v6341
    %7244 = vmatprep.subr.bf16.mxu0 %v6334
    %7245 = vmatpush1.bf16.msra.mxu0 %v6333
    %7246 = vmatprep.subr.bf16.mxu0 0
    %7247 = vmatpush2.bf16.msra.mxu0 0
    %7248 = vmatprep.subr.bf16.mxu0 0
    %7249 = vmatpush2.bf16.msra.mxu0 0
    %7250 = vmatprep.subr.bf16.mxu0 0
    %7251 = vmatpush2.bf16.msra.mxu0 0
    %7252 = vmatprep.subr.bf16.mxu0 0
    %7253 = vmatpush2.bf16.msra.mxu0 0
    %7254 = vmatprep.subr.bf16.mxu0 0
    %7255 = vmatpush2.bf16.msra.mxu0 0
    %7256 = vmatprep.subr.bf16.mxu0 0
    %7257 = vmatpush2.bf16.msra.mxu0 0
    %7258 = vmatprep.subr.bf16.mxu0 0
    %7259 = vmatpush2.bf16.msra.mxu0 0
    %7260 = vmatprep.subr.bf16.mxu0 0
    %7261 = vmatpush2.bf16.msra.mxu0 0
    %7262 = vmatprep.mubr.bf16.mxu0 0
    %7263 = vmatmul.mubr.bf16.gmra.mxu0 %v7146
    %v7264 = vpop.f32.mrf.mxu0
    %v7265 = vadd.f32 %v7139, %v7264
    %v7266 = vpop.f32.mrf.mxu0
    %v7267 = vadd.f32 %v7141, %v7266
    %v7268 = vpop.f32.mrf.mxu0
    %v7269 = vpop.f32.mrf.mxu0
    %7270 = vdwg.mxu0
    %v7271 = vadd.f32 %v7183, %v6534
    %v7272 = vadd.f32 %v7185, %v6538
    %v7273 = vadd.f32 %v7224, %v6542
    %v7274 = vadd.f32 %v7226, %v6546
    %v7275 = vadd.f32 %v7265, %v6550
    %v7276 = vadd.f32 %v7267, %v6554
    %v7277 = vxor.u32 %v7271, 2147483648
    %v7278 = vxor.u32 %v7272, 2147483648
    %v7279 = vmul.f32 %v7277, 1.442695
    %v7280 = vpow.pop %v7279
    %v7281 = vmul.f32 %v7278, 1.442695
    %v7282 = vpow.pop %v7281
    %v7283 = vadd.f32 %v7280, 1.0
    %v7284 = vadd.f32 %v7282, 1.0
    %v7285 = vrcp.pop %v7283
    %v7286 = vmul.f32 1.0, %v7285
    %v7287 = vrcp.pop %v7284
    %v7288 = vmul.f32 1.0, %v7287
    %v7289 = vxor.u32 %v7273, 2147483648
    %v7290 = vxor.u32 %v7274, 2147483648
    %v7291 = vmul.f32 %v7289, 1.442695
    %v7292 = vpow.pop %v7291
    %v7293 = vmul.f32 %v7290, 1.442695
    %v7294 = vpow.pop %v7293
    %v7295 = vadd.f32 %v7292, 1.0
    %v7296 = vadd.f32 %v7294, 1.0
    %v7297 = vrcp.pop %v7295
    %v7298 = vmul.f32 1.0, %v7297
    %v7299 = vrcp.pop %v7296
    %v7300 = vmul.f32 1.0, %v7299
    %v7301 = vtanh.pop %v7275
    %v7302 = vtanh.pop %v7276
    %v7303 = vmul.f32 %v7298, %v7012
    %v7304 = vmul.f32 %v7300, %v7013
    %v7305 = vmul.f32 %v7286, %v7301
    %v7306 = vmul.f32 %v7288, %v7302
    %v7307 = vadd.f32 %v7303, %v7305
    %v7308 = vadd.f32 %v7304, %v7306
    %v7311 = vcombine.low %v7307, %v7308
    %v7313 = vunpack.c.l.s4 1983009808
    %v7314 = vunpack.c.0.s8 %v7313
    %v7315 = vlaneseq
    %v7316 = vshrl.u32 %v7315, 7
    %v7317 = vsub.s32 %v7314, %v7316
    %v7318 = vrot.slane %v7311, %v7317
    %7320 = vst [vmem:[#allocation2] sm:$0xf] %v7318
    // Predicated region
    $region34: #{feature_extractor_forward.1} parent=1 // pred_check
      _
    $region35: #{feature_extractor_forward.1} parent=1 // pred_check_branch
      %7322 = sbr.rel (0) target = $region37
    $region36: #{feature_extractor_forward.1} parent=1 // pred_region
      %s7324 = ssub.s32 64, 64
      %7325 = vsyncadd [#allocation3], %s7324
      %s7327 = sshll.u32 [#allocation2], 4
      %s7328 = int_to_ptr.vmem [resolvable:$true] %s7327
      %7330 = dma.vmem_to_hbm [thread:$0]  %s7328, 64, %s8, [#allocation3]
    $region37: #{feature_extractor_forward.1} parent=1 // pred_fallthru
      _
    // Predicated region
    $region38: #{feature_extractor_forward.1} parent=1 // pred_check
      _
    $region39: #{feature_extractor_forward.1} parent=1 // pred_check_branch
      %7332 = sbr.rel (0) target = $region41
    $region40: #{feature_extractor_forward.1} parent=1 // pred_region
      %7333 = dma.done [#allocation3], 64
    $region41: #{feature_extractor_forward.1} parent=1 // pred_fallthru
      _
    %7334 = vsyncpa [#allocation3], 1

</llo_original>
